<compile_context>
chip_gen: v7x
topology: tpu7x:2x2x1
jax: 0.10.0
libtpu: 0.0.40
codegen_flags: <defaults>
</compile_context>

<pallas_src>
import numpy as np

import jax
import jax.numpy as jnp
from jax.experimental import pallas as pl
from jax.experimental.pallas import tpu as pltpu


# ----------------------- host-side parameter folding -------------------------

def _fold_bn(bn, eps=1e-5):
    g = np.asarray(bn["gamma"], np.float32)
    b = np.asarray(bn["beta"], np.float32)
    m = np.asarray(bn["mean"], np.float32)
    v = np.asarray(bn["var"], np.float32)
    scale = g / np.sqrt(v + eps)
    return scale, b - m * scale


def _dw_mat(w, scale):
    # torch depthwise (C,1,3,3) -> (9, C) with BN scale folded.
    w = np.asarray(w, np.float32)
    c = w.shape[0]
    return w[:, 0].reshape(c, 9).T * scale[None, :]


def _pw_mat(w, scale):
    # torch pointwise (Cout,Cin,1,1) -> (Cin, Cout) with BN scale folded.
    w = np.asarray(w, np.float32)
    return w[:, :, 0, 0].T * scale[None, :]


def _even_cols(w):
    k, b = w.shape
    out = np.zeros((k, 2 * b), np.float32)
    out[:, 0::2] = w
    return out


def _odd_cols(w):
    k, b = w.shape
    out = np.zeros((k, 2 * b), np.float32)
    out[:, 1::2] = w
    return out


def _interleave(e, o):
    c = e.shape[0]
    out = np.zeros((2 * c,), np.float32)
    out[0::2] = e
    out[1::2] = o
    return out


def _interior_mask(h, w):
    # (4*npp, 1) interior mask of the phase-decomposed zero-padded (h+2,w+2) grid.
    hh, ww = h // 2 + 1, w // 2 + 1
    npp = hh * ww
    m = np.zeros((4 * npp, 1), np.float32)
    for pidx in range(4):
        a, b = pidx // 2, pidx % 2
        for r in range(hh):
            for c in range(ww):
                if 1 <= 2 * r + a <= h and 1 <= 2 * c + b <= w:
                    m[pidx * npp + r * ww + c, 0] = 1.0
    return m


def _selection_matrix(ho, wo, hh_i, ww_i, hh_o, ww_o):
    # Maps stride-2 block output rows ((Ho+1)x(Wo+1) grid, row-major, last
    # row/col garbage) into the phase-decomposed zero-padded layout at the new
    # resolution.  Border rows are all-zero -> zero border, exact elsewhere.
    npp_i = hh_i * ww_i
    npp_o = hh_o * ww_o
    s = np.zeros((4 * npp_o, npp_i), np.float32)
    for pidx in range(4):
        a, b = pidx // 2, pidx % 2
        for r in range(hh_o):
            for c in range(ww_o):
                i = 2 * r + a - 1
                j = 2 * c + b - 1
                if 0 <= i < ho and 0 <= j < wo:
                    s[pidx * npp_o + r * ww_o + c, i * ww_i + j] = 1.0
    return s


class _Slab:
    """Packs many tiny 2-D parameters into one lane-dense (rows, 128) array."""

    def __init__(self, lanes=128):
        self.lanes = lanes
        self.items = []
        self.count = 0

    def add(self, a):
        a = np.asarray(a, np.float32)
        if a.ndim == 1:
            a = a[None, :]
        assert a.ndim == 2 and a.shape[1] <= self.lanes, a.shape
        off = self.count
        self.items.append((off, a))
        self.count = off + ((a.shape[0] + 7) // 8) * 8   # 8-row aligned entries
        return off

    def finalize(self, dtype):
        rows = max(8, self.count)
        slab = np.zeros((rows, self.lanes), np.float32)
        for off, a in self.items:
            slab[off:off + a.shape[0], :a.shape[1]] = a
        return jnp.asarray(slab, dtype)


# ------------------------- fused forward-pass builder -------------------------

def build_encoder_forward(raw, batch, height, width):
    assert height % 16 == 0 and width % 16 == 0, (height, width)
    wmm = _Slab()   # bf16 MXU weights
    p32 = _Slab()   # f32 depthwise weights / biases / masks / selection mats

    mask_offs = {}

    def mask_off(h_, w_):
        if (h_, w_) not in mask_offs:
            mask_offs[(h_, w_)] = p32.add(_interior_mask(h_, w_))
        return mask_offs[(h_, w_)]

    # ---- conv1 (3x3 stride-2) + BN + ReLU, as one K=27 matmul ----
    c1r = raw["conv1"]
    sc, bc = _fold_bn(c1r["bn"])
    w27 = np.transpose(np.asarray(c1r["w"], np.float32), (2, 3, 1, 0)).reshape(27, -1)
    w27 = w27 * sc[None, :]
    c0 = w27.shape[1]
    h, w = height // 2, width // 2                     # resolution after conv1
    conv1 = {
        "w": wmm.add(w27),
        "b": p32.add(bc),
        "mask": mask_off(h, w),
        "rows": 4 * ((h // 2 + 1) * (w // 2 + 1)),
        "cout": c0,
    }

    # ---- residual blocks ----
    sched = []
    cin = c0
    for name in ("stage1", "stage2", "stage3"):
        for p in raw[name]:
            if "branch1" in p:                         # stride-2 block
                ho, wo = h // 2, w // 2
                hh_i, ww_i = h // 2 + 1, w // 2 + 1
                hh_o, ww_o = ho // 2 + 1, wo // 2 + 1
                b1p, b2p = p["branch1"], p["branch2"]
                bf = b1p["pw_w"].shape[0]
                sa, ta = _fold_bn(b1p["bn1"])
                sb, tb = _fold_bn(b1p["bn2"])
                s3, t3 = _fold_bn(b2p["bn1"])
                s4, t4 = _fold_bn(b2p["bn2"])
                s5, t5 = _fold_bn(b2p["bn3"])
                sched.append({
                    "kind": "s2", "cin": cin, "bf": bf,
                    "npp_in": hh_i * ww_i, "ww_in": ww_i, "npp_out": hh_o * ww_o,
                    "wdw1": p32.add(_dw_mat(b1p["dw_w"], sa)),
                    "bdw1": p32.add(ta),
                    "wc1": wmm.add(_even_cols(_pw_mat(b1p["pw_w"], sb))),
                    "w1": wmm.add(_pw_mat(b2p["pw1_w"], s3)),
                    "b1": p32.add(t3),
                    "wdw2": p32.add(_dw_mat(b2p["dw_w"], s4)),
                    "bdw2": p32.add(t4),
                    "wc2": wmm.add(_odd_cols(_pw_mat(b2p["pw2_w"], s5))),
                    "bc": p32.add(_interleave(tb, t5)),
                    "mask": mask_off(h, w),
                    "sel": p32.add(_selection_matrix(ho, wo, hh_i, ww_i, hh_o, ww_o)),
                })
                h, w, cin = ho, wo, 2 * bf
            else:                                      # stride-1 block
                b2p = p["branch2"]
                bf = b2p["pw1_w"].shape[0]
                hh, ww = h // 2 + 1, w // 2 + 1
                s3, t3 = _fold_bn(b2p["bn1"])
                s4, t4 = _fold_bn(b2p["bn2"])
                s5, t5 = _fold_bn(b2p["bn3"])
                w1 = _pw_mat(b2p["pw1_w"], s3)
                w1ext = np.concatenate([np.zeros((bf, bf), np.float32), w1], axis=0)
                sched.append({
                    "kind": "s1", "cin": cin, "bf": bf, "npp": hh * ww, "ww": ww,
                    "w1": wmm.add(w1ext),
                    "b1": p32.add(t3),
                    "wdw": p32.add(_dw_mat(b2p["dw_w"], s4)),
                    "bdw": p32.add(t4),
                    "wa": p32.add(_even_cols(np.eye(bf, dtype=np.float32))),
                    "wb": wmm.add(_odd_cols(_pw_mat(b2p["pw2_w"], s5))),
                    "bc": p32.add(_interleave(np.zeros((bf,), np.float32), t5)),
                    "mask": mask_off(h, w),
                })
                cin = 2 * bf

    hf, wf, cf = h, w, cin

    # ---- VMEM scratch: every inter-block activation + branch2 temporaries ----
    scr_shapes = []

    def add_scr(rows, cols):
        scr_shapes.append(pltpu.VMEM((rows, cols), jnp.float32))
        return len(scr_shapes) - 1

    conv1["dst"] = add_scr(conv1["rows"], c0)
    cur = conv1["dst"]
    for blk in sched:
        blk["src"] = cur
        if blk["kind"] == "s2":
            blk["t"] = add_scr(4 * blk["npp_in"], blk["bf"])
            blk["dst"] = add_scr(4 * blk["npp_out"], 2 * blk["bf"])
        else:
            blk["t"] = add_scr(4 * blk["npp"], blk["bf"])
            blk["dst"] = add_scr(4 * blk["npp"], 2 * blk["bf"])
        cur = blk["dst"]

    # rows of the final canonical buffer holding the Hf x Wf output pixels
    npp_f, ww_f = (hf // 2 + 1) * (wf // 2 + 1), wf // 2 + 1
    final_rows = []
    for i in range(hf):
        for j in range(wf):
            pp, qq = i + 1, j + 1
            final_rows.append(((pp % 2) * 2 + (qq % 2)) * npp_f
                              + (pp // 2) * ww_f + (qq // 2))

    wmm_arr = wmm.finalize(jnp.bfloat16)
    p32_arr = p32.finalize(jnp.float32)
    g1 = conv1["rows"]

    # ------------------------------- the kernel -------------------------------
    def kernel(x27_ref, wmm_ref, p32_ref, o_ref, *scr):
        def wmat(off, k, n):
            return wmm_ref[pl.ds(off, k), pl.ds(0, n)]

        def pmat(off, k, n):
            return p32_ref[pl.ds(off, k), pl.ds(0, n)]

        def dw_s2(src, npp, ww, w9, bias):
            # 3x3 stride-2 depthwise on the phase-decomposed padded buffer.
            acc = None
            for kh in range(3):
                for kw in range(3):
                    start = ((kh % 2) * 2 + (kw % 2)) * npp + (kh // 2) * ww + (kw // 2)
                    k = kh * 3 + kw
                    term = src[pl.ds(start, npp), :] * w9[k:k + 1, :]
                    acc = term if acc is None else acc + term
            return acc + bias

        def dw_s1(src, npp, ww, w9, bias):
            # 3x3 stride-1 depthwise, computed per output phase (shifted slices).
            outs = []
            for a in (0, 1):
                for b in (0, 1):
                    acc = None
                    for dh in (-1, 0, 1):
                        for dv in (-1, 0, 1):
                            ap, bp = (a + dh) % 2, (b + dv) % 2
                            ra, cb = (a + dh - ap) // 2, (b + dv - bp) // 2
                            start = (ap * 2 + bp) * npp + ra * ww + cb
                            k = (dh + 1) * 3 + (dv + 1)
                            term = src[pl.ds(start, npp), :] * w9[k:k + 1, :]
                            acc = term if acc is None else acc + term
                    outs.append(acc)
            return jnp.concatenate(outs, axis=0) + bias

        # ---- conv1 + BN + ReLU, written directly in stage1's input layout ----
        a = jnp.dot(x27_ref[0], wmat(conv1["w"], 27, c0),
                    preferred_element_type=jnp.float32)
        a = jnp.maximum(a + pmat(conv1["b"], 1, c0), 0.0)
        scr[conv1["dst"]][...] = a * pmat(conv1["mask"], g1, 1)

        # ---- residual blocks (fully unrolled at trace time) ----
        for blk in sched:
            src = scr[blk["src"]]
            tbuf = scr[blk["t"]]
            dst = scr[blk["dst"]]
            bf = blk["bf"]
            if blk["kind"] == "s2":
                npp, ww = blk["npp_in"], blk["ww_in"]
                cin_b = blk["cin"]
                mask = pmat(blk["mask"], 4 * npp, 1)
                x16 = src[...].astype(jnp.bfloat16)
                # branch1: depthwise stride-2 (+ folded BN)
                a1 = dw_s2(src, npp, ww,
                           pmat(blk["wdw1"], 9, cin_b), pmat(blk["bdw1"], 1, cin_b))
                # branch2: 1x1 + BN + ReLU (masked so padding stays zero), dw + BN
                t = jnp.dot(x16, wmat(blk["w1"], cin_b, bf),
                            preferred_element_type=jnp.float32)
                tbuf[...] = jnp.maximum(t + pmat(blk["b1"], 1, bf), 0.0) * mask
                a2 = dw_s2(tbuf, npp, ww,
                           pmat(blk["wdw2"], 9, bf), pmat(blk["bdw2"], 1, bf))
                # both final 1x1 convs + BN + ReLU + concat + channel shuffle
                out = jnp.dot(a1.astype(jnp.bfloat16), wmat(blk["wc1"], bf, 2 * bf),
                              preferred_element_type=jnp.float32)
                out = out + jnp.dot(a2.astype(jnp.bfloat16),
                                    wmat(blk["wc2"], bf, 2 * bf),
                                    preferred_element_type=jnp.float32)
                out = jnp.maximum(out + pmat(blk["bc"], 1, 2 * bf), 0.0)
                # exact f32 selection matmul: crop garbage row/col and place the
                # result in the zero-padded phase layout at the new resolution.
                sel = pmat(blk["sel"], 4 * blk["npp_out"], npp)
                dst[...] = jnp.dot(sel, out, preferred_element_type=jnp.float32)
            else:
                npp, ww = blk["npp"], blk["ww"]
                mask = pmat(blk["mask"], 4 * npp, 1)
                x = src[...]
                x16 = x.astype(jnp.bfloat16)
                # branch2 on the second channel half (selected by zero weight rows)
                t = jnp.dot(x16, wmat(blk["w1"], 2 * bf, bf),
                            preferred_element_type=jnp.float32)
                tbuf[...] = jnp.maximum(t + pmat(blk["b1"], 1, bf), 0.0) * mask
                a2 = dw_s1(tbuf, npp, ww,
                           pmat(blk["wdw"], 9, bf), pmat(blk["bdw"], 1, bf))
                # exact f32 pass-through into even lanes + branch2 1x1 + BN + ReLU
                # (= concat + channel shuffle), masked back to a zero border.
                out = jnp.dot(x[:, 0:bf], pmat(blk["wa"], bf, 2 * bf),
                              preferred_element_type=jnp.float32)
                out = out + jnp.dot(a2.astype(jnp.bfloat16),
                                    wmat(blk["wb"], bf, 2 * bf),
                                    preferred_element_type=jnp.float32)
                out = jnp.maximum(out + pmat(blk["bc"], 1, 2 * bf), 0.0)
                dst[...] = out * mask

        # ---- gather the Hf x Wf interior pixels of the last block ----
        last = scr[sched[-1]["dst"]]
        o_ref[0] = jnp.concatenate(
            [last[pl.ds(r, 1), :] for r in final_rows], axis=0)

    grid_spec = pltpu.PrefetchScalarGridSpec(
        num_scalar_prefetch=0,
        grid=(batch,),
        in_specs=[
            pl.BlockSpec((1, g1, 27), lambda i: (i, 0, 0)),
            pl.BlockSpec(wmm_arr.shape, lambda i: (0, 0)),
            pl.BlockSpec(p32_arr.shape, lambda i: (0, 0)),
        ],
        out_specs=pl.BlockSpec((1, hf * wf, cf), lambda i: (i, 0, 0)),
        scratch_shapes=scr_shapes,
    )
    call = pl.pallas_call(
        kernel,
        out_shape=jax.ShapeDtypeStruct((batch, hf * wf, cf), jnp.float32),
        grid_spec=grid_spec,
        compiler_params=pltpu.CompilerParams(
            dimension_semantics=("parallel",)),
    )

    gh, gw = height // 2 + 2, width // 2 + 2   # stage1 zero-padded grid

    def forward(x_nchw):
        # Input-boundary glue only: NCHW -> NHWC, conv1 im2col (9 taps x 3 ch)
        # laid out in the phase-decomposed padded order the kernel expects.
        x = jnp.transpose(x_nchw, (0, 2, 3, 1)).astype(jnp.float32)
        q = jnp.pad(x, ((0, 0), (3, 3), (3, 3), (0, 0)))
        taps = [q[:, kh:kh + 2 * gh:2, kw:kw + 2 * gw:2, :]
                for kh in range(3) for kw in range(3)]
        t = jnp.concatenate(taps, axis=-1)
        t = t.reshape(batch, gh // 2, 2, gw // 2, 2, 27)
        t = jnp.transpose(t, (0, 2, 4, 1, 3, 5)).reshape(batch, gh * gw, 27)
        out = call(t.astype(jnp.bfloat16), wmm_arr, p32_arr)
        return jnp.transpose(out, (0, 2, 1)).reshape(batch, cf, hf, wf)

    return jax.jit(forward)


# ------------------- deterministic raw (PyTorch-layout) params -----------------

def _conv_init(key, shape):
    fan_in = shape[1] * shape[2] * shape[3]
    return jax.random.normal(key, shape, jnp.float32) / jnp.sqrt(float(fan_in))


def _bn_init(key, c):
    k1, k2, k3, k4 = jax.random.split(key, 4)
    return {
        "gamma": 1.0 + 0.05 * jax.random.normal(k1, (c,), jnp.float32),
        "beta": 0.05 * jax.random.normal(k2, (c,), jnp.float32),
        "mean": 0.05 * jax.random.normal(k3, (c,), jnp.float32),
        "var": 1.0 + 0.1 * jnp.abs(jax.random.normal(k4, (c,), jnp.float32)),
    }


def _init_residual(key, inp, oup, stride):
    assert 1 <= stride <= 3
    bf = oup // 2
    assert stride != 1 or inp == bf << 1
    keys = jax.random.split(key, 10)
    p = {"stride": stride}
    if stride > 1:
        p["branch1"] = {
            "dw_w": _conv_init(keys[0], (inp, 1, 3, 3)),
            "bn1": _bn_init(keys[1], inp),
            "pw_w": _conv_init(keys[2], (bf, inp, 1, 1)),
            "bn2": _bn_init(keys[3], bf),
        }
    in2 = inp if stride > 1 else bf
    p["branch2"] = {
        "pw1_w": _conv_init(keys[4], (bf, in2, 1, 1)),
        "bn1": _bn_init(keys[5], bf),
        "dw_w": _conv_init(keys[6], (bf, 1, 3, 3)),
        "bn2": _bn_init(keys[7], bf),
        "pw2_w": _conv_init(keys[8], (bf, bf, 1, 1)),
        "bn3": _bn_init(keys[9], bf),
    }
    return p


def init_encoder_params(key, stages_repeats, stages_out_channels):
    params = {}
    k_conv, k_bn, key = jax.random.split(key, 3)
    input_channels = 3
    output_channels = stages_out_channels[0]
    params["conv1"] = {
        "w": _conv_init(k_conv, (output_channels, input_channels, 3, 3)),
        "bn": _bn_init(k_bn, output_channels),
    }
    input_channels = output_channels
    for name, repeats, output_channels in zip(
            ["stage1", "stage2", "stage3"], stages_repeats, stages_out_channels[1:]):
        blocks = []
        key, k = jax.random.split(key)
        blocks.append(_init_residual(k, input_channels, output_channels, 2))
        for _ in range(repeats - 1):
            key, k = jax.random.split(key)
            blocks.append(_init_residual(k, output_channels, output_channels, 1))
        params[name] = blocks
        input_channels = output_channels
    return params


# ----------------------- pure-JAX reference (for checking) ---------------------

def _ref_bn(x, bn):
    s = bn["gamma"] / jnp.sqrt(bn["var"] + 1e-5)
    return x * s + (bn["beta"] - bn["mean"] * s)


def _ref_conv(x, w, stride, pad, groups=1):
    return jax.lax.conv_general_dilated(
        x, jnp.transpose(w, (2, 3, 1, 0)), window_strides=(stride, stride),
        padding=[(pad, pad), (pad, pad)],
        dimension_numbers=("NHWC", "HWIO", "NHWC"), feature_group_count=groups)


def _ref_branch1(p, x, stride):
    x = _ref_bn(_ref_conv(x, p["dw_w"], stride, 1, groups=x.shape[-1]), p["bn1"])
    return jax.nn.relu(_ref_bn(_ref_conv(x, p["pw_w"], 1, 0), p["bn2"]))


def _ref_branch2(p, x, stride):
    x = jax.nn.relu(_ref_bn(_ref_conv(x, p["pw1_w"], 1, 0), p["bn1"]))
    x = _ref_bn(_ref_conv(x, p["dw_w"], stride, 1, groups=x.shape[-1]), p["bn2"])
    return jax.nn.relu(_ref_bn(_ref_conv(x, p["pw2_w"], 1, 0), p["bn3"]))


def _ref_shuffle(x):
    n, h, w, c = x.shape
    return x.reshape(n, h, w, 2, c // 2).transpose(0, 1, 2, 4, 3).reshape(n, h, w, c)


def reference_forward(raw, x_nchw):
    x = jnp.transpose(x_nchw, (0, 2, 3, 1))
    p = raw["conv1"]
    x = jax.nn.relu(_ref_bn(_ref_conv(x, p["w"], 2, 1), p["bn"]))
    for name in ("stage1", "stage2", "stage3"):
        for blk in raw[name]:
            if blk["stride"] == 1:
                c = x.shape[-1]
                out = jnp.concatenate(
                    [x[..., :c // 2], _ref_branch2(blk["branch2"], x[..., c // 2:], 1)],
                    axis=-1)
            else:
                out = jnp.concatenate(
                    [_ref_branch1(blk["branch1"], x, 2),
                     _ref_branch2(blk["branch2"], x, 2)], axis=-1)
            x = _ref_shuffle(out)
    return jnp.transpose(x, (0, 3, 1, 2))


# ------------------------------------ main ------------------------------------

if __name__ == "__main__":
    root = jax.random.PRNGKey(0)
    pkey, xkey = jax.random.split(root)

    stages_repeats = [2, 2, 2]
    stages_out_channels = [16, 32, 64, 128]
    raw = init_encoder_params(pkey, stages_repeats, stages_out_channels)

    # Input: NCHW like the PyTorch module. 32x32 -> conv1 16x16 -> stages 8/4/2.
    x = jax.random.normal(xkey, (2, 3, 32, 32), dtype=jnp.float32)

    fwd = build_encoder_forward(raw, 2, 32, 32)
    out = jax.block_until_ready(fwd(x))

    assert out.shape == (2, 128, 2, 2), out.shape
    assert bool(jnp.all(jnp.isfinite(out)))

    # Numerical check against a pure-JAX f32 reference (loose tolerance for the
    # bf16 MXU operands used inside the Pallas kernel).
    ref = jax.block_until_ready(reference_forward(raw, x))
    rel = float(jnp.max(jnp.abs(out - ref)) / (jnp.max(jnp.abs(ref)) + 1e-6))
    assert rel < 0.1, rel

    print("KERNEL_OK")
</pallas_src>

<mosaic_0001>
module attributes {stable_mosaic.version = 11 : i64} {
  func.func @kernel(%arg0: i32, %arg1: memref<1x324x27xbf16, #tpu.memory_space<vmem>>, %arg2: memref<704x128xbf16, #tpu.memory_space<vmem>>, %arg3: memref<1080x128xf32, #tpu.memory_space<vmem>>, %arg4: memref<1x4x128xf32, #tpu.memory_space<vmem>>, %arg5: memref<324x16xf32, #tpu.memory_space<vmem>>, %arg6: memref<324x16xf32, #tpu.memory_space<vmem>>, %arg7: memref<100x32xf32, #tpu.memory_space<vmem>>, %arg8: memref<100x16xf32, #tpu.memory_space<vmem>>, %arg9: memref<100x32xf32, #tpu.memory_space<vmem>>, %arg10: memref<100x32xf32, #tpu.memory_space<vmem>>, %arg11: memref<36x64xf32, #tpu.memory_space<vmem>>, %arg12: memref<36x32xf32, #tpu.memory_space<vmem>>, %arg13: memref<36x64xf32, #tpu.memory_space<vmem>>, %arg14: memref<36x64xf32, #tpu.memory_space<vmem>>, %arg15: memref<16x128xf32, #tpu.memory_space<vmem>>, %arg16: memref<16x64xf32, #tpu.memory_space<vmem>>, %arg17: memref<16x128xf32, #tpu.memory_space<vmem>>) attributes {dimension_semantics = [#tpu.dimension_semantics<parallel>], iteration_bounds = array<i64: 2>, scalar_prefetch = 0 : i64, scratch_operands = 13 : i64, tpu.core_type = #tpu.core_type<tc>, window_params = [{transform_indices = @transform_0, window_bounds = array<i64: 1, 324, 27>}, {pipeline_mode = #tpu.pipeline_mode<synchronous>, transform_indices = @transform_1, window_bounds = array<i64: 704, 128>}, {pipeline_mode = #tpu.pipeline_mode<synchronous>, transform_indices = @transform_2, window_bounds = array<i64: 1080, 128>}, {transform_indices = @transform_3, window_bounds = array<i64: 1, 4, 128>}]} {
    %c0 = arith.constant 0 : index
    %c0_0 = arith.constant 0 : index
    %c0_1 = arith.constant 0 : index
    %0 = vector.load %arg1[%c0, %c0_0, %c0_1] : memref<1x324x27xbf16, #tpu.memory_space<vmem>>, vector<1x324x27xbf16>
    %1 = vector.shape_cast %0 : vector<1x324x27xbf16> to vector<324x27xbf16>
    %c0_2 = arith.constant 0 : index
    %c0_3 = arith.constant 0 : index
    %2 = vector.load %arg2[%c0_2, %c0_3] : memref<704x128xbf16, #tpu.memory_space<vmem>>, vector<27x16xbf16>
    %cst = arith.constant dense<0.000000e+00> : vector<324x16xf32>
    %3 = tpu.matmul %1, %2, %cst {dimension_numbers = #tpu.dot_dimension_numbers<[1], [0], [0], [1], [0, 0, 1, 1], [], []>} : vector<324x27xbf16>, vector<27x16xbf16>, vector<324x16xf32> -> vector<324x16xf32>
    %c0_4 = arith.constant 0 : index
    %c0_5 = arith.constant 0 : index
    %4 = vector.load %arg3[%c0_4, %c0_5] : memref<1080x128xf32, #tpu.memory_space<vmem>>, vector<1x16xf32>
    %5 = vector.broadcast %4 : vector<1x16xf32> to vector<324x16xf32>
    %6 = arith.addf %3, %5 : vector<324x16xf32>
    %cst_6 = arith.constant 0.000000e+00 : f32
    %7 = vector.broadcast %cst_6 : f32 to vector<324x16xf32>
    %8 = arith.maximumf %6, %7 : vector<324x16xf32>
    %c8 = arith.constant 8 : index
    %c0_7 = arith.constant 0 : index
    %9 = vector.load %arg3[%c8, %c0_7] : memref<1080x128xf32, #tpu.memory_space<vmem>>, vector<324x1xf32>
    %10 = vector.broadcast %9 : vector<324x1xf32> to vector<324x16xf32>
    %11 = arith.mulf %8, %10 : vector<324x16xf32>
    %c0_8 = arith.constant 0 : index
    %c0_9 = arith.constant 0 : index
    %12 = vector.load %arg5[%c0_8, %c0_9] : memref<324x16xf32, #tpu.memory_space<vmem>>, vector<324x16xf32>
    tpu.vector_store %arg5[%c0_8, %c0_9], %11 {strides = array<i32>} : memref<324x16xf32, #tpu.memory_space<vmem>>, vector<324x16xf32>,
    %c8_10 = arith.constant 8 : index
    %c0_11 = arith.constant 0 : index
    %13 = vector.load %arg3[%c8_10, %c0_11] : memref<1080x128xf32, #tpu.memory_space<vmem>>, vector<324x1xf32>
    %c0_12 = arith.constant 0 : index
    %c0_13 = arith.constant 0 : index
    %14 = vector.load %arg5[%c0_12, %c0_13] : memref<324x16xf32, #tpu.memory_space<vmem>>, vector<324x16xf32>
    %15 = arith.truncf %14 : vector<324x16xf32> to vector<324x16xbf16>
    %c336 = arith.constant 336 : index
    %c0_14 = arith.constant 0 : index
    %16 = vector.load %arg3[%c336, %c0_14] : memref<1080x128xf32, #tpu.memory_space<vmem>>, vector<9x16xf32>
    %c352 = arith.constant 352 : index
    %c0_15 = arith.constant 0 : index
    %17 = vector.load %arg3[%c352, %c0_15] : memref<1080x128xf32, #tpu.memory_space<vmem>>, vector<1x16xf32>
    %c0_16 = arith.constant 0 : index
    %c0_17 = arith.constant 0 : index
    %18 = vector.load %arg5[%c0_16, %c0_17] : memref<324x16xf32, #tpu.memory_space<vmem>>, vector<81x16xf32>
    %19 = vector.extract_strided_slice %16 {offsets = [0, 0], sizes = [1, 16], strides = [1, 1]} : vector<9x16xf32> to vector<1x16xf32>
    %20 = vector.broadcast %19 : vector<1x16xf32> to vector<81x16xf32>
    %21 = arith.mulf %18, %20 : vector<81x16xf32>
    %c81 = arith.constant 81 : index
    %c0_18 = arith.constant 0 : index
    %22 = vector.load %arg5[%c81, %c0_18] : memref<324x16xf32, #tpu.memory_space<vmem>>, vector<81x16xf32>
    %23 = vector.extract_strided_slice %16 {offsets = [1, 0], sizes = [1, 16], strides = [1, 1]} : vector<9x16xf32> to vector<1x16xf32>
    %24 = vector.broadcast %23 : vector<1x16xf32> to vector<81x16xf32>
    %25 = arith.mulf %22, %24 : vector<81x16xf32>
    %26 = arith.addf %21, %25 : vector<81x16xf32>
    %c1 = arith.constant 1 : index
    %c0_19 = arith.constant 0 : index
    %27 = vector.load %arg5[%c1, %c0_19] : memref<324x16xf32, #tpu.memory_space<vmem>>, vector<81x16xf32>
    %28 = vector.extract_strided_slice %16 {offsets = [2, 0], sizes = [1, 16], strides = [1, 1]} : vector<9x16xf32> to vector<1x16xf32>
    %29 = vector.broadcast %28 : vector<1x16xf32> to vector<81x16xf32>
    %30 = arith.mulf %27, %29 : vector<81x16xf32>
    %31 = arith.addf %26, %30 : vector<81x16xf32>
    %c162 = arith.constant 162 : index
    %c0_20 = arith.constant 0 : index
    %32 = vector.load %arg5[%c162, %c0_20] : memref<324x16xf32, #tpu.memory_space<vmem>>, vector<81x16xf32>
    %33 = vector.extract_strided_slice %16 {offsets = [3, 0], sizes = [1, 16], strides = [1, 1]} : vector<9x16xf32> to vector<1x16xf32>
    %34 = vector.broadcast %33 : vector<1x16xf32> to vector<81x16xf32>
    %35 = arith.mulf %32, %34 : vector<81x16xf32>
    %36 = arith.addf %31, %35 : vector<81x16xf32>
    %c243 = arith.constant 243 : index
    %c0_21 = arith.constant 0 : index
    %37 = vector.load %arg5[%c243, %c0_21] : memref<324x16xf32, #tpu.memory_space<vmem>>, vector<81x16xf32>
    %38 = vector.extract_strided_slice %16 {offsets = [4, 0], sizes = [1, 16], strides = [1, 1]} : vector<9x16xf32> to vector<1x16xf32>
    %39 = vector.broadcast %38 : vector<1x16xf32> to vector<81x16xf32>
    %40 = arith.mulf %37, %39 : vector<81x16xf32>
    %41 = arith.addf %36, %40 : vector<81x16xf32>
    %c163 = arith.constant 163 : index
    %c0_22 = arith.constant 0 : index
    %42 = vector.load %arg5[%c163, %c0_22] : memref<324x16xf32, #tpu.memory_space<vmem>>, vector<81x16xf32>
    %43 = vector.extract_strided_slice %16 {offsets = [5, 0], sizes = [1, 16], strides = [1, 1]} : vector<9x16xf32> to vector<1x16xf32>
    %44 = vector.broadcast %43 : vector<1x16xf32> to vector<81x16xf32>
    %45 = arith.mulf %42, %44 : vector<81x16xf32>
    %46 = arith.addf %41, %45 : vector<81x16xf32>
    %c9 = arith.constant 9 : index
    %c0_23 = arith.constant 0 : index
    %47 = vector.load %arg5[%c9, %c0_23] : memref<324x16xf32, #tpu.memory_space<vmem>>, vector<81x16xf32>
    %48 = vector.extract_strided_slice %16 {offsets = [6, 0], sizes = [1, 16], strides = [1, 1]} : vector<9x16xf32> to vector<1x16xf32>
    %49 = vector.broadcast %48 : vector<1x16xf32> to vector<81x16xf32>
    %50 = arith.mulf %47, %49 : vector<81x16xf32>
    %51 = arith.addf %46, %50 : vector<81x16xf32>
    %c90 = arith.constant 90 : index
    %c0_24 = arith.constant 0 : index
    %52 = vector.load %arg5[%c90, %c0_24] : memref<324x16xf32, #tpu.memory_space<vmem>>, vector<81x16xf32>
    %53 = vector.extract_strided_slice %16 {offsets = [7, 0], sizes = [1, 16], strides = [1, 1]} : vector<9x16xf32> to vector<1x16xf32>
    %54 = vector.broadcast %53 : vector<1x16xf32> to vector<81x16xf32>
    %55 = arith.mulf %52, %54 : vector<81x16xf32>
    %56 = arith.addf %51, %55 : vector<81x16xf32>
    %c10 = arith.constant 10 : index
    %c0_25 = arith.constant 0 : index
    %57 = vector.load %arg5[%c10, %c0_25] : memref<324x16xf32, #tpu.memory_space<vmem>>, vector<81x16xf32>
    %58 = vector.extract_strided_slice %16 {offsets = [8, 0], sizes = [1, 16], strides = [1, 1]} : vector<9x16xf32> to vector<1x16xf32>
    %59 = vector.broadcast %58 : vector<1x16xf32> to vector<81x16xf32>
    %60 = arith.mulf %57, %59 : vector<81x16xf32>
    %61 = arith.addf %56, %60 : vector<81x16xf32>
    %62 = vector.broadcast %17 : vector<1x16xf32> to vector<81x16xf32>
    %63 = arith.addf %61, %62 : vector<81x16xf32>
    %c48 = arith.constant 48 : index
    %c0_26 = arith.constant 0 : index
    %64 = vector.load %arg2[%c48, %c0_26] : memref<704x128xbf16, #tpu.memory_space<vmem>>, vector<16x16xbf16>
    %cst_27 = arith.constant dense<0.000000e+00> : vector<324x16xf32>
    %65 = tpu.matmul %15, %64, %cst_27 {dimension_numbers = #tpu.dot_dimension_numbers<[1], [0], [0], [1], [0, 0, 1, 1], [], []>} : vector<324x16xbf16>, vector<16x16xbf16>, vector<324x16xf32> -> vector<324x16xf32>
    %c360 = arith.constant 360 : index
    %c0_28 = arith.constant 0 : index
    %66 = vector.load %arg3[%c360, %c0_28] : memref<1080x128xf32, #tpu.memory_space<vmem>>, vector<1x16xf32>
    %67 = vector.broadcast %66 : vector<1x16xf32> to vector<324x16xf32>
    %68 = arith.addf %65, %67 : vector<324x16xf32>
    %cst_29 = arith.constant 0.000000e+00 : f32
    %69 = vector.broadcast %cst_29 : f32 to vector<324x16xf32>
    %70 = arith.maximumf %68, %69 : vector<324x16xf32>
    %71 = vector.broadcast %13 : vector<324x1xf32> to vector<324x16xf32>
    %72 = arith.mulf %70, %71 : vector<324x16xf32>
    %c0_30 = arith.constant 0 : index
    %c0_31 = arith.constant 0 : index
    %73 = vector.load %arg6[%c0_30, %c0_31] : memref<324x16xf32, #tpu.memory_space<vmem>>, vector<324x16xf32>
    tpu.vector_store %arg6[%c0_30, %c0_31], %72 {strides = array<i32>} : memref<324x16xf32, #tpu.memory_space<vmem>>, vector<324x16xf32>,
    %c368 = arith.constant 368 : index
    %c0_32 = arith.constant 0 : index
    %74 = vector.load %arg3[%c368, %c0_32] : memref<1080x128xf32, #tpu.memory_space<vmem>>, vector<9x16xf32>
    %c384 = arith.constant 384 : index
    %c0_33 = arith.constant 0 : index
    %75 = vector.load %arg3[%c384, %c0_33] : memref<1080x128xf32, #tpu.memory_space<vmem>>, vector<1x16xf32>
    %c0_34 = arith.constant 0 : index
    %c0_35 = arith.constant 0 : index
    %76 = vector.load %arg6[%c0_34, %c0_35] : memref<324x16xf32, #tpu.memory_space<vmem>>, vector<81x16xf32>
    %77 = vector.extract_strided_slice %74 {offsets = [0, 0], sizes = [1, 16], strides = [1, 1]} : vector<9x16xf32> to vector<1x16xf32>
    %78 = vector.broadcast %77 : vector<1x16xf32> to vector<81x16xf32>
    %79 = arith.mulf %76, %78 : vector<81x16xf32>
    %c81_36 = arith.constant 81 : index
    %c0_37 = arith.constant 0 : index
    %80 = vector.load %arg6[%c81_36, %c0_37] : memref<324x16xf32, #tpu.memory_space<vmem>>, vector<81x16xf32>
    %81 = vector.extract_strided_slice %74 {offsets = [1, 0], sizes = [1, 16], strides = [1, 1]} : vector<9x16xf32> to vector<1x16xf32>
    %82 = vector.broadcast %81 : vector<1x16xf32> to vector<81x16xf32>
    %83 = arith.mulf %80, %82 : vector<81x16xf32>
    %84 = arith.addf %79, %83 : vector<81x16xf32>
    %c1_38 = arith.constant 1 : index
    %c0_39 = arith.constant 0 : index
    %85 = vector.load %arg6[%c1_38, %c0_39] : memref<324x16xf32, #tpu.memory_space<vmem>>, vector<81x16xf32>
    %86 = vector.extract_strided_slice %74 {offsets = [2, 0], sizes = [1, 16], strides = [1, 1]} : vector<9x16xf32> to vector<1x16xf32>
    %87 = vector.broadcast %86 : vector<1x16xf32> to vector<81x16xf32>
    %88 = arith.mulf %85, %87 : vector<81x16xf32>
    %89 = arith.addf %84, %88 : vector<81x16xf32>
    %c162_40 = arith.constant 162 : index
    %c0_41 = arith.constant 0 : index
    %90 = vector.load %arg6[%c162_40, %c0_41] : memref<324x16xf32, #tpu.memory_space<vmem>>, vector<81x16xf32>
    %91 = vector.extract_strided_slice %74 {offsets = [3, 0], sizes = [1, 16], strides = [1, 1]} : vector<9x16xf32> to vector<1x16xf32>
    %92 = vector.broadcast %91 : vector<1x16xf32> to vector<81x16xf32>
    %93 = arith.mulf %90, %92 : vector<81x16xf32>
    %94 = arith.addf %89, %93 : vector<81x16xf32>
    %c243_42 = arith.constant 243 : index
    %c0_43 = arith.constant 0 : index
    %95 = vector.load %arg6[%c243_42, %c0_43] : memref<324x16xf32, #tpu.memory_space<vmem>>, vector<81x16xf32>
    %96 = vector.extract_strided_slice %74 {offsets = [4, 0], sizes = [1, 16], strides = [1, 1]} : vector<9x16xf32> to vector<1x16xf32>
    %97 = vector.broadcast %96 : vector<1x16xf32> to vector<81x16xf32>
    %98 = arith.mulf %95, %97 : vector<81x16xf32>
    %99 = arith.addf %94, %98 : vector<81x16xf32>
    %c163_44 = arith.constant 163 : index
    %c0_45 = arith.constant 0 : index
    %100 = vector.load %arg6[%c163_44, %c0_45] : memref<324x16xf32, #tpu.memory_space<vmem>>, vector<81x16xf32>
    %101 = vector.extract_strided_slice %74 {offsets = [5, 0], sizes = [1, 16], strides = [1, 1]} : vector<9x16xf32> to vector<1x16xf32>
    %102 = vector.broadcast %101 : vector<1x16xf32> to vector<81x16xf32>
    %103 = arith.mulf %100, %102 : vector<81x16xf32>
    %104 = arith.addf %99, %103 : vector<81x16xf32>
    %c9_46 = arith.constant 9 : index
    %c0_47 = arith.constant 0 : index
    %105 = vector.load %arg6[%c9_46, %c0_47] : memref<324x16xf32, #tpu.memory_space<vmem>>, vector<81x16xf32>
    %106 = vector.extract_strided_slice %74 {offsets = [6, 0], sizes = [1, 16], strides = [1, 1]} : vector<9x16xf32> to vector<1x16xf32>
    %107 = vector.broadcast %106 : vector<1x16xf32> to vector<81x16xf32>
    %108 = arith.mulf %105, %107 : vector<81x16xf32>
    %109 = arith.addf %104, %108 : vector<81x16xf32>
    %c90_48 = arith.constant 90 : index
    %c0_49 = arith.constant 0 : index
    %110 = vector.load %arg6[%c90_48, %c0_49] : memref<324x16xf32, #tpu.memory_space<vmem>>, vector<81x16xf32>
    %111 = vector.extract_strided_slice %74 {offsets = [7, 0], sizes = [1, 16], strides = [1, 1]} : vector<9x16xf32> to vector<1x16xf32>
    %112 = vector.broadcast %111 : vector<1x16xf32> to vector<81x16xf32>
    %113 = arith.mulf %110, %112 : vector<81x16xf32>
    %114 = arith.addf %109, %113 : vector<81x16xf32>
    %c10_50 = arith.constant 10 : index
    %c0_51 = arith.constant 0 : index
    %115 = vector.load %arg6[%c10_50, %c0_51] : memref<324x16xf32, #tpu.memory_space<vmem>>, vector<81x16xf32>
    %116 = vector.extract_strided_slice %74 {offsets = [8, 0], sizes = [1, 16], strides = [1, 1]} : vector<9x16xf32> to vector<1x16xf32>
    %117 = vector.broadcast %116 : vector<1x16xf32> to vector<81x16xf32>
    %118 = arith.mulf %115, %117 : vector<81x16xf32>
    %119 = arith.addf %114, %118 : vector<81x16xf32>
    %120 = vector.broadcast %75 : vector<1x16xf32> to vector<81x16xf32>
    %121 = arith.addf %119, %120 : vector<81x16xf32>
    %122 = arith.truncf %63 : vector<81x16xf32> to vector<81x16xbf16>
    %c32 = arith.constant 32 : index
    %c0_52 = arith.constant 0 : index
    %123 = vector.load %arg2[%c32, %c0_52] : memref<704x128xbf16, #tpu.memory_space<vmem>>, vector<16x32xbf16>
    %cst_53 = arith.constant dense<0.000000e+00> : vector<81x32xf32>
    %124 = tpu.matmul %122, %123, %cst_53 {dimension_numbers = #tpu.dot_dimension_numbers<[1], [0], [0], [1], [0, 0, 1, 1], [], []>} : vector<81x16xbf16>, vector<16x32xbf16>, vector<81x32xf32> -> vector<81x32xf32>
    %125 = arith.truncf %121 : vector<81x16xf32> to vector<81x16xbf16>
    %c64 = arith.constant 64 : index
    %c0_54 = arith.constant 0 : index
    %126 = vector.load %arg2[%c64, %c0_54] : memref<704x128xbf16, #tpu.memory_space<vmem>>, vector<16x32xbf16>
    %cst_55 = arith.constant dense<0.000000e+00> : vector<81x32xf32>
    %127 = tpu.matmul %125, %126, %cst_55 {dimension_numbers = #tpu.dot_dimension_numbers<[1], [0], [0], [1], [0, 0, 1, 1], [], []>} : vector<81x16xbf16>, vector<16x32xbf16>, vector<81x32xf32> -> vector<81x32xf32>
    %128 = arith.addf %124, %127 : vector<81x32xf32>
    %c392 = arith.constant 392 : index
    %c0_56 = arith.constant 0 : index
    %129 = vector.load %arg3[%c392, %c0_56] : memref<1080x128xf32, #tpu.memory_space<vmem>>, vector<1x32xf32>
    %130 = vector.broadcast %129 : vector<1x32xf32> to vector<81x32xf32>
    %131 = arith.addf %128, %130 : vector<81x32xf32>
    %cst_57 = arith.constant 0.000000e+00 : f32
    %132 = vector.broadcast %cst_57 : f32 to vector<81x32xf32>
    %133 = arith.maximumf %131, %132 : vector<81x32xf32>
    %c400 = arith.constant 400 : index
    %c0_58 = arith.constant 0 : index
    %134 = vector.load %arg3[%c400, %c0_58] : memref<1080x128xf32, #tpu.memory_space<vmem>>, vector<100x81xf32>
    %cst_59 = arith.constant dense<0.000000e+00> : vector<100x32xf32>
    %135 = tpu.matmul %134, %133, %cst_59 {dimension_numbers = #tpu.dot_dimension_numbers<[1], [0], [0], [1], [0, 0, 1, 1], [], []>} : vector<100x81xf32>, vector<81x32xf32>, vector<100x32xf32> -> vector<100x32xf32>
    %c0_60 = arith.constant 0 : index
    %c0_61 = arith.constant 0 : index
    %136 = vector.load %arg7[%c0_60, %c0_61] : memref<100x32xf32, #tpu.memory_space<vmem>>, vector<100x32xf32>
    tpu.vector_store %arg7[%c0_60, %c0_61], %135 {strides = array<i32>} : memref<100x32xf32, #tpu.memory_space<vmem>>, vector<100x32xf32>,
    %c560 = arith.constant 560 : index
    %c0_62 = arith.constant 0 : index
    %137 = vector.load %arg3[%c560, %c0_62] : memref<1080x128xf32, #tpu.memory_space<vmem>>, vector<100x1xf32>
    %c0_63 = arith.constant 0 : index
    %c0_64 = arith.constant 0 : index
    %138 = vector.load %arg7[%c0_63, %c0_64] : memref<100x32xf32, #tpu.memory_space<vmem>>, vector<100x32xf32>
    %139 = arith.truncf %138 : vector<100x32xf32> to vector<100x32xbf16>
    %c80 = arith.constant 80 : index
    %c0_65 = arith.constant 0 : index
    %140 = vector.load %arg2[%c80, %c0_65] : memref<704x128xbf16, #tpu.memory_space<vmem>>, vector<32x16xbf16>
    %cst_66 = arith.constant dense<0.000000e+00> : vector<100x16xf32>
    %141 = tpu.matmul %139, %140, %cst_66 {dimension_numbers = #tpu.dot_dimension_numbers<[1], [0], [0], [1], [0, 0, 1, 1], [], []>} : vector<100x32xbf16>, vector<32x16xbf16>, vector<100x16xf32> -> vector<100x16xf32>
    %c504 = arith.constant 504 : index
    %c0_67 = arith.constant 0 : index
    %142 = vector.load %arg3[%c504, %c0_67] : memref<1080x128xf32, #tpu.memory_space<vmem>>, vector<1x16xf32>
    %143 = vector.broadcast %142 : vector<1x16xf32> to vector<100x16xf32>
    %144 = arith.addf %141, %143 : vector<100x16xf32>
    %cst_68 = arith.constant 0.000000e+00 : f32
    %145 = vector.broadcast %cst_68 : f32 to vector<100x16xf32>
    %146 = arith.maximumf %144, %145 : vector<100x16xf32>
    %147 = vector.broadcast %137 : vector<100x1xf32> to vector<100x16xf32>
    %148 = arith.mulf %146, %147 : vector<100x16xf32>
    %c0_69 = arith.constant 0 : index
    %c0_70 = arith.constant 0 : index
    %149 = vector.load %arg8[%c0_69, %c0_70] : memref<100x16xf32, #tpu.memory_space<vmem>>, vector<100x16xf32>
    tpu.vector_store %arg8[%c0_69, %c0_70], %148 {strides = array<i32>} : memref<100x16xf32, #tpu.memory_space<vmem>>, vector<100x16xf32>,
    %c512 = arith.constant 512 : index
    %c0_71 = arith.constant 0 : index
    %150 = vector.load %arg3[%c512, %c0_71] : memref<1080x128xf32, #tpu.memory_space<vmem>>, vector<9x16xf32>
    %c528 = arith.constant 528 : index
    %c0_72 = arith.constant 0 : index
    %151 = vector.load %arg3[%c528, %c0_72] : memref<1080x128xf32, #tpu.memory_space<vmem>>, vector<1x16xf32>
    %c69 = arith.constant 69 : index
    %c0_73 = arith.constant 0 : index
    %152 = vector.load %arg8[%c69, %c0_73] : memref<100x16xf32, #tpu.memory_space<vmem>>, vector<25x16xf32>
    %153 = vector.extract_strided_slice %150 {offsets = [0, 0], sizes = [1, 16], strides = [1, 1]} : vector<9x16xf32> to vector<1x16xf32>
    %154 = vector.broadcast %153 : vector<1x16xf32> to vector<25x16xf32>
    %155 = arith.mulf %152, %154 : vector<25x16xf32>
    %c45 = arith.constant 45 : index
    %c0_74 = arith.constant 0 : index
    %156 = vector.load %arg8[%c45, %c0_74] : memref<100x16xf32, #tpu.memory_space<vmem>>, vector<25x16xf32>
    %157 = vector.extract_strided_slice %150 {offsets = [1, 0], sizes = [1, 16], strides = [1, 1]} : vector<9x16xf32> to vector<1x16xf32>
    %158 = vector.broadcast %157 : vector<1x16xf32> to vector<25x16xf32>
    %159 = arith.mulf %156, %158 : vector<25x16xf32>
    %160 = arith.addf %155, %159 : vector<25x16xf32>
    %c70 = arith.constant 70 : index
    %c0_75 = arith.constant 0 : index
    %161 = vector.load %arg8[%c70, %c0_75] : memref<100x16xf32, #tpu.memory_space<vmem>>, vector<25x16xf32>
    %162 = vector.extract_strided_slice %150 {offsets = [2, 0], sizes = [1, 16], strides = [1, 1]} : vector<9x16xf32> to vector<1x16xf32>
    %163 = vector.broadcast %162 : vector<1x16xf32> to vector<25x16xf32>
    %164 = arith.mulf %161, %163 : vector<25x16xf32>
    %165 = arith.addf %160, %164 : vector<25x16xf32>
    %c24 = arith.constant 24 : index
    %c0_76 = arith.constant 0 : index
    %166 = vector.load %arg8[%c24, %c0_76] : memref<100x16xf32, #tpu.memory_space<vmem>>, vector<25x16xf32>
    %167 = vector.extract_strided_slice %150 {offsets = [3, 0], sizes = [1, 16], strides = [1, 1]} : vector<9x16xf32> to vector<1x16xf32>
    %168 = vector.broadcast %167 : vector<1x16xf32> to vector<25x16xf32>
    %169 = arith.mulf %166, %168 : vector<25x16xf32>
    %170 = arith.addf %165, %169 : vector<25x16xf32>
    %c0_77 = arith.constant 0 : index
    %c0_78 = arith.constant 0 : index
    %171 = vector.load %arg8[%c0_77, %c0_78] : memref<100x16xf32, #tpu.memory_space<vmem>>, vector<25x16xf32>
    %172 = vector.extract_strided_slice %150 {offsets = [4, 0], sizes = [1, 16], strides = [1, 1]} : vector<9x16xf32> to vector<1x16xf32>
    %173 = vector.broadcast %172 : vector<1x16xf32> to vector<25x16xf32>
    %174 = arith.mulf %171, %173 : vector<25x16xf32>
    %175 = arith.addf %170, %174 : vector<25x16xf32>
    %c25 = arith.constant 25 : index
    %c0_79 = arith.constant 0 : index
    %176 = vector.load %arg8[%c25, %c0_79] : memref<100x16xf32, #tpu.memory_space<vmem>>, vector<25x16xf32>
    %177 = vector.extract_strided_slice %150 {offsets = [5, 0], sizes = [1, 16], strides = [1, 1]} : vector<9x16xf32> to vector<1x16xf32>
    %178 = vector.broadcast %177 : vector<1x16xf32> to vector<25x16xf32>
    %179 = arith.mulf %176, %178 : vector<25x16xf32>
    %180 = arith.addf %175, %179 : vector<25x16xf32>
    %c74 = arith.constant 74 : index
    %c0_80 = arith.constant 0 : index
    %181 = vector.load %arg8[%c74, %c0_80] : memref<100x16xf32, #tpu.memory_space<vmem>>, vector<25x16xf32>
    %182 = vector.extract_strided_slice %150 {offsets = [6, 0], sizes = [1, 16], strides = [1, 1]} : vector<9x16xf32> to vector<1x16xf32>
    %183 = vector.broadcast %182 : vector<1x16xf32> to vector<25x16xf32>
    %184 = arith.mulf %181, %183 : vector<25x16xf32>
    %185 = arith.addf %180, %184 : vector<25x16xf32>
    %c50 = arith.constant 50 : index
    %c0_81 = arith.constant 0 : index
    %186 = vector.load %arg8[%c50, %c0_81] : memref<100x16xf32, #tpu.memory_space<vmem>>, vector<25x16xf32>
    %187 = vector.extract_strided_slice %150 {offsets = [7, 0], sizes = [1, 16], strides = [1, 1]} : vector<9x16xf32> to vector<1x16xf32>
    %188 = vector.broadcast %187 : vector<1x16xf32> to vector<25x16xf32>
    %189 = arith.mulf %186, %188 : vector<25x16xf32>
    %190 = arith.addf %185, %189 : vector<25x16xf32>
    %c75 = arith.constant 75 : index
    %c0_82 = arith.constant 0 : index
    %191 = vector.load %arg8[%c75, %c0_82] : memref<100x16xf32, #tpu.memory_space<vmem>>, vector<25x16xf32>
    %192 = vector.extract_strided_slice %150 {offsets = [8, 0], sizes = [1, 16], strides = [1, 1]} : vector<9x16xf32> to vector<1x16xf32>
    %193 = vector.broadcast %192 : vector<1x16xf32> to vector<25x16xf32>
    %194 = arith.mulf %191, %193 : vector<25x16xf32>
    %195 = arith.addf %190, %194 : vector<25x16xf32>
    %c45_83 = arith.constant 45 : index
    %c0_84 = arith.constant 0 : index
    %196 = vector.load %arg8[%c45_83, %c0_84] : memref<100x16xf32, #tpu.memory_space<vmem>>, vector<25x16xf32>
    %197 = vector.extract_strided_slice %150 {offsets = [0, 0], sizes = [1, 16], strides = [1, 1]} : vector<9x16xf32> to vector<1x16xf32>
    %198 = vector.broadcast %197 : vector<1x16xf32> to vector<25x16xf32>
    %199 = arith.mulf %196, %198 : vector<25x16xf32>
    %c70_85 = arith.constant 70 : index
    %c0_86 = arith.constant 0 : index
    %200 = vector.load %arg8[%c70_85, %c0_86] : memref<100x16xf32, #tpu.memory_space<vmem>>, vector<25x16xf32>
    %201 = vector.extract_strided_slice %150 {offsets = [1, 0], sizes = [1, 16], strides = [1, 1]} : vector<9x16xf32> to vector<1x16xf32>
    %202 = vector.broadcast %201 : vector<1x16xf32> to vector<25x16xf32>
    %203 = arith.mulf %200, %202 : vector<25x16xf32>
    %204 = arith.addf %199, %203 : vector<25x16xf32>
    %c46 = arith.constant 46 : index
    %c0_87 = arith.constant 0 : index
    %205 = vector.load %arg8[%c46, %c0_87] : memref<100x16xf32, #tpu.memory_space<vmem>>, vector<25x16xf32>
    %206 = vector.extract_strided_slice %150 {offsets = [2, 0], sizes = [1, 16], strides = [1, 1]} : vector<9x16xf32> to vector<1x16xf32>
    %207 = vector.broadcast %206 : vector<1x16xf32> to vector<25x16xf32>
    %208 = arith.mulf %205, %207 : vector<25x16xf32>
    %209 = arith.addf %204, %208 : vector<25x16xf32>
    %c0_88 = arith.constant 0 : index
    %c0_89 = arith.constant 0 : index
    %210 = vector.load %arg8[%c0_88, %c0_89] : memref<100x16xf32, #tpu.memory_space<vmem>>, vector<25x16xf32>
    %211 = vector.extract_strided_slice %150 {offsets = [3, 0], sizes = [1, 16], strides = [1, 1]} : vector<9x16xf32> to vector<1x16xf32>
    %212 = vector.broadcast %211 : vector<1x16xf32> to vector<25x16xf32>
    %213 = arith.mulf %210, %212 : vector<25x16xf32>
    %214 = arith.addf %209, %213 : vector<25x16xf32>
    %c25_90 = arith.constant 25 : index
    %c0_91 = arith.constant 0 : index
    %215 = vector.load %arg8[%c25_90, %c0_91] : memref<100x16xf32, #tpu.memory_space<vmem>>, vector<25x16xf32>
    %216 = vector.extract_strided_slice %150 {offsets = [4, 0], sizes = [1, 16], strides = [1, 1]} : vector<9x16xf32> to vector<1x16xf32>
    %217 = vector.broadcast %216 : vector<1x16xf32> to vector<25x16xf32>
    %218 = arith.mulf %215, %217 : vector<25x16xf32>
    %219 = arith.addf %214, %218 : vector<25x16xf32>
    %c1_92 = arith.constant 1 : index
    %c0_93 = arith.constant 0 : index
    %220 = vector.load %arg8[%c1_92, %c0_93] : memref<100x16xf32, #tpu.memory_space<vmem>>, vector<25x16xf32>
    %221 = vector.extract_strided_slice %150 {offsets = [5, 0], sizes = [1, 16], strides = [1, 1]} : vector<9x16xf32> to vector<1x16xf32>
    %222 = vector.broadcast %221 : vector<1x16xf32> to vector<25x16xf32>
    %223 = arith.mulf %220, %222 : vector<25x16xf32>
    %224 = arith.addf %219, %223 : vector<25x16xf32>
    %c50_94 = arith.constant 50 : index
    %c0_95 = arith.constant 0 : index
    %225 = vector.load %arg8[%c50_94, %c0_95] : memref<100x16xf32, #tpu.memory_space<vmem>>, vector<25x16xf32>
    %226 = vector.extract_strided_slice %150 {offsets = [6, 0], sizes = [1, 16], strides = [1, 1]} : vector<9x16xf32> to vector<1x16xf32>
    %227 = vector.broadcast %226 : vector<1x16xf32> to vector<25x16xf32>
    %228 = arith.mulf %225, %227 : vector<25x16xf32>
    %229 = arith.addf %224, %228 : vector<25x16xf32>
    %c75_96 = arith.constant 75 : index
    %c0_97 = arith.constant 0 : index
    %230 = vector.load %arg8[%c75_96, %c0_97] : memref<100x16xf32, #tpu.memory_space<vmem>>, vector<25x16xf32>
    %231 = vector.extract_strided_slice %150 {offsets = [7, 0], sizes = [1, 16], strides = [1, 1]} : vector<9x16xf32> to vector<1x16xf32>
    %232 = vector.broadcast %231 : vector<1x16xf32> to vector<25x16xf32>
    %233 = arith.mulf %230, %232 : vector<25x16xf32>
    %234 = arith.addf %229, %233 : vector<25x16xf32>
    %c51 = arith.constant 51 : index
    %c0_98 = arith.constant 0 : index
    %235 = vector.load %arg8[%c51, %c0_98] : memref<100x16xf32, #tpu.memory_space<vmem>>, vector<25x16xf32>
    %236 = vector.extract_strided_slice %150 {offsets = [8, 0], sizes = [1, 16], strides = [1, 1]} : vector<9x16xf32> to vector<1x16xf32>
    %237 = vector.broadcast %236 : vector<1x16xf32> to vector<25x16xf32>
    %238 = arith.mulf %235, %237 : vector<25x16xf32>
    %239 = arith.addf %234, %238 : vector<25x16xf32>
    %c24_99 = arith.constant 24 : index
    %c0_100 = arith.constant 0 : index
    %240 = vector.load %arg8[%c24_99, %c0_100] : memref<100x16xf32, #tpu.memory_space<vmem>>, vector<25x16xf32>
    %241 = vector.extract_strided_slice %150 {offsets = [0, 0], sizes = [1, 16], strides = [1, 1]} : vector<9x16xf32> to vector<1x16xf32>
    %242 = vector.broadcast %241 : vector<1x16xf32> to vector<25x16xf32>
    %243 = arith.mulf %240, %242 : vector<25x16xf32>
    %c0_101 = arith.constant 0 : index
    %c0_102 = arith.constant 0 : index
    %244 = vector.load %arg8[%c0_101, %c0_102] : memref<100x16xf32, #tpu.memory_space<vmem>>, vector<25x16xf32>
    %245 = vector.extract_strided_slice %150 {offsets = [1, 0], sizes = [1, 16], strides = [1, 1]} : vector<9x16xf32> to vector<1x16xf32>
    %246 = vector.broadcast %245 : vector<1x16xf32> to vector<25x16xf32>
    %247 = arith.mulf %244, %246 : vector<25x16xf32>
    %248 = arith.addf %243, %247 : vector<25x16xf32>
    %c25_103 = arith.constant 25 : index
    %c0_104 = arith.constant 0 : index
    %249 = vector.load %arg8[%c25_103, %c0_104] : memref<100x16xf32, #tpu.memory_space<vmem>>, vector<25x16xf32>
    %250 = vector.extract_strided_slice %150 {offsets = [2, 0], sizes = [1, 16], strides = [1, 1]} : vector<9x16xf32> to vector<1x16xf32>
    %251 = vector.broadcast %250 : vector<1x16xf32> to vector<25x16xf32>
    %252 = arith.mulf %249, %251 : vector<25x16xf32>
    %253 = arith.addf %248, %252 : vector<25x16xf32>
    %c74_105 = arith.constant 74 : index
    %c0_106 = arith.constant 0 : index
    %254 = vector.load %arg8[%c74_105, %c0_106] : memref<100x16xf32, #tpu.memory_space<vmem>>, vector<25x16xf32>
    %255 = vector.extract_strided_slice %150 {offsets = [3, 0], sizes = [1, 16], strides = [1, 1]} : vector<9x16xf32> to vector<1x16xf32>
    %256 = vector.broadcast %255 : vector<1x16xf32> to vector<25x16xf32>
    %257 = arith.mulf %254, %256 : vector<25x16xf32>
    %258 = arith.addf %253, %257 : vector<25x16xf32>
    %c50_107 = arith.constant 50 : index
    %c0_108 = arith.constant 0 : index
    %259 = vector.load %arg8[%c50_107, %c0_108] : memref<100x16xf32, #tpu.memory_space<vmem>>, vector<25x16xf32>
    %260 = vector.extract_strided_slice %150 {offsets = [4, 0], sizes = [1, 16], strides = [1, 1]} : vector<9x16xf32> to vector<1x16xf32>
    %261 = vector.broadcast %260 : vector<1x16xf32> to vector<25x16xf32>
    %262 = arith.mulf %259, %261 : vector<25x16xf32>
    %263 = arith.addf %258, %262 : vector<25x16xf32>
    %c75_109 = arith.constant 75 : index
    %c0_110 = arith.constant 0 : index
    %264 = vector.load %arg8[%c75_109, %c0_110] : memref<100x16xf32, #tpu.memory_space<vmem>>, vector<25x16xf32>
    %265 = vector.extract_strided_slice %150 {offsets = [5, 0], sizes = [1, 16], strides = [1, 1]} : vector<9x16xf32> to vector<1x16xf32>
    %266 = vector.broadcast %265 : vector<1x16xf32> to vector<25x16xf32>
    %267 = arith.mulf %264, %266 : vector<25x16xf32>
    %268 = arith.addf %263, %267 : vector<25x16xf32>
    %c29 = arith.constant 29 : index
    %c0_111 = arith.constant 0 : index
    %269 = vector.load %arg8[%c29, %c0_111] : memref<100x16xf32, #tpu.memory_space<vmem>>, vector<25x16xf32>
    %270 = vector.extract_strided_slice %150 {offsets = [6, 0], sizes = [1, 16], strides = [1, 1]} : vector<9x16xf32> to vector<1x16xf32>
    %271 = vector.broadcast %270 : vector<1x16xf32> to vector<25x16xf32>
    %272 = arith.mulf %269, %271 : vector<25x16xf32>
    %273 = arith.addf %268, %272 : vector<25x16xf32>
    %c5 = arith.constant 5 : index
    %c0_112 = arith.constant 0 : index
    %274 = vector.load %arg8[%c5, %c0_112] : memref<100x16xf32, #tpu.memory_space<vmem>>, vector<25x16xf32>
    %275 = vector.extract_strided_slice %150 {offsets = [7, 0], sizes = [1, 16], strides = [1, 1]} : vector<9x16xf32> to vector<1x16xf32>
    %276 = vector.broadcast %275 : vector<1x16xf32> to vector<25x16xf32>
    %277 = arith.mulf %274, %276 : vector<25x16xf32>
    %278 = arith.addf %273, %277 : vector<25x16xf32>
    %c30 = arith.constant 30 : index
    %c0_113 = arith.constant 0 : index
    %279 = vector.load %arg8[%c30, %c0_113] : memref<100x16xf32, #tpu.memory_space<vmem>>, vector<25x16xf32>
    %280 = vector.extract_strided_slice %150 {offsets = [8, 0], sizes = [1, 16], strides = [1, 1]} : vector<9x16xf32> to vector<1x16xf32>
    %281 = vector.broadcast %280 : vector<1x16xf32> to vector<25x16xf32>
    %282 = arith.mulf %279, %281 : vector<25x16xf32>
    %283 = arith.addf %278, %282 : vector<25x16xf32>
    %c0_114 = arith.constant 0 : index
    %c0_115 = arith.constant 0 : index
    %284 = vector.load %arg8[%c0_114, %c0_115] : memref<100x16xf32, #tpu.memory_space<vmem>>, vector<25x16xf32>
    %285 = vector.extract_strided_slice %150 {offsets = [0, 0], sizes = [1, 16], strides = [1, 1]} : vector<9x16xf32> to vector<1x16xf32>
    %286 = vector.broadcast %285 : vector<1x16xf32> to vector<25x16xf32>
    %287 = arith.mulf %284, %286 : vector<25x16xf32>
    %c25_116 = arith.constant 25 : index
    %c0_117 = arith.constant 0 : index
    %288 = vector.load %arg8[%c25_116, %c0_117] : memref<100x16xf32, #tpu.memory_space<vmem>>, vector<25x16xf32>
    %289 = vector.extract_strided_slice %150 {offsets = [1, 0], sizes = [1, 16], strides = [1, 1]} : vector<9x16xf32> to vector<1x16xf32>
    %290 = vector.broadcast %289 : vector<1x16xf32> to vector<25x16xf32>
    %291 = arith.mulf %288, %290 : vector<25x16xf32>
    %292 = arith.addf %287, %291 : vector<25x16xf32>
    %c1_118 = arith.constant 1 : index
    %c0_119 = arith.constant 0 : index
    %293 = vector.load %arg8[%c1_118, %c0_119] : memref<100x16xf32, #tpu.memory_space<vmem>>, vector<25x16xf32>
    %294 = vector.extract_strided_slice %150 {offsets = [2, 0], sizes = [1, 16], strides = [1, 1]} : vector<9x16xf32> to vector<1x16xf32>
    %295 = vector.broadcast %294 : vector<1x16xf32> to vector<25x16xf32>
    %296 = arith.mulf %293, %295 : vector<25x16xf32>
    %297 = arith.addf %292, %296 : vector<25x16xf32>
    %c50_120 = arith.constant 50 : index
    %c0_121 = arith.constant 0 : index
    %298 = vector.load %arg8[%c50_120, %c0_121] : memref<100x16xf32, #tpu.memory_space<vmem>>, vector<25x16xf32>
    %299 = vector.extract_strided_slice %150 {offsets = [3, 0], sizes = [1, 16], strides = [1, 1]} : vector<9x16xf32> to vector<1x16xf32>
    %300 = vector.broadcast %299 : vector<1x16xf32> to vector<25x16xf32>
    %301 = arith.mulf %298, %300 : vector<25x16xf32>
    %302 = arith.addf %297, %301 : vector<25x16xf32>
    %c75_122 = arith.constant 75 : index
    %c0_123 = arith.constant 0 : index
    %303 = vector.load %arg8[%c75_122, %c0_123] : memref<100x16xf32, #tpu.memory_space<vmem>>, vector<25x16xf32>
    %304 = vector.extract_strided_slice %150 {offsets = [4, 0], sizes = [1, 16], strides = [1, 1]} : vector<9x16xf32> to vector<1x16xf32>
    %305 = vector.broadcast %304 : vector<1x16xf32> to vector<25x16xf32>
    %306 = arith.mulf %303, %305 : vector<25x16xf32>
    %307 = arith.addf %302, %306 : vector<25x16xf32>
    %c51_124 = arith.constant 51 : index
    %c0_125 = arith.constant 0 : index
    %308 = vector.load %arg8[%c51_124, %c0_125] : memref<100x16xf32, #tpu.memory_space<vmem>>, vector<25x16xf32>
    %309 = vector.extract_strided_slice %150 {offsets = [5, 0], sizes = [1, 16], strides = [1, 1]} : vector<9x16xf32> to vector<1x16xf32>
    %310 = vector.broadcast %309 : vector<1x16xf32> to vector<25x16xf32>
    %311 = arith.mulf %308, %310 : vector<25x16xf32>
    %312 = arith.addf %307, %311 : vector<25x16xf32>
    %c5_126 = arith.constant 5 : index
    %c0_127 = arith.constant 0 : index
    %313 = vector.load %arg8[%c5_126, %c0_127] : memref<100x16xf32, #tpu.memory_space<vmem>>, vector<25x16xf32>
    %314 = vector.extract_strided_slice %150 {offsets = [6, 0], sizes = [1, 16], strides = [1, 1]} : vector<9x16xf32> to vector<1x16xf32>
    %315 = vector.broadcast %314 : vector<1x16xf32> to vector<25x16xf32>
    %316 = arith.mulf %313, %315 : vector<25x16xf32>
    %317 = arith.addf %312, %316 : vector<25x16xf32>
    %c30_128 = arith.constant 30 : index
    %c0_129 = arith.constant 0 : index
    %318 = vector.load %arg8[%c30_128, %c0_129] : memref<100x16xf32, #tpu.memory_space<vmem>>, vector<25x16xf32>
    %319 = vector.extract_strided_slice %150 {offsets = [7, 0], sizes = [1, 16], strides = [1, 1]} : vector<9x16xf32> to vector<1x16xf32>
    %320 = vector.broadcast %319 : vector<1x16xf32> to vector<25x16xf32>
    %321 = arith.mulf %318, %320 : vector<25x16xf32>
    %322 = arith.addf %317, %321 : vector<25x16xf32>
    %c6 = arith.constant 6 : index
    %c0_130 = arith.constant 0 : index
    %323 = vector.load %arg8[%c6, %c0_130] : memref<100x16xf32, #tpu.memory_space<vmem>>, vector<25x16xf32>
    %324 = vector.extract_strided_slice %150 {offsets = [8, 0], sizes = [1, 16], strides = [1, 1]} : vector<9x16xf32> to vector<1x16xf32>
    %325 = vector.broadcast %324 : vector<1x16xf32> to vector<25x16xf32>
    %326 = arith.mulf %323, %325 : vector<25x16xf32>
    %327 = arith.addf %322, %326 : vector<25x16xf32>
    %328 = tpu.concatenate %195, %239, %283, %327 in 0 : vector<25x16xf32>, vector<25x16xf32>, vector<25x16xf32>, vector<25x16xf32> -> vector<100x16xf32>
    %329 = vector.broadcast %151 : vector<1x16xf32> to vector<100x16xf32>
    %330 = arith.addf %328, %329 : vector<100x16xf32>
    %331 = vector.extract_strided_slice %138 {offsets = [0, 0], sizes = [100, 16], strides = [1, 1]} : vector<100x32xf32> to vector<100x16xf32>
    %c536 = arith.constant 536 : index
    %c0_131 = arith.constant 0 : index
    %332 = vector.load %arg3[%c536, %c0_131] : memref<1080x128xf32, #tpu.memory_space<vmem>>, vector<16x32xf32>
    %cst_132 = arith.constant dense<0.000000e+00> : vector<100x32xf32>
    %333 = tpu.matmul %331, %332, %cst_132 {dimension_numbers = #tpu.dot_dimension_numbers<[1], [0], [0], [1], [0, 0, 1, 1], [], []>} : vector<100x16xf32>, vector<16x32xf32>, vector<100x32xf32> -> vector<100x32xf32>
    %334 = arith.truncf %330 : vector<100x16xf32> to vector<100x16xbf16>
    %c112 = arith.constant 112 : index
    %c0_133 = arith.constant 0 : index
    %335 = vector.load %arg2[%c112, %c0_133] : memref<704x128xbf16, #tpu.memory_space<vmem>>, vector<16x32xbf16>
    %cst_134 = arith.constant dense<0.000000e+00> : vector<100x32xf32>
    %336 = tpu.matmul %334, %335, %cst_134 {dimension_numbers = #tpu.dot_dimension_numbers<[1], [0], [0], [1], [0, 0, 1, 1], [], []>} : vector<100x16xbf16>, vector<16x32xbf16>, vector<100x32xf32> -> vector<100x32xf32>
    %337 = arith.addf %333, %336 : vector<100x32xf32>
    %c552 = arith.constant 552 : index
    %c0_135 = arith.constant 0 : index
    %338 = vector.load %arg3[%c552, %c0_135] : memref<1080x128xf32, #tpu.memory_space<vmem>>, vector<1x32xf32>
    %339 = vector.broadcast %338 : vector<1x32xf32> to vector<100x32xf32>
    %340 = arith.addf %337, %339 : vector<100x32xf32>
    %cst_136 = arith.constant 0.000000e+00 : f32
    %341 = vector.broadcast %cst_136 : f32 to vector<100x32xf32>
    %342 = arith.maximumf %340, %341 : vector<100x32xf32>
    %343 = vector.broadcast %137 : vector<100x1xf32> to vector<100x32xf32>
    %344 = arith.mulf %342, %343 : vector<100x32xf32>
    %c0_137 = arith.constant 0 : index
    %c0_138 = arith.constant 0 : index
    %345 = vector.load %arg9[%c0_137, %c0_138] : memref<100x32xf32, #tpu.memory_space<vmem>>, vector<100x32xf32>
    tpu.vector_store %arg9[%c0_137, %c0_138], %344 {strides = array<i32>} : memref<100x32xf32, #tpu.memory_space<vmem>>, vector<100x32xf32>,
    %c560_139 = arith.constant 560 : index
    %c0_140 = arith.constant 0 : index
    %346 = vector.load %arg3[%c560_139, %c0_140] : memref<1080x128xf32, #tpu.memory_space<vmem>>, vector<100x1xf32>
    %c0_141 = arith.constant 0 : index
    %c0_142 = arith.constant 0 : index
    %347 = vector.load %arg9[%c0_141, %c0_142] : memref<100x32xf32, #tpu.memory_space<vmem>>, vector<100x32xf32>
    %348 = arith.truncf %347 : vector<100x32xf32> to vector<100x32xbf16>
    %c664 = arith.constant 664 : index
    %c0_143 = arith.constant 0 : index
    %349 = vector.load %arg3[%c664, %c0_143] : memref<1080x128xf32, #tpu.memory_space<vmem>>, vector<9x32xf32>
    %c680 = arith.constant 680 : index
    %c0_144 = arith.constant 0 : index
    %350 = vector.load %arg3[%c680, %c0_144] : memref<1080x128xf32, #tpu.memory_space<vmem>>, vector<1x32xf32>
    %c0_145 = arith.constant 0 : index
    %c0_146 = arith.constant 0 : index
    %351 = vector.load %arg9[%c0_145, %c0_146] : memref<100x32xf32, #tpu.memory_space<vmem>>, vector<25x32xf32>
    %352 = vector.extract_strided_slice %349 {offsets = [0, 0], sizes = [1, 32], strides = [1, 1]} : vector<9x32xf32> to vector<1x32xf32>
    %353 = vector.broadcast %352 : vector<1x32xf32> to vector<25x32xf32>
    %354 = arith.mulf %351, %353 : vector<25x32xf32>
    %c25_147 = arith.constant 25 : index
    %c0_148 = arith.constant 0 : index
    %355 = vector.load %arg9[%c25_147, %c0_148] : memref<100x32xf32, #tpu.memory_space<vmem>>, vector<25x32xf32>
    %356 = vector.extract_strided_slice %349 {offsets = [1, 0], sizes = [1, 32], strides = [1, 1]} : vector<9x32xf32> to vector<1x32xf32>
    %357 = vector.broadcast %356 : vector<1x32xf32> to vector<25x32xf32>
    %358 = arith.mulf %355, %357 : vector<25x32xf32>
    %359 = arith.addf %354, %358 : vector<25x32xf32>
    %c1_149 = arith.constant 1 : index
    %c0_150 = arith.constant 0 : index
    %360 = vector.load %arg9[%c1_149, %c0_150] : memref<100x32xf32, #tpu.memory_space<vmem>>, vector<25x32xf32>
    %361 = vector.extract_strided_slice %349 {offsets = [2, 0], sizes = [1, 32], strides = [1, 1]} : vector<9x32xf32> to vector<1x32xf32>
    %362 = vector.broadcast %361 : vector<1x32xf32> to vector<25x32xf32>
    %363 = arith.mulf %360, %362 : vector<25x32xf32>
    %364 = arith.addf %359, %363 : vector<25x32xf32>
    %c50_151 = arith.constant 50 : index
    %c0_152 = arith.constant 0 : index
    %365 = vector.load %arg9[%c50_151, %c0_152] : memref<100x32xf32, #tpu.memory_space<vmem>>, vector<25x32xf32>
    %366 = vector.extract_strided_slice %349 {offsets = [3, 0], sizes = [1, 32], strides = [1, 1]} : vector<9x32xf32> to vector<1x32xf32>
    %367 = vector.broadcast %366 : vector<1x32xf32> to vector<25x32xf32>
    %368 = arith.mulf %365, %367 : vector<25x32xf32>
    %369 = arith.addf %364, %368 : vector<25x32xf32>
    %c75_153 = arith.constant 75 : index
    %c0_154 = arith.constant 0 : index
    %370 = vector.load %arg9[%c75_153, %c0_154] : memref<100x32xf32, #tpu.memory_space<vmem>>, vector<25x32xf32>
    %371 = vector.extract_strided_slice %349 {offsets = [4, 0], sizes = [1, 32], strides = [1, 1]} : vector<9x32xf32> to vector<1x32xf32>
    %372 = vector.broadcast %371 : vector<1x32xf32> to vector<25x32xf32>
    %373 = arith.mulf %370, %372 : vector<25x32xf32>
    %374 = arith.addf %369, %373 : vector<25x32xf32>
    %c51_155 = arith.constant 51 : index
    %c0_156 = arith.constant 0 : index
    %375 = vector.load %arg9[%c51_155, %c0_156] : memref<100x32xf32, #tpu.memory_space<vmem>>, vector<25x32xf32>
    %376 = vector.extract_strided_slice %349 {offsets = [5, 0], sizes = [1, 32], strides = [1, 1]} : vector<9x32xf32> to vector<1x32xf32>
    %377 = vector.broadcast %376 : vector<1x32xf32> to vector<25x32xf32>
    %378 = arith.mulf %375, %377 : vector<25x32xf32>
    %379 = arith.addf %374, %378 : vector<25x32xf32>
    %c5_157 = arith.constant 5 : index
    %c0_158 = arith.constant 0 : index
    %380 = vector.load %arg9[%c5_157, %c0_158] : memref<100x32xf32, #tpu.memory_space<vmem>>, vector<25x32xf32>
    %381 = vector.extract_strided_slice %349 {offsets = [6, 0], sizes = [1, 32], strides = [1, 1]} : vector<9x32xf32> to vector<1x32xf32>
    %382 = vector.broadcast %381 : vector<1x32xf32> to vector<25x32xf32>
    %383 = arith.mulf %380, %382 : vector<25x32xf32>
    %384 = arith.addf %379, %383 : vector<25x32xf32>
    %c30_159 = arith.constant 30 : index
    %c0_160 = arith.constant 0 : index
    %385 = vector.load %arg9[%c30_159, %c0_160] : memref<100x32xf32, #tpu.memory_space<vmem>>, vector<25x32xf32>
    %386 = vector.extract_strided_slice %349 {offsets = [7, 0], sizes = [1, 32], strides = [1, 1]} : vector<9x32xf32> to vector<1x32xf32>
    %387 = vector.broadcast %386 : vector<1x32xf32> to vector<25x32xf32>
    %388 = arith.mulf %385, %387 : vector<25x32xf32>
    %389 = arith.addf %384, %388 : vector<25x32xf32>
    %c6_161 = arith.constant 6 : index
    %c0_162 = arith.constant 0 : index
    %390 = vector.load %arg9[%c6_161, %c0_162] : memref<100x32xf32, #tpu.memory_space<vmem>>, vector<25x32xf32>
    %391 = vector.extract_strided_slice %349 {offsets = [8, 0], sizes = [1, 32], strides = [1, 1]} : vector<9x32xf32> to vector<1x32xf32>
    %392 = vector.broadcast %391 : vector<1x32xf32> to vector<25x32xf32>
    %393 = arith.mulf %390, %392 : vector<25x32xf32>
    %394 = arith.addf %389, %393 : vector<25x32xf32>
    %395 = vector.broadcast %350 : vector<1x32xf32> to vector<25x32xf32>
    %396 = arith.addf %394, %395 : vector<25x32xf32>
    %c160 = arith.constant 160 : index
    %c0_163 = arith.constant 0 : index
    %397 = vector.load %arg2[%c160, %c0_163] : memref<704x128xbf16, #tpu.memory_space<vmem>>, vector<32x32xbf16>
    %cst_164 = arith.constant dense<0.000000e+00> : vector<100x32xf32>
    %398 = tpu.matmul %348, %397, %cst_164 {dimension_numbers = #tpu.dot_dimension_numbers<[1], [0], [0], [1], [0, 0, 1, 1], [], []>} : vector<100x32xbf16>, vector<32x32xbf16>, vector<100x32xf32> -> vector<100x32xf32>
    %c688 = arith.constant 688 : index
    %c0_165 = arith.constant 0 : index
    %399 = vector.load %arg3[%c688, %c0_165] : memref<1080x128xf32, #tpu.memory_space<vmem>>, vector<1x32xf32>
    %400 = vector.broadcast %399 : vector<1x32xf32> to vector<100x32xf32>
    %401 = arith.addf %398, %400 : vector<100x32xf32>
    %cst_166 = arith.constant 0.000000e+00 : f32
    %402 = vector.broadcast %cst_166 : f32 to vector<100x32xf32>
    %403 = arith.maximumf %401, %402 : vector<100x32xf32>
    %404 = vector.broadcast %346 : vector<100x1xf32> to vector<100x32xf32>
    %405 = arith.mulf %403, %404 : vector<100x32xf32>
    %c0_167 = arith.constant 0 : index
    %c0_168 = arith.constant 0 : index
    %406 = vector.load %arg10[%c0_167, %c0_168] : memref<100x32xf32, #tpu.memory_space<vmem>>, vector<100x32xf32>
    tpu.vector_store %arg10[%c0_167, %c0_168], %405 {strides = array<i32>} : memref<100x32xf32, #tpu.memory_space<vmem>>, vector<100x32xf32>,
    %c696 = arith.constant 696 : index
    %c0_169 = arith.constant 0 : index
    %407 = vector.load %arg3[%c696, %c0_169] : memref<1080x128xf32, #tpu.memory_space<vmem>>, vector<9x32xf32>
    %c712 = arith.constant 712 : index
    %c0_170 = arith.constant 0 : index
    %408 = vector.load %arg3[%c712, %c0_170] : memref<1080x128xf32, #tpu.memory_space<vmem>>, vector<1x32xf32>
    %c0_171 = arith.constant 0 : index
    %c0_172 = arith.constant 0 : index
    %409 = vector.load %arg10[%c0_171, %c0_172] : memref<100x32xf32, #tpu.memory_space<vmem>>, vector<25x32xf32>
    %410 = vector.extract_strided_slice %407 {offsets = [0, 0], sizes = [1, 32], strides = [1, 1]} : vector<9x32xf32> to vector<1x32xf32>
    %411 = vector.broadcast %410 : vector<1x32xf32> to vector<25x32xf32>
    %412 = arith.mulf %409, %411 : vector<25x32xf32>
    %c25_173 = arith.constant 25 : index
    %c0_174 = arith.constant 0 : index
    %413 = vector.load %arg10[%c25_173, %c0_174] : memref<100x32xf32, #tpu.memory_space<vmem>>, vector<25x32xf32>
    %414 = vector.extract_strided_slice %407 {offsets = [1, 0], sizes = [1, 32], strides = [1, 1]} : vector<9x32xf32> to vector<1x32xf32>
    %415 = vector.broadcast %414 : vector<1x32xf32> to vector<25x32xf32>
    %416 = arith.mulf %413, %415 : vector<25x32xf32>
    %417 = arith.addf %412, %416 : vector<25x32xf32>
    %c1_175 = arith.constant 1 : index
    %c0_176 = arith.constant 0 : index
    %418 = vector.load %arg10[%c1_175, %c0_176] : memref<100x32xf32, #tpu.memory_space<vmem>>, vector<25x32xf32>
    %419 = vector.extract_strided_slice %407 {offsets = [2, 0], sizes = [1, 32], strides = [1, 1]} : vector<9x32xf32> to vector<1x32xf32>
    %420 = vector.broadcast %419 : vector<1x32xf32> to vector<25x32xf32>
    %421 = arith.mulf %418, %420 : vector<25x32xf32>
    %422 = arith.addf %417, %421 : vector<25x32xf32>
    %c50_177 = arith.constant 50 : index
    %c0_178 = arith.constant 0 : index
    %423 = vector.load %arg10[%c50_177, %c0_178] : memref<100x32xf32, #tpu.memory_space<vmem>>, vector<25x32xf32>
    %424 = vector.extract_strided_slice %407 {offsets = [3, 0], sizes = [1, 32], strides = [1, 1]} : vector<9x32xf32> to vector<1x32xf32>
    %425 = vector.broadcast %424 : vector<1x32xf32> to vector<25x32xf32>
    %426 = arith.mulf %423, %425 : vector<25x32xf32>
    %427 = arith.addf %422, %426 : vector<25x32xf32>
    %c75_179 = arith.constant 75 : index
    %c0_180 = arith.constant 0 : index
    %428 = vector.load %arg10[%c75_179, %c0_180] : memref<100x32xf32, #tpu.memory_space<vmem>>, vector<25x32xf32>
    %429 = vector.extract_strided_slice %407 {offsets = [4, 0], sizes = [1, 32], strides = [1, 1]} : vector<9x32xf32> to vector<1x32xf32>
    %430 = vector.broadcast %429 : vector<1x32xf32> to vector<25x32xf32>
    %431 = arith.mulf %428, %430 : vector<25x32xf32>
    %432 = arith.addf %427, %431 : vector<25x32xf32>
    %c51_181 = arith.constant 51 : index
    %c0_182 = arith.constant 0 : index
    %433 = vector.load %arg10[%c51_181, %c0_182] : memref<100x32xf32, #tpu.memory_space<vmem>>, vector<25x32xf32>
    %434 = vector.extract_strided_slice %407 {offsets = [5, 0], sizes = [1, 32], strides = [1, 1]} : vector<9x32xf32> to vector<1x32xf32>
    %435 = vector.broadcast %434 : vector<1x32xf32> to vector<25x32xf32>
    %436 = arith.mulf %433, %435 : vector<25x32xf32>
    %437 = arith.addf %432, %436 : vector<25x32xf32>
    %c5_183 = arith.constant 5 : index
    %c0_184 = arith.constant 0 : index
    %438 = vector.load %arg10[%c5_183, %c0_184] : memref<100x32xf32, #tpu.memory_space<vmem>>, vector<25x32xf32>
    %439 = vector.extract_strided_slice %407 {offsets = [6, 0], sizes = [1, 32], strides = [1, 1]} : vector<9x32xf32> to vector<1x32xf32>
    %440 = vector.broadcast %439 : vector<1x32xf32> to vector<25x32xf32>
    %441 = arith.mulf %438, %440 : vector<25x32xf32>
    %442 = arith.addf %437, %441 : vector<25x32xf32>
    %c30_185 = arith.constant 30 : index
    %c0_186 = arith.constant 0 : index
    %443 = vector.load %arg10[%c30_185, %c0_186] : memref<100x32xf32, #tpu.memory_space<vmem>>, vector<25x32xf32>
    %444 = vector.extract_strided_slice %407 {offsets = [7, 0], sizes = [1, 32], strides = [1, 1]} : vector<9x32xf32> to vector<1x32xf32>
    %445 = vector.broadcast %444 : vector<1x32xf32> to vector<25x32xf32>
    %446 = arith.mulf %443, %445 : vector<25x32xf32>
    %447 = arith.addf %442, %446 : vector<25x32xf32>
    %c6_187 = arith.constant 6 : index
    %c0_188 = arith.constant 0 : index
    %448 = vector.load %arg10[%c6_187, %c0_188] : memref<100x32xf32, #tpu.memory_space<vmem>>, vector<25x32xf32>
    %449 = vector.extract_strided_slice %407 {offsets = [8, 0], sizes = [1, 32], strides = [1, 1]} : vector<9x32xf32> to vector<1x32xf32>
    %450 = vector.broadcast %449 : vector<1x32xf32> to vector<25x32xf32>
    %451 = arith.mulf %448, %450 : vector<25x32xf32>
    %452 = arith.addf %447, %451 : vector<25x32xf32>
    %453 = vector.broadcast %408 : vector<1x32xf32> to vector<25x32xf32>
    %454 = arith.addf %452, %453 : vector<25x32xf32>
    %455 = arith.truncf %396 : vector<25x32xf32> to vector<25x32xbf16>
    %c128 = arith.constant 128 : index
    %c0_189 = arith.constant 0 : index
    %456 = vector.load %arg2[%c128, %c0_189] : memref<704x128xbf16, #tpu.memory_space<vmem>>, vector<32x64xbf16>
    %cst_190 = arith.constant dense<0.000000e+00> : vector<25x64xf32>
    %457 = tpu.matmul %455, %456, %cst_190 {dimension_numbers = #tpu.dot_dimension_numbers<[1], [0], [0], [1], [0, 0, 1, 1], [], []>} : vector<25x32xbf16>, vector<32x64xbf16>, vector<25x64xf32> -> vector<25x64xf32>
    %458 = arith.truncf %454 : vector<25x32xf32> to vector<25x32xbf16>
    %c192 = arith.constant 192 : index
    %c0_191 = arith.constant 0 : index
    %459 = vector.load %arg2[%c192, %c0_191] : memref<704x128xbf16, #tpu.memory_space<vmem>>, vector<32x64xbf16>
    %cst_192 = arith.constant dense<0.000000e+00> : vector<25x64xf32>
    %460 = tpu.matmul %458, %459, %cst_192 {dimension_numbers = #tpu.dot_dimension_numbers<[1], [0], [0], [1], [0, 0, 1, 1], [], []>} : vector<25x32xbf16>, vector<32x64xbf16>, vector<25x64xf32> -> vector<25x64xf32>
    %461 = arith.addf %457, %460 : vector<25x64xf32>
    %c720 = arith.constant 720 : index
    %c0_193 = arith.constant 0 : index
    %462 = vector.load %arg3[%c720, %c0_193] : memref<1080x128xf32, #tpu.memory_space<vmem>>, vector<1x64xf32>
    %463 = vector.broadcast %462 : vector<1x64xf32> to vector<25x64xf32>
    %464 = arith.addf %461, %463 : vector<25x64xf32>
    %cst_194 = arith.constant 0.000000e+00 : f32
    %465 = vector.broadcast %cst_194 : f32 to vector<25x64xf32>
    %466 = arith.maximumf %464, %465 : vector<25x64xf32>
    %c728 = arith.constant 728 : index
    %c0_195 = arith.constant 0 : index
    %467 = vector.load %arg3[%c728, %c0_195] : memref<1080x128xf32, #tpu.memory_space<vmem>>, vector<36x25xf32>
    %cst_196 = arith.constant dense<0.000000e+00> : vector<36x64xf32>
    %468 = tpu.matmul %467, %466, %cst_196 {dimension_numbers = #tpu.dot_dimension_numbers<[1], [0], [0], [1], [0, 0, 1, 1], [], []>} : vector<36x25xf32>, vector<25x64xf32>, vector<36x64xf32> -> vector<36x64xf32>
    %c0_197 = arith.constant 0 : index
    %c0_198 = arith.constant 0 : index
    %469 = vector.load %arg11[%c0_197, %c0_198] : memref<36x64xf32, #tpu.memory_space<vmem>>, vector<36x64xf32>
    tpu.vector_store %arg11[%c0_197, %c0_198], %468 {strides = array<i32>} : memref<36x64xf32, #tpu.memory_space<vmem>>, vector<36x64xf32>,
    %c840 = arith.constant 840 : index
    %c0_199 = arith.constant 0 : index
    %470 = vector.load %arg3[%c840, %c0_199] : memref<1080x128xf32, #tpu.memory_space<vmem>>, vector<36x1xf32>
    %c0_200 = arith.constant 0 : index
    %c0_201 = arith.constant 0 : index
    %471 = vector.load %arg11[%c0_200, %c0_201] : memref<36x64xf32, #tpu.memory_space<vmem>>, vector<36x64xf32>
    %472 = arith.truncf %471 : vector<36x64xf32> to vector<36x64xbf16>
    %c224 = arith.constant 224 : index
    %c0_202 = arith.constant 0 : index
    %473 = vector.load %arg2[%c224, %c0_202] : memref<704x128xbf16, #tpu.memory_space<vmem>>, vector<64x32xbf16>
    %cst_203 = arith.constant dense<0.000000e+00> : vector<36x32xf32>
    %474 = tpu.matmul %472, %473, %cst_203 {dimension_numbers = #tpu.dot_dimension_numbers<[1], [0], [0], [1], [0, 0, 1, 1], [], []>} : vector<36x64xbf16>, vector<64x32xbf16>, vector<36x32xf32> -> vector<36x32xf32>
    %c768 = arith.constant 768 : index
    %c0_204 = arith.constant 0 : index
    %475 = vector.load %arg3[%c768, %c0_204] : memref<1080x128xf32, #tpu.memory_space<vmem>>, vector<1x32xf32>
    %476 = vector.broadcast %475 : vector<1x32xf32> to vector<36x32xf32>
    %477 = arith.addf %474, %476 : vector<36x32xf32>
    %cst_205 = arith.constant 0.000000e+00 : f32
    %478 = vector.broadcast %cst_205 : f32 to vector<36x32xf32>
    %479 = arith.maximumf %477, %478 : vector<36x32xf32>
    %480 = vector.broadcast %470 : vector<36x1xf32> to vector<36x32xf32>
    %481 = arith.mulf %479, %480 : vector<36x32xf32>
    %c0_206 = arith.constant 0 : index
    %c0_207 = arith.constant 0 : index
    %482 = vector.load %arg12[%c0_206, %c0_207] : memref<36x32xf32, #tpu.memory_space<vmem>>, vector<36x32xf32>
    tpu.vector_store %arg12[%c0_206, %c0_207], %481 {strides = array<i32>} : memref<36x32xf32, #tpu.memory_space<vmem>>, vector<36x32xf32>,
    %c776 = arith.constant 776 : index
    %c0_208 = arith.constant 0 : index
    %483 = vector.load %arg3[%c776, %c0_208] : memref<1080x128xf32, #tpu.memory_space<vmem>>, vector<9x32xf32>
    %c792 = arith.constant 792 : index
    %c0_209 = arith.constant 0 : index
    %484 = vector.load %arg3[%c792, %c0_209] : memref<1080x128xf32, #tpu.memory_space<vmem>>, vector<1x32xf32>
    %c23 = arith.constant 23 : index
    %c0_210 = arith.constant 0 : index
    %485 = vector.load %arg12[%c23, %c0_210] : memref<36x32xf32, #tpu.memory_space<vmem>>, vector<9x32xf32>
    %486 = vector.extract_strided_slice %483 {offsets = [0, 0], sizes = [1, 32], strides = [1, 1]} : vector<9x32xf32> to vector<1x32xf32>
    %487 = vector.broadcast %486 : vector<1x32xf32> to vector<9x32xf32>
    %488 = arith.mulf %485, %487 : vector<9x32xf32>
    %c15 = arith.constant 15 : index
    %c0_211 = arith.constant 0 : index
    %489 = vector.load %arg12[%c15, %c0_211] : memref<36x32xf32, #tpu.memory_space<vmem>>, vector<9x32xf32>
    %490 = vector.extract_strided_slice %483 {offsets = [1, 0], sizes = [1, 32], strides = [1, 1]} : vector<9x32xf32> to vector<1x32xf32>
    %491 = vector.broadcast %490 : vector<1x32xf32> to vector<9x32xf32>
    %492 = arith.mulf %489, %491 : vector<9x32xf32>
    %493 = arith.addf %488, %492 : vector<9x32xf32>
    %c24_212 = arith.constant 24 : index
    %c0_213 = arith.constant 0 : index
    %494 = vector.load %arg12[%c24_212, %c0_213] : memref<36x32xf32, #tpu.memory_space<vmem>>, vector<9x32xf32>
    %495 = vector.extract_strided_slice %483 {offsets = [2, 0], sizes = [1, 32], strides = [1, 1]} : vector<9x32xf32> to vector<1x32xf32>
    %496 = vector.broadcast %495 : vector<1x32xf32> to vector<9x32xf32>
    %497 = arith.mulf %494, %496 : vector<9x32xf32>
    %498 = arith.addf %493, %497 : vector<9x32xf32>
    %c8_214 = arith.constant 8 : index
    %c0_215 = arith.constant 0 : index
    %499 = vector.load %arg12[%c8_214, %c0_215] : memref<36x32xf32, #tpu.memory_space<vmem>>, vector<9x32xf32>
    %500 = vector.extract_strided_slice %483 {offsets = [3, 0], sizes = [1, 32], strides = [1, 1]} : vector<9x32xf32> to vector<1x32xf32>
    %501 = vector.broadcast %500 : vector<1x32xf32> to vector<9x32xf32>
    %502 = arith.mulf %499, %501 : vector<9x32xf32>
    %503 = arith.addf %498, %502 : vector<9x32xf32>
    %c0_216 = arith.constant 0 : index
    %c0_217 = arith.constant 0 : index
    %504 = vector.load %arg12[%c0_216, %c0_217] : memref<36x32xf32, #tpu.memory_space<vmem>>, vector<9x32xf32>
    %505 = vector.extract_strided_slice %483 {offsets = [4, 0], sizes = [1, 32], strides = [1, 1]} : vector<9x32xf32> to vector<1x32xf32>
    %506 = vector.broadcast %505 : vector<1x32xf32> to vector<9x32xf32>
    %507 = arith.mulf %504, %506 : vector<9x32xf32>
    %508 = arith.addf %503, %507 : vector<9x32xf32>
    %c9_218 = arith.constant 9 : index
    %c0_219 = arith.constant 0 : index
    %509 = vector.load %arg12[%c9_218, %c0_219] : memref<36x32xf32, #tpu.memory_space<vmem>>, vector<9x32xf32>
    %510 = vector.extract_strided_slice %483 {offsets = [5, 0], sizes = [1, 32], strides = [1, 1]} : vector<9x32xf32> to vector<1x32xf32>
    %511 = vector.broadcast %510 : vector<1x32xf32> to vector<9x32xf32>
    %512 = arith.mulf %509, %511 : vector<9x32xf32>
    %513 = arith.addf %508, %512 : vector<9x32xf32>
    %c26 = arith.constant 26 : index
    %c0_220 = arith.constant 0 : index
    %514 = vector.load %arg12[%c26, %c0_220] : memref<36x32xf32, #tpu.memory_space<vmem>>, vector<9x32xf32>
    %515 = vector.extract_strided_slice %483 {offsets = [6, 0], sizes = [1, 32], strides = [1, 1]} : vector<9x32xf32> to vector<1x32xf32>
    %516 = vector.broadcast %515 : vector<1x32xf32> to vector<9x32xf32>
    %517 = arith.mulf %514, %516 : vector<9x32xf32>
    %518 = arith.addf %513, %517 : vector<9x32xf32>
    %c18 = arith.constant 18 : index
    %c0_221 = arith.constant 0 : index
    %519 = vector.load %arg12[%c18, %c0_221] : memref<36x32xf32, #tpu.memory_space<vmem>>, vector<9x32xf32>
    %520 = vector.extract_strided_slice %483 {offsets = [7, 0], sizes = [1, 32], strides = [1, 1]} : vector<9x32xf32> to vector<1x32xf32>
    %521 = vector.broadcast %520 : vector<1x32xf32> to vector<9x32xf32>
    %522 = arith.mulf %519, %521 : vector<9x32xf32>
    %523 = arith.addf %518, %522 : vector<9x32xf32>
    %c27 = arith.constant 27 : index
    %c0_222 = arith.constant 0 : index
    %524 = vector.load %arg12[%c27, %c0_222] : memref<36x32xf32, #tpu.memory_space<vmem>>, vector<9x32xf32>
    %525 = vector.extract_strided_slice %483 {offsets = [8, 0], sizes = [1, 32], strides = [1, 1]} : vector<9x32xf32> to vector<1x32xf32>
    %526 = vector.broadcast %525 : vector<1x32xf32> to vector<9x32xf32>
    %527 = arith.mulf %524, %526 : vector<9x32xf32>
    %528 = arith.addf %523, %527 : vector<9x32xf32>
    %c15_223 = arith.constant 15 : index
    %c0_224 = arith.constant 0 : index
    %529 = vector.load %arg12[%c15_223, %c0_224] : memref<36x32xf32, #tpu.memory_space<vmem>>, vector<9x32xf32>
    %530 = vector.extract_strided_slice %483 {offsets = [0, 0], sizes = [1, 32], strides = [1, 1]} : vector<9x32xf32> to vector<1x32xf32>
    %531 = vector.broadcast %530 : vector<1x32xf32> to vector<9x32xf32>
    %532 = arith.mulf %529, %531 : vector<9x32xf32>
    %c24_225 = arith.constant 24 : index
    %c0_226 = arith.constant 0 : index
    %533 = vector.load %arg12[%c24_225, %c0_226] : memref<36x32xf32, #tpu.memory_space<vmem>>, vector<9x32xf32>
    %534 = vector.extract_strided_slice %483 {offsets = [1, 0], sizes = [1, 32], strides = [1, 1]} : vector<9x32xf32> to vector<1x32xf32>
    %535 = vector.broadcast %534 : vector<1x32xf32> to vector<9x32xf32>
    %536 = arith.mulf %533, %535 : vector<9x32xf32>
    %537 = arith.addf %532, %536 : vector<9x32xf32>
    %c16 = arith.constant 16 : index
    %c0_227 = arith.constant 0 : index
    %538 = vector.load %arg12[%c16, %c0_227] : memref<36x32xf32, #tpu.memory_space<vmem>>, vector<9x32xf32>
    %539 = vector.extract_strided_slice %483 {offsets = [2, 0], sizes = [1, 32], strides = [1, 1]} : vector<9x32xf32> to vector<1x32xf32>
    %540 = vector.broadcast %539 : vector<1x32xf32> to vector<9x32xf32>
    %541 = arith.mulf %538, %540 : vector<9x32xf32>
    %542 = arith.addf %537, %541 : vector<9x32xf32>
    %c0_228 = arith.constant 0 : index
    %c0_229 = arith.constant 0 : index
    %543 = vector.load %arg12[%c0_228, %c0_229] : memref<36x32xf32, #tpu.memory_space<vmem>>, vector<9x32xf32>
    %544 = vector.extract_strided_slice %483 {offsets = [3, 0], sizes = [1, 32], strides = [1, 1]} : vector<9x32xf32> to vector<1x32xf32>
    %545 = vector.broadcast %544 : vector<1x32xf32> to vector<9x32xf32>
    %546 = arith.mulf %543, %545 : vector<9x32xf32>
    %547 = arith.addf %542, %546 : vector<9x32xf32>
    %c9_230 = arith.constant 9 : index
    %c0_231 = arith.constant 0 : index
    %548 = vector.load %arg12[%c9_230, %c0_231] : memref<36x32xf32, #tpu.memory_space<vmem>>, vector<9x32xf32>
    %549 = vector.extract_strided_slice %483 {offsets = [4, 0], sizes = [1, 32], strides = [1, 1]} : vector<9x32xf32> to vector<1x32xf32>
    %550 = vector.broadcast %549 : vector<1x32xf32> to vector<9x32xf32>
    %551 = arith.mulf %548, %550 : vector<9x32xf32>
    %552 = arith.addf %547, %551 : vector<9x32xf32>
    %c1_232 = arith.constant 1 : index
    %c0_233 = arith.constant 0 : index
    %553 = vector.load %arg12[%c1_232, %c0_233] : memref<36x32xf32, #tpu.memory_space<vmem>>, vector<9x32xf32>
    %554 = vector.extract_strided_slice %483 {offsets = [5, 0], sizes = [1, 32], strides = [1, 1]} : vector<9x32xf32> to vector<1x32xf32>
    %555 = vector.broadcast %554 : vector<1x32xf32> to vector<9x32xf32>
    %556 = arith.mulf %553, %555 : vector<9x32xf32>
    %557 = arith.addf %552, %556 : vector<9x32xf32>
    %c18_234 = arith.constant 18 : index
    %c0_235 = arith.constant 0 : index
    %558 = vector.load %arg12[%c18_234, %c0_235] : memref<36x32xf32, #tpu.memory_space<vmem>>, vector<9x32xf32>
    %559 = vector.extract_strided_slice %483 {offsets = [6, 0], sizes = [1, 32], strides = [1, 1]} : vector<9x32xf32> to vector<1x32xf32>
    %560 = vector.broadcast %559 : vector<1x32xf32> to vector<9x32xf32>
    %561 = arith.mulf %558, %560 : vector<9x32xf32>
    %562 = arith.addf %557, %561 : vector<9x32xf32>
    %c27_236 = arith.constant 27 : index
    %c0_237 = arith.constant 0 : index
    %563 = vector.load %arg12[%c27_236, %c0_237] : memref<36x32xf32, #tpu.memory_space<vmem>>, vector<9x32xf32>
    %564 = vector.extract_strided_slice %483 {offsets = [7, 0], sizes = [1, 32], strides = [1, 1]} : vector<9x32xf32> to vector<1x32xf32>
    %565 = vector.broadcast %564 : vector<1x32xf32> to vector<9x32xf32>
    %566 = arith.mulf %563, %565 : vector<9x32xf32>
    %567 = arith.addf %562, %566 : vector<9x32xf32>
    %c19 = arith.constant 19 : index
    %c0_238 = arith.constant 0 : index
    %568 = vector.load %arg12[%c19, %c0_238] : memref<36x32xf32, #tpu.memory_space<vmem>>, vector<9x32xf32>
    %569 = vector.extract_strided_slice %483 {offsets = [8, 0], sizes = [1, 32], strides = [1, 1]} : vector<9x32xf32> to vector<1x32xf32>
    %570 = vector.broadcast %569 : vector<1x32xf32> to vector<9x32xf32>
    %571 = arith.mulf %568, %570 : vector<9x32xf32>
    %572 = arith.addf %567, %571 : vector<9x32xf32>
    %c8_239 = arith.constant 8 : index
    %c0_240 = arith.constant 0 : index
    %573 = vector.load %arg12[%c8_239, %c0_240] : memref<36x32xf32, #tpu.memory_space<vmem>>, vector<9x32xf32>
    %574 = vector.extract_strided_slice %483 {offsets = [0, 0], sizes = [1, 32], strides = [1, 1]} : vector<9x32xf32> to vector<1x32xf32>
    %575 = vector.broadcast %574 : vector<1x32xf32> to vector<9x32xf32>
    %576 = arith.mulf %573, %575 : vector<9x32xf32>
    %c0_241 = arith.constant 0 : index
    %c0_242 = arith.constant 0 : index
    %577 = vector.load %arg12[%c0_241, %c0_242] : memref<36x32xf32, #tpu.memory_space<vmem>>, vector<9x32xf32>
    %578 = vector.extract_strided_slice %483 {offsets = [1, 0], sizes = [1, 32], strides = [1, 1]} : vector<9x32xf32> to vector<1x32xf32>
    %579 = vector.broadcast %578 : vector<1x32xf32> to vector<9x32xf32>
    %580 = arith.mulf %577, %579 : vector<9x32xf32>
    %581 = arith.addf %576, %580 : vector<9x32xf32>
    %c9_243 = arith.constant 9 : index
    %c0_244 = arith.constant 0 : index
    %582 = vector.load %arg12[%c9_243, %c0_244] : memref<36x32xf32, #tpu.memory_space<vmem>>, vector<9x32xf32>
    %583 = vector.extract_strided_slice %483 {offsets = [2, 0], sizes = [1, 32], strides = [1, 1]} : vector<9x32xf32> to vector<1x32xf32>
    %584 = vector.broadcast %583 : vector<1x32xf32> to vector<9x32xf32>
    %585 = arith.mulf %582, %584 : vector<9x32xf32>
    %586 = arith.addf %581, %585 : vector<9x32xf32>
    %c26_245 = arith.constant 26 : index
    %c0_246 = arith.constant 0 : index
    %587 = vector.load %arg12[%c26_245, %c0_246] : memref<36x32xf32, #tpu.memory_space<vmem>>, vector<9x32xf32>
    %588 = vector.extract_strided_slice %483 {offsets = [3, 0], sizes = [1, 32], strides = [1, 1]} : vector<9x32xf32> to vector<1x32xf32>
    %589 = vector.broadcast %588 : vector<1x32xf32> to vector<9x32xf32>
    %590 = arith.mulf %587, %589 : vector<9x32xf32>
    %591 = arith.addf %586, %590 : vector<9x32xf32>
    %c18_247 = arith.constant 18 : index
    %c0_248 = arith.constant 0 : index
    %592 = vector.load %arg12[%c18_247, %c0_248] : memref<36x32xf32, #tpu.memory_space<vmem>>, vector<9x32xf32>
    %593 = vector.extract_strided_slice %483 {offsets = [4, 0], sizes = [1, 32], strides = [1, 1]} : vector<9x32xf32> to vector<1x32xf32>
    %594 = vector.broadcast %593 : vector<1x32xf32> to vector<9x32xf32>
    %595 = arith.mulf %592, %594 : vector<9x32xf32>
    %596 = arith.addf %591, %595 : vector<9x32xf32>
    %c27_249 = arith.constant 27 : index
    %c0_250 = arith.constant 0 : index
    %597 = vector.load %arg12[%c27_249, %c0_250] : memref<36x32xf32, #tpu.memory_space<vmem>>, vector<9x32xf32>
    %598 = vector.extract_strided_slice %483 {offsets = [5, 0], sizes = [1, 32], strides = [1, 1]} : vector<9x32xf32> to vector<1x32xf32>
    %599 = vector.broadcast %598 : vector<1x32xf32> to vector<9x32xf32>
    %600 = arith.mulf %597, %599 : vector<9x32xf32>
    %601 = arith.addf %596, %600 : vector<9x32xf32>
    %c11 = arith.constant 11 : index
    %c0_251 = arith.constant 0 : index
    %602 = vector.load %arg12[%c11, %c0_251] : memref<36x32xf32, #tpu.memory_space<vmem>>, vector<9x32xf32>
    %603 = vector.extract_strided_slice %483 {offsets = [6, 0], sizes = [1, 32], strides = [1, 1]} : vector<9x32xf32> to vector<1x32xf32>
    %604 = vector.broadcast %603 : vector<1x32xf32> to vector<9x32xf32>
    %605 = arith.mulf %602, %604 : vector<9x32xf32>
    %606 = arith.addf %601, %605 : vector<9x32xf32>
    %c3 = arith.constant 3 : index
    %c0_252 = arith.constant 0 : index
    %607 = vector.load %arg12[%c3, %c0_252] : memref<36x32xf32, #tpu.memory_space<vmem>>, vector<9x32xf32>
    %608 = vector.extract_strided_slice %483 {offsets = [7, 0], sizes = [1, 32], strides = [1, 1]} : vector<9x32xf32> to vector<1x32xf32>
    %609 = vector.broadcast %608 : vector<1x32xf32> to vector<9x32xf32>
    %610 = arith.mulf %607, %609 : vector<9x32xf32>
    %611 = arith.addf %606, %610 : vector<9x32xf32>
    %c12 = arith.constant 12 : index
    %c0_253 = arith.constant 0 : index
    %612 = vector.load %arg12[%c12, %c0_253] : memref<36x32xf32, #tpu.memory_space<vmem>>, vector<9x32xf32>
    %613 = vector.extract_strided_slice %483 {offsets = [8, 0], sizes = [1, 32], strides = [1, 1]} : vector<9x32xf32> to vector<1x32xf32>
    %614 = vector.broadcast %613 : vector<1x32xf32> to vector<9x32xf32>
    %615 = arith.mulf %612, %614 : vector<9x32xf32>
    %616 = arith.addf %611, %615 : vector<9x32xf32>
    %c0_254 = arith.constant 0 : index
    %c0_255 = arith.constant 0 : index
    %617 = vector.load %arg12[%c0_254, %c0_255] : memref<36x32xf32, #tpu.memory_space<vmem>>, vector<9x32xf32>
    %618 = vector.extract_strided_slice %483 {offsets = [0, 0], sizes = [1, 32], strides = [1, 1]} : vector<9x32xf32> to vector<1x32xf32>
    %619 = vector.broadcast %618 : vector<1x32xf32> to vector<9x32xf32>
    %620 = arith.mulf %617, %619 : vector<9x32xf32>
    %c9_256 = arith.constant 9 : index
    %c0_257 = arith.constant 0 : index
    %621 = vector.load %arg12[%c9_256, %c0_257] : memref<36x32xf32, #tpu.memory_space<vmem>>, vector<9x32xf32>
    %622 = vector.extract_strided_slice %483 {offsets = [1, 0], sizes = [1, 32], strides = [1, 1]} : vector<9x32xf32> to vector<1x32xf32>
    %623 = vector.broadcast %622 : vector<1x32xf32> to vector<9x32xf32>
    %624 = arith.mulf %621, %623 : vector<9x32xf32>
    %625 = arith.addf %620, %624 : vector<9x32xf32>
    %c1_258 = arith.constant 1 : index
    %c0_259 = arith.constant 0 : index
    %626 = vector.load %arg12[%c1_258, %c0_259] : memref<36x32xf32, #tpu.memory_space<vmem>>, vector<9x32xf32>
    %627 = vector.extract_strided_slice %483 {offsets = [2, 0], sizes = [1, 32], strides = [1, 1]} : vector<9x32xf32> to vector<1x32xf32>
    %628 = vector.broadcast %627 : vector<1x32xf32> to vector<9x32xf32>
    %629 = arith.mulf %626, %628 : vector<9x32xf32>
    %630 = arith.addf %625, %629 : vector<9x32xf32>
    %c18_260 = arith.constant 18 : index
    %c0_261 = arith.constant 0 : index
    %631 = vector.load %arg12[%c18_260, %c0_261] : memref<36x32xf32, #tpu.memory_space<vmem>>, vector<9x32xf32>
    %632 = vector.extract_strided_slice %483 {offsets = [3, 0], sizes = [1, 32], strides = [1, 1]} : vector<9x32xf32> to vector<1x32xf32>
    %633 = vector.broadcast %632 : vector<1x32xf32> to vector<9x32xf32>
    %634 = arith.mulf %631, %633 : vector<9x32xf32>
    %635 = arith.addf %630, %634 : vector<9x32xf32>
    %c27_262 = arith.constant 27 : index
    %c0_263 = arith.constant 0 : index
    %636 = vector.load %arg12[%c27_262, %c0_263] : memref<36x32xf32, #tpu.memory_space<vmem>>, vector<9x32xf32>
    %637 = vector.extract_strided_slice %483 {offsets = [4, 0], sizes = [1, 32], strides = [1, 1]} : vector<9x32xf32> to vector<1x32xf32>
    %638 = vector.broadcast %637 : vector<1x32xf32> to vector<9x32xf32>
    %639 = arith.mulf %636, %638 : vector<9x32xf32>
    %640 = arith.addf %635, %639 : vector<9x32xf32>
    %c19_264 = arith.constant 19 : index
    %c0_265 = arith.constant 0 : index
    %641 = vector.load %arg12[%c19_264, %c0_265] : memref<36x32xf32, #tpu.memory_space<vmem>>, vector<9x32xf32>
    %642 = vector.extract_strided_slice %483 {offsets = [5, 0], sizes = [1, 32], strides = [1, 1]} : vector<9x32xf32> to vector<1x32xf32>
    %643 = vector.broadcast %642 : vector<1x32xf32> to vector<9x32xf32>
    %644 = arith.mulf %641, %643 : vector<9x32xf32>
    %645 = arith.addf %640, %644 : vector<9x32xf32>
    %c3_266 = arith.constant 3 : index
    %c0_267 = arith.constant 0 : index
    %646 = vector.load %arg12[%c3_266, %c0_267] : memref<36x32xf32, #tpu.memory_space<vmem>>, vector<9x32xf32>
    %647 = vector.extract_strided_slice %483 {offsets = [6, 0], sizes = [1, 32], strides = [1, 1]} : vector<9x32xf32> to vector<1x32xf32>
    %648 = vector.broadcast %647 : vector<1x32xf32> to vector<9x32xf32>
    %649 = arith.mulf %646, %648 : vector<9x32xf32>
    %650 = arith.addf %645, %649 : vector<9x32xf32>
    %c12_268 = arith.constant 12 : index
    %c0_269 = arith.constant 0 : index
    %651 = vector.load %arg12[%c12_268, %c0_269] : memref<36x32xf32, #tpu.memory_space<vmem>>, vector<9x32xf32>
    %652 = vector.extract_strided_slice %483 {offsets = [7, 0], sizes = [1, 32], strides = [1, 1]} : vector<9x32xf32> to vector<1x32xf32>
    %653 = vector.broadcast %652 : vector<1x32xf32> to vector<9x32xf32>
    %654 = arith.mulf %651, %653 : vector<9x32xf32>
    %655 = arith.addf %650, %654 : vector<9x32xf32>
    %c4 = arith.constant 4 : index
    %c0_270 = arith.constant 0 : index
    %656 = vector.load %arg12[%c4, %c0_270] : memref<36x32xf32, #tpu.memory_space<vmem>>, vector<9x32xf32>
    %657 = vector.extract_strided_slice %483 {offsets = [8, 0], sizes = [1, 32], strides = [1, 1]} : vector<9x32xf32> to vector<1x32xf32>
    %658 = vector.broadcast %657 : vector<1x32xf32> to vector<9x32xf32>
    %659 = arith.mulf %656, %658 : vector<9x32xf32>
    %660 = arith.addf %655, %659 : vector<9x32xf32>
    %661 = tpu.concatenate %528, %572, %616, %660 in 0 : vector<9x32xf32>, vector<9x32xf32>, vector<9x32xf32>, vector<9x32xf32> -> vector<36x32xf32>
    %662 = vector.broadcast %484 : vector<1x32xf32> to vector<36x32xf32>
    %663 = arith.addf %661, %662 : vector<36x32xf32>
    %664 = vector.extract_strided_slice %471 {offsets = [0, 0], sizes = [36, 32], strides = [1, 1]} : vector<36x64xf32> to vector<36x32xf32>
    %c800 = arith.constant 800 : index
    %c0_271 = arith.constant 0 : index
    %665 = vector.load %arg3[%c800, %c0_271] : memref<1080x128xf32, #tpu.memory_space<vmem>>, vector<32x64xf32>
    %cst_272 = arith.constant dense<0.000000e+00> : vector<36x64xf32>
    %666 = tpu.matmul %664, %665, %cst_272 {dimension_numbers = #tpu.dot_dimension_numbers<[1], [0], [0], [1], [0, 0, 1, 1], [], []>} : vector<36x32xf32>, vector<32x64xf32>, vector<36x64xf32> -> vector<36x64xf32>
    %667 = arith.truncf %663 : vector<36x32xf32> to vector<36x32xbf16>
    %c288 = arith.constant 288 : index
    %c0_273 = arith.constant 0 : index
    %668 = vector.load %arg2[%c288, %c0_273] : memref<704x128xbf16, #tpu.memory_space<vmem>>, vector<32x64xbf16>
    %cst_274 = arith.constant dense<0.000000e+00> : vector<36x64xf32>
    %669 = tpu.matmul %667, %668, %cst_274 {dimension_numbers = #tpu.dot_dimension_numbers<[1], [0], [0], [1], [0, 0, 1, 1], [], []>} : vector<36x32xbf16>, vector<32x64xbf16>, vector<36x64xf32> -> vector<36x64xf32>
    %670 = arith.addf %666, %669 : vector<36x64xf32>
    %c832 = arith.constant 832 : index
    %c0_275 = arith.constant 0 : index
    %671 = vector.load %arg3[%c832, %c0_275] : memref<1080x128xf32, #tpu.memory_space<vmem>>, vector<1x64xf32>
    %672 = vector.broadcast %671 : vector<1x64xf32> to vector<36x64xf32>
    %673 = arith.addf %670, %672 : vector<36x64xf32>
    %cst_276 = arith.constant 0.000000e+00 : f32
    %674 = vector.broadcast %cst_276 : f32 to vector<36x64xf32>
    %675 = arith.maximumf %673, %674 : vector<36x64xf32>
    %676 = vector.broadcast %470 : vector<36x1xf32> to vector<36x64xf32>
    %677 = arith.mulf %675, %676 : vector<36x64xf32>
    %c0_277 = arith.constant 0 : index
    %c0_278 = arith.constant 0 : index
    %678 = vector.load %arg13[%c0_277, %c0_278] : memref<36x64xf32, #tpu.memory_space<vmem>>, vector<36x64xf32>
    tpu.vector_store %arg13[%c0_277, %c0_278], %677 {strides = array<i32>} : memref<36x64xf32, #tpu.memory_space<vmem>>, vector<36x64xf32>,
    %c840_279 = arith.constant 840 : index
    %c0_280 = arith.constant 0 : index
    %679 = vector.load %arg3[%c840_279, %c0_280] : memref<1080x128xf32, #tpu.memory_space<vmem>>, vector<36x1xf32>
    %c0_281 = arith.constant 0 : index
    %c0_282 = arith.constant 0 : index
    %680 = vector.load %arg13[%c0_281, %c0_282] : memref<36x64xf32, #tpu.memory_space<vmem>>, vector<36x64xf32>
    %681 = arith.truncf %680 : vector<36x64xf32> to vector<36x64xbf16>
    %c880 = arith.constant 880 : index
    %c0_283 = arith.constant 0 : index
    %682 = vector.load %arg3[%c880, %c0_283] : memref<1080x128xf32, #tpu.memory_space<vmem>>, vector<9x64xf32>
    %c896 = arith.constant 896 : index
    %c0_284 = arith.constant 0 : index
    %683 = vector.load %arg3[%c896, %c0_284] : memref<1080x128xf32, #tpu.memory_space<vmem>>, vector<1x64xf32>
    %c0_285 = arith.constant 0 : index
    %c0_286 = arith.constant 0 : index
    %684 = vector.load %arg13[%c0_285, %c0_286] : memref<36x64xf32, #tpu.memory_space<vmem>>, vector<9x64xf32>
    %685 = vector.extract_strided_slice %682 {offsets = [0, 0], sizes = [1, 64], strides = [1, 1]} : vector<9x64xf32> to vector<1x64xf32>
    %686 = vector.broadcast %685 : vector<1x64xf32> to vector<9x64xf32>
    %687 = arith.mulf %684, %686 : vector<9x64xf32>
    %c9_287 = arith.constant 9 : index
    %c0_288 = arith.constant 0 : index
    %688 = vector.load %arg13[%c9_287, %c0_288] : memref<36x64xf32, #tpu.memory_space<vmem>>, vector<9x64xf32>
    %689 = vector.extract_strided_slice %682 {offsets = [1, 0], sizes = [1, 64], strides = [1, 1]} : vector<9x64xf32> to vector<1x64xf32>
    %690 = vector.broadcast %689 : vector<1x64xf32> to vector<9x64xf32>
    %691 = arith.mulf %688, %690 : vector<9x64xf32>
    %692 = arith.addf %687, %691 : vector<9x64xf32>
    %c1_289 = arith.constant 1 : index
    %c0_290 = arith.constant 0 : index
    %693 = vector.load %arg13[%c1_289, %c0_290] : memref<36x64xf32, #tpu.memory_space<vmem>>, vector<9x64xf32>
    %694 = vector.extract_strided_slice %682 {offsets = [2, 0], sizes = [1, 64], strides = [1, 1]} : vector<9x64xf32> to vector<1x64xf32>
    %695 = vector.broadcast %694 : vector<1x64xf32> to vector<9x64xf32>
    %696 = arith.mulf %693, %695 : vector<9x64xf32>
    %697 = arith.addf %692, %696 : vector<9x64xf32>
    %c18_291 = arith.constant 18 : index
    %c0_292 = arith.constant 0 : index
    %698 = vector.load %arg13[%c18_291, %c0_292] : memref<36x64xf32, #tpu.memory_space<vmem>>, vector<9x64xf32>
    %699 = vector.extract_strided_slice %682 {offsets = [3, 0], sizes = [1, 64], strides = [1, 1]} : vector<9x64xf32> to vector<1x64xf32>
    %700 = vector.broadcast %699 : vector<1x64xf32> to vector<9x64xf32>
    %701 = arith.mulf %698, %700 : vector<9x64xf32>
    %702 = arith.addf %697, %701 : vector<9x64xf32>
    %c27_293 = arith.constant 27 : index
    %c0_294 = arith.constant 0 : index
    %703 = vector.load %arg13[%c27_293, %c0_294] : memref<36x64xf32, #tpu.memory_space<vmem>>, vector<9x64xf32>
    %704 = vector.extract_strided_slice %682 {offsets = [4, 0], sizes = [1, 64], strides = [1, 1]} : vector<9x64xf32> to vector<1x64xf32>
    %705 = vector.broadcast %704 : vector<1x64xf32> to vector<9x64xf32>
    %706 = arith.mulf %703, %705 : vector<9x64xf32>
    %707 = arith.addf %702, %706 : vector<9x64xf32>
    %c19_295 = arith.constant 19 : index
    %c0_296 = arith.constant 0 : index
    %708 = vector.load %arg13[%c19_295, %c0_296] : memref<36x64xf32, #tpu.memory_space<vmem>>, vector<9x64xf32>
    %709 = vector.extract_strided_slice %682 {offsets = [5, 0], sizes = [1, 64], strides = [1, 1]} : vector<9x64xf32> to vector<1x64xf32>
    %710 = vector.broadcast %709 : vector<1x64xf32> to vector<9x64xf32>
    %711 = arith.mulf %708, %710 : vector<9x64xf32>
    %712 = arith.addf %707, %711 : vector<9x64xf32>
    %c3_297 = arith.constant 3 : index
    %c0_298 = arith.constant 0 : index
    %713 = vector.load %arg13[%c3_297, %c0_298] : memref<36x64xf32, #tpu.memory_space<vmem>>, vector<9x64xf32>
    %714 = vector.extract_strided_slice %682 {offsets = [6, 0], sizes = [1, 64], strides = [1, 1]} : vector<9x64xf32> to vector<1x64xf32>
    %715 = vector.broadcast %714 : vector<1x64xf32> to vector<9x64xf32>
    %716 = arith.mulf %713, %715 : vector<9x64xf32>
    %717 = arith.addf %712, %716 : vector<9x64xf32>
    %c12_299 = arith.constant 12 : index
    %c0_300 = arith.constant 0 : index
    %718 = vector.load %arg13[%c12_299, %c0_300] : memref<36x64xf32, #tpu.memory_space<vmem>>, vector<9x64xf32>
    %719 = vector.extract_strided_slice %682 {offsets = [7, 0], sizes = [1, 64], strides = [1, 1]} : vector<9x64xf32> to vector<1x64xf32>
    %720 = vector.broadcast %719 : vector<1x64xf32> to vector<9x64xf32>
    %721 = arith.mulf %718, %720 : vector<9x64xf32>
    %722 = arith.addf %717, %721 : vector<9x64xf32>
    %c4_301 = arith.constant 4 : index
    %c0_302 = arith.constant 0 : index
    %723 = vector.load %arg13[%c4_301, %c0_302] : memref<36x64xf32, #tpu.memory_space<vmem>>, vector<9x64xf32>
    %724 = vector.extract_strided_slice %682 {offsets = [8, 0], sizes = [1, 64], strides = [1, 1]} : vector<9x64xf32> to vector<1x64xf32>
    %725 = vector.broadcast %724 : vector<1x64xf32> to vector<9x64xf32>
    %726 = arith.mulf %723, %725 : vector<9x64xf32>
    %727 = arith.addf %722, %726 : vector<9x64xf32>
    %728 = vector.broadcast %683 : vector<1x64xf32> to vector<9x64xf32>
    %729 = arith.addf %727, %728 : vector<9x64xf32>
    %c384_303 = arith.constant 384 : index
    %c0_304 = arith.constant 0 : index
    %730 = vector.load %arg2[%c384_303, %c0_304] : memref<704x128xbf16, #tpu.memory_space<vmem>>, vector<64x64xbf16>
    %cst_305 = arith.constant dense<0.000000e+00> : vector<36x64xf32>
    %731 = tpu.matmul %681, %730, %cst_305 {dimension_numbers = #tpu.dot_dimension_numbers<[1], [0], [0], [1], [0, 0, 1, 1], [], []>} : vector<36x64xbf16>, vector<64x64xbf16>, vector<36x64xf32> -> vector<36x64xf32>
    %c904 = arith.constant 904 : index
    %c0_306 = arith.constant 0 : index
    %732 = vector.load %arg3[%c904, %c0_306] : memref<1080x128xf32, #tpu.memory_space<vmem>>, vector<1x64xf32>
    %733 = vector.broadcast %732 : vector<1x64xf32> to vector<36x64xf32>
    %734 = arith.addf %731, %733 : vector<36x64xf32>
    %cst_307 = arith.constant 0.000000e+00 : f32
    %735 = vector.broadcast %cst_307 : f32 to vector<36x64xf32>
    %736 = arith.maximumf %734, %735 : vector<36x64xf32>
    %737 = vector.broadcast %679 : vector<36x1xf32> to vector<36x64xf32>
    %738 = arith.mulf %736, %737 : vector<36x64xf32>
    %c0_308 = arith.constant 0 : index
    %c0_309 = arith.constant 0 : index
    %739 = vector.load %arg14[%c0_308, %c0_309] : memref<36x64xf32, #tpu.memory_space<vmem>>, vector<36x64xf32>
    tpu.vector_store %arg14[%c0_308, %c0_309], %738 {strides = array<i32>} : memref<36x64xf32, #tpu.memory_space<vmem>>, vector<36x64xf32>,
    %c912 = arith.constant 912 : index
    %c0_310 = arith.constant 0 : index
    %740 = vector.load %arg3[%c912, %c0_310] : memref<1080x128xf32, #tpu.memory_space<vmem>>, vector<9x64xf32>
    %c928 = arith.constant 928 : index
    %c0_311 = arith.constant 0 : index
    %741 = vector.load %arg3[%c928, %c0_311] : memref<1080x128xf32, #tpu.memory_space<vmem>>, vector<1x64xf32>
    %c0_312 = arith.constant 0 : index
    %c0_313 = arith.constant 0 : index
    %742 = vector.load %arg14[%c0_312, %c0_313] : memref<36x64xf32, #tpu.memory_space<vmem>>, vector<9x64xf32>
    %743 = vector.extract_strided_slice %740 {offsets = [0, 0], sizes = [1, 64], strides = [1, 1]} : vector<9x64xf32> to vector<1x64xf32>
    %744 = vector.broadcast %743 : vector<1x64xf32> to vector<9x64xf32>
    %745 = arith.mulf %742, %744 : vector<9x64xf32>
    %c9_314 = arith.constant 9 : index
    %c0_315 = arith.constant 0 : index
    %746 = vector.load %arg14[%c9_314, %c0_315] : memref<36x64xf32, #tpu.memory_space<vmem>>, vector<9x64xf32>
    %747 = vector.extract_strided_slice %740 {offsets = [1, 0], sizes = [1, 64], strides = [1, 1]} : vector<9x64xf32> to vector<1x64xf32>
    %748 = vector.broadcast %747 : vector<1x64xf32> to vector<9x64xf32>
    %749 = arith.mulf %746, %748 : vector<9x64xf32>
    %750 = arith.addf %745, %749 : vector<9x64xf32>
    %c1_316 = arith.constant 1 : index
    %c0_317 = arith.constant 0 : index
    %751 = vector.load %arg14[%c1_316, %c0_317] : memref<36x64xf32, #tpu.memory_space<vmem>>, vector<9x64xf32>
    %752 = vector.extract_strided_slice %740 {offsets = [2, 0], sizes = [1, 64], strides = [1, 1]} : vector<9x64xf32> to vector<1x64xf32>
    %753 = vector.broadcast %752 : vector<1x64xf32> to vector<9x64xf32>
    %754 = arith.mulf %751, %753 : vector<9x64xf32>
    %755 = arith.addf %750, %754 : vector<9x64xf32>
    %c18_318 = arith.constant 18 : index
    %c0_319 = arith.constant 0 : index
    %756 = vector.load %arg14[%c18_318, %c0_319] : memref<36x64xf32, #tpu.memory_space<vmem>>, vector<9x64xf32>
    %757 = vector.extract_strided_slice %740 {offsets = [3, 0], sizes = [1, 64], strides = [1, 1]} : vector<9x64xf32> to vector<1x64xf32>
    %758 = vector.broadcast %757 : vector<1x64xf32> to vector<9x64xf32>
    %759 = arith.mulf %756, %758 : vector<9x64xf32>
    %760 = arith.addf %755, %759 : vector<9x64xf32>
    %c27_320 = arith.constant 27 : index
    %c0_321 = arith.constant 0 : index
    %761 = vector.load %arg14[%c27_320, %c0_321] : memref<36x64xf32, #tpu.memory_space<vmem>>, vector<9x64xf32>
    %762 = vector.extract_strided_slice %740 {offsets = [4, 0], sizes = [1, 64], strides = [1, 1]} : vector<9x64xf32> to vector<1x64xf32>
    %763 = vector.broadcast %762 : vector<1x64xf32> to vector<9x64xf32>
    %764 = arith.mulf %761, %763 : vector<9x64xf32>
    %765 = arith.addf %760, %764 : vector<9x64xf32>
    %c19_322 = arith.constant 19 : index
    %c0_323 = arith.constant 0 : index
    %766 = vector.load %arg14[%c19_322, %c0_323] : memref<36x64xf32, #tpu.memory_space<vmem>>, vector<9x64xf32>
    %767 = vector.extract_strided_slice %740 {offsets = [5, 0], sizes = [1, 64], strides = [1, 1]} : vector<9x64xf32> to vector<1x64xf32>
    %768 = vector.broadcast %767 : vector<1x64xf32> to vector<9x64xf32>
    %769 = arith.mulf %766, %768 : vector<9x64xf32>
    %770 = arith.addf %765, %769 : vector<9x64xf32>
    %c3_324 = arith.constant 3 : index
    %c0_325 = arith.constant 0 : index
    %771 = vector.load %arg14[%c3_324, %c0_325] : memref<36x64xf32, #tpu.memory_space<vmem>>, vector<9x64xf32>
    %772 = vector.extract_strided_slice %740 {offsets = [6, 0], sizes = [1, 64], strides = [1, 1]} : vector<9x64xf32> to vector<1x64xf32>
    %773 = vector.broadcast %772 : vector<1x64xf32> to vector<9x64xf32>
    %774 = arith.mulf %771, %773 : vector<9x64xf32>
    %775 = arith.addf %770, %774 : vector<9x64xf32>
    %c12_326 = arith.constant 12 : index
    %c0_327 = arith.constant 0 : index
    %776 = vector.load %arg14[%c12_326, %c0_327] : memref<36x64xf32, #tpu.memory_space<vmem>>, vector<9x64xf32>
    %777 = vector.extract_strided_slice %740 {offsets = [7, 0], sizes = [1, 64], strides = [1, 1]} : vector<9x64xf32> to vector<1x64xf32>
    %778 = vector.broadcast %777 : vector<1x64xf32> to vector<9x64xf32>
    %779 = arith.mulf %776, %778 : vector<9x64xf32>
    %780 = arith.addf %775, %779 : vector<9x64xf32>
    %c4_328 = arith.constant 4 : index
    %c0_329 = arith.constant 0 : index
    %781 = vector.load %arg14[%c4_328, %c0_329] : memref<36x64xf32, #tpu.memory_space<vmem>>, vector<9x64xf32>
    %782 = vector.extract_strided_slice %740 {offsets = [8, 0], sizes = [1, 64], strides = [1, 1]} : vector<9x64xf32> to vector<1x64xf32>
    %783 = vector.broadcast %782 : vector<1x64xf32> to vector<9x64xf32>
    %784 = arith.mulf %781, %783 : vector<9x64xf32>
    %785 = arith.addf %780, %784 : vector<9x64xf32>
    %786 = vector.broadcast %741 : vector<1x64xf32> to vector<9x64xf32>
    %787 = arith.addf %785, %786 : vector<9x64xf32>
    %788 = arith.truncf %729 : vector<9x64xf32> to vector<9x64xbf16>
    %c320 = arith.constant 320 : index
    %c0_330 = arith.constant 0 : index
    %789 = vector.load %arg2[%c320, %c0_330] : memref<704x128xbf16, #tpu.memory_space<vmem>>, vector<64x128xbf16>
    %cst_331 = arith.constant dense<0.000000e+00> : vector<9x128xf32>
    %790 = tpu.matmul %788, %789, %cst_331 {dimension_numbers = #tpu.dot_dimension_numbers<[1], [0], [0], [1], [0, 0, 1, 1], [], []>} : vector<9x64xbf16>, vector<64x128xbf16>, vector<9x128xf32> -> vector<9x128xf32>
    %791 = arith.truncf %787 : vector<9x64xf32> to vector<9x64xbf16>
    %c448 = arith.constant 448 : index
    %c0_332 = arith.constant 0 : index
    %792 = vector.load %arg2[%c448, %c0_332] : memref<704x128xbf16, #tpu.memory_space<vmem>>, vector<64x128xbf16>
    %cst_333 = arith.constant dense<0.000000e+00> : vector<9x128xf32>
    %793 = tpu.matmul %791, %792, %cst_333 {dimension_numbers = #tpu.dot_dimension_numbers<[1], [0], [0], [1], [0, 0, 1, 1], [], []>} : vector<9x64xbf16>, vector<64x128xbf16>, vector<9x128xf32> -> vector<9x128xf32>
    %794 = arith.addf %790, %793 : vector<9x128xf32>
    %c936 = arith.constant 936 : index
    %c0_334 = arith.constant 0 : index
    %795 = vector.load %arg3[%c936, %c0_334] : memref<1080x128xf32, #tpu.memory_space<vmem>>, vector<1x128xf32>
    %796 = vector.broadcast %795 : vector<1x128xf32> to vector<9x128xf32>
    %797 = arith.addf %794, %796 : vector<9x128xf32>
    %cst_335 = arith.constant 0.000000e+00 : f32
    %798 = vector.broadcast %cst_335 : f32 to vector<9x128xf32>
    %799 = arith.maximumf %797, %798 : vector<9x128xf32>
    %c944 = arith.constant 944 : index
    %c0_336 = arith.constant 0 : index
    %800 = vector.load %arg3[%c944, %c0_336] : memref<1080x128xf32, #tpu.memory_space<vmem>>, vector<16x9xf32>
    %cst_337 = arith.constant dense<0.000000e+00> : vector<16x128xf32>
    %801 = tpu.matmul %800, %799, %cst_337 {dimension_numbers = #tpu.dot_dimension_numbers<[1], [0], [0], [1], [0, 0, 1, 1], [], []>} : vector<16x9xf32>, vector<9x128xf32>, vector<16x128xf32> -> vector<16x128xf32>
    %c0_338 = arith.constant 0 : index
    %c0_339 = arith.constant 0 : index
    %802 = vector.load %arg15[%c0_338, %c0_339] : memref<16x128xf32, #tpu.memory_space<vmem>>, vector<16x128xf32>
    tpu.vector_store %arg15[%c0_338, %c0_339], %801 {strides = array<i32>} : memref<16x128xf32, #tpu.memory_space<vmem>>, vector<16x128xf32>,
    %c1064 = arith.constant 1064 : index
    %c0_340 = arith.constant 0 : index
    %803 = vector.load %arg3[%c1064, %c0_340] : memref<1080x128xf32, #tpu.memory_space<vmem>>, vector<16x1xf32>
    %c0_341 = arith.constant 0 : index
    %c0_342 = arith.constant 0 : index
    %804 = vector.load %arg15[%c0_341, %c0_342] : memref<16x128xf32, #tpu.memory_space<vmem>>, vector<16x128xf32>
    %805 = arith.truncf %804 : vector<16x128xf32> to vector<16x128xbf16>
    %c512_343 = arith.constant 512 : index
    %c0_344 = arith.constant 0 : index
    %806 = vector.load %arg2[%c512_343, %c0_344] : memref<704x128xbf16, #tpu.memory_space<vmem>>, vector<128x64xbf16>
    %cst_345 = arith.constant dense<0.000000e+00> : vector<16x64xf32>
    %807 = tpu.matmul %805, %806, %cst_345 {dimension_numbers = #tpu.dot_dimension_numbers<[1], [0], [0], [1], [0, 0, 1, 1], [], []>} : vector<16x128xbf16>, vector<128x64xbf16>, vector<16x64xf32> -> vector<16x64xf32>
    %c960 = arith.constant 960 : index
    %c0_346 = arith.constant 0 : index
    %808 = vector.load %arg3[%c960, %c0_346] : memref<1080x128xf32, #tpu.memory_space<vmem>>, vector<1x64xf32>
    %809 = vector.broadcast %808 : vector<1x64xf32> to vector<16x64xf32>
    %810 = arith.addf %807, %809 : vector<16x64xf32>
    %cst_347 = arith.constant 0.000000e+00 : f32
    %811 = vector.broadcast %cst_347 : f32 to vector<16x64xf32>
    %812 = arith.maximumf %810, %811 : vector<16x64xf32>
    %813 = vector.broadcast %803 : vector<16x1xf32> to vector<16x64xf32>
    %814 = arith.mulf %812, %813 : vector<16x64xf32>
    %c0_348 = arith.constant 0 : index
    %c0_349 = arith.constant 0 : index
    %815 = vector.load %arg16[%c0_348, %c0_349] : memref<16x64xf32, #tpu.memory_space<vmem>>, vector<16x64xf32>
    tpu.vector_store %arg16[%c0_348, %c0_349], %814 {strides = array<i32>} : memref<16x64xf32, #tpu.memory_space<vmem>>, vector<16x64xf32>,
    %c968 = arith.constant 968 : index
    %c0_350 = arith.constant 0 : index
    %816 = vector.load %arg3[%c968, %c0_350] : memref<1080x128xf32, #tpu.memory_space<vmem>>, vector<9x64xf32>
    %c984 = arith.constant 984 : index
    %c0_351 = arith.constant 0 : index
    %817 = vector.load %arg3[%c984, %c0_351] : memref<1080x128xf32, #tpu.memory_space<vmem>>, vector<1x64xf32>
    %c9_352 = arith.constant 9 : index
    %c0_353 = arith.constant 0 : index
    %818 = vector.load %arg16[%c9_352, %c0_353] : memref<16x64xf32, #tpu.memory_space<vmem>>, vector<4x64xf32>
    %819 = vector.extract_strided_slice %816 {offsets = [0, 0], sizes = [1, 64], strides = [1, 1]} : vector<9x64xf32> to vector<1x64xf32>
    %820 = vector.broadcast %819 : vector<1x64xf32> to vector<4x64xf32>
    %821 = arith.mulf %818, %820 : vector<4x64xf32>
    %c6_354 = arith.constant 6 : index
    %c0_355 = arith.constant 0 : index
    %822 = vector.load %arg16[%c6_354, %c0_355] : memref<16x64xf32, #tpu.memory_space<vmem>>, vector<4x64xf32>
    %823 = vector.extract_strided_slice %816 {offsets = [1, 0], sizes = [1, 64], strides = [1, 1]} : vector<9x64xf32> to vector<1x64xf32>
    %824 = vector.broadcast %823 : vector<1x64xf32> to vector<4x64xf32>
    %825 = arith.mulf %822, %824 : vector<4x64xf32>
    %826 = arith.addf %821, %825 : vector<4x64xf32>
    %c10_356 = arith.constant 10 : index
    %c0_357 = arith.constant 0 : index
    %827 = vector.load %arg16[%c10_356, %c0_357] : memref<16x64xf32, #tpu.memory_space<vmem>>, vector<4x64xf32>
    %828 = vector.extract_strided_slice %816 {offsets = [2, 0], sizes = [1, 64], strides = [1, 1]} : vector<9x64xf32> to vector<1x64xf32>
    %829 = vector.broadcast %828 : vector<1x64xf32> to vector<4x64xf32>
    %830 = arith.mulf %827, %829 : vector<4x64xf32>
    %831 = arith.addf %826, %830 : vector<4x64xf32>
    %c3_358 = arith.constant 3 : index
    %c0_359 = arith.constant 0 : index
    %832 = vector.load %arg16[%c3_358, %c0_359] : memref<16x64xf32, #tpu.memory_space<vmem>>, vector<4x64xf32>
    %833 = vector.extract_strided_slice %816 {offsets = [3, 0], sizes = [1, 64], strides = [1, 1]} : vector<9x64xf32> to vector<1x64xf32>
    %834 = vector.broadcast %833 : vector<1x64xf32> to vector<4x64xf32>
    %835 = arith.mulf %832, %834 : vector<4x64xf32>
    %836 = arith.addf %831, %835 : vector<4x64xf32>
    %c0_360 = arith.constant 0 : index
    %c0_361 = arith.constant 0 : index
    %837 = vector.load %arg16[%c0_360, %c0_361] : memref<16x64xf32, #tpu.memory_space<vmem>>, vector<4x64xf32>
    %838 = vector.extract_strided_slice %816 {offsets = [4, 0], sizes = [1, 64], strides = [1, 1]} : vector<9x64xf32> to vector<1x64xf32>
    %839 = vector.broadcast %838 : vector<1x64xf32> to vector<4x64xf32>
    %840 = arith.mulf %837, %839 : vector<4x64xf32>
    %841 = arith.addf %836, %840 : vector<4x64xf32>
    %c4_362 = arith.constant 4 : index
    %c0_363 = arith.constant 0 : index
    %842 = vector.load %arg16[%c4_362, %c0_363] : memref<16x64xf32, #tpu.memory_space<vmem>>, vector<4x64xf32>
    %843 = vector.extract_strided_slice %816 {offsets = [5, 0], sizes = [1, 64], strides = [1, 1]} : vector<9x64xf32> to vector<1x64xf32>
    %844 = vector.broadcast %843 : vector<1x64xf32> to vector<4x64xf32>
    %845 = arith.mulf %842, %844 : vector<4x64xf32>
    %846 = arith.addf %841, %845 : vector<4x64xf32>
    %c11_364 = arith.constant 11 : index
    %c0_365 = arith.constant 0 : index
    %847 = vector.load %arg16[%c11_364, %c0_365] : memref<16x64xf32, #tpu.memory_space<vmem>>, vector<4x64xf32>
    %848 = vector.extract_strided_slice %816 {offsets = [6, 0], sizes = [1, 64], strides = [1, 1]} : vector<9x64xf32> to vector<1x64xf32>
    %849 = vector.broadcast %848 : vector<1x64xf32> to vector<4x64xf32>
    %850 = arith.mulf %847, %849 : vector<4x64xf32>
    %851 = arith.addf %846, %850 : vector<4x64xf32>
    %c8_366 = arith.constant 8 : index
    %c0_367 = arith.constant 0 : index
    %852 = vector.load %arg16[%c8_366, %c0_367] : memref<16x64xf32, #tpu.memory_space<vmem>>, vector<4x64xf32>
    %853 = vector.extract_strided_slice %816 {offsets = [7, 0], sizes = [1, 64], strides = [1, 1]} : vector<9x64xf32> to vector<1x64xf32>
    %854 = vector.broadcast %853 : vector<1x64xf32> to vector<4x64xf32>
    %855 = arith.mulf %852, %854 : vector<4x64xf32>
    %856 = arith.addf %851, %855 : vector<4x64xf32>
    %c12_368 = arith.constant 12 : index
    %c0_369 = arith.constant 0 : index
    %857 = vector.load %arg16[%c12_368, %c0_369] : memref<16x64xf32, #tpu.memory_space<vmem>>, vector<4x64xf32>
    %858 = vector.extract_strided_slice %816 {offsets = [8, 0], sizes = [1, 64], strides = [1, 1]} : vector<9x64xf32> to vector<1x64xf32>
    %859 = vector.broadcast %858 : vector<1x64xf32> to vector<4x64xf32>
    %860 = arith.mulf %857, %859 : vector<4x64xf32>
    %861 = arith.addf %856, %860 : vector<4x64xf32>
    %c6_370 = arith.constant 6 : index
    %c0_371 = arith.constant 0 : index
    %862 = vector.load %arg16[%c6_370, %c0_371] : memref<16x64xf32, #tpu.memory_space<vmem>>, vector<4x64xf32>
    %863 = vector.extract_strided_slice %816 {offsets = [0, 0], sizes = [1, 64], strides = [1, 1]} : vector<9x64xf32> to vector<1x64xf32>
    %864 = vector.broadcast %863 : vector<1x64xf32> to vector<4x64xf32>
    %865 = arith.mulf %862, %864 : vector<4x64xf32>
    %c10_372 = arith.constant 10 : index
    %c0_373 = arith.constant 0 : index
    %866 = vector.load %arg16[%c10_372, %c0_373] : memref<16x64xf32, #tpu.memory_space<vmem>>, vector<4x64xf32>
    %867 = vector.extract_strided_slice %816 {offsets = [1, 0], sizes = [1, 64], strides = [1, 1]} : vector<9x64xf32> to vector<1x64xf32>
    %868 = vector.broadcast %867 : vector<1x64xf32> to vector<4x64xf32>
    %869 = arith.mulf %866, %868 : vector<4x64xf32>
    %870 = arith.addf %865, %869 : vector<4x64xf32>
    %c7 = arith.constant 7 : index
    %c0_374 = arith.constant 0 : index
    %871 = vector.load %arg16[%c7, %c0_374] : memref<16x64xf32, #tpu.memory_space<vmem>>, vector<4x64xf32>
    %872 = vector.extract_strided_slice %816 {offsets = [2, 0], sizes = [1, 64], strides = [1, 1]} : vector<9x64xf32> to vector<1x64xf32>
    %873 = vector.broadcast %872 : vector<1x64xf32> to vector<4x64xf32>
    %874 = arith.mulf %871, %873 : vector<4x64xf32>
    %875 = arith.addf %870, %874 : vector<4x64xf32>
    %c0_375 = arith.constant 0 : index
    %c0_376 = arith.constant 0 : index
    %876 = vector.load %arg16[%c0_375, %c0_376] : memref<16x64xf32, #tpu.memory_space<vmem>>, vector<4x64xf32>
    %877 = vector.extract_strided_slice %816 {offsets = [3, 0], sizes = [1, 64], strides = [1, 1]} : vector<9x64xf32> to vector<1x64xf32>
    %878 = vector.broadcast %877 : vector<1x64xf32> to vector<4x64xf32>
    %879 = arith.mulf %876, %878 : vector<4x64xf32>
    %880 = arith.addf %875, %879 : vector<4x64xf32>
    %c4_377 = arith.constant 4 : index
    %c0_378 = arith.constant 0 : index
    %881 = vector.load %arg16[%c4_377, %c0_378] : memref<16x64xf32, #tpu.memory_space<vmem>>, vector<4x64xf32>
    %882 = vector.extract_strided_slice %816 {offsets = [4, 0], sizes = [1, 64], strides = [1, 1]} : vector<9x64xf32> to vector<1x64xf32>
    %883 = vector.broadcast %882 : vector<1x64xf32> to vector<4x64xf32>
    %884 = arith.mulf %881, %883 : vector<4x64xf32>
    %885 = arith.addf %880, %884 : vector<4x64xf32>
    %c1_379 = arith.constant 1 : index
    %c0_380 = arith.constant 0 : index
    %886 = vector.load %arg16[%c1_379, %c0_380] : memref<16x64xf32, #tpu.memory_space<vmem>>, vector<4x64xf32>
    %887 = vector.extract_strided_slice %816 {offsets = [5, 0], sizes = [1, 64], strides = [1, 1]} : vector<9x64xf32> to vector<1x64xf32>
    %888 = vector.broadcast %887 : vector<1x64xf32> to vector<4x64xf32>
    %889 = arith.mulf %886, %888 : vector<4x64xf32>
    %890 = arith.addf %885, %889 : vector<4x64xf32>
    %c8_381 = arith.constant 8 : index
    %c0_382 = arith.constant 0 : index
    %891 = vector.load %arg16[%c8_381, %c0_382] : memref<16x64xf32, #tpu.memory_space<vmem>>, vector<4x64xf32>
    %892 = vector.extract_strided_slice %816 {offsets = [6, 0], sizes = [1, 64], strides = [1, 1]} : vector<9x64xf32> to vector<1x64xf32>
    %893 = vector.broadcast %892 : vector<1x64xf32> to vector<4x64xf32>
    %894 = arith.mulf %891, %893 : vector<4x64xf32>
    %895 = arith.addf %890, %894 : vector<4x64xf32>
    %c12_383 = arith.constant 12 : index
    %c0_384 = arith.constant 0 : index
    %896 = vector.load %arg16[%c12_383, %c0_384] : memref<16x64xf32, #tpu.memory_space<vmem>>, vector<4x64xf32>
    %897 = vector.extract_strided_slice %816 {offsets = [7, 0], sizes = [1, 64], strides = [1, 1]} : vector<9x64xf32> to vector<1x64xf32>
    %898 = vector.broadcast %897 : vector<1x64xf32> to vector<4x64xf32>
    %899 = arith.mulf %896, %898 : vector<4x64xf32>
    %900 = arith.addf %895, %899 : vector<4x64xf32>
    %c9_385 = arith.constant 9 : index
    %c0_386 = arith.constant 0 : index
    %901 = vector.load %arg16[%c9_385, %c0_386] : memref<16x64xf32, #tpu.memory_space<vmem>>, vector<4x64xf32>
    %902 = vector.extract_strided_slice %816 {offsets = [8, 0], sizes = [1, 64], strides = [1, 1]} : vector<9x64xf32> to vector<1x64xf32>
    %903 = vector.broadcast %902 : vector<1x64xf32> to vector<4x64xf32>
    %904 = arith.mulf %901, %903 : vector<4x64xf32>
    %905 = arith.addf %900, %904 : vector<4x64xf32>
    %c3_387 = arith.constant 3 : index
    %c0_388 = arith.constant 0 : index
    %906 = vector.load %arg16[%c3_387, %c0_388] : memref<16x64xf32, #tpu.memory_space<vmem>>, vector<4x64xf32>
    %907 = vector.extract_strided_slice %816 {offsets = [0, 0], sizes = [1, 64], strides = [1, 1]} : vector<9x64xf32> to vector<1x64xf32>
    %908 = vector.broadcast %907 : vector<1x64xf32> to vector<4x64xf32>
    %909 = arith.mulf %906, %908 : vector<4x64xf32>
    %c0_389 = arith.constant 0 : index
    %c0_390 = arith.constant 0 : index
    %910 = vector.load %arg16[%c0_389, %c0_390] : memref<16x64xf32, #tpu.memory_space<vmem>>, vector<4x64xf32>
    %911 = vector.extract_strided_slice %816 {offsets = [1, 0], sizes = [1, 64], strides = [1, 1]} : vector<9x64xf32> to vector<1x64xf32>
    %912 = vector.broadcast %911 : vector<1x64xf32> to vector<4x64xf32>
    %913 = arith.mulf %910, %912 : vector<4x64xf32>
    %914 = arith.addf %909, %913 : vector<4x64xf32>
    %c4_391 = arith.constant 4 : index
    %c0_392 = arith.constant 0 : index
    %915 = vector.load %arg16[%c4_391, %c0_392] : memref<16x64xf32, #tpu.memory_space<vmem>>, vector<4x64xf32>
    %916 = vector.extract_strided_slice %816 {offsets = [2, 0], sizes = [1, 64], strides = [1, 1]} : vector<9x64xf32> to vector<1x64xf32>
    %917 = vector.broadcast %916 : vector<1x64xf32> to vector<4x64xf32>
    %918 = arith.mulf %915, %917 : vector<4x64xf32>
    %919 = arith.addf %914, %918 : vector<4x64xf32>
    %c11_393 = arith.constant 11 : index
    %c0_394 = arith.constant 0 : index
    %920 = vector.load %arg16[%c11_393, %c0_394] : memref<16x64xf32, #tpu.memory_space<vmem>>, vector<4x64xf32>
    %921 = vector.extract_strided_slice %816 {offsets = [3, 0], sizes = [1, 64], strides = [1, 1]} : vector<9x64xf32> to vector<1x64xf32>
    %922 = vector.broadcast %921 : vector<1x64xf32> to vector<4x64xf32>
    %923 = arith.mulf %920, %922 : vector<4x64xf32>
    %924 = arith.addf %919, %923 : vector<4x64xf32>
    %c8_395 = arith.constant 8 : index
    %c0_396 = arith.constant 0 : index
    %925 = vector.load %arg16[%c8_395, %c0_396] : memref<16x64xf32, #tpu.memory_space<vmem>>, vector<4x64xf32>
    %926 = vector.extract_strided_slice %816 {offsets = [4, 0], sizes = [1, 64], strides = [1, 1]} : vector<9x64xf32> to vector<1x64xf32>
    %927 = vector.broadcast %926 : vector<1x64xf32> to vector<4x64xf32>
    %928 = arith.mulf %925, %927 : vector<4x64xf32>
    %929 = arith.addf %924, %928 : vector<4x64xf32>
    %c12_397 = arith.constant 12 : index
    %c0_398 = arith.constant 0 : index
    %930 = vector.load %arg16[%c12_397, %c0_398] : memref<16x64xf32, #tpu.memory_space<vmem>>, vector<4x64xf32>
    %931 = vector.extract_strided_slice %816 {offsets = [5, 0], sizes = [1, 64], strides = [1, 1]} : vector<9x64xf32> to vector<1x64xf32>
    %932 = vector.broadcast %931 : vector<1x64xf32> to vector<4x64xf32>
    %933 = arith.mulf %930, %932 : vector<4x64xf32>
    %934 = arith.addf %929, %933 : vector<4x64xf32>
    %c5_399 = arith.constant 5 : index
    %c0_400 = arith.constant 0 : index
    %935 = vector.load %arg16[%c5_399, %c0_400] : memref<16x64xf32, #tpu.memory_space<vmem>>, vector<4x64xf32>
    %936 = vector.extract_strided_slice %816 {offsets = [6, 0], sizes = [1, 64], strides = [1, 1]} : vector<9x64xf32> to vector<1x64xf32>
    %937 = vector.broadcast %936 : vector<1x64xf32> to vector<4x64xf32>
    %938 = arith.mulf %935, %937 : vector<4x64xf32>
    %939 = arith.addf %934, %938 : vector<4x64xf32>
    %c2 = arith.constant 2 : index
    %c0_401 = arith.constant 0 : index
    %940 = vector.load %arg16[%c2, %c0_401] : memref<16x64xf32, #tpu.memory_space<vmem>>, vector<4x64xf32>
    %941 = vector.extract_strided_slice %816 {offsets = [7, 0], sizes = [1, 64], strides = [1, 1]} : vector<9x64xf32> to vector<1x64xf32>
    %942 = vector.broadcast %941 : vector<1x64xf32> to vector<4x64xf32>
    %943 = arith.mulf %940, %942 : vector<4x64xf32>
    %944 = arith.addf %939, %943 : vector<4x64xf32>
    %c6_402 = arith.constant 6 : index
    %c0_403 = arith.constant 0 : index
    %945 = vector.load %arg16[%c6_402, %c0_403] : memref<16x64xf32, #tpu.memory_space<vmem>>, vector<4x64xf32>
    %946 = vector.extract_strided_slice %816 {offsets = [8, 0], sizes = [1, 64], strides = [1, 1]} : vector<9x64xf32> to vector<1x64xf32>
    %947 = vector.broadcast %946 : vector<1x64xf32> to vector<4x64xf32>
    %948 = arith.mulf %945, %947 : vector<4x64xf32>
    %949 = arith.addf %944, %948 : vector<4x64xf32>
    %c0_404 = arith.constant 0 : index
    %c0_405 = arith.constant 0 : index
    %950 = vector.load %arg16[%c0_404, %c0_405] : memref<16x64xf32, #tpu.memory_space<vmem>>, vector<4x64xf32>
    %951 = vector.extract_strided_slice %816 {offsets = [0, 0], sizes = [1, 64], strides = [1, 1]} : vector<9x64xf32> to vector<1x64xf32>
    %952 = vector.broadcast %951 : vector<1x64xf32> to vector<4x64xf32>
    %953 = arith.mulf %950, %952 : vector<4x64xf32>
    %c4_406 = arith.constant 4 : index
    %c0_407 = arith.constant 0 : index
    %954 = vector.load %arg16[%c4_406, %c0_407] : memref<16x64xf32, #tpu.memory_space<vmem>>, vector<4x64xf32>
    %955 = vector.extract_strided_slice %816 {offsets = [1, 0], sizes = [1, 64], strides = [1, 1]} : vector<9x64xf32> to vector<1x64xf32>
    %956 = vector.broadcast %955 : vector<1x64xf32> to vector<4x64xf32>
    %957 = arith.mulf %954, %956 : vector<4x64xf32>
    %958 = arith.addf %953, %957 : vector<4x64xf32>
    %c1_408 = arith.constant 1 : index
    %c0_409 = arith.constant 0 : index
    %959 = vector.load %arg16[%c1_408, %c0_409] : memref<16x64xf32, #tpu.memory_space<vmem>>, vector<4x64xf32>
    %960 = vector.extract_strided_slice %816 {offsets = [2, 0], sizes = [1, 64], strides = [1, 1]} : vector<9x64xf32> to vector<1x64xf32>
    %961 = vector.broadcast %960 : vector<1x64xf32> to vector<4x64xf32>
    %962 = arith.mulf %959, %961 : vector<4x64xf32>
    %963 = arith.addf %958, %962 : vector<4x64xf32>
    %c8_410 = arith.constant 8 : index
    %c0_411 = arith.constant 0 : index
    %964 = vector.load %arg16[%c8_410, %c0_411] : memref<16x64xf32, #tpu.memory_space<vmem>>, vector<4x64xf32>
    %965 = vector.extract_strided_slice %816 {offsets = [3, 0], sizes = [1, 64], strides = [1, 1]} : vector<9x64xf32> to vector<1x64xf32>
    %966 = vector.broadcast %965 : vector<1x64xf32> to vector<4x64xf32>
    %967 = arith.mulf %964, %966 : vector<4x64xf32>
    %968 = arith.addf %963, %967 : vector<4x64xf32>
    %c12_412 = arith.constant 12 : index
    %c0_413 = arith.constant 0 : index
    %969 = vector.load %arg16[%c12_412, %c0_413] : memref<16x64xf32, #tpu.memory_space<vmem>>, vector<4x64xf32>
    %970 = vector.extract_strided_slice %816 {offsets = [4, 0], sizes = [1, 64], strides = [1, 1]} : vector<9x64xf32> to vector<1x64xf32>
    %971 = vector.broadcast %970 : vector<1x64xf32> to vector<4x64xf32>
    %972 = arith.mulf %969, %971 : vector<4x64xf32>
    %973 = arith.addf %968, %972 : vector<4x64xf32>
    %c9_414 = arith.constant 9 : index
    %c0_415 = arith.constant 0 : index
    %974 = vector.load %arg16[%c9_414, %c0_415] : memref<16x64xf32, #tpu.memory_space<vmem>>, vector<4x64xf32>
    %975 = vector.extract_strided_slice %816 {offsets = [5, 0], sizes = [1, 64], strides = [1, 1]} : vector<9x64xf32> to vector<1x64xf32>
    %976 = vector.broadcast %975 : vector<1x64xf32> to vector<4x64xf32>
    %977 = arith.mulf %974, %976 : vector<4x64xf32>
    %978 = arith.addf %973, %977 : vector<4x64xf32>
    %c2_416 = arith.constant 2 : index
    %c0_417 = arith.constant 0 : index
    %979 = vector.load %arg16[%c2_416, %c0_417] : memref<16x64xf32, #tpu.memory_space<vmem>>, vector<4x64xf32>
    %980 = vector.extract_strided_slice %816 {offsets = [6, 0], sizes = [1, 64], strides = [1, 1]} : vector<9x64xf32> to vector<1x64xf32>
    %981 = vector.broadcast %980 : vector<1x64xf32> to vector<4x64xf32>
    %982 = arith.mulf %979, %981 : vector<4x64xf32>
    %983 = arith.addf %978, %982 : vector<4x64xf32>
    %c6_418 = arith.constant 6 : index
    %c0_419 = arith.constant 0 : index
    %984 = vector.load %arg16[%c6_418, %c0_419] : memref<16x64xf32, #tpu.memory_space<vmem>>, vector<4x64xf32>
    %985 = vector.extract_strided_slice %816 {offsets = [7, 0], sizes = [1, 64], strides = [1, 1]} : vector<9x64xf32> to vector<1x64xf32>
    %986 = vector.broadcast %985 : vector<1x64xf32> to vector<4x64xf32>
    %987 = arith.mulf %984, %986 : vector<4x64xf32>
    %988 = arith.addf %983, %987 : vector<4x64xf32>
    %c3_420 = arith.constant 3 : index
    %c0_421 = arith.constant 0 : index
    %989 = vector.load %arg16[%c3_420, %c0_421] : memref<16x64xf32, #tpu.memory_space<vmem>>, vector<4x64xf32>
    %990 = vector.extract_strided_slice %816 {offsets = [8, 0], sizes = [1, 64], strides = [1, 1]} : vector<9x64xf32> to vector<1x64xf32>
    %991 = vector.broadcast %990 : vector<1x64xf32> to vector<4x64xf32>
    %992 = arith.mulf %989, %991 : vector<4x64xf32>
    %993 = arith.addf %988, %992 : vector<4x64xf32>
    %994 = tpu.concatenate %861, %905, %949, %993 in 0 : vector<4x64xf32>, vector<4x64xf32>, vector<4x64xf32>, vector<4x64xf32> -> vector<16x64xf32>
    %995 = vector.broadcast %817 : vector<1x64xf32> to vector<16x64xf32>
    %996 = arith.addf %994, %995 : vector<16x64xf32>
    %997 = vector.extract_strided_slice %804 {offsets = [0, 0], sizes = [16, 64], strides = [1, 1]} : vector<16x128xf32> to vector<16x64xf32>
    %c992 = arith.constant 992 : index
    %c0_422 = arith.constant 0 : index
    %998 = vector.load %arg3[%c992, %c0_422] : memref<1080x128xf32, #tpu.memory_space<vmem>>, vector<64x128xf32>
    %cst_423 = arith.constant dense<0.000000e+00> : vector<16x128xf32>
    %999 = tpu.matmul %997, %998, %cst_423 {dimension_numbers = #tpu.dot_dimension_numbers<[1], [0], [0], [1], [0, 0, 1, 1], [], []>} : vector<16x64xf32>, vector<64x128xf32>, vector<16x128xf32> -> vector<16x128xf32>
    %1000 = arith.truncf %996 : vector<16x64xf32> to vector<16x64xbf16>
    %c640 = arith.constant 640 : index
    %c0_424 = arith.constant 0 : index
    %1001 = vector.load %arg2[%c640, %c0_424] : memref<704x128xbf16, #tpu.memory_space<vmem>>, vector<64x128xbf16>
    %cst_425 = arith.constant dense<0.000000e+00> : vector<16x128xf32>
    %1002 = tpu.matmul %1000, %1001, %cst_425 {dimension_numbers = #tpu.dot_dimension_numbers<[1], [0], [0], [1], [0, 0, 1, 1], [], []>} : vector<16x64xbf16>, vector<64x128xbf16>, vector<16x128xf32> -> vector<16x128xf32>
    %1003 = arith.addf %999, %1002 : vector<16x128xf32>
    %c1056 = arith.constant 1056 : index
    %c0_426 = arith.constant 0 : index
    %1004 = vector.load %arg3[%c1056, %c0_426] : memref<1080x128xf32, #tpu.memory_space<vmem>>, vector<1x128xf32>
    %1005 = vector.broadcast %1004 : vector<1x128xf32> to vector<16x128xf32>
    %1006 = arith.addf %1003, %1005 : vector<16x128xf32>
    %cst_427 = arith.constant 0.000000e+00 : f32
    %1007 = vector.broadcast %cst_427 : f32 to vector<16x128xf32>
    %1008 = arith.maximumf %1006, %1007 : vector<16x128xf32>
    %1009 = vector.broadcast %803 : vector<16x1xf32> to vector<16x128xf32>
    %1010 = arith.mulf %1008, %1009 : vector<16x128xf32>
    %c0_428 = arith.constant 0 : index
    %c0_429 = arith.constant 0 : index
    %1011 = vector.load %arg17[%c0_428, %c0_429] : memref<16x128xf32, #tpu.memory_space<vmem>>, vector<16x128xf32>
    tpu.vector_store %arg17[%c0_428, %c0_429], %1010 {strides = array<i32>} : memref<16x128xf32, #tpu.memory_space<vmem>>, vector<16x128xf32>,
    %c12_430 = arith.constant 12 : index
    %c0_431 = arith.constant 0 : index
    %1012 = vector.load %arg17[%c12_430, %c0_431] : memref<16x128xf32, #tpu.memory_space<vmem>>, vector<1x128xf32>
    %c9_432 = arith.constant 9 : index
    %c0_433 = arith.constant 0 : index
    %1013 = vector.load %arg17[%c9_432, %c0_433] : memref<16x128xf32, #tpu.memory_space<vmem>>, vector<1x128xf32>
    %c6_434 = arith.constant 6 : index
    %c0_435 = arith.constant 0 : index
    %1014 = vector.load %arg17[%c6_434, %c0_435] : memref<16x128xf32, #tpu.memory_space<vmem>>, vector<1x128xf32>
    %c3_436 = arith.constant 3 : index
    %c0_437 = arith.constant 0 : index
    %1015 = vector.load %arg17[%c3_436, %c0_437] : memref<16x128xf32, #tpu.memory_space<vmem>>, vector<1x128xf32>
    %1016 = tpu.concatenate %1012, %1013, %1014, %1015 in 0 : vector<1x128xf32>, vector<1x128xf32>, vector<1x128xf32>, vector<1x128xf32> -> vector<4x128xf32>
    %c0_438 = arith.constant 0 : index
    %c0_439 = arith.constant 0 : index
    %c0_440 = arith.constant 0 : index
    %1017 = vector.load %arg4[%c0_438, %c0_439, %c0_440] : memref<1x4x128xf32, #tpu.memory_space<vmem>>, vector<1x4x128xf32>
    %1018 = vector.shape_cast %1017 : vector<1x4x128xf32> to vector<4x128xf32>
    %1019 = vector.shape_cast %1016 : vector<4x128xf32> to vector<1x4x128xf32>
    tpu.vector_store %arg4[%c0_438, %c0_439, %c0_440], %1019 {strides = array<i32>} : memref<1x4x128xf32, #tpu.memory_space<vmem>>, vector<1x4x128xf32>,
    return
  }
  func.func @transform_0(%arg0: i32) -> (i32, i32, i32) {
    %c0_i32 = arith.constant 0 : i32
    %c0_i32_0 = arith.constant 0 : i32
    %c0_i32_1 = arith.constant 0 : i32
    return %arg0, %c0_i32, %c0_i32_0 : i32, i32, i32
  }
  func.func @transform_1(%arg0: i32) -> (i32, i32) {
    %c0_i32 = arith.constant 0 : i32
    %c0_i32_0 = arith.constant 0 : i32
    %c0_i32_1 = arith.constant 0 : i32
    return %c0_i32, %c0_i32_0 : i32, i32
  }
  func.func @transform_2(%arg0: i32) -> (i32, i32) {
    %c0_i32 = arith.constant 0 : i32
    %c0_i32_0 = arith.constant 0 : i32
    %c0_i32_1 = arith.constant 0 : i32
    return %c0_i32, %c0_i32_0 : i32, i32
  }
  func.func @transform_3(%arg0: i32) -> (i32, i32, i32) {
    %c0_i32 = arith.constant 0 : i32
    %c0_i32_0 = arith.constant 0 : i32
    %c0_i32_1 = arith.constant 0 : i32
    return %arg0, %c0_i32, %c0_i32_0 : i32, i32, i32
  }
}

</mosaic_0001>

<llo_original>
// kernel: forward.1
$region0: #{forward.1}
  #allocation0 [shape = 'u32[]', space=smem, size = 0x4, offset = 0x4, fixed_abs, tag = 'smem constant byte address 0x4 - core index']
  #allocation1 [shape = 'u32[144,128]{1,0:T(1,128)}', space=vmem, size = 0x12000, scoped, tag = 'internal scratch']
  #allocation2 [shape = 'f32[324,16]{1,0:T(8,128)}', space=vmem, size = 0x29000, scoped, tag = 'scratch operand']
  #allocation3 [shape = 'f32[324,16]{1,0:T(8,128)}', space=vmem, size = 0x29000, scoped, tag = 'scratch operand']
  #allocation4 [shape = 'f32[100,32]{1,0:T(8,128)}', space=vmem, size = 0xd000, scoped, tag = 'scratch operand']
  #allocation5 [shape = 'f32[100,16]{1,0:T(8,128)}', space=vmem, size = 0xd000, scoped, tag = 'scratch operand']
  #allocation6 [shape = 'f32[100,32]{1,0:T(8,128)}', space=vmem, size = 0xd000, scoped, tag = 'scratch operand']
  #allocation7 [shape = 'f32[100,32]{1,0:T(8,128)}', space=vmem, size = 0xd000, scoped, tag = 'scratch operand']
  #allocation8 [shape = 'f32[36,64]{1,0:T(8,128)}', space=vmem, size = 0x5000, scoped, tag = 'scratch operand']
  #allocation9 [shape = 'f32[36,32]{1,0:T(8,128)}', space=vmem, size = 0x5000, scoped, tag = 'scratch operand']
  #allocation10 [shape = 'f32[36,64]{1,0:T(8,128)}', space=vmem, size = 0x5000, scoped, tag = 'scratch operand']
  #allocation11 [shape = 'f32[36,64]{1,0:T(8,128)}', space=vmem, size = 0x5000, scoped, tag = 'scratch operand']
  #allocation12 [shape = 'f32[16,128]{1,0:T(8,128)}', space=vmem, size = 0x2000, scoped, tag = 'scratch operand']
  #allocation13 [shape = 'f32[16,64]{1,0:T(8,128)}', space=vmem, size = 0x2000, scoped, tag = 'scratch operand']
  #allocation14 [shape = 'f32[16,128]{1,0:T(8,128)}', space=vmem, size = 0x2000, scoped, tag = 'scratch operand']
  %s0 = inlined_call_operand.vmem [shape: bf16[2,324,27], index: 0, kind: input, shape index: {}]
  %s1 = inlined_call_operand.vmem [shape: bf16[704,128], index: 1, kind: input, shape index: {}]
  %s2 = inlined_call_operand.vmem [shape: f32[1080,128], index: 2, kind: input, shape index: {}]
  %s3 = inlined_call_operand.hbm [shape: f32[2,4,128], index: 3, kind: output, shape index: {}]
  %s4 = sld [smem:[#allocation0]]
  $region45: #{forward.1} parent=0
    _
  %s6 = ssub.s32 1, %s4
  %s7 = scalar_select 0, %s6, %s4
  $region1: #{forward.1} parent=0
    #allocation15 [shape = 'u8[4096]{0}', space=vmem, size = 0x1000, scoped, tag = 'output window, operand 0']
    #allocation16 [shape = 's32[2]{0}', space=sflag, size = 0x8, scoped, tag = 'scoped memory for forward.1']
    %8 = vsyncpa [#allocation16], 0
    %s9 = scalar_lea.sflag [#allocation16], 1
    %10 = vsyncpa %s9, 0
    loop: start=0, step=1, limit=4
    $region2: #{forward.1} parent=1 // loop_pre_header
      _
    $region3: #{forward.1} parent=1 // loop_header
      %s12 = sphi 0, %s16
      %p13 = scmp.ge.s32.totalorder %s12, 4
      %s22 = sphi 0, %s24
      %s25 = sphi 0, %s22
      %s26 = sphi 0, %s25
      %s42 = sphi 0, %s26
      %s46 = sphi 0, %s46
      %s48 = sphi 0, %s46
      %s49 = sphi 0, %s48
      %s63 = sphi 0, %s49
      %s67 = sphi 0, %s67
      %s69 = sphi 0, %s67
      %s70 = sphi 0, %s69
      %s84 = sphi 0, %s70
      %s90 = sphi 0, %s92
      %s93 = sphi 0, %s90
      %s94 = sphi 0, %s93
      %s110 = sphi 0, %s94
    $region4: #{forward.1} parent=1 // loop_header_branch
      %15 = sbr.rel (%p13) target = $region8
    $region5: #{forward.1} parent=1 // loop_body
      %s17 = ssub.s32 %s12, 1
      %s18 = ssub.s32 %s12, 2
      %s19 = sadd.s32 %s12, 1
      %s20 = ssub.s32 %s12, %s19
      %p21 = scmp.eq.s32.totalorder %s20, 0
      %s23 = sadd.s32 %s22, 1
      %s24 = scalar_select %p21, %s22, %s23
      %p27 = pneg %p21
      %p28 = scmp.eq.s32.totalorder %s12, 1
      %p29 = por %p27, %p28
      %p30 = scmp.ne.s32.totalorder %s22, %s25
      %p31 = scmp.eq.s32.totalorder %s12, 0
      %p32 = por %p30, %p31
      %p33 = scmp.ne.s32.totalorder %s22, %s25
      %p34 = scmp.eq.s32.totalorder %s17, 1
      %p35 = por %p33, %p34
      %p36 = scmp.ne.s32.totalorder %s25, %s26
      %p37 = scmp.eq.s32.totalorder %s17, 0
      %p38 = por %p36, %p37
      %p39 = scmp.ne.s32.totalorder %s25, %s26
      %p40 = scmp.eq.s32.totalorder %s18, 1
      %p41 = por %p39, %p40
      %p43 = scmp.ne.s32.totalorder %s26, %s42
      %p44 = scmp.eq.s32.totalorder %s18, 0
      %p45 = por %p43, %p44
      %s47 = sadd.s32 %s46, 1
      %p50 = scmp.eq.s32.totalorder %s12, 1
      %p51 = scmp.ne.s32.totalorder %s46, %s48
      %p52 = scmp.eq.s32.totalorder %s12, 0
      %p53 = por %p51, %p52
      %p54 = scmp.ne.s32.totalorder %s46, %s48
      %p55 = scmp.eq.s32.totalorder %s17, 1
      %p56 = por %p54, %p55
      %p57 = scmp.ne.s32.totalorder %s48, %s49
      %p58 = scmp.eq.s32.totalorder %s17, 0
      %p59 = por %p57, %p58
      %p60 = scmp.ne.s32.totalorder %s48, %s49
      %p61 = scmp.eq.s32.totalorder %s18, 1
      %p62 = por %p60, %p61
      %p64 = scmp.ne.s32.totalorder %s49, %s63
      %p65 = scmp.eq.s32.totalorder %s18, 0
      %p66 = por %p64, %p65
      %s68 = sadd.s32 %s67, 1
      %p71 = scmp.eq.s32.totalorder %s12, 1
      %p72 = scmp.ne.s32.totalorder %s67, %s69
      %p73 = scmp.eq.s32.totalorder %s12, 0
      %p74 = por %p72, %p73
      %p75 = scmp.ne.s32.totalorder %s67, %s69
      %p76 = scmp.eq.s32.totalorder %s17, 1
      %p77 = por %p75, %p76
      %p78 = scmp.ne.s32.totalorder %s69, %s70
      %p79 = scmp.eq.s32.totalorder %s17, 0
      %p80 = por %p78, %p79
      %p81 = scmp.ne.s32.totalorder %s69, %s70
      %p82 = scmp.eq.s32.totalorder %s18, 1
      %p83 = por %p81, %p82
      %p85 = scmp.ne.s32.totalorder %s70, %s84
      %p86 = scmp.eq.s32.totalorder %s18, 0
      %p87 = por %p85, %p86
      %s88 = ssub.s32 %s12, %s19
      %p89 = scmp.eq.s32.totalorder %s88, 0
      %s91 = sadd.s32 %s90, 1
      %s92 = scalar_select %p89, %s90, %s91
      %p95 = pneg %p89
      %p96 = scmp.eq.s32.totalorder %s12, 1
      %p97 = por %p95, %p96
      %p98 = scmp.ne.s32.totalorder %s90, %s93
      %p99 = scmp.eq.s32.totalorder %s12, 0
      %p100 = por %p98, %p99
      %p101 = scmp.ne.s32.totalorder %s90, %s93
      %p102 = scmp.eq.s32.totalorder %s17, 1
      %p103 = por %p101, %p102
      %p104 = scmp.ne.s32.totalorder %s93, %s94
      %p105 = scmp.eq.s32.totalorder %s17, 0
      %p106 = por %p104, %p105
      %p107 = scmp.ne.s32.totalorder %s93, %s94
      %p108 = scmp.eq.s32.totalorder %s18, 1
      %p109 = por %p107, %p108
      %p111 = scmp.ne.s32.totalorder %s94, %s110
      %p112 = scmp.eq.s32.totalorder %s18, 0
      %p113 = por %p111, %p112
      %p114 = scmp.le.s32.totalorder 1, %s12
      %p115 = scmp.lt.s32.totalorder %s12, 3
      %p116 = pnand %p114, %p115
      %p117 = pneg %p116
      // Predicated region
      $region9: #{forward.1} parent=5 // pred_check
        _
      $region10: #{forward.1} parent=5 // pred_check_branch
        %119 = sbr.rel (%p116) target = $region12
      $region11: #{forward.1} parent=5 // pred_region
        %s120 = ssub.s32 %s12, 1
        // Predicated region
        $region13: #{forward.1} parent=11 // pred_check
          %p121 = pneg %p59
        $region14: #{forward.1} parent=11 // pred_check_branch
          %123 = sbr.rel (%p121) target = $region16
        $region15: #{forward.1} parent=11 // pred_region
          _
        $region16: #{forward.1} parent=11 // pred_fallthru
          _
        // Predicated region
        $region17: #{forward.1} parent=11 // pred_check
          %p124 = pneg %p80
        $region18: #{forward.1} parent=11 // pred_check_branch
          %126 = sbr.rel (%p124) target = $region20
        $region19: #{forward.1} parent=11 // pred_region
          _
        $region20: #{forward.1} parent=11 // pred_fallthru
          _
      $region12: #{forward.1} parent=5 // pred_fallthru
        _
      %p127 = scmp.lt.s32.totalorder %s12, 2
      // Predicated region
      $region21: #{forward.1} parent=5 // pred_check
        %p128 = pneg %p127
      $region22: #{forward.1} parent=5 // pred_check_branch
        %130 = sbr.rel (%p128) target = $region24
      $region23: #{forward.1} parent=5 // pred_region
        // Predicated region
        $region25: #{forward.1} parent=23 // pred_check
          %p131 = pneg %p32
        $region26: #{forward.1} parent=23 // pred_check_branch
          %133 = sbr.rel (%p131) target = $region28
        $region27: #{forward.1} parent=23 // pred_region
          %p134 = scmp.lt.s32.totalorder %s12, 1
          %s135 = scalar_select %p134, %s12, 1
          %s136 = smul.addr %s135, 41
          %s137 = smul.addr %s136, 4
          %s138 = scalar_lea.vmem %s0, %s137
        $region28: #{forward.1} parent=23 // pred_fallthru
          _
      $region24: #{forward.1} parent=5 // pred_fallthru
        _
      %p139 = scmp.le.s32.totalorder 1, %s12
      %p140 = scmp.lt.s32.totalorder %s12, 3
      %p141 = pnand %p139, %p140
      %p142 = pneg %p141
      // Predicated region
      $region29: #{forward.1} parent=5 // pred_check
        _
      $region30: #{forward.1} parent=5 // pred_check_branch
        %144 = sbr.rel (%p141) target = $region32
      $region31: #{forward.1} parent=5 // pred_region
        %s145 = ssub.s32 %s12, 1
        %p146 = scmp.lt.s32.totalorder %s17, 1
        %s147 = scalar_select %p146, %s17, 1
        %s148 = smul.addr %s147, 41
        %s149 = smul.addr %s148, 4
        %s150 = scalar_lea.vmem %s0, %s149
        %p151 = pneg %p38
        %p152 = pneg %p35
        %p153 = pneg %p59
        %p154 = pneg %p56
        %p155 = pneg %p80
        %p156 = pneg %p77
        %p157 = pneg %p106
        %p158 = pneg %p103
        %s159 = sand.u32 %s93, 1
        %s160 = scalar_lea.sflag [#allocation16], %s159
        %s161 = sand.u32 %s93, 1
        %s162 = smul.addr %s161, 4
        %s163 = scalar_lea.vmem [#allocation15], %s162
        %p164 = scmp.lt.s32.totalorder %s17, 1
        %s165 = scalar_select %p164, %s17, 1
        %s166 = smul.addr %s165, 41
        %s167 = smul.addr %s166, 4
        %s168 = scalar_lea.vmem %s0, %s167
        %v170 = vld [vmem:[%s168] sm:$0xf]
        %v171 = vld [vmem:[%s168 + $0x4] sm:$0xf]
        %v172 = vld [vmem:[%s168 + $0x8] sm:$0xf]
        %v173 = vld [vmem:[%s168 + $0xc] sm:$0xf]
        %v174 = vld [vmem:[%s168 + $0x10] sm:$0xf]
        %v175 = vld [vmem:[%s168 + $0x14] sm:$0xf]
        %v176 = vld [vmem:[%s168 + $0x18] sm:$0xf]
        %v177 = vld [vmem:[%s168 + $0x1c] sm:$0xf]
        %v178 = vld [vmem:[%s168 + $0x20] sm:$0xf]
        %v179 = vld [vmem:[%s168 + $0x24] sm:$0xf]
        %v180 = vld [vmem:[%s168 + $0x28] sm:$0xf]
        %v181 = vld [vmem:[%s168 + $0x2c] sm:$0xf]
        %v182 = vld [vmem:[%s168 + $0x30] sm:$0xf]
        %v183 = vld [vmem:[%s168 + $0x34] sm:$0xf]
        %v184 = vld [vmem:[%s168 + $0x38] sm:$0xf]
        %v185 = vld [vmem:[%s168 + $0x3c] sm:$0xf]
        %v186 = vld [vmem:[%s168 + $0x40] sm:$0xf]
        %v187 = vld [vmem:[%s168 + $0x44] sm:$0xf]
        %v188 = vld [vmem:[%s168 + $0x48] sm:$0xf]
        %v189 = vld [vmem:[%s168 + $0x4c] sm:$0xf]
        %v190 = vld [vmem:[%s168 + $0x50] sm:$0xf]
        %v191 = vld [vmem:[%s168 + $0x54] sm:$0xf]
        %v192 = vld [vmem:[%s168 + $0x58] sm:$0xf]
        %v193 = vld [vmem:[%s168 + $0x5c] sm:$0xf]
        %v194 = vld [vmem:[%s168 + $0x60] sm:$0xf]
        %v195 = vld [vmem:[%s168 + $0x64] sm:$0xf]
        %v196 = vld [vmem:[%s168 + $0x68] sm:$0xf]
        %v197 = vld [vmem:[%s168 + $0x6c] sm:$0xf]
        %v198 = vld [vmem:[%s168 + $0x70] sm:$0xf]
        %v199 = vld [vmem:[%s168 + $0x74] sm:$0xf]
        %v200 = vld [vmem:[%s168 + $0x78] sm:$0xf]
        %v201 = vld [vmem:[%s168 + $0x7c] sm:$0xf]
        %v202 = vld [vmem:[%s168 + $0x80] sm:$0xf]
        %v203 = vld [vmem:[%s168 + $0x84] sm:$0xf]
        %v204 = vld [vmem:[%s168 + $0x88] sm:$0xf]
        %v205 = vld [vmem:[%s168 + $0x8c] sm:$0xf]
        %v206 = vld [vmem:[%s168 + $0x90] sm:$0xf]
        %v207 = vld [vmem:[%s168 + $0x94] sm:$0xf]
        %v208 = vld [vmem:[%s168 + $0x98] sm:$0xf]
        %v209 = vld [vmem:[%s168 + $0x9c] sm:$0xf]
        %v210 = vld [vmem:[%s168 + $0xa0] sm:$0x3]
        %v211 = vld [vmem:[%s1] sm:$0xf]
        %v212 = vld [vmem:[%s1 + $0x4] sm:$0xf]
        %v213 = vld [vmem:[%s1 + $0x8] sm:$0xf]
        %v214 = vld [vmem:[%s1 + $0xc] sm:$0x3]
        %v215 = vld [vmem:[%s2] sm:$0x1]
        %v216 = vlaneseq
        %v217 = vshrl.u32 %v216, 7
        %v218 = vsub.s32 0, %v217
        %v219 = vrot.slane %v215, %v218
        %v261 = vunpack.c.l.b16 %v170
        %v262 = vunpack.c.l.b16 %v171
        %v263 = vunpack.c.l.b16 %v172
        %v264 = vunpack.c.l.b16 %v173
        %v265 = vunpack.c.l.b16 %v174
        %v266 = vunpack.c.l.b16 %v175
        %v267 = vunpack.c.l.b16 %v176
        %v268 = vunpack.c.l.b16 %v177
        %v269 = vunpack.c.l.b16 %v178
        %v270 = vunpack.c.l.b16 %v179
        %v271 = vunpack.c.l.b16 %v180
        %v272 = vunpack.c.l.b16 %v181
        %v273 = vunpack.c.l.b16 %v182
        %v274 = vunpack.c.l.b16 %v183
        %v275 = vunpack.c.l.b16 %v184
        %v276 = vunpack.c.l.b16 %v185
        %v277 = vunpack.c.l.b16 %v186
        %v278 = vunpack.c.l.b16 %v187
        %v279 = vunpack.c.l.b16 %v188
        %v280 = vunpack.c.l.b16 %v189
        %v281 = vunpack.c.l.b16 %v190
        %v282 = vunpack.c.l.b16 %v191
        %v283 = vunpack.c.l.b16 %v192
        %v284 = vunpack.c.l.b16 %v193
        %v285 = vunpack.c.l.b16 %v194
        %v286 = vunpack.c.l.b16 %v195
        %v287 = vunpack.c.l.b16 %v196
        %v288 = vunpack.c.l.b16 %v197
        %v289 = vunpack.c.l.b16 %v198
        %v290 = vunpack.c.l.b16 %v199
        %v291 = vunpack.c.l.b16 %v200
        %v292 = vunpack.c.l.b16 %v201
        %v293 = vunpack.c.l.b16 %v202
        %v294 = vunpack.c.l.b16 %v203
        %v295 = vunpack.c.l.b16 %v204
        %v296 = vunpack.c.l.b16 %v205
        %v297 = vunpack.c.l.b16 %v206
        %v298 = vunpack.c.l.b16 %v207
        %v299 = vunpack.c.l.b16 %v208
        %v300 = vunpack.c.l.b16 %v209
        %v301 = vunpack.c.l.b16 %v210
        %v302 = vpack.c.b16 %v262, %v261
        %v303 = vpack.c.b16 %v264, %v263
        %v304 = vpack.c.b16 %v266, %v265
        %v305 = vpack.c.b16 %v268, %v267
        %v306 = vpack.c.b16 %v270, %v269
        %v307 = vpack.c.b16 %v272, %v271
        %v308 = vpack.c.b16 %v274, %v273
        %v309 = vpack.c.b16 %v276, %v275
        %v310 = vpack.c.b16 %v278, %v277
        %v311 = vpack.c.b16 %v280, %v279
        %v312 = vpack.c.b16 %v282, %v281
        %v313 = vpack.c.b16 %v284, %v283
        %v314 = vpack.c.b16 %v286, %v285
        %v315 = vpack.c.b16 %v288, %v287
        %v316 = vpack.c.b16 %v290, %v289
        %v317 = vpack.c.b16 %v292, %v291
        %v318 = vpack.c.b16 %v294, %v293
        %v319 = vpack.c.b16 %v296, %v295
        %v320 = vpack.c.b16 %v298, %v297
        %v321 = vpack.c.b16 %v300, %v299
        %v322 = vpack.c.b16 %v301, %v301
        %v327 = vunpack.c.l.b16 %v211
        %v328 = vunpack.c.l.b16 %v212
        %v329 = vunpack.c.l.b16 %v213
        %v330 = vunpack.c.l.b16 %v214
        %v331 = vpack.c.b16 %v328, %v327
        %v332 = vpack.c.b16 %v330, %v329
        %vm334 = vcmask 220160
        %v336 = vsel %vm334, %v302, 0
        %v339 = vsel %vm334, %v303, 0
        %v342 = vsel %vm334, %v304, 0
        %v345 = vsel %vm334, %v305, 0
        %v348 = vsel %vm334, %v306, 0
        %v351 = vsel %vm334, %v307, 0
        %v354 = vsel %vm334, %v308, 0
        %v357 = vsel %vm334, %v309, 0
        %v360 = vsel %vm334, %v310, 0
        %v363 = vsel %vm334, %v311, 0
        %v366 = vsel %vm334, %v312, 0
        %v369 = vsel %vm334, %v313, 0
        %v372 = vsel %vm334, %v314, 0
        %v375 = vsel %vm334, %v315, 0
        %v378 = vsel %vm334, %v316, 0
        %v381 = vsel %vm334, %v317, 0
        %v384 = vsel %vm334, %v318, 0
        %v387 = vsel %vm334, %v319, 0
        %v390 = vsel %vm334, %v320, 0
        %v393 = vsel %vm334, %v321, 0
        %v396 = vsel %vm334, %v322, 0
        %vm398 = vcmask 1044480
        %vm399 = vcmask 1045504
        %v400 = vsel %vm398, 4294967295, 65535
        %v401 = vsel %vm399, %v400, 0
        %v403 = vand.u32 %v332, %v401
        %405 = vmatprep.subr.bf16.mxu0 0
        %406 = vmatpush1.bf16.msra.mxu0 %v331
        %407 = vmatprep.subr.bf16.mxu0 0
        %408 = vmatpush1.bf16.msra.mxu0 %v403
        %409 = vmatprep.subr.bf16.mxu0 0
        %410 = vmatpush1.bf16.msra.mxu0 0
        %411 = vmatprep.subr.bf16.mxu0 0
        %412 = vmatpush1.bf16.msra.mxu0 0
        %413 = vmatprep.subr.bf16.mxu0 0
        %414 = vmatpush1.bf16.msra.mxu0 0
        %415 = vmatprep.subr.bf16.mxu0 0
        %416 = vmatpush1.bf16.msra.mxu0 0
        %417 = vmatprep.subr.bf16.mxu0 0
        %418 = vmatpush1.bf16.msra.mxu0 0
        %419 = vmatprep.subr.bf16.mxu0 0
        %420 = vmatpush1.bf16.msra.mxu0 0
        %421 = vmatprep.subr.bf16.mxu0 0
        %422 = vmatpush1.bf16.msra.mxu0 0
        %423 = vmatprep.subr.bf16.mxu0 0
        %424 = vmatpush1.bf16.msra.mxu0 0
        %425 = vmatprep.subr.bf16.mxu0 0
        %426 = vmatpush1.bf16.msra.mxu0 0
        %427 = vmatprep.subr.bf16.mxu0 0
        %428 = vmatpush1.bf16.msra.mxu0 0
        %429 = vmatprep.subr.bf16.mxu0 0
        %430 = vmatpush1.bf16.msra.mxu0 0
        %431 = vmatprep.subr.bf16.mxu0 0
        %432 = vmatpush1.bf16.msra.mxu0 0
        %433 = vmatprep.subr.bf16.mxu0 0
        %434 = vmatpush1.bf16.msra.mxu0 0
        %435 = vmatprep.subr.bf16.mxu0 0
        %436 = vmatpush1.bf16.msra.mxu0 0
        %437 = vmatprep.mubr.bf16.mxu0 0
        %438 = vmatmul.mubr.bf16.gmra.mrb[0].mxu0 %v336
        %v439 = vpop.f32.mrb[0].mxu0
        %v440 = vadd.f32 %v219, %v439
        %v441 = vpop.f32.mrb[0].mxu0
        %v442 = vpop.f32.mrb[0].mxu0
        %v443 = vadd.f32 %v219, %v442
        %v444 = vpop.f32.mrb[0].mxu0
        %445 = vmatprep.mubr.bf16.mxu0 0
        %446 = vmatmul.mubr.bf16.gmra.mrb[0].mxu0 %v339
        %v447 = vpop.f32.mrb[0].mxu0
        %v448 = vadd.f32 %v219, %v447
        %v449 = vpop.f32.mrb[0].mxu0
        %v450 = vpop.f32.mrb[0].mxu0
        %v451 = vadd.f32 %v219, %v450
        %v452 = vpop.f32.mrb[0].mxu0
        %453 = vmatprep.mubr.bf16.mxu0 0
        %454 = vmatmul.mubr.bf16.gmra.mrb[0].mxu0 %v342
        %v455 = vpop.f32.mrb[0].mxu0
        %v456 = vadd.f32 %v219, %v455
        %v457 = vpop.f32.mrb[0].mxu0
        %v458 = vpop.f32.mrb[0].mxu0
        %v459 = vadd.f32 %v219, %v458
        %v460 = vpop.f32.mrb[0].mxu0
        %461 = vmatprep.mubr.bf16.mxu0 0
        %462 = vmatmul.mubr.bf16.gmra.mrb[0].mxu0 %v345
        %v463 = vpop.f32.mrb[0].mxu0
        %v464 = vadd.f32 %v219, %v463
        %v465 = vpop.f32.mrb[0].mxu0
        %v466 = vpop.f32.mrb[0].mxu0
        %v467 = vadd.f32 %v219, %v466
        %v468 = vpop.f32.mrb[0].mxu0
        %469 = vmatprep.mubr.bf16.mxu0 0
        %470 = vmatmul.mubr.bf16.gmra.mrb[0].mxu0 %v348
        %v471 = vpop.f32.mrb[0].mxu0
        %v472 = vadd.f32 %v219, %v471
        %v473 = vpop.f32.mrb[0].mxu0
        %v474 = vpop.f32.mrb[0].mxu0
        %v475 = vadd.f32 %v219, %v474
        %v476 = vpop.f32.mrb[0].mxu0
        %477 = vmatprep.mubr.bf16.mxu0 0
        %478 = vmatmul.mubr.bf16.gmra.mrb[0].mxu0 %v351
        %v479 = vpop.f32.mrb[0].mxu0
        %v480 = vadd.f32 %v219, %v479
        %v481 = vpop.f32.mrb[0].mxu0
        %v482 = vpop.f32.mrb[0].mxu0
        %v483 = vadd.f32 %v219, %v482
        %v484 = vpop.f32.mrb[0].mxu0
        %485 = vmatprep.mubr.bf16.mxu0 0
        %486 = vmatmul.mubr.bf16.gmra.mrb[0].mxu0 %v354
        %v487 = vpop.f32.mrb[0].mxu0
        %v488 = vadd.f32 %v219, %v487
        %v489 = vpop.f32.mrb[0].mxu0
        %v490 = vpop.f32.mrb[0].mxu0
        %v491 = vadd.f32 %v219, %v490
        %v492 = vpop.f32.mrb[0].mxu0
        %493 = vmatprep.mubr.bf16.mxu0 0
        %494 = vmatmul.mubr.bf16.gmra.mrb[0].mxu0 %v357
        %v495 = vpop.f32.mrb[0].mxu0
        %v496 = vadd.f32 %v219, %v495
        %v497 = vpop.f32.mrb[0].mxu0
        %v498 = vpop.f32.mrb[0].mxu0
        %v499 = vadd.f32 %v219, %v498
        %v500 = vpop.f32.mrb[0].mxu0
        %501 = vmatprep.mubr.bf16.mxu0 0
        %502 = vmatmul.mubr.bf16.gmra.mrb[0].mxu0 %v360
        %v503 = vpop.f32.mrb[0].mxu0
        %v504 = vadd.f32 %v219, %v503
        %v505 = vpop.f32.mrb[0].mxu0
        %v506 = vpop.f32.mrb[0].mxu0
        %v507 = vadd.f32 %v219, %v506
        %v508 = vpop.f32.mrb[0].mxu0
        %509 = vmatprep.mubr.bf16.mxu0 0
        %510 = vmatmul.mubr.bf16.gmra.mrb[0].mxu0 %v363
        %v511 = vpop.f32.mrb[0].mxu0
        %v512 = vadd.f32 %v219, %v511
        %v513 = vpop.f32.mrb[0].mxu0
        %v514 = vpop.f32.mrb[0].mxu0
        %v515 = vadd.f32 %v219, %v514
        %v516 = vpop.f32.mrb[0].mxu0
        %517 = vmatprep.mubr.bf16.mxu0 0
        %518 = vmatmul.mubr.bf16.gmra.mrb[0].mxu0 %v366
        %v519 = vpop.f32.mrb[0].mxu0
        %v520 = vadd.f32 %v219, %v519
        %v521 = vpop.f32.mrb[0].mxu0
        %v522 = vpop.f32.mrb[0].mxu0
        %v523 = vadd.f32 %v219, %v522
        %v524 = vpop.f32.mrb[0].mxu0
        %525 = vmatprep.mubr.bf16.mxu0 0
        %526 = vmatmul.mubr.bf16.gmra.mrb[0].mxu0 %v369
        %v527 = vpop.f32.mrb[0].mxu0
        %v528 = vadd.f32 %v219, %v527
        %v529 = vpop.f32.mrb[0].mxu0
        %v530 = vpop.f32.mrb[0].mxu0
        %v531 = vadd.f32 %v219, %v530
        %v532 = vpop.f32.mrb[0].mxu0
        %533 = vmatprep.mubr.bf16.mxu0 0
        %534 = vmatmul.mubr.bf16.gmra.mrb[0].mxu0 %v372
        %v535 = vpop.f32.mrb[0].mxu0
        %v536 = vadd.f32 %v219, %v535
        %v537 = vpop.f32.mrb[0].mxu0
        %v538 = vpop.f32.mrb[0].mxu0
        %v539 = vadd.f32 %v219, %v538
        %v540 = vpop.f32.mrb[0].mxu0
        %541 = vmatprep.mubr.bf16.mxu0 0
        %542 = vmatmul.mubr.bf16.gmra.mrb[0].mxu0 %v375
        %v543 = vpop.f32.mrb[0].mxu0
        %v544 = vadd.f32 %v219, %v543
        %v545 = vpop.f32.mrb[0].mxu0
        %v546 = vpop.f32.mrb[0].mxu0
        %v547 = vadd.f32 %v219, %v546
        %v548 = vpop.f32.mrb[0].mxu0
        %549 = vmatprep.mubr.bf16.mxu0 0
        %550 = vmatmul.mubr.bf16.gmra.mrb[0].mxu0 %v378
        %v551 = vpop.f32.mrb[0].mxu0
        %v552 = vadd.f32 %v219, %v551
        %v553 = vpop.f32.mrb[0].mxu0
        %v554 = vpop.f32.mrb[0].mxu0
        %v555 = vadd.f32 %v219, %v554
        %v556 = vpop.f32.mrb[0].mxu0
        %557 = vmatprep.mubr.bf16.mxu0 0
        %558 = vmatmul.mubr.bf16.gmra.mrb[0].mxu0 %v381
        %v559 = vpop.f32.mrb[0].mxu0
        %v560 = vadd.f32 %v219, %v559
        %v561 = vpop.f32.mrb[0].mxu0
        %v562 = vpop.f32.mrb[0].mxu0
        %v563 = vadd.f32 %v219, %v562
        %v564 = vpop.f32.mrb[0].mxu0
        %565 = vmatprep.mubr.bf16.mxu0 0
        %566 = vmatmul.mubr.bf16.gmra.mrb[0].mxu0 %v384
        %v567 = vpop.f32.mrb[0].mxu0
        %v568 = vadd.f32 %v219, %v567
        %v569 = vpop.f32.mrb[0].mxu0
        %v570 = vpop.f32.mrb[0].mxu0
        %v571 = vadd.f32 %v219, %v570
        %v572 = vpop.f32.mrb[0].mxu0
        %573 = vmatprep.mubr.bf16.mxu0 0
        %574 = vmatmul.mubr.bf16.gmra.mrb[0].mxu0 %v387
        %v575 = vpop.f32.mrb[0].mxu0
        %v576 = vadd.f32 %v219, %v575
        %v577 = vpop.f32.mrb[0].mxu0
        %v578 = vpop.f32.mrb[0].mxu0
        %v579 = vadd.f32 %v219, %v578
        %v580 = vpop.f32.mrb[0].mxu0
        %581 = vmatprep.mubr.bf16.mxu0 0
        %582 = vmatmul.mubr.bf16.gmra.mrb[0].mxu0 %v390
        %v583 = vpop.f32.mrb[0].mxu0
        %v584 = vadd.f32 %v219, %v583
        %v585 = vpop.f32.mrb[0].mxu0
        %v586 = vpop.f32.mrb[0].mxu0
        %v587 = vadd.f32 %v219, %v586
        %v588 = vpop.f32.mrb[0].mxu0
        %589 = vmatprep.mubr.bf16.mxu0 0
        %590 = vmatmul.mubr.bf16.gmra.mrb[0].mxu0 %v393
        %v591 = vpop.f32.mrb[0].mxu0
        %v592 = vadd.f32 %v219, %v591
        %v593 = vpop.f32.mrb[0].mxu0
        %v594 = vpop.f32.mrb[0].mxu0
        %v595 = vadd.f32 %v219, %v594
        %v596 = vpop.f32.mrb[0].mxu0
        %597 = vmatprep.mubr.bf16.mxu0 0
        %598 = vmatmul.mubr.bf16.gmra.mrb[0].mxu0 %v396
        %v599 = vpop.f32.mrb[0].mxu0
        %v600 = vadd.f32 %v219, %v599
        %v601 = vpop.f32.mrb[0].mxu0
        %v602 = vpop.f32.mrb[0].mxu0
        %v603 = vpop.f32.mrb[0].mxu0
        %604 = vdwg.mxu0
        %v605 = vmax.f32 %v440, 0.0
        %v606 = vmax.f32 %v443, 0.0
        %v607 = vmax.f32 %v448, 0.0
        %v608 = vmax.f32 %v451, 0.0
        %v609 = vmax.f32 %v456, 0.0
        %v610 = vmax.f32 %v459, 0.0
        %v611 = vmax.f32 %v464, 0.0
        %v612 = vmax.f32 %v467, 0.0
        %v613 = vmax.f32 %v472, 0.0
        %v614 = vmax.f32 %v475, 0.0
        %v615 = vmax.f32 %v480, 0.0
        %v616 = vmax.f32 %v483, 0.0
        %v617 = vmax.f32 %v488, 0.0
        %v618 = vmax.f32 %v491, 0.0
        %v619 = vmax.f32 %v496, 0.0
        %v620 = vmax.f32 %v499, 0.0
        %v621 = vmax.f32 %v504, 0.0
        %v622 = vmax.f32 %v507, 0.0
        %v623 = vmax.f32 %v512, 0.0
        %v624 = vmax.f32 %v515, 0.0
        %v625 = vmax.f32 %v520, 0.0
        %v626 = vmax.f32 %v523, 0.0
        %v627 = vmax.f32 %v528, 0.0
        %v628 = vmax.f32 %v531, 0.0
        %v629 = vmax.f32 %v536, 0.0
        %v630 = vmax.f32 %v539, 0.0
        %v631 = vmax.f32 %v544, 0.0
        %v632 = vmax.f32 %v547, 0.0
        %v633 = vmax.f32 %v552, 0.0
        %v634 = vmax.f32 %v555, 0.0
        %v635 = vmax.f32 %v560, 0.0
        %v636 = vmax.f32 %v563, 0.0
        %v637 = vmax.f32 %v568, 0.0
        %v638 = vmax.f32 %v571, 0.0
        %v639 = vmax.f32 %v576, 0.0
        %v640 = vmax.f32 %v579, 0.0
        %v641 = vmax.f32 %v584, 0.0
        %v642 = vmax.f32 %v587, 0.0
        %v643 = vmax.f32 %v592, 0.0
        %v644 = vmax.f32 %v595, 0.0
        %v645 = vmax.f32 %v600, 0.0
        %v646 = vld [vmem:[%s2 + $0x8] sm:$0xff]
        %v647 = vld [vmem:[%s2 + $0x10] sm:$0xff]
        %v648 = vld [vmem:[%s2 + $0x18] sm:$0xff]
        %v649 = vld [vmem:[%s2 + $0x20] sm:$0xff]
        %v650 = vld [vmem:[%s2 + $0x28] sm:$0xff]
        %v651 = vld [vmem:[%s2 + $0x30] sm:$0xff]
        %v652 = vld [vmem:[%s2 + $0x38] sm:$0xff]
        %v653 = vld [vmem:[%s2 + $0x40] sm:$0xff]
        %v654 = vld [vmem:[%s2 + $0x48] sm:$0xff]
        %v655 = vld [vmem:[%s2 + $0x50] sm:$0xff]
        %v656 = vld [vmem:[%s2 + $0x58] sm:$0xff]
        %v657 = vld [vmem:[%s2 + $0x60] sm:$0xff]
        %v658 = vld [vmem:[%s2 + $0x68] sm:$0xff]
        %v659 = vld [vmem:[%s2 + $0x70] sm:$0xff]
        %v660 = vld [vmem:[%s2 + $0x78] sm:$0xff]
        %v661 = vld [vmem:[%s2 + $0x80] sm:$0xff]
        %v662 = vld [vmem:[%s2 + $0x88] sm:$0xff]
        %v663 = vld [vmem:[%s2 + $0x90] sm:$0xff]
        %v664 = vld [vmem:[%s2 + $0x98] sm:$0xff]
        %v665 = vld [vmem:[%s2 + $0xa0] sm:$0xff]
        %v666 = vld [vmem:[%s2 + $0xa8] sm:$0xff]
        %v667 = vld [vmem:[%s2 + $0xb0] sm:$0xff]
        %v668 = vld [vmem:[%s2 + $0xb8] sm:$0xff]
        %v669 = vld [vmem:[%s2 + $0xc0] sm:$0xff]
        %v670 = vld [vmem:[%s2 + $0xc8] sm:$0xff]
        %v671 = vld [vmem:[%s2 + $0xd0] sm:$0xff]
        %v672 = vld [vmem:[%s2 + $0xd8] sm:$0xff]
        %v673 = vld [vmem:[%s2 + $0xe0] sm:$0xff]
        %v674 = vld [vmem:[%s2 + $0xe8] sm:$0xff]
        %v675 = vld [vmem:[%s2 + $0xf0] sm:$0xff]
        %v676 = vld [vmem:[%s2 + $0xf8] sm:$0xff]
        %v677 = vld [vmem:[%s2 + $0x100] sm:$0xff]
        %v678 = vld [vmem:[%s2 + $0x108] sm:$0xff]
        %v679 = vld [vmem:[%s2 + $0x110] sm:$0xff]
        %v680 = vld [vmem:[%s2 + $0x118] sm:$0xff]
        %v681 = vld [vmem:[%s2 + $0x120] sm:$0xff]
        %v682 = vld [vmem:[%s2 + $0x128] sm:$0xff]
        %v683 = vld [vmem:[%s2 + $0x130] sm:$0xff]
        %v684 = vld [vmem:[%s2 + $0x138] sm:$0xff]
        %v685 = vld [vmem:[%s2 + $0x140] sm:$0xff]
        %v686 = vld [vmem:[%s2 + $0x148] sm:$0xf]
        %688 = vset.pattern.permute.xlu0 0
        %689 = vperm.xlu0 %688, %v646
        %v690 = vpop.permute.xlu0 %689
        %693 = vset.pattern.permute.xlu0 0
        %694 = vperm.xlu0 %693, %v647
        %v695 = vpop.permute.xlu0 %694
        %698 = vset.pattern.permute.xlu0 0
        %699 = vperm.xlu0 %698, %v648
        %v700 = vpop.permute.xlu0 %699
        %703 = vset.pattern.permute.xlu0 0
        %704 = vperm.xlu0 %703, %v649
        %v705 = vpop.permute.xlu0 %704
        %708 = vset.pattern.permute.xlu0 0
        %709 = vperm.xlu0 %708, %v650
        %v710 = vpop.permute.xlu0 %709
        %713 = vset.pattern.permute.xlu0 0
        %714 = vperm.xlu0 %713, %v651
        %v715 = vpop.permute.xlu0 %714
        %718 = vset.pattern.permute.xlu0 0
        %719 = vperm.xlu0 %718, %v652
        %v720 = vpop.permute.xlu0 %719
        %723 = vset.pattern.permute.xlu0 0
        %724 = vperm.xlu0 %723, %v653
        %v725 = vpop.permute.xlu0 %724
        %728 = vset.pattern.permute.xlu0 0
        %729 = vperm.xlu0 %728, %v654
        %v730 = vpop.permute.xlu0 %729
        %733 = vset.pattern.permute.xlu0 0
        %734 = vperm.xlu0 %733, %v655
        %v735 = vpop.permute.xlu0 %734
        %738 = vset.pattern.permute.xlu0 0
        %739 = vperm.xlu0 %738, %v656
        %v740 = vpop.permute.xlu0 %739
        %743 = vset.pattern.permute.xlu0 0
        %744 = vperm.xlu0 %743, %v657
        %v745 = vpop.permute.xlu0 %744
        %748 = vset.pattern.permute.xlu0 0
        %749 = vperm.xlu0 %748, %v658
        %v750 = vpop.permute.xlu0 %749
        %753 = vset.pattern.permute.xlu0 0
        %754 = vperm.xlu0 %753, %v659
        %v755 = vpop.permute.xlu0 %754
        %758 = vset.pattern.permute.xlu0 0
        %759 = vperm.xlu0 %758, %v660
        %v760 = vpop.permute.xlu0 %759
        %763 = vset.pattern.permute.xlu0 0
        %764 = vperm.xlu0 %763, %v661
        %v765 = vpop.permute.xlu0 %764
        %768 = vset.pattern.permute.xlu0 0
        %769 = vperm.xlu0 %768, %v662
        %v770 = vpop.permute.xlu0 %769
        %773 = vset.pattern.permute.xlu0 0
        %774 = vperm.xlu0 %773, %v663
        %v775 = vpop.permute.xlu0 %774
        %778 = vset.pattern.permute.xlu0 0
        %779 = vperm.xlu0 %778, %v664
        %v780 = vpop.permute.xlu0 %779
        %783 = vset.pattern.permute.xlu0 0
        %784 = vperm.xlu0 %783, %v665
        %v785 = vpop.permute.xlu0 %784
        %788 = vset.pattern.permute.xlu0 0
        %789 = vperm.xlu0 %788, %v666
        %v790 = vpop.permute.xlu0 %789
        %793 = vset.pattern.permute.xlu0 0
        %794 = vperm.xlu0 %793, %v667
        %v795 = vpop.permute.xlu0 %794
        %798 = vset.pattern.permute.xlu0 0
        %799 = vperm.xlu0 %798, %v668
        %v800 = vpop.permute.xlu0 %799
        %803 = vset.pattern.permute.xlu0 0
        %804 = vperm.xlu0 %803, %v669
        %v805 = vpop.permute.xlu0 %804
        %808 = vset.pattern.permute.xlu0 0
        %809 = vperm.xlu0 %808, %v670
        %v810 = vpop.permute.xlu0 %809
        %813 = vset.pattern.permute.xlu0 0
        %814 = vperm.xlu0 %813, %v671
        %v815 = vpop.permute.xlu0 %814
        %818 = vset.pattern.permute.xlu0 0
        %819 = vperm.xlu0 %818, %v672
        %v820 = vpop.permute.xlu0 %819
        %823 = vset.pattern.permute.xlu0 0
        %824 = vperm.xlu0 %823, %v673
        %v825 = vpop.permute.xlu0 %824
        %828 = vset.pattern.permute.xlu0 0
        %829 = vperm.xlu0 %828, %v674
        %v830 = vpop.permute.xlu0 %829
        %833 = vset.pattern.permute.xlu0 0
        %834 = vperm.xlu0 %833, %v675
        %v835 = vpop.permute.xlu0 %834
        %838 = vset.pattern.permute.xlu0 0
        %839 = vperm.xlu0 %838, %v676
        %v840 = vpop.permute.xlu0 %839
        %843 = vset.pattern.permute.xlu0 0
        %844 = vperm.xlu0 %843, %v677
        %v845 = vpop.permute.xlu0 %844
        %848 = vset.pattern.permute.xlu0 0
        %849 = vperm.xlu0 %848, %v678
        %v850 = vpop.permute.xlu0 %849
        %853 = vset.pattern.permute.xlu0 0
        %854 = vperm.xlu0 %853, %v679
        %v855 = vpop.permute.xlu0 %854
        %858 = vset.pattern.permute.xlu0 0
        %859 = vperm.xlu0 %858, %v680
        %v860 = vpop.permute.xlu0 %859
        %863 = vset.pattern.permute.xlu0 0
        %864 = vperm.xlu0 %863, %v681
        %v865 = vpop.permute.xlu0 %864
        %868 = vset.pattern.permute.xlu0 0
        %869 = vperm.xlu0 %868, %v682
        %v870 = vpop.permute.xlu0 %869
        %873 = vset.pattern.permute.xlu0 0
        %874 = vperm.xlu0 %873, %v683
        %v875 = vpop.permute.xlu0 %874
        %878 = vset.pattern.permute.xlu0 0
        %879 = vperm.xlu0 %878, %v684
        %v880 = vpop.permute.xlu0 %879
        %883 = vset.pattern.permute.xlu0 0
        %884 = vperm.xlu0 %883, %v685
        %v885 = vpop.permute.xlu0 %884
        %888 = vset.pattern.permute.xlu0 0
        %889 = vperm.xlu0 %888, %v686
        %v890 = vpop.permute.xlu0 %889
        %v892 = vmul.f32 %v605, %v690
        %v893 = vmul.f32 %v606, %v695
        %v894 = vmul.f32 %v607, %v700
        %v895 = vmul.f32 %v608, %v705
        %v896 = vmul.f32 %v609, %v710
        %v897 = vmul.f32 %v610, %v715
        %v898 = vmul.f32 %v611, %v720
        %v899 = vmul.f32 %v612, %v725
        %v900 = vmul.f32 %v613, %v730
        %v901 = vmul.f32 %v614, %v735
        %v902 = vmul.f32 %v615, %v740
        %v903 = vmul.f32 %v616, %v745
        %v904 = vmul.f32 %v617, %v750
        %v905 = vmul.f32 %v618, %v755
        %v906 = vmul.f32 %v619, %v760
        %v907 = vmul.f32 %v620, %v765
        %v908 = vmul.f32 %v621, %v770
        %v909 = vmul.f32 %v622, %v775
        %v910 = vmul.f32 %v623, %v780
        %v911 = vmul.f32 %v624, %v785
        %v912 = vmul.f32 %v625, %v790
        %v913 = vmul.f32 %v626, %v795
        %v914 = vmul.f32 %v627, %v800
        %v915 = vmul.f32 %v628, %v805
        %v916 = vmul.f32 %v629, %v810
        %v917 = vmul.f32 %v630, %v815
        %v918 = vmul.f32 %v631, %v820
        %v919 = vmul.f32 %v632, %v825
        %v920 = vmul.f32 %v633, %v830
        %v921 = vmul.f32 %v634, %v835
        %v922 = vmul.f32 %v635, %v840
        %v923 = vmul.f32 %v636, %v845
        %v924 = vmul.f32 %v637, %v850
        %v925 = vmul.f32 %v638, %v855
        %v926 = vmul.f32 %v639, %v860
        %v927 = vmul.f32 %v640, %v865
        %v928 = vmul.f32 %v641, %v870
        %v929 = vmul.f32 %v642, %v875
        %v930 = vmul.f32 %v643, %v880
        %v931 = vmul.f32 %v644, %v885
        %v932 = vmul.f32 %v645, %v890
        %vm933 = vcmask 130048
        %934 = vst.msk [vmem:[#allocation2] sm:$0xff] %vm933, %v892
        %935 = vst.msk [vmem:[#allocation2 + $0x8] sm:$0xff] %vm933, %v893
        %936 = vst.msk [vmem:[#allocation2 + $0x10] sm:$0xff] %vm933, %v894
        %937 = vst.msk [vmem:[#allocation2 + $0x18] sm:$0xff] %vm933, %v895
        %938 = vst.msk [vmem:[#allocation2 + $0x20] sm:$0xff] %vm933, %v896
        %939 = vst.msk [vmem:[#allocation2 + $0x28] sm:$0xff] %vm933, %v897
        %940 = vst.msk [vmem:[#allocation2 + $0x30] sm:$0xff] %vm933, %v898
        %941 = vst.msk [vmem:[#allocation2 + $0x38] sm:$0xff] %vm933, %v899
        %942 = vst.msk [vmem:[#allocation2 + $0x40] sm:$0xff] %vm933, %v900
        %943 = vst.msk [vmem:[#allocation2 + $0x48] sm:$0xff] %vm933, %v901
        %944 = vst.msk [vmem:[#allocation2 + $0x50] sm:$0xff] %vm933, %v902
        %945 = vst.msk [vmem:[#allocation2 + $0x58] sm:$0xff] %vm933, %v903
        %946 = vst.msk [vmem:[#allocation2 + $0x60] sm:$0xff] %vm933, %v904
        %947 = vst.msk [vmem:[#allocation2 + $0x68] sm:$0xff] %vm933, %v905
        %948 = vst.msk [vmem:[#allocation2 + $0x70] sm:$0xff] %vm933, %v906
        %949 = vst.msk [vmem:[#allocation2 + $0x78] sm:$0xff] %vm933, %v907
        %950 = vst.msk [vmem:[#allocation2 + $0x80] sm:$0xff] %vm933, %v908
        %951 = vst.msk [vmem:[#allocation2 + $0x88] sm:$0xff] %vm933, %v909
        %952 = vst.msk [vmem:[#allocation2 + $0x90] sm:$0xff] %vm933, %v910
        %953 = vst.msk [vmem:[#allocation2 + $0x98] sm:$0xff] %vm933, %v911
        %954 = vst.msk [vmem:[#allocation2 + $0xa0] sm:$0xff] %vm933, %v912
        %955 = vst.msk [vmem:[#allocation2 + $0xa8] sm:$0xff] %vm933, %v913
        %956 = vst.msk [vmem:[#allocation2 + $0xb0] sm:$0xff] %vm933, %v914
        %957 = vst.msk [vmem:[#allocation2 + $0xb8] sm:$0xff] %vm933, %v915
        %958 = vst.msk [vmem:[#allocation2 + $0xc0] sm:$0xff] %vm933, %v916
        %959 = vst.msk [vmem:[#allocation2 + $0xc8] sm:$0xff] %vm933, %v917
        %960 = vst.msk [vmem:[#allocation2 + $0xd0] sm:$0xff] %vm933, %v918
        %961 = vst.msk [vmem:[#allocation2 + $0xd8] sm:$0xff] %vm933, %v919
        %962 = vst.msk [vmem:[#allocation2 + $0xe0] sm:$0xff] %vm933, %v920
        %963 = vst.msk [vmem:[#allocation2 + $0xe8] sm:$0xff] %vm933, %v921
        %964 = vst.msk [vmem:[#allocation2 + $0xf0] sm:$0xff] %vm933, %v922
        %965 = vst.msk [vmem:[#allocation2 + $0xf8] sm:$0xff] %vm933, %v923
        %966 = vst.msk [vmem:[#allocation2 + $0x100] sm:$0xff] %vm933, %v924
        %967 = vst.msk [vmem:[#allocation2 + $0x108] sm:$0xff] %vm933, %v925
        %968 = vst.msk [vmem:[#allocation2 + $0x110] sm:$0xff] %vm933, %v926
        %969 = vst.msk [vmem:[#allocation2 + $0x118] sm:$0xff] %vm933, %v927
        %970 = vst.msk [vmem:[#allocation2 + $0x120] sm:$0xff] %vm933, %v928
        %971 = vst.msk [vmem:[#allocation2 + $0x128] sm:$0xff] %vm933, %v929
        %972 = vst.msk [vmem:[#allocation2 + $0x130] sm:$0xff] %vm933, %v930
        %973 = vst.msk [vmem:[#allocation2 + $0x138] sm:$0xff] %vm933, %v931
        %vm974 = vcmask 125952
        %975 = vst.msk [vmem:[#allocation2 + $0x140] sm:$0xf] %vm974, %v932
        %v976 = vld [vmem:[%s2 + $0x8] sm:$0xff]
        %v977 = vld [vmem:[%s2 + $0x10] sm:$0xff]
        %v978 = vld [vmem:[%s2 + $0x18] sm:$0xff]
        %v979 = vld [vmem:[%s2 + $0x20] sm:$0xff]
        %v980 = vld [vmem:[%s2 + $0x28] sm:$0xff]
        %v981 = vld [vmem:[%s2 + $0x30] sm:$0xff]
        %v982 = vld [vmem:[%s2 + $0x38] sm:$0xff]
        %v983 = vld [vmem:[%s2 + $0x40] sm:$0xff]
        %v984 = vld [vmem:[%s2 + $0x48] sm:$0xff]
        %v985 = vld [vmem:[%s2 + $0x50] sm:$0xff]
        %v986 = vld [vmem:[%s2 + $0x58] sm:$0xff]
        %v987 = vld [vmem:[%s2 + $0x60] sm:$0xff]
        %v988 = vld [vmem:[%s2 + $0x68] sm:$0xff]
        %v989 = vld [vmem:[%s2 + $0x70] sm:$0xff]
        %v990 = vld [vmem:[%s2 + $0x78] sm:$0xff]
        %v991 = vld [vmem:[%s2 + $0x80] sm:$0xff]
        %v992 = vld [vmem:[%s2 + $0x88] sm:$0xff]
        %v993 = vld [vmem:[%s2 + $0x90] sm:$0xff]
        %v994 = vld [vmem:[%s2 + $0x98] sm:$0xff]
        %v995 = vld [vmem:[%s2 + $0xa0] sm:$0xff]
        %v996 = vld [vmem:[%s2 + $0xa8] sm:$0xff]
        %v997 = vld [vmem:[%s2 + $0xb0] sm:$0xff]
        %v998 = vld [vmem:[%s2 + $0xb8] sm:$0xff]
        %v999 = vld [vmem:[%s2 + $0xc0] sm:$0xff]
        %v1000 = vld [vmem:[%s2 + $0xc8] sm:$0xff]
        %v1001 = vld [vmem:[%s2 + $0xd0] sm:$0xff]
        %v1002 = vld [vmem:[%s2 + $0xd8] sm:$0xff]
        %v1003 = vld [vmem:[%s2 + $0xe0] sm:$0xff]
        %v1004 = vld [vmem:[%s2 + $0xe8] sm:$0xff]
        %v1005 = vld [vmem:[%s2 + $0xf0] sm:$0xff]
        %v1006 = vld [vmem:[%s2 + $0xf8] sm:$0xff]
        %v1007 = vld [vmem:[%s2 + $0x100] sm:$0xff]
        %v1008 = vld [vmem:[%s2 + $0x108] sm:$0xff]
        %v1009 = vld [vmem:[%s2 + $0x110] sm:$0xff]
        %v1010 = vld [vmem:[%s2 + $0x118] sm:$0xff]
        %v1011 = vld [vmem:[%s2 + $0x120] sm:$0xff]
        %v1012 = vld [vmem:[%s2 + $0x128] sm:$0xff]
        %v1013 = vld [vmem:[%s2 + $0x130] sm:$0xff]
        %v1014 = vld [vmem:[%s2 + $0x138] sm:$0xff]
        %v1015 = vld [vmem:[%s2 + $0x140] sm:$0xff]
        %v1016 = vld [vmem:[%s2 + $0x148] sm:$0xf]
        %v1017 = vld [vmem:[#allocation2] sm:$0xff]
        %v1018 = vld [vmem:[#allocation2 + $0x8] sm:$0xff]
        %v1019 = vld [vmem:[#allocation2 + $0x10] sm:$0xff]
        %v1020 = vld [vmem:[#allocation2 + $0x18] sm:$0xff]
        %v1021 = vld [vmem:[#allocation2 + $0x20] sm:$0xff]
        %v1022 = vld [vmem:[#allocation2 + $0x28] sm:$0xff]
        %v1023 = vld [vmem:[#allocation2 + $0x30] sm:$0xff]
        %v1024 = vld [vmem:[#allocation2 + $0x38] sm:$0xff]
        %v1025 = vld [vmem:[#allocation2 + $0x40] sm:$0xff]
        %v1026 = vld [vmem:[#allocation2 + $0x48] sm:$0xff]
        %v1027 = vld [vmem:[#allocation2 + $0x50] sm:$0xff]
        %v1028 = vld [vmem:[#allocation2 + $0x58] sm:$0xff]
        %v1029 = vld [vmem:[#allocation2 + $0x60] sm:$0xff]
        %v1030 = vld [vmem:[#allocation2 + $0x68] sm:$0xff]
        %v1031 = vld [vmem:[#allocation2 + $0x70] sm:$0xff]
        %v1032 = vld [vmem:[#allocation2 + $0x78] sm:$0xff]
        %v1033 = vld [vmem:[#allocation2 + $0x80] sm:$0xff]
        %v1034 = vld [vmem:[#allocation2 + $0x88] sm:$0xff]
        %v1035 = vld [vmem:[#allocation2 + $0x90] sm:$0xff]
        %v1036 = vld [vmem:[#allocation2 + $0x98] sm:$0xff]
        %v1037 = vld [vmem:[#allocation2 + $0xa0] sm:$0xff]
        %v1038 = vld [vmem:[#allocation2 + $0xa8] sm:$0xff]
        %v1039 = vld [vmem:[#allocation2 + $0xb0] sm:$0xff]
        %v1040 = vld [vmem:[#allocation2 + $0xb8] sm:$0xff]
        %v1041 = vld [vmem:[#allocation2 + $0xc0] sm:$0xff]
        %v1042 = vld [vmem:[#allocation2 + $0xc8] sm:$0xff]
        %v1043 = vld [vmem:[#allocation2 + $0xd0] sm:$0xff]
        %v1044 = vld [vmem:[#allocation2 + $0xd8] sm:$0xff]
        %v1045 = vld [vmem:[#allocation2 + $0xe0] sm:$0xff]
        %v1046 = vld [vmem:[#allocation2 + $0xe8] sm:$0xff]
        %v1047 = vld [vmem:[#allocation2 + $0xf0] sm:$0xff]
        %v1048 = vld [vmem:[#allocation2 + $0xf8] sm:$0xff]
        %v1049 = vld [vmem:[#allocation2 + $0x100] sm:$0xff]
        %v1050 = vld [vmem:[#allocation2 + $0x108] sm:$0xff]
        %v1051 = vld [vmem:[#allocation2 + $0x110] sm:$0xff]
        %v1052 = vld [vmem:[#allocation2 + $0x118] sm:$0xff]
        %v1053 = vld [vmem:[#allocation2 + $0x120] sm:$0xff]
        %v1054 = vld [vmem:[#allocation2 + $0x128] sm:$0xff]
        %v1055 = vld [vmem:[#allocation2 + $0x130] sm:$0xff]
        %v1056 = vld [vmem:[#allocation2 + $0x138] sm:$0xff]
        %v1057 = vld [vmem:[#allocation2 + $0x140] sm:$0xf]
        %v1058 = vpack.c.bf16 %v1018, %v1017
        %v1059 = vpack.c.bf16 %v1020, %v1019
        %v1060 = vpack.c.bf16 %v1022, %v1021
        %v1061 = vpack.c.bf16 %v1024, %v1023
        %v1062 = vpack.c.bf16 %v1026, %v1025
        %v1063 = vpack.c.bf16 %v1028, %v1027
        %v1064 = vpack.c.bf16 %v1030, %v1029
        %v1065 = vpack.c.bf16 %v1032, %v1031
        %v1066 = vpack.c.bf16 %v1034, %v1033
        %v1067 = vpack.c.bf16 %v1036, %v1035
        %v1068 = vpack.c.bf16 %v1038, %v1037
        %v1069 = vpack.c.bf16 %v1040, %v1039
        %v1070 = vpack.c.bf16 %v1042, %v1041
        %v1071 = vpack.c.bf16 %v1044, %v1043
        %v1072 = vpack.c.bf16 %v1046, %v1045
        %v1073 = vpack.c.bf16 %v1048, %v1047
        %v1074 = vpack.c.bf16 %v1050, %v1049
        %v1075 = vpack.c.bf16 %v1052, %v1051
        %v1076 = vpack.c.bf16 %v1054, %v1053
        %v1077 = vpack.c.bf16 %v1056, %v1055
        %v1078 = vpack.c.bf16 %v1057, %v1057
        %v1079 = vld [vmem:[%s2 + $0x150] sm:$0xff]
        %v1080 = vld [vmem:[%s2 + $0x158] sm:$0x1]
        %v1081 = vld [vmem:[%s2 + $0x160] sm:$0x1]
        %v1082 = vld [vmem:[#allocation2 + $0x50] sm:$0x1]
        %v1083 = vlaneseq
        %v1084 = vshrl.u32 %v1083, 7
        %v1085 = vsub.s32 0, %v1084
        %v1086 = vrot.slane %v1079, %v1085
        %v1087 = vmul.f32 %v1017, %v1086
        %v1088 = vmul.f32 %v1018, %v1086
        %v1089 = vmul.f32 %v1019, %v1086
        %v1090 = vmul.f32 %v1020, %v1086
        %v1091 = vmul.f32 %v1021, %v1086
        %v1092 = vmul.f32 %v1022, %v1086
        %v1093 = vmul.f32 %v1023, %v1086
        %v1094 = vmul.f32 %v1024, %v1086
        %v1095 = vmul.f32 %v1025, %v1086
        %v1096 = vmul.f32 %v1026, %v1086
        %v1097 = vmul.f32 %v1082, %v1086
        %v1098 = vld [vmem:[#allocation2 + $0x51] sm:$0xff]
        %v1099 = vld [vmem:[#allocation2 + $0x59] sm:$0xff]
        %v1100 = vld [vmem:[#allocation2 + $0x61] sm:$0xff]
        %v1101 = vld [vmem:[#allocation2 + $0x69] sm:$0xff]
        %v1102 = vld [vmem:[#allocation2 + $0x71] sm:$0xff]
        %v1103 = vld [vmem:[#allocation2 + $0x79] sm:$0xff]
        %v1104 = vld [vmem:[#allocation2 + $0x81] sm:$0xff]
        %v1105 = vld [vmem:[#allocation2 + $0x89] sm:$0xff]
        %v1106 = vld [vmem:[#allocation2 + $0x91] sm:$0xff]
        %v1107 = vld [vmem:[#allocation2 + $0x99] sm:$0xff]
        %v1108 = vld [vmem:[#allocation2 + $0xa1] sm:$0x1]
        %v1109 = vlaneseq
        %v1110 = vshrl.u32 %v1109, 7
        %v1111 = vsub.s32 1, %v1110
        %v1112 = vrot.slane %v1079, %v1111
        %v1113 = vmul.f32 %v1098, %v1112
        %v1114 = vmul.f32 %v1099, %v1112
        %v1115 = vmul.f32 %v1100, %v1112
        %v1116 = vmul.f32 %v1101, %v1112
        %v1117 = vmul.f32 %v1102, %v1112
        %v1118 = vmul.f32 %v1103, %v1112
        %v1119 = vmul.f32 %v1104, %v1112
        %v1120 = vmul.f32 %v1105, %v1112
        %v1121 = vmul.f32 %v1106, %v1112
        %v1122 = vmul.f32 %v1107, %v1112
        %v1123 = vmul.f32 %v1108, %v1112
        %v1124 = vadd.f32 %v1087, %v1113
        %v1125 = vadd.f32 %v1088, %v1114
        %v1126 = vadd.f32 %v1089, %v1115
        %v1127 = vadd.f32 %v1090, %v1116
        %v1128 = vadd.f32 %v1091, %v1117
        %v1129 = vadd.f32 %v1092, %v1118
        %v1130 = vadd.f32 %v1093, %v1119
        %v1131 = vadd.f32 %v1094, %v1120
        %v1132 = vadd.f32 %v1095, %v1121
        %v1133 = vadd.f32 %v1096, %v1122
        %v1134 = vadd.f32 %v1097, %v1123
        %v1135 = vld [vmem:[#allocation2 + $0x1] sm:$0xff]
        %v1136 = vld [vmem:[#allocation2 + $0x9] sm:$0xff]
        %v1137 = vld [vmem:[#allocation2 + $0x11] sm:$0xff]
        %v1138 = vld [vmem:[#allocation2 + $0x19] sm:$0xff]
        %v1139 = vld [vmem:[#allocation2 + $0x21] sm:$0xff]
        %v1140 = vld [vmem:[#allocation2 + $0x29] sm:$0xff]
        %v1141 = vld [vmem:[#allocation2 + $0x31] sm:$0xff]
        %v1142 = vld [vmem:[#allocation2 + $0x39] sm:$0xff]
        %v1143 = vld [vmem:[#allocation2 + $0x41] sm:$0xff]
        %v1144 = vld [vmem:[#allocation2 + $0x49] sm:$0xff]
        %v1145 = vld [vmem:[#allocation2 + $0x51] sm:$0x1]
        %v1146 = vlaneseq
        %v1147 = vshrl.u32 %v1146, 7
        %v1148 = vsub.s32 2, %v1147
        %v1149 = vrot.slane %v1079, %v1148
        %v1150 = vmul.f32 %v1135, %v1149
        %v1151 = vmul.f32 %v1136, %v1149
        %v1152 = vmul.f32 %v1137, %v1149
        %v1153 = vmul.f32 %v1138, %v1149
        %v1154 = vmul.f32 %v1139, %v1149
        %v1155 = vmul.f32 %v1140, %v1149
        %v1156 = vmul.f32 %v1141, %v1149
        %v1157 = vmul.f32 %v1142, %v1149
        %v1158 = vmul.f32 %v1143, %v1149
        %v1159 = vmul.f32 %v1144, %v1149
        %v1160 = vmul.f32 %v1145, %v1149
        %v1161 = vadd.f32 %v1124, %v1150
        %v1162 = vadd.f32 %v1125, %v1151
        %v1163 = vadd.f32 %v1126, %v1152
        %v1164 = vadd.f32 %v1127, %v1153
        %v1165 = vadd.f32 %v1128, %v1154
        %v1166 = vadd.f32 %v1129, %v1155
        %v1167 = vadd.f32 %v1130, %v1156
        %v1168 = vadd.f32 %v1131, %v1157
        %v1169 = vadd.f32 %v1132, %v1158
        %v1170 = vadd.f32 %v1133, %v1159
        %v1171 = vadd.f32 %v1134, %v1160
        %v1172 = vld [vmem:[#allocation2 + $0xa2] sm:$0xff]
        %v1173 = vld [vmem:[#allocation2 + $0xaa] sm:$0xff]
        %v1174 = vld [vmem:[#allocation2 + $0xb2] sm:$0xff]
        %v1175 = vld [vmem:[#allocation2 + $0xba] sm:$0xff]
        %v1176 = vld [vmem:[#allocation2 + $0xc2] sm:$0xff]
        %v1177 = vld [vmem:[#allocation2 + $0xca] sm:$0xff]
        %v1178 = vld [vmem:[#allocation2 + $0xd2] sm:$0xff]
        %v1179 = vld [vmem:[#allocation2 + $0xda] sm:$0xff]
        %v1180 = vld [vmem:[#allocation2 + $0xe2] sm:$0xff]
        %v1181 = vld [vmem:[#allocation2 + $0xea] sm:$0xff]
        %v1182 = vld [vmem:[#allocation2 + $0xf2] sm:$0x1]
        %v1183 = vlaneseq
        %v1184 = vshrl.u32 %v1183, 7
        %v1185 = vsub.s32 3, %v1184
        %v1186 = vrot.slane %v1079, %v1185
        %v1187 = vmul.f32 %v1172, %v1186
        %v1188 = vmul.f32 %v1173, %v1186
        %v1189 = vmul.f32 %v1174, %v1186
        %v1190 = vmul.f32 %v1175, %v1186
        %v1191 = vmul.f32 %v1176, %v1186
        %v1192 = vmul.f32 %v1177, %v1186
        %v1193 = vmul.f32 %v1178, %v1186
        %v1194 = vmul.f32 %v1179, %v1186
        %v1195 = vmul.f32 %v1180, %v1186
        %v1196 = vmul.f32 %v1181, %v1186
        %v1197 = vmul.f32 %v1182, %v1186
        %v1198 = vadd.f32 %v1161, %v1187
        %v1199 = vadd.f32 %v1162, %v1188
        %v1200 = vadd.f32 %v1163, %v1189
        %v1201 = vadd.f32 %v1164, %v1190
        %v1202 = vadd.f32 %v1165, %v1191
        %v1203 = vadd.f32 %v1166, %v1192
        %v1204 = vadd.f32 %v1167, %v1193
        %v1205 = vadd.f32 %v1168, %v1194
        %v1206 = vadd.f32 %v1169, %v1195
        %v1207 = vadd.f32 %v1170, %v1196
        %v1208 = vadd.f32 %v1171, %v1197
        %v1209 = vld [vmem:[#allocation2 + $0xf3] sm:$0xff]
        %v1210 = vld [vmem:[#allocation2 + $0xfb] sm:$0xff]
        %v1211 = vld [vmem:[#allocation2 + $0x103] sm:$0xff]
        %v1212 = vld [vmem:[#allocation2 + $0x10b] sm:$0xff]
        %v1213 = vld [vmem:[#allocation2 + $0x113] sm:$0xff]
        %v1214 = vld [vmem:[#allocation2 + $0x11b] sm:$0xff]
        %v1215 = vld [vmem:[#allocation2 + $0x123] sm:$0xff]
        %v1216 = vld [vmem:[#allocation2 + $0x12b] sm:$0xff]
        %v1217 = vld [vmem:[#allocation2 + $0x133] sm:$0xff]
        %v1218 = vld [vmem:[#allocation2 + $0x13b] sm:$0xff]
        %v1219 = vld [vmem:[#allocation2 + $0x143] sm:$0x1]
        %v1220 = vlaneseq
        %v1221 = vshrl.u32 %v1220, 7
        %v1222 = vsub.s32 4, %v1221
        %v1223 = vrot.slane %v1079, %v1222
        %v1224 = vmul.f32 %v1209, %v1223
        %v1225 = vmul.f32 %v1210, %v1223
        %v1226 = vmul.f32 %v1211, %v1223
        %v1227 = vmul.f32 %v1212, %v1223
        %v1228 = vmul.f32 %v1213, %v1223
        %v1229 = vmul.f32 %v1214, %v1223
        %v1230 = vmul.f32 %v1215, %v1223
        %v1231 = vmul.f32 %v1216, %v1223
        %v1232 = vmul.f32 %v1217, %v1223
        %v1233 = vmul.f32 %v1218, %v1223
        %v1234 = vmul.f32 %v1219, %v1223
        %v1235 = vadd.f32 %v1198, %v1224
        %v1236 = vadd.f32 %v1199, %v1225
        %v1237 = vadd.f32 %v1200, %v1226
        %v1238 = vadd.f32 %v1201, %v1227
        %v1239 = vadd.f32 %v1202, %v1228
        %v1240 = vadd.f32 %v1203, %v1229
        %v1241 = vadd.f32 %v1204, %v1230
        %v1242 = vadd.f32 %v1205, %v1231
        %v1243 = vadd.f32 %v1206, %v1232
        %v1244 = vadd.f32 %v1207, %v1233
        %v1245 = vadd.f32 %v1208, %v1234
        %v1246 = vld [vmem:[#allocation2 + $0xa3] sm:$0xff]
        %v1247 = vld [vmem:[#allocation2 + $0xab] sm:$0xff]
        %v1248 = vld [vmem:[#allocation2 + $0xb3] sm:$0xff]
        %v1249 = vld [vmem:[#allocation2 + $0xbb] sm:$0xff]
        %v1250 = vld [vmem:[#allocation2 + $0xc3] sm:$0xff]
        %v1251 = vld [vmem:[#allocation2 + $0xcb] sm:$0xff]
        %v1252 = vld [vmem:[#allocation2 + $0xd3] sm:$0xff]
        %v1253 = vld [vmem:[#allocation2 + $0xdb] sm:$0xff]
        %v1254 = vld [vmem:[#allocation2 + $0xe3] sm:$0xff]
        %v1255 = vld [vmem:[#allocation2 + $0xeb] sm:$0xff]
        %v1256 = vld [vmem:[#allocation2 + $0xf3] sm:$0x1]
        %v1257 = vlaneseq
        %v1258 = vshrl.u32 %v1257, 7
        %v1259 = vsub.s32 5, %v1258
        %v1260 = vrot.slane %v1079, %v1259
        %v1261 = vmul.f32 %v1246, %v1260
        %v1262 = vmul.f32 %v1247, %v1260
        %v1263 = vmul.f32 %v1248, %v1260
        %v1264 = vmul.f32 %v1249, %v1260
        %v1265 = vmul.f32 %v1250, %v1260
        %v1266 = vmul.f32 %v1251, %v1260
        %v1267 = vmul.f32 %v1252, %v1260
        %v1268 = vmul.f32 %v1253, %v1260
        %v1269 = vmul.f32 %v1254, %v1260
        %v1270 = vmul.f32 %v1255, %v1260
        %v1271 = vmul.f32 %v1256, %v1260
        %v1272 = vadd.f32 %v1235, %v1261
        %v1273 = vadd.f32 %v1236, %v1262
        %v1274 = vadd.f32 %v1237, %v1263
        %v1275 = vadd.f32 %v1238, %v1264
        %v1276 = vadd.f32 %v1239, %v1265
        %v1277 = vadd.f32 %v1240, %v1266
        %v1278 = vadd.f32 %v1241, %v1267
        %v1279 = vadd.f32 %v1242, %v1268
        %v1280 = vadd.f32 %v1243, %v1269
        %v1281 = vadd.f32 %v1244, %v1270
        %v1282 = vadd.f32 %v1245, %v1271
        %v1283 = vld [vmem:[#allocation2 + $0x59] sm:$0x1]
        %v1284 = vlaneseq
        %v1285 = vshrl.u32 %v1284, 7
        %v1286 = vsub.s32 6, %v1285
        %v1287 = vrot.slane %v1079, %v1286
        %v1288 = vmul.f32 %v1136, %v1287
        %v1289 = vmul.f32 %v1137, %v1287
        %v1290 = vmul.f32 %v1138, %v1287
        %v1291 = vmul.f32 %v1139, %v1287
        %v1292 = vmul.f32 %v1140, %v1287
        %v1293 = vmul.f32 %v1141, %v1287
        %v1294 = vmul.f32 %v1142, %v1287
        %v1295 = vmul.f32 %v1143, %v1287
        %v1296 = vmul.f32 %v1144, %v1287
        %v1297 = vmul.f32 %v1098, %v1287
        %v1298 = vmul.f32 %v1283, %v1287
        %v1299 = vadd.f32 %v1272, %v1288
        %v1300 = vadd.f32 %v1273, %v1289
        %v1301 = vadd.f32 %v1274, %v1290
        %v1302 = vadd.f32 %v1275, %v1291
        %v1303 = vadd.f32 %v1276, %v1292
        %v1304 = vadd.f32 %v1277, %v1293
        %v1305 = vadd.f32 %v1278, %v1294
        %v1306 = vadd.f32 %v1279, %v1295
        %v1307 = vadd.f32 %v1280, %v1296
        %v1308 = vadd.f32 %v1281, %v1297
        %v1309 = vadd.f32 %v1282, %v1298
        %v1310 = vld [vmem:[#allocation2 + $0x5a] sm:$0xff]
        %v1311 = vld [vmem:[#allocation2 + $0x62] sm:$0xff]
        %v1312 = vld [vmem:[#allocation2 + $0x6a] sm:$0xff]
        %v1313 = vld [vmem:[#allocation2 + $0x72] sm:$0xff]
        %v1314 = vld [vmem:[#allocation2 + $0x7a] sm:$0xff]
        %v1315 = vld [vmem:[#allocation2 + $0x82] sm:$0xff]
        %v1316 = vld [vmem:[#allocation2 + $0x8a] sm:$0xff]
        %v1317 = vld [vmem:[#allocation2 + $0x92] sm:$0xff]
        %v1318 = vld [vmem:[#allocation2 + $0x9a] sm:$0xff]
        %v1319 = vld [vmem:[#allocation2 + $0xaa] sm:$0x1]
        %v1320 = vlaneseq
        %v1321 = vshrl.u32 %v1320, 7
        %v1322 = vsub.s32 7, %v1321
        %v1323 = vrot.slane %v1079, %v1322
        %v1324 = vmul.f32 %v1310, %v1323
        %v1325 = vmul.f32 %v1311, %v1323
        %v1326 = vmul.f32 %v1312, %v1323
        %v1327 = vmul.f32 %v1313, %v1323
        %v1328 = vmul.f32 %v1314, %v1323
        %v1329 = vmul.f32 %v1315, %v1323
        %v1330 = vmul.f32 %v1316, %v1323
        %v1331 = vmul.f32 %v1317, %v1323
        %v1332 = vmul.f32 %v1318, %v1323
        %v1333 = vmul.f32 %v1172, %v1323
        %v1334 = vmul.f32 %v1319, %v1323
        %v1335 = vadd.f32 %v1299, %v1324
        %v1336 = vadd.f32 %v1300, %v1325
        %v1337 = vadd.f32 %v1301, %v1326
        %v1338 = vadd.f32 %v1302, %v1327
        %v1339 = vadd.f32 %v1303, %v1328
        %v1340 = vadd.f32 %v1304, %v1329
        %v1341 = vadd.f32 %v1305, %v1330
        %v1342 = vadd.f32 %v1306, %v1331
        %v1343 = vadd.f32 %v1307, %v1332
        %v1344 = vadd.f32 %v1308, %v1333
        %v1345 = vadd.f32 %v1309, %v1334
        %v1346 = vld [vmem:[#allocation2 + $0xa] sm:$0xff]
        %v1347 = vld [vmem:[#allocation2 + $0x12] sm:$0xff]
        %v1348 = vld [vmem:[#allocation2 + $0x1a] sm:$0xff]
        %v1349 = vld [vmem:[#allocation2 + $0x22] sm:$0xff]
        %v1350 = vld [vmem:[#allocation2 + $0x2a] sm:$0xff]
        %v1351 = vld [vmem:[#allocation2 + $0x32] sm:$0xff]
        %v1352 = vld [vmem:[#allocation2 + $0x3a] sm:$0xff]
        %v1353 = vld [vmem:[#allocation2 + $0x42] sm:$0xff]
        %v1354 = vld [vmem:[#allocation2 + $0x4a] sm:$0xff]
        %v1355 = vld [vmem:[#allocation2 + $0x52] sm:$0xff]
        %v1356 = vld [vmem:[#allocation2 + $0x5a] sm:$0x1]
        %v1357 = vlaneseq
        %v1358 = vshrl.u32 %v1357, 7
        %v1359 = vsub.s32 0, %v1358
        %v1360 = vrot.slane %v1080, %v1359
        %v1361 = vmul.f32 %v1346, %v1360
        %v1362 = vmul.f32 %v1347, %v1360
        %v1363 = vmul.f32 %v1348, %v1360
        %v1364 = vmul.f32 %v1349, %v1360
        %v1365 = vmul.f32 %v1350, %v1360
        %v1366 = vmul.f32 %v1351, %v1360
        %v1367 = vmul.f32 %v1352, %v1360
        %v1368 = vmul.f32 %v1353, %v1360
        %v1369 = vmul.f32 %v1354, %v1360
        %v1370 = vmul.f32 %v1355, %v1360
        %v1371 = vmul.f32 %v1356, %v1360
        %v1372 = vadd.f32 %v1335, %v1361
        %v1373 = vadd.f32 %v1336, %v1362
        %v1374 = vadd.f32 %v1337, %v1363
        %v1375 = vadd.f32 %v1338, %v1364
        %v1376 = vadd.f32 %v1339, %v1365
        %v1377 = vadd.f32 %v1340, %v1366
        %v1378 = vadd.f32 %v1341, %v1367
        %v1379 = vadd.f32 %v1342, %v1368
        %v1380 = vadd.f32 %v1343, %v1369
        %v1381 = vadd.f32 %v1344, %v1370
        %v1382 = vadd.f32 %v1345, %v1371
        %v1383 = vlaneseq
        %v1384 = vshrl.u32 %v1383, 7
        %v1385 = vsub.s32 0, %v1384
        %v1386 = vrot.slane %v1081, %v1385
        %v1387 = vadd.f32 %v1372, %v1386
        %v1388 = vadd.f32 %v1373, %v1386
        %v1389 = vadd.f32 %v1374, %v1386
        %v1390 = vadd.f32 %v1375, %v1386
        %v1391 = vadd.f32 %v1376, %v1386
        %v1392 = vadd.f32 %v1377, %v1386
        %v1393 = vadd.f32 %v1378, %v1386
        %v1394 = vadd.f32 %v1379, %v1386
        %v1395 = vadd.f32 %v1380, %v1386
        %v1396 = vadd.f32 %v1381, %v1386
        %v1397 = vadd.f32 %v1382, %v1386
        %v1398 = vld [vmem:[%s1 + $0x18] sm:$0xf]
        %v1399 = vld [vmem:[%s1 + $0x1c] sm:$0xf]
        %v1400 = vld [vmem:[%s2 + $0x168] sm:$0x1]
        %v1401 = vlaneseq
        %v1402 = vshrl.u32 %v1401, 7
        %v1403 = vsub.s32 0, %v1402
        %v1404 = vrot.slane %v1400, %v1403
        %v1407 = vunpack.c.l.b16 %v1398
        %v1408 = vunpack.c.l.b16 %v1399
        %v1409 = vpack.c.b16 %v1408, %v1407
        %v1412 = vsel %vm933, %v1058, 0
        %v1415 = vsel %vm933, %v1059, 0
        %v1418 = vsel %vm933, %v1060, 0
        %v1421 = vsel %vm933, %v1061, 0
        %v1424 = vsel %vm933, %v1062, 0
        %v1427 = vsel %vm933, %v1063, 0
        %v1430 = vsel %vm933, %v1064, 0
        %v1433 = vsel %vm933, %v1065, 0
        %v1436 = vsel %vm933, %v1066, 0
        %v1439 = vsel %vm933, %v1067, 0
        %v1442 = vsel %vm933, %v1068, 0
        %v1445 = vsel %vm933, %v1069, 0
        %v1448 = vsel %vm933, %v1070, 0
        %v1451 = vsel %vm933, %v1071, 0
        %v1454 = vsel %vm933, %v1072, 0
        %v1457 = vsel %vm933, %v1073, 0
        %v1460 = vsel %vm933, %v1074, 0
        %v1463 = vsel %vm933, %v1075, 0
        %v1466 = vsel %vm933, %v1076, 0
        %v1469 = vsel %vm933, %v1077, 0
        %v1472 = vsel %vm933, %v1078, 0
        %1474 = vmatprep.subr.bf16.mxu0 0
        %1475 = vmatpush1.bf16.msra.mxu0 %v1409
        %1476 = vmatprep.subr.bf16.mxu0 0
        %1477 = vmatpush1.bf16.msra.mxu0 0
        %1478 = vmatprep.subr.bf16.mxu0 0
        %1479 = vmatpush1.bf16.msra.mxu0 0
        %1480 = vmatprep.subr.bf16.mxu0 0
        %1481 = vmatpush1.bf16.msra.mxu0 0
        %1482 = vmatprep.subr.bf16.mxu0 0
        %1483 = vmatpush1.bf16.msra.mxu0 0
        %1484 = vmatprep.subr.bf16.mxu0 0
        %1485 = vmatpush1.bf16.msra.mxu0 0
        %1486 = vmatprep.subr.bf16.mxu0 0
        %1487 = vmatpush1.bf16.msra.mxu0 0
        %1488 = vmatprep.subr.bf16.mxu0 0
        %1489 = vmatpush1.bf16.msra.mxu0 0
        %1490 = vmatprep.subr.bf16.mxu0 0
        %1491 = vmatpush1.bf16.msra.mxu0 0
        %1492 = vmatprep.subr.bf16.mxu0 0
        %1493 = vmatpush1.bf16.msra.mxu0 0
        %1494 = vmatprep.subr.bf16.mxu0 0
        %1495 = vmatpush1.bf16.msra.mxu0 0
        %1496 = vmatprep.subr.bf16.mxu0 0
        %1497 = vmatpush1.bf16.msra.mxu0 0
        %1498 = vmatprep.subr.bf16.mxu0 0
        %1499 = vmatpush1.bf16.msra.mxu0 0
        %1500 = vmatprep.subr.bf16.mxu0 0
        %1501 = vmatpush1.bf16.msra.mxu0 0
        %1502 = vmatprep.subr.bf16.mxu0 0
        %1503 = vmatpush1.bf16.msra.mxu0 0
        %1504 = vmatprep.subr.bf16.mxu0 0
        %1505 = vmatpush1.bf16.msra.mxu0 0
        %1506 = vmatprep.mubr.bf16.mxu0 0
        %1507 = vmatmul.mubr.bf16.gmra.mrb[0].mxu0 %v1412
        %v1508 = vpop.f32.mrb[0].mxu0
        %v1509 = vadd.f32 %v1404, %v1508
        %v1510 = vpop.f32.mrb[0].mxu0
        %v1511 = vpop.f32.mrb[0].mxu0
        %v1512 = vadd.f32 %v1404, %v1511
        %v1513 = vpop.f32.mrb[0].mxu0
        %1514 = vmatprep.mubr.bf16.mxu0 0
        %1515 = vmatmul.mubr.bf16.gmra.mrb[0].mxu0 %v1415
        %v1516 = vpop.f32.mrb[0].mxu0
        %v1517 = vadd.f32 %v1404, %v1516
        %v1518 = vpop.f32.mrb[0].mxu0
        %v1519 = vpop.f32.mrb[0].mxu0
        %v1520 = vadd.f32 %v1404, %v1519
        %v1521 = vpop.f32.mrb[0].mxu0
        %1522 = vmatprep.mubr.bf16.mxu0 0
        %1523 = vmatmul.mubr.bf16.gmra.mrb[0].mxu0 %v1418
        %v1524 = vpop.f32.mrb[0].mxu0
        %v1525 = vadd.f32 %v1404, %v1524
        %v1526 = vpop.f32.mrb[0].mxu0
        %v1527 = vpop.f32.mrb[0].mxu0
        %v1528 = vadd.f32 %v1404, %v1527
        %v1529 = vpop.f32.mrb[0].mxu0
        %1530 = vmatprep.mubr.bf16.mxu0 0
        %1531 = vmatmul.mubr.bf16.gmra.mrb[0].mxu0 %v1421
        %v1532 = vpop.f32.mrb[0].mxu0
        %v1533 = vadd.f32 %v1404, %v1532
        %v1534 = vpop.f32.mrb[0].mxu0
        %v1535 = vpop.f32.mrb[0].mxu0
        %v1536 = vadd.f32 %v1404, %v1535
        %v1537 = vpop.f32.mrb[0].mxu0
        %1538 = vmatprep.mubr.bf16.mxu0 0
        %1539 = vmatmul.mubr.bf16.gmra.mrb[0].mxu0 %v1424
        %v1540 = vpop.f32.mrb[0].mxu0
        %v1541 = vadd.f32 %v1404, %v1540
        %v1542 = vpop.f32.mrb[0].mxu0
        %v1543 = vpop.f32.mrb[0].mxu0
        %v1544 = vadd.f32 %v1404, %v1543
        %v1545 = vpop.f32.mrb[0].mxu0
        %1546 = vmatprep.mubr.bf16.mxu0 0
        %1547 = vmatmul.mubr.bf16.gmra.mrb[0].mxu0 %v1427
        %v1548 = vpop.f32.mrb[0].mxu0
        %v1549 = vadd.f32 %v1404, %v1548
        %v1550 = vpop.f32.mrb[0].mxu0
        %v1551 = vpop.f32.mrb[0].mxu0
        %v1552 = vadd.f32 %v1404, %v1551
        %v1553 = vpop.f32.mrb[0].mxu0
        %1554 = vmatprep.mubr.bf16.mxu0 0
        %1555 = vmatmul.mubr.bf16.gmra.mrb[0].mxu0 %v1430
        %v1556 = vpop.f32.mrb[0].mxu0
        %v1557 = vadd.f32 %v1404, %v1556
        %v1558 = vpop.f32.mrb[0].mxu0
        %v1559 = vpop.f32.mrb[0].mxu0
        %v1560 = vadd.f32 %v1404, %v1559
        %v1561 = vpop.f32.mrb[0].mxu0
        %1562 = vmatprep.mubr.bf16.mxu0 0
        %1563 = vmatmul.mubr.bf16.gmra.mrb[0].mxu0 %v1433
        %v1564 = vpop.f32.mrb[0].mxu0
        %v1565 = vadd.f32 %v1404, %v1564
        %v1566 = vpop.f32.mrb[0].mxu0
        %v1567 = vpop.f32.mrb[0].mxu0
        %v1568 = vadd.f32 %v1404, %v1567
        %v1569 = vpop.f32.mrb[0].mxu0
        %1570 = vmatprep.mubr.bf16.mxu0 0
        %1571 = vmatmul.mubr.bf16.gmra.mrb[0].mxu0 %v1436
        %v1572 = vpop.f32.mrb[0].mxu0
        %v1573 = vadd.f32 %v1404, %v1572
        %v1574 = vpop.f32.mrb[0].mxu0
        %v1575 = vpop.f32.mrb[0].mxu0
        %v1576 = vadd.f32 %v1404, %v1575
        %v1577 = vpop.f32.mrb[0].mxu0
        %1578 = vmatprep.mubr.bf16.mxu0 0
        %1579 = vmatmul.mubr.bf16.gmra.mrb[0].mxu0 %v1439
        %v1580 = vpop.f32.mrb[0].mxu0
        %v1581 = vadd.f32 %v1404, %v1580
        %v1582 = vpop.f32.mrb[0].mxu0
        %v1583 = vpop.f32.mrb[0].mxu0
        %v1584 = vadd.f32 %v1404, %v1583
        %v1585 = vpop.f32.mrb[0].mxu0
        %1586 = vmatprep.mubr.bf16.mxu0 0
        %1587 = vmatmul.mubr.bf16.gmra.mrb[0].mxu0 %v1442
        %v1588 = vpop.f32.mrb[0].mxu0
        %v1589 = vadd.f32 %v1404, %v1588
        %v1590 = vpop.f32.mrb[0].mxu0
        %v1591 = vpop.f32.mrb[0].mxu0
        %v1592 = vadd.f32 %v1404, %v1591
        %v1593 = vpop.f32.mrb[0].mxu0
        %1594 = vmatprep.mubr.bf16.mxu0 0
        %1595 = vmatmul.mubr.bf16.gmra.mrb[0].mxu0 %v1445
        %v1596 = vpop.f32.mrb[0].mxu0
        %v1597 = vadd.f32 %v1404, %v1596
        %v1598 = vpop.f32.mrb[0].mxu0
        %v1599 = vpop.f32.mrb[0].mxu0
        %v1600 = vadd.f32 %v1404, %v1599
        %v1601 = vpop.f32.mrb[0].mxu0
        %1602 = vmatprep.mubr.bf16.mxu0 0
        %1603 = vmatmul.mubr.bf16.gmra.mrb[0].mxu0 %v1448
        %v1604 = vpop.f32.mrb[0].mxu0
        %v1605 = vadd.f32 %v1404, %v1604
        %v1606 = vpop.f32.mrb[0].mxu0
        %v1607 = vpop.f32.mrb[0].mxu0
        %v1608 = vadd.f32 %v1404, %v1607
        %v1609 = vpop.f32.mrb[0].mxu0
        %1610 = vmatprep.mubr.bf16.mxu0 0
        %1611 = vmatmul.mubr.bf16.gmra.mrb[0].mxu0 %v1451
        %v1612 = vpop.f32.mrb[0].mxu0
        %v1613 = vadd.f32 %v1404, %v1612
        %v1614 = vpop.f32.mrb[0].mxu0
        %v1615 = vpop.f32.mrb[0].mxu0
        %v1616 = vadd.f32 %v1404, %v1615
        %v1617 = vpop.f32.mrb[0].mxu0
        %1618 = vmatprep.mubr.bf16.mxu0 0
        %1619 = vmatmul.mubr.bf16.gmra.mrb[0].mxu0 %v1454
        %v1620 = vpop.f32.mrb[0].mxu0
        %v1621 = vadd.f32 %v1404, %v1620
        %v1622 = vpop.f32.mrb[0].mxu0
        %v1623 = vpop.f32.mrb[0].mxu0
        %v1624 = vadd.f32 %v1404, %v1623
        %v1625 = vpop.f32.mrb[0].mxu0
        %1626 = vmatprep.mubr.bf16.mxu0 0
        %1627 = vmatmul.mubr.bf16.gmra.mrb[0].mxu0 %v1457
        %v1628 = vpop.f32.mrb[0].mxu0
        %v1629 = vadd.f32 %v1404, %v1628
        %v1630 = vpop.f32.mrb[0].mxu0
        %v1631 = vpop.f32.mrb[0].mxu0
        %v1632 = vadd.f32 %v1404, %v1631
        %v1633 = vpop.f32.mrb[0].mxu0
        %1634 = vmatprep.mubr.bf16.mxu0 0
        %1635 = vmatmul.mubr.bf16.gmra.mrb[0].mxu0 %v1460
        %v1636 = vpop.f32.mrb[0].mxu0
        %v1637 = vadd.f32 %v1404, %v1636
        %v1638 = vpop.f32.mrb[0].mxu0
        %v1639 = vpop.f32.mrb[0].mxu0
        %v1640 = vadd.f32 %v1404, %v1639
        %v1641 = vpop.f32.mrb[0].mxu0
        %1642 = vmatprep.mubr.bf16.mxu0 0
        %1643 = vmatmul.mubr.bf16.gmra.mrb[0].mxu0 %v1463
        %v1644 = vpop.f32.mrb[0].mxu0
        %v1645 = vadd.f32 %v1404, %v1644
        %v1646 = vpop.f32.mrb[0].mxu0
        %v1647 = vpop.f32.mrb[0].mxu0
        %v1648 = vadd.f32 %v1404, %v1647
        %v1649 = vpop.f32.mrb[0].mxu0
        %1650 = vmatprep.mubr.bf16.mxu0 0
        %1651 = vmatmul.mubr.bf16.gmra.mrb[0].mxu0 %v1466
        %v1652 = vpop.f32.mrb[0].mxu0
        %v1653 = vadd.f32 %v1404, %v1652
        %v1654 = vpop.f32.mrb[0].mxu0
        %v1655 = vpop.f32.mrb[0].mxu0
        %v1656 = vadd.f32 %v1404, %v1655
        %v1657 = vpop.f32.mrb[0].mxu0
        %1658 = vmatprep.mubr.bf16.mxu0 0
        %1659 = vmatmul.mubr.bf16.gmra.mrb[0].mxu0 %v1469
        %v1660 = vpop.f32.mrb[0].mxu0
        %v1661 = vadd.f32 %v1404, %v1660
        %v1662 = vpop.f32.mrb[0].mxu0
        %v1663 = vpop.f32.mrb[0].mxu0
        %v1664 = vadd.f32 %v1404, %v1663
        %v1665 = vpop.f32.mrb[0].mxu0
        %1666 = vmatprep.mubr.bf16.mxu0 0
        %1667 = vmatmul.mubr.bf16.gmra.mrb[0].mxu0 %v1472
        %v1668 = vpop.f32.mrb[0].mxu0
        %v1669 = vadd.f32 %v1404, %v1668
        %v1670 = vpop.f32.mrb[0].mxu0
        %v1671 = vpop.f32.mrb[0].mxu0
        %v1672 = vpop.f32.mrb[0].mxu0
        %1673 = vdwg.mxu0
        %v1674 = vmax.f32 %v1509, 0.0
        %v1675 = vmax.f32 %v1512, 0.0
        %v1676 = vmax.f32 %v1517, 0.0
        %v1677 = vmax.f32 %v1520, 0.0
        %v1678 = vmax.f32 %v1525, 0.0
        %v1679 = vmax.f32 %v1528, 0.0
        %v1680 = vmax.f32 %v1533, 0.0
        %v1681 = vmax.f32 %v1536, 0.0
        %v1682 = vmax.f32 %v1541, 0.0
        %v1683 = vmax.f32 %v1544, 0.0
        %v1684 = vmax.f32 %v1549, 0.0
        %v1685 = vmax.f32 %v1552, 0.0
        %v1686 = vmax.f32 %v1557, 0.0
        %v1687 = vmax.f32 %v1560, 0.0
        %v1688 = vmax.f32 %v1565, 0.0
        %v1689 = vmax.f32 %v1568, 0.0
        %v1690 = vmax.f32 %v1573, 0.0
        %v1691 = vmax.f32 %v1576, 0.0
        %v1692 = vmax.f32 %v1581, 0.0
        %v1693 = vmax.f32 %v1584, 0.0
        %v1694 = vmax.f32 %v1589, 0.0
        %v1695 = vmax.f32 %v1592, 0.0
        %v1696 = vmax.f32 %v1597, 0.0
        %v1697 = vmax.f32 %v1600, 0.0
        %v1698 = vmax.f32 %v1605, 0.0
        %v1699 = vmax.f32 %v1608, 0.0
        %v1700 = vmax.f32 %v1613, 0.0
        %v1701 = vmax.f32 %v1616, 0.0
        %v1702 = vmax.f32 %v1621, 0.0
        %v1703 = vmax.f32 %v1624, 0.0
        %v1704 = vmax.f32 %v1629, 0.0
        %v1705 = vmax.f32 %v1632, 0.0
        %v1706 = vmax.f32 %v1637, 0.0
        %v1707 = vmax.f32 %v1640, 0.0
        %v1708 = vmax.f32 %v1645, 0.0
        %v1709 = vmax.f32 %v1648, 0.0
        %v1710 = vmax.f32 %v1653, 0.0
        %v1711 = vmax.f32 %v1656, 0.0
        %v1712 = vmax.f32 %v1661, 0.0
        %v1713 = vmax.f32 %v1664, 0.0
        %v1714 = vmax.f32 %v1669, 0.0
        %1716 = vset.pattern.permute.xlu0 0
        %1717 = vperm.xlu0 %1716, %v976
        %v1718 = vpop.permute.xlu0 %1717
        %1721 = vset.pattern.permute.xlu0 0
        %1722 = vperm.xlu0 %1721, %v977
        %v1723 = vpop.permute.xlu0 %1722
        %1726 = vset.pattern.permute.xlu0 0
        %1727 = vperm.xlu0 %1726, %v978
        %v1728 = vpop.permute.xlu0 %1727
        %1731 = vset.pattern.permute.xlu0 0
        %1732 = vperm.xlu0 %1731, %v979
        %v1733 = vpop.permute.xlu0 %1732
        %1736 = vset.pattern.permute.xlu0 0
        %1737 = vperm.xlu0 %1736, %v980
        %v1738 = vpop.permute.xlu0 %1737
        %1741 = vset.pattern.permute.xlu0 0
        %1742 = vperm.xlu0 %1741, %v981
        %v1743 = vpop.permute.xlu0 %1742
        %1746 = vset.pattern.permute.xlu0 0
        %1747 = vperm.xlu0 %1746, %v982
        %v1748 = vpop.permute.xlu0 %1747
        %1751 = vset.pattern.permute.xlu0 0
        %1752 = vperm.xlu0 %1751, %v983
        %v1753 = vpop.permute.xlu0 %1752
        %1756 = vset.pattern.permute.xlu0 0
        %1757 = vperm.xlu0 %1756, %v984
        %v1758 = vpop.permute.xlu0 %1757
        %1761 = vset.pattern.permute.xlu0 0
        %1762 = vperm.xlu0 %1761, %v985
        %v1763 = vpop.permute.xlu0 %1762
        %1766 = vset.pattern.permute.xlu0 0
        %1767 = vperm.xlu0 %1766, %v986
        %v1768 = vpop.permute.xlu0 %1767
        %1771 = vset.pattern.permute.xlu0 0
        %1772 = vperm.xlu0 %1771, %v987
        %v1773 = vpop.permute.xlu0 %1772
        %1776 = vset.pattern.permute.xlu0 0
        %1777 = vperm.xlu0 %1776, %v988
        %v1778 = vpop.permute.xlu0 %1777
        %1781 = vset.pattern.permute.xlu0 0
        %1782 = vperm.xlu0 %1781, %v989
        %v1783 = vpop.permute.xlu0 %1782
        %1786 = vset.pattern.permute.xlu0 0
        %1787 = vperm.xlu0 %1786, %v990
        %v1788 = vpop.permute.xlu0 %1787
        %1791 = vset.pattern.permute.xlu0 0
        %1792 = vperm.xlu0 %1791, %v991
        %v1793 = vpop.permute.xlu0 %1792
        %1796 = vset.pattern.permute.xlu0 0
        %1797 = vperm.xlu0 %1796, %v992
        %v1798 = vpop.permute.xlu0 %1797
        %1801 = vset.pattern.permute.xlu0 0
        %1802 = vperm.xlu0 %1801, %v993
        %v1803 = vpop.permute.xlu0 %1802
        %1806 = vset.pattern.permute.xlu0 0
        %1807 = vperm.xlu0 %1806, %v994
        %v1808 = vpop.permute.xlu0 %1807
        %1811 = vset.pattern.permute.xlu0 0
        %1812 = vperm.xlu0 %1811, %v995
        %v1813 = vpop.permute.xlu0 %1812
        %1816 = vset.pattern.permute.xlu0 0
        %1817 = vperm.xlu0 %1816, %v996
        %v1818 = vpop.permute.xlu0 %1817
        %1821 = vset.pattern.permute.xlu0 0
        %1822 = vperm.xlu0 %1821, %v997
        %v1823 = vpop.permute.xlu0 %1822
        %1826 = vset.pattern.permute.xlu0 0
        %1827 = vperm.xlu0 %1826, %v998
        %v1828 = vpop.permute.xlu0 %1827
        %1831 = vset.pattern.permute.xlu0 0
        %1832 = vperm.xlu0 %1831, %v999
        %v1833 = vpop.permute.xlu0 %1832
        %1836 = vset.pattern.permute.xlu0 0
        %1837 = vperm.xlu0 %1836, %v1000
        %v1838 = vpop.permute.xlu0 %1837
        %1841 = vset.pattern.permute.xlu0 0
        %1842 = vperm.xlu0 %1841, %v1001
        %v1843 = vpop.permute.xlu0 %1842
        %1846 = vset.pattern.permute.xlu0 0
        %1847 = vperm.xlu0 %1846, %v1002
        %v1848 = vpop.permute.xlu0 %1847
        %1851 = vset.pattern.permute.xlu0 0
        %1852 = vperm.xlu0 %1851, %v1003
        %v1853 = vpop.permute.xlu0 %1852
        %1856 = vset.pattern.permute.xlu0 0
        %1857 = vperm.xlu0 %1856, %v1004
        %v1858 = vpop.permute.xlu0 %1857
        %1861 = vset.pattern.permute.xlu0 0
        %1862 = vperm.xlu0 %1861, %v1005
        %v1863 = vpop.permute.xlu0 %1862
        %1866 = vset.pattern.permute.xlu0 0
        %1867 = vperm.xlu0 %1866, %v1006
        %v1868 = vpop.permute.xlu0 %1867
        %1871 = vset.pattern.permute.xlu0 0
        %1872 = vperm.xlu0 %1871, %v1007
        %v1873 = vpop.permute.xlu0 %1872
        %1876 = vset.pattern.permute.xlu0 0
        %1877 = vperm.xlu0 %1876, %v1008
        %v1878 = vpop.permute.xlu0 %1877
        %1881 = vset.pattern.permute.xlu0 0
        %1882 = vperm.xlu0 %1881, %v1009
        %v1883 = vpop.permute.xlu0 %1882
        %1886 = vset.pattern.permute.xlu0 0
        %1887 = vperm.xlu0 %1886, %v1010
        %v1888 = vpop.permute.xlu0 %1887
        %1891 = vset.pattern.permute.xlu0 0
        %1892 = vperm.xlu0 %1891, %v1011
        %v1893 = vpop.permute.xlu0 %1892
        %1896 = vset.pattern.permute.xlu0 0
        %1897 = vperm.xlu0 %1896, %v1012
        %v1898 = vpop.permute.xlu0 %1897
        %1901 = vset.pattern.permute.xlu0 0
        %1902 = vperm.xlu0 %1901, %v1013
        %v1903 = vpop.permute.xlu0 %1902
        %1906 = vset.pattern.permute.xlu0 0
        %1907 = vperm.xlu0 %1906, %v1014
        %v1908 = vpop.permute.xlu0 %1907
        %1911 = vset.pattern.permute.xlu0 0
        %1912 = vperm.xlu0 %1911, %v1015
        %v1913 = vpop.permute.xlu0 %1912
        %1916 = vset.pattern.permute.xlu0 0
        %1917 = vperm.xlu0 %1916, %v1016
        %v1918 = vpop.permute.xlu0 %1917
        %v1920 = vmul.f32 %v1674, %v1718
        %v1921 = vmul.f32 %v1675, %v1723
        %v1922 = vmul.f32 %v1676, %v1728
        %v1923 = vmul.f32 %v1677, %v1733
        %v1924 = vmul.f32 %v1678, %v1738
        %v1925 = vmul.f32 %v1679, %v1743
        %v1926 = vmul.f32 %v1680, %v1748
        %v1927 = vmul.f32 %v1681, %v1753
        %v1928 = vmul.f32 %v1682, %v1758
        %v1929 = vmul.f32 %v1683, %v1763
        %v1930 = vmul.f32 %v1684, %v1768
        %v1931 = vmul.f32 %v1685, %v1773
        %v1932 = vmul.f32 %v1686, %v1778
        %v1933 = vmul.f32 %v1687, %v1783
        %v1934 = vmul.f32 %v1688, %v1788
        %v1935 = vmul.f32 %v1689, %v1793
        %v1936 = vmul.f32 %v1690, %v1798
        %v1937 = vmul.f32 %v1691, %v1803
        %v1938 = vmul.f32 %v1692, %v1808
        %v1939 = vmul.f32 %v1693, %v1813
        %v1940 = vmul.f32 %v1694, %v1818
        %v1941 = vmul.f32 %v1695, %v1823
        %v1942 = vmul.f32 %v1696, %v1828
        %v1943 = vmul.f32 %v1697, %v1833
        %v1944 = vmul.f32 %v1698, %v1838
        %v1945 = vmul.f32 %v1699, %v1843
        %v1946 = vmul.f32 %v1700, %v1848
        %v1947 = vmul.f32 %v1701, %v1853
        %v1948 = vmul.f32 %v1702, %v1858
        %v1949 = vmul.f32 %v1703, %v1863
        %v1950 = vmul.f32 %v1704, %v1868
        %v1951 = vmul.f32 %v1705, %v1873
        %v1952 = vmul.f32 %v1706, %v1878
        %v1953 = vmul.f32 %v1707, %v1883
        %v1954 = vmul.f32 %v1708, %v1888
        %v1955 = vmul.f32 %v1709, %v1893
        %v1956 = vmul.f32 %v1710, %v1898
        %v1957 = vmul.f32 %v1711, %v1903
        %v1958 = vmul.f32 %v1712, %v1908
        %v1959 = vmul.f32 %v1713, %v1913
        %v1960 = vmul.f32 %v1714, %v1918
        %1961 = vst.msk [vmem:[#allocation3] sm:$0xff] %vm933, %v1920
        %1962 = vst.msk [vmem:[#allocation3 + $0x8] sm:$0xff] %vm933, %v1921
        %1963 = vst.msk [vmem:[#allocation3 + $0x10] sm:$0xff] %vm933, %v1922
        %1964 = vst.msk [vmem:[#allocation3 + $0x18] sm:$0xff] %vm933, %v1923
        %1965 = vst.msk [vmem:[#allocation3 + $0x20] sm:$0xff] %vm933, %v1924
        %1966 = vst.msk [vmem:[#allocation3 + $0x28] sm:$0xff] %vm933, %v1925
        %1967 = vst.msk [vmem:[#allocation3 + $0x30] sm:$0xff] %vm933, %v1926
        %1968 = vst.msk [vmem:[#allocation3 + $0x38] sm:$0xff] %vm933, %v1927
        %1969 = vst.msk [vmem:[#allocation3 + $0x40] sm:$0xff] %vm933, %v1928
        %1970 = vst.msk [vmem:[#allocation3 + $0x48] sm:$0xff] %vm933, %v1929
        %1971 = vst.msk [vmem:[#allocation3 + $0x50] sm:$0xff] %vm933, %v1930
        %1972 = vst.msk [vmem:[#allocation3 + $0x58] sm:$0xff] %vm933, %v1931
        %1973 = vst.msk [vmem:[#allocation3 + $0x60] sm:$0xff] %vm933, %v1932
        %1974 = vst.msk [vmem:[#allocation3 + $0x68] sm:$0xff] %vm933, %v1933
        %1975 = vst.msk [vmem:[#allocation3 + $0x70] sm:$0xff] %vm933, %v1934
        %1976 = vst.msk [vmem:[#allocation3 + $0x78] sm:$0xff] %vm933, %v1935
        %1977 = vst.msk [vmem:[#allocation3 + $0x80] sm:$0xff] %vm933, %v1936
        %1978 = vst.msk [vmem:[#allocation3 + $0x88] sm:$0xff] %vm933, %v1937
        %1979 = vst.msk [vmem:[#allocation3 + $0x90] sm:$0xff] %vm933, %v1938
        %1980 = vst.msk [vmem:[#allocation3 + $0x98] sm:$0xff] %vm933, %v1939
        %1981 = vst.msk [vmem:[#allocation3 + $0xa0] sm:$0xff] %vm933, %v1940
        %1982 = vst.msk [vmem:[#allocation3 + $0xa8] sm:$0xff] %vm933, %v1941
        %1983 = vst.msk [vmem:[#allocation3 + $0xb0] sm:$0xff] %vm933, %v1942
        %1984 = vst.msk [vmem:[#allocation3 + $0xb8] sm:$0xff] %vm933, %v1943
        %1985 = vst.msk [vmem:[#allocation3 + $0xc0] sm:$0xff] %vm933, %v1944
        %1986 = vst.msk [vmem:[#allocation3 + $0xc8] sm:$0xff] %vm933, %v1945
        %1987 = vst.msk [vmem:[#allocation3 + $0xd0] sm:$0xff] %vm933, %v1946
        %1988 = vst.msk [vmem:[#allocation3 + $0xd8] sm:$0xff] %vm933, %v1947
        %1989 = vst.msk [vmem:[#allocation3 + $0xe0] sm:$0xff] %vm933, %v1948
        %1990 = vst.msk [vmem:[#allocation3 + $0xe8] sm:$0xff] %vm933, %v1949
        %1991 = vst.msk [vmem:[#allocation3 + $0xf0] sm:$0xff] %vm933, %v1950
        %1992 = vst.msk [vmem:[#allocation3 + $0xf8] sm:$0xff] %vm933, %v1951
        %1993 = vst.msk [vmem:[#allocation3 + $0x100] sm:$0xff] %vm933, %v1952
        %1994 = vst.msk [vmem:[#allocation3 + $0x108] sm:$0xff] %vm933, %v1953
        %1995 = vst.msk [vmem:[#allocation3 + $0x110] sm:$0xff] %vm933, %v1954
        %1996 = vst.msk [vmem:[#allocation3 + $0x118] sm:$0xff] %vm933, %v1955
        %1997 = vst.msk [vmem:[#allocation3 + $0x120] sm:$0xff] %vm933, %v1956
        %1998 = vst.msk [vmem:[#allocation3 + $0x128] sm:$0xff] %vm933, %v1957
        %1999 = vst.msk [vmem:[#allocation3 + $0x130] sm:$0xff] %vm933, %v1958
        %2000 = vst.msk [vmem:[#allocation3 + $0x138] sm:$0xff] %vm933, %v1959
        %2001 = vst.msk [vmem:[#allocation3 + $0x140] sm:$0xf] %vm974, %v1960
        %v2002 = vld [vmem:[%s2 + $0x170] sm:$0xff]
        %v2003 = vld [vmem:[%s2 + $0x178] sm:$0x1]
        %v2004 = vld [vmem:[%s2 + $0x180] sm:$0x1]
        %v2005 = vld [vmem:[#allocation3] sm:$0xff]
        %v2006 = vld [vmem:[#allocation3 + $0x8] sm:$0xff]
        %v2007 = vld [vmem:[#allocation3 + $0x10] sm:$0xff]
        %v2008 = vld [vmem:[#allocation3 + $0x18] sm:$0xff]
        %v2009 = vld [vmem:[#allocation3 + $0x20] sm:$0xff]
        %v2010 = vld [vmem:[#allocation3 + $0x28] sm:$0xff]
        %v2011 = vld [vmem:[#allocation3 + $0x30] sm:$0xff]
        %v2012 = vld [vmem:[#allocation3 + $0x38] sm:$0xff]
        %v2013 = vld [vmem:[#allocation3 + $0x40] sm:$0xff]
        %v2014 = vld [vmem:[#allocation3 + $0x48] sm:$0xff]
        %v2015 = vld [vmem:[#allocation3 + $0x50] sm:$0x1]
        %v2016 = vlaneseq
        %v2017 = vshrl.u32 %v2016, 7
        %v2018 = vsub.s32 0, %v2017
        %v2019 = vrot.slane %v2002, %v2018
        %v2020 = vmul.f32 %v2005, %v2019
        %v2021 = vmul.f32 %v2006, %v2019
        %v2022 = vmul.f32 %v2007, %v2019
        %v2023 = vmul.f32 %v2008, %v2019
        %v2024 = vmul.f32 %v2009, %v2019
        %v2025 = vmul.f32 %v2010, %v2019
        %v2026 = vmul.f32 %v2011, %v2019
        %v2027 = vmul.f32 %v2012, %v2019
        %v2028 = vmul.f32 %v2013, %v2019
        %v2029 = vmul.f32 %v2014, %v2019
        %v2030 = vmul.f32 %v2015, %v2019
        %v2031 = vld [vmem:[#allocation3 + $0x51] sm:$0xff]
        %v2032 = vld [vmem:[#allocation3 + $0x59] sm:$0xff]
        %v2033 = vld [vmem:[#allocation3 + $0x61] sm:$0xff]
        %v2034 = vld [vmem:[#allocation3 + $0x69] sm:$0xff]
        %v2035 = vld [vmem:[#allocation3 + $0x71] sm:$0xff]
        %v2036 = vld [vmem:[#allocation3 + $0x79] sm:$0xff]
        %v2037 = vld [vmem:[#allocation3 + $0x81] sm:$0xff]
        %v2038 = vld [vmem:[#allocation3 + $0x89] sm:$0xff]
        %v2039 = vld [vmem:[#allocation3 + $0x91] sm:$0xff]
        %v2040 = vld [vmem:[#allocation3 + $0x99] sm:$0xff]
        %v2041 = vld [vmem:[#allocation3 + $0xa1] sm:$0x1]
        %v2042 = vlaneseq
        %v2043 = vshrl.u32 %v2042, 7
        %v2044 = vsub.s32 1, %v2043
        %v2045 = vrot.slane %v2002, %v2044
        %v2046 = vmul.f32 %v2031, %v2045
        %v2047 = vmul.f32 %v2032, %v2045
        %v2048 = vmul.f32 %v2033, %v2045
        %v2049 = vmul.f32 %v2034, %v2045
        %v2050 = vmul.f32 %v2035, %v2045
        %v2051 = vmul.f32 %v2036, %v2045
        %v2052 = vmul.f32 %v2037, %v2045
        %v2053 = vmul.f32 %v2038, %v2045
        %v2054 = vmul.f32 %v2039, %v2045
        %v2055 = vmul.f32 %v2040, %v2045
        %v2056 = vmul.f32 %v2041, %v2045
        %v2057 = vadd.f32 %v2020, %v2046
        %v2058 = vadd.f32 %v2021, %v2047
        %v2059 = vadd.f32 %v2022, %v2048
        %v2060 = vadd.f32 %v2023, %v2049
        %v2061 = vadd.f32 %v2024, %v2050
        %v2062 = vadd.f32 %v2025, %v2051
        %v2063 = vadd.f32 %v2026, %v2052
        %v2064 = vadd.f32 %v2027, %v2053
        %v2065 = vadd.f32 %v2028, %v2054
        %v2066 = vadd.f32 %v2029, %v2055
        %v2067 = vadd.f32 %v2030, %v2056
        %v2068 = vld [vmem:[#allocation3 + $0x1] sm:$0xff]
        %v2069 = vld [vmem:[#allocation3 + $0x9] sm:$0xff]
        %v2070 = vld [vmem:[#allocation3 + $0x11] sm:$0xff]
        %v2071 = vld [vmem:[#allocation3 + $0x19] sm:$0xff]
        %v2072 = vld [vmem:[#allocation3 + $0x21] sm:$0xff]
        %v2073 = vld [vmem:[#allocation3 + $0x29] sm:$0xff]
        %v2074 = vld [vmem:[#allocation3 + $0x31] sm:$0xff]
        %v2075 = vld [vmem:[#allocation3 + $0x39] sm:$0xff]
        %v2076 = vld [vmem:[#allocation3 + $0x41] sm:$0xff]
        %v2077 = vld [vmem:[#allocation3 + $0x49] sm:$0xff]
        %v2078 = vld [vmem:[#allocation3 + $0x51] sm:$0x1]
        %v2079 = vlaneseq
        %v2080 = vshrl.u32 %v2079, 7
        %v2081 = vsub.s32 2, %v2080
        %v2082 = vrot.slane %v2002, %v2081
        %v2083 = vmul.f32 %v2068, %v2082
        %v2084 = vmul.f32 %v2069, %v2082
        %v2085 = vmul.f32 %v2070, %v2082
        %v2086 = vmul.f32 %v2071, %v2082
        %v2087 = vmul.f32 %v2072, %v2082
        %v2088 = vmul.f32 %v2073, %v2082
        %v2089 = vmul.f32 %v2074, %v2082
        %v2090 = vmul.f32 %v2075, %v2082
        %v2091 = vmul.f32 %v2076, %v2082
        %v2092 = vmul.f32 %v2077, %v2082
        %v2093 = vmul.f32 %v2078, %v2082
        %v2094 = vadd.f32 %v2057, %v2083
        %v2095 = vadd.f32 %v2058, %v2084
        %v2096 = vadd.f32 %v2059, %v2085
        %v2097 = vadd.f32 %v2060, %v2086
        %v2098 = vadd.f32 %v2061, %v2087
        %v2099 = vadd.f32 %v2062, %v2088
        %v2100 = vadd.f32 %v2063, %v2089
        %v2101 = vadd.f32 %v2064, %v2090
        %v2102 = vadd.f32 %v2065, %v2091
        %v2103 = vadd.f32 %v2066, %v2092
        %v2104 = vadd.f32 %v2067, %v2093
        %v2105 = vld [vmem:[#allocation3 + $0xa2] sm:$0xff]
        %v2106 = vld [vmem:[#allocation3 + $0xaa] sm:$0xff]
        %v2107 = vld [vmem:[#allocation3 + $0xb2] sm:$0xff]
        %v2108 = vld [vmem:[#allocation3 + $0xba] sm:$0xff]
        %v2109 = vld [vmem:[#allocation3 + $0xc2] sm:$0xff]
        %v2110 = vld [vmem:[#allocation3 + $0xca] sm:$0xff]
        %v2111 = vld [vmem:[#allocation3 + $0xd2] sm:$0xff]
        %v2112 = vld [vmem:[#allocation3 + $0xda] sm:$0xff]
        %v2113 = vld [vmem:[#allocation3 + $0xe2] sm:$0xff]
        %v2114 = vld [vmem:[#allocation3 + $0xea] sm:$0xff]
        %v2115 = vld [vmem:[#allocation3 + $0xf2] sm:$0x1]
        %v2116 = vlaneseq
        %v2117 = vshrl.u32 %v2116, 7
        %v2118 = vsub.s32 3, %v2117
        %v2119 = vrot.slane %v2002, %v2118
        %v2120 = vmul.f32 %v2105, %v2119
        %v2121 = vmul.f32 %v2106, %v2119
        %v2122 = vmul.f32 %v2107, %v2119
        %v2123 = vmul.f32 %v2108, %v2119
        %v2124 = vmul.f32 %v2109, %v2119
        %v2125 = vmul.f32 %v2110, %v2119
        %v2126 = vmul.f32 %v2111, %v2119
        %v2127 = vmul.f32 %v2112, %v2119
        %v2128 = vmul.f32 %v2113, %v2119
        %v2129 = vmul.f32 %v2114, %v2119
        %v2130 = vmul.f32 %v2115, %v2119
        %v2131 = vadd.f32 %v2094, %v2120
        %v2132 = vadd.f32 %v2095, %v2121
        %v2133 = vadd.f32 %v2096, %v2122
        %v2134 = vadd.f32 %v2097, %v2123
        %v2135 = vadd.f32 %v2098, %v2124
        %v2136 = vadd.f32 %v2099, %v2125
        %v2137 = vadd.f32 %v2100, %v2126
        %v2138 = vadd.f32 %v2101, %v2127
        %v2139 = vadd.f32 %v2102, %v2128
        %v2140 = vadd.f32 %v2103, %v2129
        %v2141 = vadd.f32 %v2104, %v2130
        %v2142 = vld [vmem:[#allocation3 + $0xf3] sm:$0xff]
        %v2143 = vld [vmem:[#allocation3 + $0xfb] sm:$0xff]
        %v2144 = vld [vmem:[#allocation3 + $0x103] sm:$0xff]
        %v2145 = vld [vmem:[#allocation3 + $0x10b] sm:$0xff]
        %v2146 = vld [vmem:[#allocation3 + $0x113] sm:$0xff]
        %v2147 = vld [vmem:[#allocation3 + $0x11b] sm:$0xff]
        %v2148 = vld [vmem:[#allocation3 + $0x123] sm:$0xff]
        %v2149 = vld [vmem:[#allocation3 + $0x12b] sm:$0xff]
        %v2150 = vld [vmem:[#allocation3 + $0x133] sm:$0xff]
        %v2151 = vld [vmem:[#allocation3 + $0x13b] sm:$0xff]
        %v2152 = vld [vmem:[#allocation3 + $0x143] sm:$0x1]
        %v2153 = vlaneseq
        %v2154 = vshrl.u32 %v2153, 7
        %v2155 = vsub.s32 4, %v2154
        %v2156 = vrot.slane %v2002, %v2155
        %v2157 = vmul.f32 %v2142, %v2156
        %v2158 = vmul.f32 %v2143, %v2156
        %v2159 = vmul.f32 %v2144, %v2156
        %v2160 = vmul.f32 %v2145, %v2156
        %v2161 = vmul.f32 %v2146, %v2156
        %v2162 = vmul.f32 %v2147, %v2156
        %v2163 = vmul.f32 %v2148, %v2156
        %v2164 = vmul.f32 %v2149, %v2156
        %v2165 = vmul.f32 %v2150, %v2156
        %v2166 = vmul.f32 %v2151, %v2156
        %v2167 = vmul.f32 %v2152, %v2156
        %v2168 = vadd.f32 %v2131, %v2157
        %v2169 = vadd.f32 %v2132, %v2158
        %v2170 = vadd.f32 %v2133, %v2159
        %v2171 = vadd.f32 %v2134, %v2160
        %v2172 = vadd.f32 %v2135, %v2161
        %v2173 = vadd.f32 %v2136, %v2162
        %v2174 = vadd.f32 %v2137, %v2163
        %v2175 = vadd.f32 %v2138, %v2164
        %v2176 = vadd.f32 %v2139, %v2165
        %v2177 = vadd.f32 %v2140, %v2166
        %v2178 = vadd.f32 %v2141, %v2167
        %v2179 = vld [vmem:[#allocation3 + $0xa3] sm:$0xff]
        %v2180 = vld [vmem:[#allocation3 + $0xab] sm:$0xff]
        %v2181 = vld [vmem:[#allocation3 + $0xb3] sm:$0xff]
        %v2182 = vld [vmem:[#allocation3 + $0xbb] sm:$0xff]
        %v2183 = vld [vmem:[#allocation3 + $0xc3] sm:$0xff]
        %v2184 = vld [vmem:[#allocation3 + $0xcb] sm:$0xff]
        %v2185 = vld [vmem:[#allocation3 + $0xd3] sm:$0xff]
        %v2186 = vld [vmem:[#allocation3 + $0xdb] sm:$0xff]
        %v2187 = vld [vmem:[#allocation3 + $0xe3] sm:$0xff]
        %v2188 = vld [vmem:[#allocation3 + $0xeb] sm:$0xff]
        %v2189 = vld [vmem:[#allocation3 + $0xf3] sm:$0x1]
        %v2190 = vlaneseq
        %v2191 = vshrl.u32 %v2190, 7
        %v2192 = vsub.s32 5, %v2191
        %v2193 = vrot.slane %v2002, %v2192
        %v2194 = vmul.f32 %v2179, %v2193
        %v2195 = vmul.f32 %v2180, %v2193
        %v2196 = vmul.f32 %v2181, %v2193
        %v2197 = vmul.f32 %v2182, %v2193
        %v2198 = vmul.f32 %v2183, %v2193
        %v2199 = vmul.f32 %v2184, %v2193
        %v2200 = vmul.f32 %v2185, %v2193
        %v2201 = vmul.f32 %v2186, %v2193
        %v2202 = vmul.f32 %v2187, %v2193
        %v2203 = vmul.f32 %v2188, %v2193
        %v2204 = vmul.f32 %v2189, %v2193
        %v2205 = vadd.f32 %v2168, %v2194
        %v2206 = vadd.f32 %v2169, %v2195
        %v2207 = vadd.f32 %v2170, %v2196
        %v2208 = vadd.f32 %v2171, %v2197
        %v2209 = vadd.f32 %v2172, %v2198
        %v2210 = vadd.f32 %v2173, %v2199
        %v2211 = vadd.f32 %v2174, %v2200
        %v2212 = vadd.f32 %v2175, %v2201
        %v2213 = vadd.f32 %v2176, %v2202
        %v2214 = vadd.f32 %v2177, %v2203
        %v2215 = vadd.f32 %v2178, %v2204
        %v2216 = vld [vmem:[#allocation3 + $0x59] sm:$0x1]
        %v2217 = vlaneseq
        %v2218 = vshrl.u32 %v2217, 7
        %v2219 = vsub.s32 6, %v2218
        %v2220 = vrot.slane %v2002, %v2219
        %v2221 = vmul.f32 %v2069, %v2220
        %v2222 = vmul.f32 %v2070, %v2220
        %v2223 = vmul.f32 %v2071, %v2220
        %v2224 = vmul.f32 %v2072, %v2220
        %v2225 = vmul.f32 %v2073, %v2220
        %v2226 = vmul.f32 %v2074, %v2220
        %v2227 = vmul.f32 %v2075, %v2220
        %v2228 = vmul.f32 %v2076, %v2220
        %v2229 = vmul.f32 %v2077, %v2220
        %v2230 = vmul.f32 %v2031, %v2220
        %v2231 = vmul.f32 %v2216, %v2220
        %v2232 = vadd.f32 %v2205, %v2221
        %v2233 = vadd.f32 %v2206, %v2222
        %v2234 = vadd.f32 %v2207, %v2223
        %v2235 = vadd.f32 %v2208, %v2224
        %v2236 = vadd.f32 %v2209, %v2225
        %v2237 = vadd.f32 %v2210, %v2226
        %v2238 = vadd.f32 %v2211, %v2227
        %v2239 = vadd.f32 %v2212, %v2228
        %v2240 = vadd.f32 %v2213, %v2229
        %v2241 = vadd.f32 %v2214, %v2230
        %v2242 = vadd.f32 %v2215, %v2231
        %v2243 = vld [vmem:[#allocation3 + $0x5a] sm:$0xff]
        %v2244 = vld [vmem:[#allocation3 + $0x62] sm:$0xff]
        %v2245 = vld [vmem:[#allocation3 + $0x6a] sm:$0xff]
        %v2246 = vld [vmem:[#allocation3 + $0x72] sm:$0xff]
        %v2247 = vld [vmem:[#allocation3 + $0x7a] sm:$0xff]
        %v2248 = vld [vmem:[#allocation3 + $0x82] sm:$0xff]
        %v2249 = vld [vmem:[#allocation3 + $0x8a] sm:$0xff]
        %v2250 = vld [vmem:[#allocation3 + $0x92] sm:$0xff]
        %v2251 = vld [vmem:[#allocation3 + $0x9a] sm:$0xff]
        %v2252 = vld [vmem:[#allocation3 + $0xaa] sm:$0x1]
        %v2253 = vlaneseq
        %v2254 = vshrl.u32 %v2253, 7
        %v2255 = vsub.s32 7, %v2254
        %v2256 = vrot.slane %v2002, %v2255
        %v2257 = vmul.f32 %v2243, %v2256
        %v2258 = vmul.f32 %v2244, %v2256
        %v2259 = vmul.f32 %v2245, %v2256
        %v2260 = vmul.f32 %v2246, %v2256
        %v2261 = vmul.f32 %v2247, %v2256
        %v2262 = vmul.f32 %v2248, %v2256
        %v2263 = vmul.f32 %v2249, %v2256
        %v2264 = vmul.f32 %v2250, %v2256
        %v2265 = vmul.f32 %v2251, %v2256
        %v2266 = vmul.f32 %v2105, %v2256
        %v2267 = vmul.f32 %v2252, %v2256
        %v2268 = vadd.f32 %v2232, %v2257
        %v2269 = vadd.f32 %v2233, %v2258
        %v2270 = vadd.f32 %v2234, %v2259
        %v2271 = vadd.f32 %v2235, %v2260
        %v2272 = vadd.f32 %v2236, %v2261
        %v2273 = vadd.f32 %v2237, %v2262
        %v2274 = vadd.f32 %v2238, %v2263
        %v2275 = vadd.f32 %v2239, %v2264
        %v2276 = vadd.f32 %v2240, %v2265
        %v2277 = vadd.f32 %v2241, %v2266
        %v2278 = vadd.f32 %v2242, %v2267
        %v2279 = vld [vmem:[#allocation3 + $0xa] sm:$0xff]
        %v2280 = vld [vmem:[#allocation3 + $0x12] sm:$0xff]
        %v2281 = vld [vmem:[#allocation3 + $0x1a] sm:$0xff]
        %v2282 = vld [vmem:[#allocation3 + $0x22] sm:$0xff]
        %v2283 = vld [vmem:[#allocation3 + $0x2a] sm:$0xff]
        %v2284 = vld [vmem:[#allocation3 + $0x32] sm:$0xff]
        %v2285 = vld [vmem:[#allocation3 + $0x3a] sm:$0xff]
        %v2286 = vld [vmem:[#allocation3 + $0x42] sm:$0xff]
        %v2287 = vld [vmem:[#allocation3 + $0x4a] sm:$0xff]
        %v2288 = vld [vmem:[#allocation3 + $0x52] sm:$0xff]
        %v2289 = vld [vmem:[#allocation3 + $0x5a] sm:$0x1]
        %v2290 = vlaneseq
        %v2291 = vshrl.u32 %v2290, 7
        %v2292 = vsub.s32 0, %v2291
        %v2293 = vrot.slane %v2003, %v2292
        %v2294 = vmul.f32 %v2279, %v2293
        %v2295 = vmul.f32 %v2280, %v2293
        %v2296 = vmul.f32 %v2281, %v2293
        %v2297 = vmul.f32 %v2282, %v2293
        %v2298 = vmul.f32 %v2283, %v2293
        %v2299 = vmul.f32 %v2284, %v2293
        %v2300 = vmul.f32 %v2285, %v2293
        %v2301 = vmul.f32 %v2286, %v2293
        %v2302 = vmul.f32 %v2287, %v2293
        %v2303 = vmul.f32 %v2288, %v2293
        %v2304 = vmul.f32 %v2289, %v2293
        %v2305 = vadd.f32 %v2268, %v2294
        %v2306 = vadd.f32 %v2269, %v2295
        %v2307 = vadd.f32 %v2270, %v2296
        %v2308 = vadd.f32 %v2271, %v2297
        %v2309 = vadd.f32 %v2272, %v2298
        %v2310 = vadd.f32 %v2273, %v2299
        %v2311 = vadd.f32 %v2274, %v2300
        %v2312 = vadd.f32 %v2275, %v2301
        %v2313 = vadd.f32 %v2276, %v2302
        %v2314 = vadd.f32 %v2277, %v2303
        %v2315 = vadd.f32 %v2278, %v2304
        %v2316 = vlaneseq
        %v2317 = vshrl.u32 %v2316, 7
        %v2318 = vsub.s32 0, %v2317
        %v2319 = vrot.slane %v2004, %v2318
        %v2320 = vadd.f32 %v2305, %v2319
        %v2321 = vadd.f32 %v2306, %v2319
        %v2322 = vadd.f32 %v2307, %v2319
        %v2323 = vadd.f32 %v2308, %v2319
        %v2324 = vadd.f32 %v2309, %v2319
        %v2325 = vadd.f32 %v2310, %v2319
        %v2326 = vadd.f32 %v2311, %v2319
        %v2327 = vadd.f32 %v2312, %v2319
        %v2328 = vadd.f32 %v2313, %v2319
        %v2329 = vadd.f32 %v2314, %v2319
        %v2330 = vadd.f32 %v2315, %v2319
        %v2331 = vpack.c.bf16 %v1388, %v1387
        %v2332 = vpack.c.bf16 %v1390, %v1389
        %v2333 = vpack.c.bf16 %v1392, %v1391
        %v2334 = vpack.c.bf16 %v1394, %v1393
        %v2335 = vpack.c.bf16 %v1396, %v1395
        %v2336 = vpack.c.bf16 %v1397, %v1397
        %v2337 = vld [vmem:[%s1 + $0x10] sm:$0xf]
        %v2338 = vld [vmem:[%s1 + $0x14] sm:$0xf]
        %v2339 = vpack.c.bf16 %v2321, %v2320
        %v2340 = vpack.c.bf16 %v2323, %v2322
        %v2341 = vpack.c.bf16 %v2325, %v2324
        %v2342 = vpack.c.bf16 %v2327, %v2326
        %v2343 = vpack.c.bf16 %v2329, %v2328
        %v2344 = vpack.c.bf16 %v2330, %v2330
        %v2345 = vld [vmem:[%s1 + $0x20] sm:$0xf]
        %v2346 = vld [vmem:[%s1 + $0x24] sm:$0xf]
        %v2349 = vunpack.c.l.b16 %v2345
        %v2350 = vunpack.c.l.b16 %v2346
        %v2351 = vpack.c.b16 %v2350, %v2349
        %v2354 = vsel %vm933, %v2339, 0
        %v2357 = vsel %vm933, %v2340, 0
        %v2360 = vsel %vm933, %v2341, 0
        %v2363 = vsel %vm933, %v2342, 0
        %v2366 = vsel %vm933, %v2343, 0
        %v2369 = vsel %vm933, %v2344, 0
        %2371 = vmatprep.subr.bf16.mxu0 0
        %2372 = vmatpush1.bf16.msra.mxu0 %v2351
        %2373 = vmatprep.subr.bf16.mxu0 0
        %2374 = vmatpush1.bf16.msra.mxu0 0
        %2375 = vmatprep.subr.bf16.mxu0 0
        %2376 = vmatpush1.bf16.msra.mxu0 0
        %2377 = vmatprep.subr.bf16.mxu0 0
        %2378 = vmatpush1.bf16.msra.mxu0 0
        %2379 = vmatprep.subr.bf16.mxu0 0
        %2380 = vmatpush1.bf16.msra.mxu0 0
        %2381 = vmatprep.subr.bf16.mxu0 0
        %2382 = vmatpush1.bf16.msra.mxu0 0
        %2383 = vmatprep.subr.bf16.mxu0 0
        %2384 = vmatpush1.bf16.msra.mxu0 0
        %2385 = vmatprep.subr.bf16.mxu0 0
        %2386 = vmatpush1.bf16.msra.mxu0 0
        %2387 = vmatprep.subr.bf16.mxu0 0
        %2388 = vmatpush1.bf16.msra.mxu0 0
        %2389 = vmatprep.subr.bf16.mxu0 0
        %2390 = vmatpush1.bf16.msra.mxu0 0
        %2391 = vmatprep.subr.bf16.mxu0 0
        %2392 = vmatpush1.bf16.msra.mxu0 0
        %2393 = vmatprep.subr.bf16.mxu0 0
        %2394 = vmatpush1.bf16.msra.mxu0 0
        %2395 = vmatprep.subr.bf16.mxu0 0
        %2396 = vmatpush1.bf16.msra.mxu0 0
        %2397 = vmatprep.subr.bf16.mxu0 0
        %2398 = vmatpush1.bf16.msra.mxu0 0
        %2399 = vmatprep.subr.bf16.mxu0 0
        %2400 = vmatpush1.bf16.msra.mxu0 0
        %2401 = vmatprep.subr.bf16.mxu0 0
        %2402 = vmatpush1.bf16.msra.mxu0 0
        %2403 = vmatprep.mubr.bf16.mxu0 0
        %2404 = vmatmul.mubr.bf16.gmra.mrb[0].mxu0 %v2354
        %v2405 = vpop.f32.mrb[0].mxu0
        %v2406 = vadd.f32 0.0, %v2405
        %v2407 = vpop.f32.mrb[0].mxu0
        %v2408 = vpop.f32.mrb[0].mxu0
        %v2409 = vadd.f32 0.0, %v2408
        %v2410 = vpop.f32.mrb[0].mxu0
        %2411 = vmatprep.mubr.bf16.mxu0 0
        %2412 = vmatmul.mubr.bf16.gmra.mrb[0].mxu0 %v2357
        %v2413 = vpop.f32.mrb[0].mxu0
        %v2414 = vadd.f32 0.0, %v2413
        %v2415 = vpop.f32.mrb[0].mxu0
        %v2416 = vpop.f32.mrb[0].mxu0
        %v2417 = vadd.f32 0.0, %v2416
        %v2418 = vpop.f32.mrb[0].mxu0
        %2419 = vmatprep.mubr.bf16.mxu0 0
        %2420 = vmatmul.mubr.bf16.gmra.mrb[0].mxu0 %v2360
        %v2421 = vpop.f32.mrb[0].mxu0
        %v2422 = vadd.f32 0.0, %v2421
        %v2423 = vpop.f32.mrb[0].mxu0
        %v2424 = vpop.f32.mrb[0].mxu0
        %v2425 = vadd.f32 0.0, %v2424
        %v2426 = vpop.f32.mrb[0].mxu0
        %2427 = vmatprep.mubr.bf16.mxu0 0
        %2428 = vmatmul.mubr.bf16.gmra.mrb[0].mxu0 %v2363
        %v2429 = vpop.f32.mrb[0].mxu0
        %v2430 = vadd.f32 0.0, %v2429
        %v2431 = vpop.f32.mrb[0].mxu0
        %v2432 = vpop.f32.mrb[0].mxu0
        %v2433 = vadd.f32 0.0, %v2432
        %v2434 = vpop.f32.mrb[0].mxu0
        %2435 = vmatprep.mubr.bf16.mxu0 0
        %2436 = vmatmul.mubr.bf16.gmra.mrb[0].mxu0 %v2366
        %v2437 = vpop.f32.mrb[0].mxu0
        %v2438 = vadd.f32 0.0, %v2437
        %v2439 = vpop.f32.mrb[0].mxu0
        %v2440 = vpop.f32.mrb[0].mxu0
        %v2441 = vadd.f32 0.0, %v2440
        %v2442 = vpop.f32.mrb[0].mxu0
        %2443 = vmatprep.mubr.bf16.mxu0 0
        %2444 = vmatmul.mubr.bf16.gmra.mrb[0].mxu0 %v2369
        %v2445 = vpop.f32.mrb[0].mxu0
        %v2446 = vadd.f32 0.0, %v2445
        %v2447 = vpop.f32.mrb[0].mxu0
        %v2448 = vpop.f32.mrb[0].mxu0
        %v2449 = vpop.f32.mrb[0].mxu0
        %2450 = vdwg.mxu0
        %v2453 = vunpack.c.l.b16 %v2337
        %v2454 = vunpack.c.l.b16 %v2338
        %v2455 = vpack.c.b16 %v2454, %v2453
        %v2458 = vsel %vm933, %v2331, 0
        %v2461 = vsel %vm933, %v2332, 0
        %v2464 = vsel %vm933, %v2333, 0
        %v2467 = vsel %vm933, %v2334, 0
        %v2470 = vsel %vm933, %v2335, 0
        %v2473 = vsel %vm933, %v2336, 0
        %2475 = vmatprep.subr.bf16.mxu0 0
        %2476 = vmatpush1.bf16.msra.mxu0 %v2455
        %2477 = vmatprep.subr.bf16.mxu0 0
        %2478 = vmatpush1.bf16.msra.mxu0 0
        %2479 = vmatprep.subr.bf16.mxu0 0
        %2480 = vmatpush1.bf16.msra.mxu0 0
        %2481 = vmatprep.subr.bf16.mxu0 0
        %2482 = vmatpush1.bf16.msra.mxu0 0
        %2483 = vmatprep.subr.bf16.mxu0 0
        %2484 = vmatpush1.bf16.msra.mxu0 0
        %2485 = vmatprep.subr.bf16.mxu0 0
        %2486 = vmatpush1.bf16.msra.mxu0 0
        %2487 = vmatprep.subr.bf16.mxu0 0
        %2488 = vmatpush1.bf16.msra.mxu0 0
        %2489 = vmatprep.subr.bf16.mxu0 0
        %2490 = vmatpush1.bf16.msra.mxu0 0
        %2491 = vmatprep.subr.bf16.mxu0 0
        %2492 = vmatpush1.bf16.msra.mxu0 0
        %2493 = vmatprep.subr.bf16.mxu0 0
        %2494 = vmatpush1.bf16.msra.mxu0 0
        %2495 = vmatprep.subr.bf16.mxu0 0
        %2496 = vmatpush1.bf16.msra.mxu0 0
        %2497 = vmatprep.subr.bf16.mxu0 0
        %2498 = vmatpush1.bf16.msra.mxu0 0
        %2499 = vmatprep.subr.bf16.mxu0 0
        %2500 = vmatpush1.bf16.msra.mxu0 0
        %2501 = vmatprep.subr.bf16.mxu0 0
        %2502 = vmatpush1.bf16.msra.mxu0 0
        %2503 = vmatprep.subr.bf16.mxu0 0
        %2504 = vmatpush1.bf16.msra.mxu0 0
        %2505 = vmatprep.subr.bf16.mxu0 0
        %2506 = vmatpush1.bf16.msra.mxu0 0
        %2507 = vmatprep.mubr.bf16.mxu0 0
        %2508 = vmatmul.mubr.bf16.gmra.mrb[0].mxu0 %v2458
        %v2509 = vpop.f32.mrb[0].mxu0
        %v2510 = vadd.f32 %v2406, %v2509
        %v2511 = vpop.f32.mrb[0].mxu0
        %v2512 = vpop.f32.mrb[0].mxu0
        %v2513 = vadd.f32 %v2409, %v2512
        %v2514 = vpop.f32.mrb[0].mxu0
        %2515 = vmatprep.mubr.bf16.mxu0 0
        %2516 = vmatmul.mubr.bf16.gmra.mrb[0].mxu0 %v2461
        %v2517 = vpop.f32.mrb[0].mxu0
        %v2518 = vadd.f32 %v2414, %v2517
        %v2519 = vpop.f32.mrb[0].mxu0
        %v2520 = vpop.f32.mrb[0].mxu0
        %v2521 = vadd.f32 %v2417, %v2520
        %v2522 = vpop.f32.mrb[0].mxu0
        %2523 = vmatprep.mubr.bf16.mxu0 0
        %2524 = vmatmul.mubr.bf16.gmra.mrb[0].mxu0 %v2464
        %v2525 = vpop.f32.mrb[0].mxu0
        %v2526 = vadd.f32 %v2422, %v2525
        %v2527 = vpop.f32.mrb[0].mxu0
        %v2528 = vpop.f32.mrb[0].mxu0
        %v2529 = vadd.f32 %v2425, %v2528
        %v2530 = vpop.f32.mrb[0].mxu0
        %2531 = vmatprep.mubr.bf16.mxu0 0
        %2532 = vmatmul.mubr.bf16.gmra.mrb[0].mxu0 %v2467
        %v2533 = vpop.f32.mrb[0].mxu0
        %v2534 = vadd.f32 %v2430, %v2533
        %v2535 = vpop.f32.mrb[0].mxu0
        %v2536 = vpop.f32.mrb[0].mxu0
        %v2537 = vadd.f32 %v2433, %v2536
        %v2538 = vpop.f32.mrb[0].mxu0
        %2539 = vmatprep.mubr.bf16.mxu0 0
        %2540 = vmatmul.mubr.bf16.gmra.mrb[0].mxu0 %v2470
        %v2541 = vpop.f32.mrb[0].mxu0
        %v2542 = vadd.f32 %v2438, %v2541
        %v2543 = vpop.f32.mrb[0].mxu0
        %v2544 = vpop.f32.mrb[0].mxu0
        %v2545 = vadd.f32 %v2441, %v2544
        %v2546 = vpop.f32.mrb[0].mxu0
        %2547 = vmatprep.mubr.bf16.mxu0 0
        %2548 = vmatmul.mubr.bf16.gmra.mrb[0].mxu0 %v2473
        %v2549 = vpop.f32.mrb[0].mxu0
        %v2550 = vadd.f32 %v2446, %v2549
        %v2551 = vpop.f32.mrb[0].mxu0
        %v2552 = vpop.f32.mrb[0].mxu0
        %v2553 = vpop.f32.mrb[0].mxu0
        %2554 = vdwg.mxu0
        %v2555 = vld [vmem:[%s2 + $0x188] sm:$0x1]
        %v2556 = vlaneseq
        %v2557 = vshrl.u32 %v2556, 7
        %v2558 = vsub.s32 0, %v2557
        %v2559 = vrot.slane %v2555, %v2558
        %v2560 = vadd.f32 %v2510, %v2559
        %v2561 = vadd.f32 %v2513, %v2559
        %v2562 = vadd.f32 %v2518, %v2559
        %v2563 = vadd.f32 %v2521, %v2559
        %v2564 = vadd.f32 %v2526, %v2559
        %v2565 = vadd.f32 %v2529, %v2559
        %v2566 = vadd.f32 %v2534, %v2559
        %v2567 = vadd.f32 %v2537, %v2559
        %v2568 = vadd.f32 %v2542, %v2559
        %v2569 = vadd.f32 %v2545, %v2559
        %v2570 = vadd.f32 %v2550, %v2559
        %v2571 = vmax.f32 %v2560, 0.0
        %v2572 = vmax.f32 %v2561, 0.0
        %v2573 = vmax.f32 %v2562, 0.0
        %v2574 = vmax.f32 %v2563, 0.0
        %v2575 = vmax.f32 %v2564, 0.0
        %v2576 = vmax.f32 %v2565, 0.0
        %v2577 = vmax.f32 %v2566, 0.0
        %v2578 = vmax.f32 %v2567, 0.0
        %v2579 = vmax.f32 %v2568, 0.0
        %v2580 = vmax.f32 %v2569, 0.0
        %v2581 = vmax.f32 %v2570, 0.0
        %v2582 = vld [vmem:[%s2 + $0x190] sm:$0xff]
        %v2583 = vld [vmem:[%s2 + $0x198] sm:$0xff]
        %v2584 = vld [vmem:[%s2 + $0x1a0] sm:$0xff]
        %v2585 = vld [vmem:[%s2 + $0x1a8] sm:$0xff]
        %v2586 = vld [vmem:[%s2 + $0x1b0] sm:$0xff]
        %v2587 = vld [vmem:[%s2 + $0x1b8] sm:$0xff]
        %v2588 = vld [vmem:[%s2 + $0x1c0] sm:$0xff]
        %v2589 = vld [vmem:[%s2 + $0x1c8] sm:$0xff]
        %v2590 = vld [vmem:[%s2 + $0x1d0] sm:$0xff]
        %v2591 = vld [vmem:[%s2 + $0x1d8] sm:$0xff]
        %v2592 = vld [vmem:[%s2 + $0x1e0] sm:$0xff]
        %v2593 = vld [vmem:[%s2 + $0x1e8] sm:$0xff]
        %v2594 = vld [vmem:[%s2 + $0x1f0] sm:$0xf]
        %vm2595 = vcmask 662528
        %v2597 = vsel %vm2595, %v2582, 0
        %v2600 = vsel %vm2595, %v2583, 0
        %v2603 = vsel %vm2595, %v2584, 0
        %v2606 = vsel %vm2595, %v2585, 0
        %v2609 = vsel %vm2595, %v2586, 0
        %v2612 = vsel %vm2595, %v2587, 0
        %v2615 = vsel %vm2595, %v2588, 0
        %v2618 = vsel %vm2595, %v2589, 0
        %v2621 = vsel %vm2595, %v2590, 0
        %v2624 = vsel %vm2595, %v2591, 0
        %v2627 = vsel %vm2595, %v2592, 0
        %v2630 = vsel %vm2595, %v2593, 0
        %v2633 = vsel %vm2595, %v2594, 0
        %vm2635 = vcmask 1040384
        %v2637 = vsel %vm2635, %v2581, 0
        %2639 = vmatprep.subr.mxu0 0.0
        %2640 = vmatpush1.msra.mxu0 %v2571
        %2641 = vmatprep.subr.mxu0 0.0
        %2642 = vmatpush1.msra.mxu0 %v2572
        %2643 = vmatprep.subr.mxu0 0.0
        %2644 = vmatpush1.msra.mxu0 %v2573
        %2645 = vmatprep.subr.mxu0 0.0
        %2646 = vmatpush1.msra.mxu0 %v2574
        %2647 = vmatprep.subr.mxu0 0.0
        %2648 = vmatpush1.msra.mxu0 %v2575
        %2649 = vmatprep.subr.mxu0 0.0
        %2650 = vmatpush1.msra.mxu0 %v2576
        %2651 = vmatprep.subr.mxu0 0.0
        %2652 = vmatpush1.msra.mxu0 %v2577
        %2653 = vmatprep.subr.mxu0 0.0
        %2654 = vmatpush1.msra.mxu0 %v2578
        %2655 = vmatprep.subr.mxu0 0.0
        %2656 = vmatpush1.msra.mxu0 %v2579
        %2657 = vmatprep.subr.mxu0 0.0
        %2658 = vmatpush1.msra.mxu0 %v2580
        %2659 = vmatprep.subr.mxu0 0.0
        %2660 = vmatpush1.msra.mxu0 %v2637
        %2661 = vmatprep.subr.mxu0 0.0
        %2662 = vmatpush1.msra.mxu0 0.0
        %2663 = vmatprep.subr.mxu0 0.0
        %2664 = vmatpush1.msra.mxu0 0.0
        %2665 = vmatprep.subr.mxu0 0.0
        %2666 = vmatpush1.msra.mxu0 0.0
        %2667 = vmatprep.subr.mxu0 0.0
        %2668 = vmatpush1.msra.mxu0 0.0
        %2669 = vmatprep.subr.mxu0 0.0
        %2670 = vmatpush1.msra.mxu0 0.0
        %2671 = vmatprep.subr.mxu0 0.0
        %2672 = vmatpush1.msra.mxu0 0.0
        %2673 = vmatprep.subr.mxu0 0.0
        %2674 = vmatpush1.msra.mxu0 0.0
        %2675 = vmatprep.subr.mxu0 0.0
        %2676 = vmatpush1.msra.mxu0 0.0
        %2677 = vmatprep.subr.mxu0 0.0
        %2678 = vmatpush1.msra.mxu0 0.0
        %2679 = vmatprep.subr.mxu0 0.0
        %2680 = vmatpush1.msra.mxu0 0.0
        %2681 = vmatprep.subr.mxu0 0.0
        %2682 = vmatpush1.msra.mxu0 0.0
        %2683 = vmatprep.subr.mxu0 0.0
        %2684 = vmatpush1.msra.mxu0 0.0
        %2685 = vmatprep.subr.mxu0 0.0
        %2686 = vmatpush1.msra.mxu0 0.0
        %2687 = vmatprep.subr.mxu0 0.0
        %2688 = vmatpush1.msra.mxu0 0.0
        %2689 = vmatprep.subr.mxu0 0.0
        %2690 = vmatpush1.msra.mxu0 0.0
        %2691 = vmatprep.subr.mxu0 0.0
        %2692 = vmatpush1.msra.mxu0 0.0
        %2693 = vmatprep.subr.mxu0 0.0
        %2694 = vmatpush1.msra.mxu0 0.0
        %2695 = vmatprep.subr.mxu0 0.0
        %2696 = vmatpush1.msra.mxu0 0.0
        %2697 = vmatprep.subr.mxu0 0.0
        %2698 = vmatpush1.msra.mxu0 0.0
        %2699 = vmatprep.subr.mxu0 0.0
        %2700 = vmatpush1.msra.mxu0 0.0
        %2701 = vmatprep.subr.mxu0 0.0
        %2702 = vmatpush1.msra.mxu0 0.0
        %2703 = vmatprep.mubr.f32.mxu0 0.0
        %2704 = vmatmul.mubr.f32.gmra.mrb[0].mxu0 %v2597
        %v2705 = vpop.f32.mrb[0].mxu0
        %v2706 = vadd.f32 0.0, %v2705
        %v2707 = vpop.f32.mrb[0].mxu0
        %2708 = vmatprep.mubr.f32.mxu0 0.0
        %2709 = vmatmul.mubr.f32.gmra.mrb[0].mxu0 %v2600
        %v2710 = vpop.f32.mrb[0].mxu0
        %v2711 = vadd.f32 0.0, %v2710
        %v2712 = vpop.f32.mrb[0].mxu0
        %2713 = vmatprep.mubr.f32.mxu0 0.0
        %2714 = vmatmul.mubr.f32.gmra.mrb[0].mxu0 %v2603
        %v2715 = vpop.f32.mrb[0].mxu0
        %v2716 = vadd.f32 0.0, %v2715
        %v2717 = vpop.f32.mrb[0].mxu0
        %2718 = vmatprep.mubr.f32.mxu0 0.0
        %2719 = vmatmul.mubr.f32.gmra.mrb[0].mxu0 %v2606
        %v2720 = vpop.f32.mrb[0].mxu0
        %v2721 = vadd.f32 0.0, %v2720
        %v2722 = vpop.f32.mrb[0].mxu0
        %2723 = vmatprep.mubr.f32.mxu0 0.0
        %2724 = vmatmul.mubr.f32.gmra.mrb[0].mxu0 %v2609
        %v2725 = vpop.f32.mrb[0].mxu0
        %v2726 = vadd.f32 0.0, %v2725
        %v2727 = vpop.f32.mrb[0].mxu0
        %2728 = vmatprep.mubr.f32.mxu0 0.0
        %2729 = vmatmul.mubr.f32.gmra.mrb[0].mxu0 %v2612
        %v2730 = vpop.f32.mrb[0].mxu0
        %v2731 = vadd.f32 0.0, %v2730
        %v2732 = vpop.f32.mrb[0].mxu0
        %2733 = vmatprep.mubr.f32.mxu0 0.0
        %2734 = vmatmul.mubr.f32.gmra.mrb[0].mxu0 %v2615
        %v2735 = vpop.f32.mrb[0].mxu0
        %v2736 = vadd.f32 0.0, %v2735
        %v2737 = vpop.f32.mrb[0].mxu0
        %2738 = vmatprep.mubr.f32.mxu0 0.0
        %2739 = vmatmul.mubr.f32.gmra.mrb[0].mxu0 %v2618
        %v2740 = vpop.f32.mrb[0].mxu0
        %v2741 = vadd.f32 0.0, %v2740
        %v2742 = vpop.f32.mrb[0].mxu0
        %2743 = vmatprep.mubr.f32.mxu0 0.0
        %2744 = vmatmul.mubr.f32.gmra.mrb[0].mxu0 %v2621
        %v2745 = vpop.f32.mrb[0].mxu0
        %v2746 = vadd.f32 0.0, %v2745
        %v2747 = vpop.f32.mrb[0].mxu0
        %2748 = vmatprep.mubr.f32.mxu0 0.0
        %2749 = vmatmul.mubr.f32.gmra.mrb[0].mxu0 %v2624
        %v2750 = vpop.f32.mrb[0].mxu0
        %v2751 = vadd.f32 0.0, %v2750
        %v2752 = vpop.f32.mrb[0].mxu0
        %2753 = vmatprep.mubr.f32.mxu0 0.0
        %2754 = vmatmul.mubr.f32.gmra.mrb[0].mxu0 %v2627
        %v2755 = vpop.f32.mrb[0].mxu0
        %v2756 = vadd.f32 0.0, %v2755
        %v2757 = vpop.f32.mrb[0].mxu0
        %2758 = vmatprep.mubr.f32.mxu0 0.0
        %2759 = vmatmul.mubr.f32.gmra.mrb[0].mxu0 %v2630
        %v2760 = vpop.f32.mrb[0].mxu0
        %v2761 = vadd.f32 0.0, %v2760
        %v2762 = vpop.f32.mrb[0].mxu0
        %2763 = vmatprep.mubr.f32.mxu0 0.0
        %2764 = vmatmul.mubr.f32.gmra.mrb[0].mxu0 %v2633
        %v2765 = vpop.f32.mrb[0].mxu0
        %v2766 = vadd.f32 0.0, %v2765
        %v2767 = vpop.f32.mrb[0].mxu0
        %2768 = vdwg.mxu0
        %vm2769 = vcmask 261120
        %2770 = vst.msk [vmem:[#allocation4] sm:$0xff] %vm2769, %v2706
        %2771 = vst.msk [vmem:[#allocation4 + $0x8] sm:$0xff] %vm2769, %v2711
        %2772 = vst.msk [vmem:[#allocation4 + $0x10] sm:$0xff] %vm2769, %v2716
        %2773 = vst.msk [vmem:[#allocation4 + $0x18] sm:$0xff] %vm2769, %v2721
        %2774 = vst.msk [vmem:[#allocation4 + $0x20] sm:$0xff] %vm2769, %v2726
        %2775 = vst.msk [vmem:[#allocation4 + $0x28] sm:$0xff] %vm2769, %v2731
        %2776 = vst.msk [vmem:[#allocation4 + $0x30] sm:$0xff] %vm2769, %v2736
        %2777 = vst.msk [vmem:[#allocation4 + $0x38] sm:$0xff] %vm2769, %v2741
        %2778 = vst.msk [vmem:[#allocation4 + $0x40] sm:$0xff] %vm2769, %v2746
        %2779 = vst.msk [vmem:[#allocation4 + $0x48] sm:$0xff] %vm2769, %v2751
        %2780 = vst.msk [vmem:[#allocation4 + $0x50] sm:$0xff] %vm2769, %v2756
        %2781 = vst.msk [vmem:[#allocation4 + $0x58] sm:$0xff] %vm2769, %v2761
        %vm2782 = vcmask 257024
        %2783 = vst.msk [vmem:[#allocation4 + $0x60] sm:$0xf] %vm2782, %v2766
        %v2784 = vld [vmem:[%s2 + $0x230] sm:$0xff]
        %v2785 = vld [vmem:[%s2 + $0x238] sm:$0xff]
        %v2786 = vld [vmem:[%s2 + $0x240] sm:$0xff]
        %v2787 = vld [vmem:[%s2 + $0x248] sm:$0xff]
        %v2788 = vld [vmem:[%s2 + $0x250] sm:$0xff]
        %v2789 = vld [vmem:[%s2 + $0x258] sm:$0xff]
        %v2790 = vld [vmem:[%s2 + $0x260] sm:$0xff]
        %v2791 = vld [vmem:[%s2 + $0x268] sm:$0xff]
        %v2792 = vld [vmem:[%s2 + $0x270] sm:$0xff]
        %v2793 = vld [vmem:[%s2 + $0x278] sm:$0xff]
        %v2794 = vld [vmem:[%s2 + $0x280] sm:$0xff]
        %v2795 = vld [vmem:[%s2 + $0x288] sm:$0xff]
        %v2796 = vld [vmem:[%s2 + $0x290] sm:$0xf]
        %v2797 = vld [vmem:[#allocation4] sm:$0xff]
        %v2798 = vld [vmem:[#allocation4 + $0x8] sm:$0xff]
        %v2799 = vld [vmem:[#allocation4 + $0x10] sm:$0xff]
        %v2800 = vld [vmem:[#allocation4 + $0x18] sm:$0xff]
        %v2801 = vld [vmem:[#allocation4 + $0x20] sm:$0xff]
        %v2802 = vld [vmem:[#allocation4 + $0x28] sm:$0xff]
        %v2803 = vld [vmem:[#allocation4 + $0x30] sm:$0xff]
        %v2804 = vld [vmem:[#allocation4 + $0x38] sm:$0xff]
        %v2805 = vld [vmem:[#allocation4 + $0x40] sm:$0xff]
        %v2806 = vld [vmem:[#allocation4 + $0x48] sm:$0xff]
        %v2807 = vld [vmem:[#allocation4 + $0x50] sm:$0xff]
        %v2808 = vld [vmem:[#allocation4 + $0x58] sm:$0xff]
        %v2809 = vld [vmem:[#allocation4 + $0x60] sm:$0xf]
        %v2810 = vpack.c.bf16 %v2798, %v2797
        %v2811 = vpack.c.bf16 %v2800, %v2799
        %v2812 = vpack.c.bf16 %v2802, %v2801
        %v2813 = vpack.c.bf16 %v2804, %v2803
        %v2814 = vpack.c.bf16 %v2806, %v2805
        %v2815 = vpack.c.bf16 %v2808, %v2807
        %v2816 = vpack.c.bf16 %v2809, %v2809
        %v2817 = vld [vmem:[%s1 + $0x28] sm:$0xf]
        %v2818 = vld [vmem:[%s1 + $0x2c] sm:$0xf]
        %v2819 = vld [vmem:[%s1 + $0x30] sm:$0xf]
        %v2820 = vld [vmem:[%s1 + $0x34] sm:$0xf]
        %v2821 = vld [vmem:[%s2 + $0x1f8] sm:$0x1]
        %v2822 = vlaneseq
        %v2823 = vshrl.u32 %v2822, 7
        %v2824 = vsub.s32 0, %v2823
        %v2825 = vrot.slane %v2821, %v2824
        %v2830 = vunpack.c.l.b16 %v2817
        %v2831 = vunpack.c.l.b16 %v2818
        %v2832 = vunpack.c.l.b16 %v2819
        %v2833 = vunpack.c.l.b16 %v2820
        %v2834 = vpack.c.b16 %v2831, %v2830
        %v2835 = vpack.c.b16 %v2833, %v2832
        %v2839 = vsel %vm2769, %v2810, 0
        %v2842 = vsel %vm2769, %v2811, 0
        %v2845 = vsel %vm2769, %v2812, 0
        %v2848 = vsel %vm2769, %v2813, 0
        %v2851 = vsel %vm2769, %v2814, 0
        %v2854 = vsel %vm2769, %v2815, 0
        %v2857 = vsel %vm2769, %v2816, 0
        %2859 = vmatprep.subr.bf16.mxu0 0
        %2860 = vmatpush1.bf16.msra.mxu0 %v2834
        %2861 = vmatprep.subr.bf16.mxu0 0
        %2862 = vmatpush1.bf16.msra.mxu0 %v2835
        %2863 = vmatprep.subr.bf16.mxu0 0
        %2864 = vmatpush1.bf16.msra.mxu0 0
        %2865 = vmatprep.subr.bf16.mxu0 0
        %2866 = vmatpush1.bf16.msra.mxu0 0
        %2867 = vmatprep.subr.bf16.mxu0 0
        %2868 = vmatpush1.bf16.msra.mxu0 0
        %2869 = vmatprep.subr.bf16.mxu0 0
        %2870 = vmatpush1.bf16.msra.mxu0 0
        %2871 = vmatprep.subr.bf16.mxu0 0
        %2872 = vmatpush1.bf16.msra.mxu0 0
        %2873 = vmatprep.subr.bf16.mxu0 0
        %2874 = vmatpush1.bf16.msra.mxu0 0
        %2875 = vmatprep.subr.bf16.mxu0 0
        %2876 = vmatpush1.bf16.msra.mxu0 0
        %2877 = vmatprep.subr.bf16.mxu0 0
        %2878 = vmatpush1.bf16.msra.mxu0 0
        %2879 = vmatprep.subr.bf16.mxu0 0
        %2880 = vmatpush1.bf16.msra.mxu0 0
        %2881 = vmatprep.subr.bf16.mxu0 0
        %2882 = vmatpush1.bf16.msra.mxu0 0
        %2883 = vmatprep.subr.bf16.mxu0 0
        %2884 = vmatpush1.bf16.msra.mxu0 0
        %2885 = vmatprep.subr.bf16.mxu0 0
        %2886 = vmatpush1.bf16.msra.mxu0 0
        %2887 = vmatprep.subr.bf16.mxu0 0
        %2888 = vmatpush1.bf16.msra.mxu0 0
        %2889 = vmatprep.subr.bf16.mxu0 0
        %2890 = vmatpush1.bf16.msra.mxu0 0
        %2891 = vmatprep.mubr.bf16.mxu0 0
        %2892 = vmatmul.mubr.bf16.gmra.mrb[0].mxu0 %v2839
        %v2893 = vpop.f32.mrb[0].mxu0
        %v2894 = vadd.f32 %v2825, %v2893
        %v2895 = vpop.f32.mrb[0].mxu0
        %v2896 = vpop.f32.mrb[0].mxu0
        %v2897 = vadd.f32 %v2825, %v2896
        %v2898 = vpop.f32.mrb[0].mxu0
        %2899 = vmatprep.mubr.bf16.mxu0 0
        %2900 = vmatmul.mubr.bf16.gmra.mrb[0].mxu0 %v2842
        %v2901 = vpop.f32.mrb[0].mxu0
        %v2902 = vadd.f32 %v2825, %v2901
        %v2903 = vpop.f32.mrb[0].mxu0
        %v2904 = vpop.f32.mrb[0].mxu0
        %v2905 = vadd.f32 %v2825, %v2904
        %v2906 = vpop.f32.mrb[0].mxu0
        %2907 = vmatprep.mubr.bf16.mxu0 0
        %2908 = vmatmul.mubr.bf16.gmra.mrb[0].mxu0 %v2845
        %v2909 = vpop.f32.mrb[0].mxu0
        %v2910 = vadd.f32 %v2825, %v2909
        %v2911 = vpop.f32.mrb[0].mxu0
        %v2912 = vpop.f32.mrb[0].mxu0
        %v2913 = vadd.f32 %v2825, %v2912
        %v2914 = vpop.f32.mrb[0].mxu0
        %2915 = vmatprep.mubr.bf16.mxu0 0
        %2916 = vmatmul.mubr.bf16.gmra.mrb[0].mxu0 %v2848
        %v2917 = vpop.f32.mrb[0].mxu0
        %v2918 = vadd.f32 %v2825, %v2917
        %v2919 = vpop.f32.mrb[0].mxu0
        %v2920 = vpop.f32.mrb[0].mxu0
        %v2921 = vadd.f32 %v2825, %v2920
        %v2922 = vpop.f32.mrb[0].mxu0
        %2923 = vmatprep.mubr.bf16.mxu0 0
        %2924 = vmatmul.mubr.bf16.gmra.mrb[0].mxu0 %v2851
        %v2925 = vpop.f32.mrb[0].mxu0
        %v2926 = vadd.f32 %v2825, %v2925
        %v2927 = vpop.f32.mrb[0].mxu0
        %v2928 = vpop.f32.mrb[0].mxu0
        %v2929 = vadd.f32 %v2825, %v2928
        %v2930 = vpop.f32.mrb[0].mxu0
        %2931 = vmatprep.mubr.bf16.mxu0 0
        %2932 = vmatmul.mubr.bf16.gmra.mrb[0].mxu0 %v2854
        %v2933 = vpop.f32.mrb[0].mxu0
        %v2934 = vadd.f32 %v2825, %v2933
        %v2935 = vpop.f32.mrb[0].mxu0
        %v2936 = vpop.f32.mrb[0].mxu0
        %v2937 = vadd.f32 %v2825, %v2936
        %v2938 = vpop.f32.mrb[0].mxu0
        %2939 = vmatprep.mubr.bf16.mxu0 0
        %2940 = vmatmul.mubr.bf16.gmra.mrb[0].mxu0 %v2857
        %v2941 = vpop.f32.mrb[0].mxu0
        %v2942 = vadd.f32 %v2825, %v2941
        %v2943 = vpop.f32.mrb[0].mxu0
        %v2944 = vpop.f32.mrb[0].mxu0
        %v2945 = vpop.f32.mrb[0].mxu0
        %2946 = vdwg.mxu0
        %v2947 = vmax.f32 %v2894, 0.0
        %v2948 = vmax.f32 %v2897, 0.0
        %v2949 = vmax.f32 %v2902, 0.0
        %v2950 = vmax.f32 %v2905, 0.0
        %v2951 = vmax.f32 %v2910, 0.0
        %v2952 = vmax.f32 %v2913, 0.0
        %v2953 = vmax.f32 %v2918, 0.0
        %v2954 = vmax.f32 %v2921, 0.0
        %v2955 = vmax.f32 %v2926, 0.0
        %v2956 = vmax.f32 %v2929, 0.0
        %v2957 = vmax.f32 %v2934, 0.0
        %v2958 = vmax.f32 %v2937, 0.0
        %v2959 = vmax.f32 %v2942, 0.0
        %2961 = vset.pattern.permute.xlu0 0
        %2962 = vperm.xlu0 %2961, %v2784
        %v2963 = vpop.permute.xlu0 %2962
        %2966 = vset.pattern.permute.xlu0 0
        %2967 = vperm.xlu0 %2966, %v2785
        %v2968 = vpop.permute.xlu0 %2967
        %2971 = vset.pattern.permute.xlu0 0
        %2972 = vperm.xlu0 %2971, %v2786
        %v2973 = vpop.permute.xlu0 %2972
        %2976 = vset.pattern.permute.xlu0 0
        %2977 = vperm.xlu0 %2976, %v2787
        %v2978 = vpop.permute.xlu0 %2977
        %2981 = vset.pattern.permute.xlu0 0
        %2982 = vperm.xlu0 %2981, %v2788
        %v2983 = vpop.permute.xlu0 %2982
        %2986 = vset.pattern.permute.xlu0 0
        %2987 = vperm.xlu0 %2986, %v2789
        %v2988 = vpop.permute.xlu0 %2987
        %2991 = vset.pattern.permute.xlu0 0
        %2992 = vperm.xlu0 %2991, %v2790
        %v2993 = vpop.permute.xlu0 %2992
        %2996 = vset.pattern.permute.xlu0 0
        %2997 = vperm.xlu0 %2996, %v2791
        %v2998 = vpop.permute.xlu0 %2997
        %3001 = vset.pattern.permute.xlu0 0
        %3002 = vperm.xlu0 %3001, %v2792
        %v3003 = vpop.permute.xlu0 %3002
        %3006 = vset.pattern.permute.xlu0 0
        %3007 = vperm.xlu0 %3006, %v2793
        %v3008 = vpop.permute.xlu0 %3007
        %3011 = vset.pattern.permute.xlu0 0
        %3012 = vperm.xlu0 %3011, %v2794
        %v3013 = vpop.permute.xlu0 %3012
        %3016 = vset.pattern.permute.xlu0 0
        %3017 = vperm.xlu0 %3016, %v2795
        %v3018 = vpop.permute.xlu0 %3017
        %3021 = vset.pattern.permute.xlu0 0
        %3022 = vperm.xlu0 %3021, %v2796
        %v3023 = vpop.permute.xlu0 %3022
        %v3025 = vmul.f32 %v2947, %v2963
        %v3026 = vmul.f32 %v2948, %v2968
        %v3027 = vmul.f32 %v2949, %v2973
        %v3028 = vmul.f32 %v2950, %v2978
        %v3029 = vmul.f32 %v2951, %v2983
        %v3030 = vmul.f32 %v2952, %v2988
        %v3031 = vmul.f32 %v2953, %v2993
        %v3032 = vmul.f32 %v2954, %v2998
        %v3033 = vmul.f32 %v2955, %v3003
        %v3034 = vmul.f32 %v2956, %v3008
        %v3035 = vmul.f32 %v2957, %v3013
        %v3036 = vmul.f32 %v2958, %v3018
        %v3037 = vmul.f32 %v2959, %v3023
        %3038 = vst.msk [vmem:[#allocation5] sm:$0xff] %vm933, %v3025
        %3039 = vst.msk [vmem:[#allocation5 + $0x8] sm:$0xff] %vm933, %v3026
        %3040 = vst.msk [vmem:[#allocation5 + $0x10] sm:$0xff] %vm933, %v3027
        %3041 = vst.msk [vmem:[#allocation5 + $0x18] sm:$0xff] %vm933, %v3028
        %3042 = vst.msk [vmem:[#allocation5 + $0x20] sm:$0xff] %vm933, %v3029
        %3043 = vst.msk [vmem:[#allocation5 + $0x28] sm:$0xff] %vm933, %v3030
        %3044 = vst.msk [vmem:[#allocation5 + $0x30] sm:$0xff] %vm933, %v3031
        %3045 = vst.msk [vmem:[#allocation5 + $0x38] sm:$0xff] %vm933, %v3032
        %3046 = vst.msk [vmem:[#allocation5 + $0x40] sm:$0xff] %vm933, %v3033
        %3047 = vst.msk [vmem:[#allocation5 + $0x48] sm:$0xff] %vm933, %v3034
        %3048 = vst.msk [vmem:[#allocation5 + $0x50] sm:$0xff] %vm933, %v3035
        %3049 = vst.msk [vmem:[#allocation5 + $0x58] sm:$0xff] %vm933, %v3036
        %3050 = vst.msk [vmem:[#allocation5 + $0x60] sm:$0xf] %vm974, %v3037
        %v3051 = vld [vmem:[%s2 + $0x200] sm:$0xff]
        %v3052 = vld [vmem:[%s2 + $0x208] sm:$0x1]
        %v3053 = vld [vmem:[%s2 + $0x210] sm:$0x1]
        %v3054 = vld [vmem:[#allocation5 + $0x45] sm:$0xff]
        %v3055 = vld [vmem:[#allocation5 + $0x4d] sm:$0xff]
        %v3056 = vld [vmem:[#allocation5 + $0x55] sm:$0xff]
        %v3057 = vld [vmem:[#allocation5 + $0x5d] sm:$0x1]
        %v3058 = vlaneseq
        %v3059 = vshrl.u32 %v3058, 7
        %v3060 = vsub.s32 0, %v3059
        %v3061 = vrot.slane %v3051, %v3060
        %v3062 = vmul.f32 %v3054, %v3061
        %v3063 = vmul.f32 %v3055, %v3061
        %v3064 = vmul.f32 %v3056, %v3061
        %v3065 = vmul.f32 %v3057, %v3061
        %v3066 = vld [vmem:[#allocation5 + $0x2d] sm:$0xff]
        %v3067 = vld [vmem:[#allocation5 + $0x35] sm:$0xff]
        %v3068 = vld [vmem:[#allocation5 + $0x3d] sm:$0xff]
        %v3069 = vld [vmem:[#allocation5 + $0x45] sm:$0x1]
        %v3070 = vlaneseq
        %v3071 = vshrl.u32 %v3070, 7
        %v3072 = vsub.s32 1, %v3071
        %v3073 = vrot.slane %v3051, %v3072
        %v3074 = vmul.f32 %v3066, %v3073
        %v3075 = vmul.f32 %v3067, %v3073
        %v3076 = vmul.f32 %v3068, %v3073
        %v3077 = vmul.f32 %v3069, %v3073
        %v3078 = vadd.f32 %v3062, %v3074
        %v3079 = vadd.f32 %v3063, %v3075
        %v3080 = vadd.f32 %v3064, %v3076
        %v3081 = vadd.f32 %v3065, %v3077
        %v3082 = vld [vmem:[#allocation5 + $0x46] sm:$0xff]
        %v3083 = vld [vmem:[#allocation5 + $0x4e] sm:$0xff]
        %v3084 = vld [vmem:[#allocation5 + $0x56] sm:$0xff]
        %v3085 = vld [vmem:[#allocation5 + $0x5e] sm:$0x1]
        %v3086 = vlaneseq
        %v3087 = vshrl.u32 %v3086, 7
        %v3088 = vsub.s32 2, %v3087
        %v3089 = vrot.slane %v3051, %v3088
        %v3090 = vmul.f32 %v3082, %v3089
        %v3091 = vmul.f32 %v3083, %v3089
        %v3092 = vmul.f32 %v3084, %v3089
        %v3093 = vmul.f32 %v3085, %v3089
        %v3094 = vadd.f32 %v3078, %v3090
        %v3095 = vadd.f32 %v3079, %v3091
        %v3096 = vadd.f32 %v3080, %v3092
        %v3097 = vadd.f32 %v3081, %v3093
        %v3098 = vld [vmem:[#allocation5 + $0x18] sm:$0xff]
        %v3099 = vld [vmem:[#allocation5 + $0x20] sm:$0xff]
        %v3100 = vld [vmem:[#allocation5 + $0x28] sm:$0xff]
        %v3101 = vld [vmem:[#allocation5 + $0x30] sm:$0x1]
        %v3102 = vlaneseq
        %v3103 = vshrl.u32 %v3102, 7
        %v3104 = vsub.s32 3, %v3103
        %v3105 = vrot.slane %v3051, %v3104
        %v3106 = vmul.f32 %v3098, %v3105
        %v3107 = vmul.f32 %v3099, %v3105
        %v3108 = vmul.f32 %v3100, %v3105
        %v3109 = vmul.f32 %v3101, %v3105
        %v3110 = vadd.f32 %v3094, %v3106
        %v3111 = vadd.f32 %v3095, %v3107
        %v3112 = vadd.f32 %v3096, %v3108
        %v3113 = vadd.f32 %v3097, %v3109
        %v3114 = vld [vmem:[#allocation5] sm:$0xff]
        %v3115 = vld [vmem:[#allocation5 + $0x8] sm:$0xff]
        %v3116 = vld [vmem:[#allocation5 + $0x10] sm:$0xff]
        %v3117 = vld [vmem:[#allocation5 + $0x18] sm:$0x1]
        %v3118 = vlaneseq
        %v3119 = vshrl.u32 %v3118, 7
        %v3120 = vsub.s32 4, %v3119
        %v3121 = vrot.slane %v3051, %v3120
        %v3122 = vmul.f32 %v3114, %v3121
        %v3123 = vmul.f32 %v3115, %v3121
        %v3124 = vmul.f32 %v3116, %v3121
        %v3125 = vmul.f32 %v3117, %v3121
        %v3126 = vadd.f32 %v3110, %v3122
        %v3127 = vadd.f32 %v3111, %v3123
        %v3128 = vadd.f32 %v3112, %v3124
        %v3129 = vadd.f32 %v3113, %v3125
        %v3130 = vld [vmem:[#allocation5 + $0x19] sm:$0xff]
        %v3131 = vld [vmem:[#allocation5 + $0x21] sm:$0xff]
        %v3132 = vld [vmem:[#allocation5 + $0x29] sm:$0xff]
        %v3133 = vld [vmem:[#allocation5 + $0x31] sm:$0x1]
        %v3134 = vlaneseq
        %v3135 = vshrl.u32 %v3134, 7
        %v3136 = vsub.s32 5, %v3135
        %v3137 = vrot.slane %v3051, %v3136
        %v3138 = vmul.f32 %v3130, %v3137
        %v3139 = vmul.f32 %v3131, %v3137
        %v3140 = vmul.f32 %v3132, %v3137
        %v3141 = vmul.f32 %v3133, %v3137
        %v3142 = vadd.f32 %v3126, %v3138
        %v3143 = vadd.f32 %v3127, %v3139
        %v3144 = vadd.f32 %v3128, %v3140
        %v3145 = vadd.f32 %v3129, %v3141
        %v3146 = vld [vmem:[#allocation5 + $0x4a] sm:$0xff]
        %v3147 = vld [vmem:[#allocation5 + $0x52] sm:$0xff]
        %v3148 = vld [vmem:[#allocation5 + $0x5a] sm:$0xff]
        %v3149 = vld [vmem:[#allocation5 + $0x62] sm:$0x1]
        %v3150 = vlaneseq
        %v3151 = vshrl.u32 %v3150, 7
        %v3152 = vsub.s32 6, %v3151
        %v3153 = vrot.slane %v3051, %v3152
        %v3154 = vmul.f32 %v3146, %v3153
        %v3155 = vmul.f32 %v3147, %v3153
        %v3156 = vmul.f32 %v3148, %v3153
        %v3157 = vmul.f32 %v3149, %v3153
        %v3158 = vadd.f32 %v3142, %v3154
        %v3159 = vadd.f32 %v3143, %v3155
        %v3160 = vadd.f32 %v3144, %v3156
        %v3161 = vadd.f32 %v3145, %v3157
        %v3162 = vld [vmem:[#allocation5 + $0x32] sm:$0xff]
        %v3163 = vld [vmem:[#allocation5 + $0x3a] sm:$0xff]
        %v3164 = vld [vmem:[#allocation5 + $0x42] sm:$0xff]
        %v3165 = vld [vmem:[#allocation5 + $0x4a] sm:$0x1]
        %v3166 = vlaneseq
        %v3167 = vshrl.u32 %v3166, 7
        %v3168 = vsub.s32 7, %v3167
        %v3169 = vrot.slane %v3051, %v3168
        %v3170 = vmul.f32 %v3162, %v3169
        %v3171 = vmul.f32 %v3163, %v3169
        %v3172 = vmul.f32 %v3164, %v3169
        %v3173 = vmul.f32 %v3165, %v3169
        %v3174 = vadd.f32 %v3158, %v3170
        %v3175 = vadd.f32 %v3159, %v3171
        %v3176 = vadd.f32 %v3160, %v3172
        %v3177 = vadd.f32 %v3161, %v3173
        %v3178 = vld [vmem:[#allocation5 + $0x4b] sm:$0xff]
        %v3179 = vld [vmem:[#allocation5 + $0x53] sm:$0xff]
        %v3180 = vld [vmem:[#allocation5 + $0x5b] sm:$0xff]
        %v3181 = vld [vmem:[#allocation5 + $0x63] sm:$0x1]
        %v3182 = vlaneseq
        %v3183 = vshrl.u32 %v3182, 7
        %v3184 = vsub.s32 0, %v3183
        %v3185 = vrot.slane %v3052, %v3184
        %v3186 = vmul.f32 %v3178, %v3185
        %v3187 = vmul.f32 %v3179, %v3185
        %v3188 = vmul.f32 %v3180, %v3185
        %v3189 = vmul.f32 %v3181, %v3185
        %v3190 = vadd.f32 %v3174, %v3186
        %v3191 = vadd.f32 %v3175, %v3187
        %v3192 = vadd.f32 %v3176, %v3188
        %v3193 = vadd.f32 %v3177, %v3189
        %v3194 = vmul.f32 %v3066, %v3061
        %v3195 = vmul.f32 %v3067, %v3061
        %v3196 = vmul.f32 %v3068, %v3061
        %v3197 = vmul.f32 %v3069, %v3061
        %v3198 = vmul.f32 %v3082, %v3073
        %v3199 = vmul.f32 %v3083, %v3073
        %v3200 = vmul.f32 %v3084, %v3073
        %v3201 = vmul.f32 %v3085, %v3073
        %v3202 = vadd.f32 %v3194, %v3198
        %v3203 = vadd.f32 %v3195, %v3199
        %v3204 = vadd.f32 %v3196, %v3200
        %v3205 = vadd.f32 %v3197, %v3201
        %v3206 = vld [vmem:[#allocation5 + $0x2e] sm:$0xff]
        %v3207 = vld [vmem:[#allocation5 + $0x36] sm:$0xff]
        %v3208 = vld [vmem:[#allocation5 + $0x3e] sm:$0xff]
        %v3209 = vld [vmem:[#allocation5 + $0x46] sm:$0x1]
        %v3210 = vmul.f32 %v3206, %v3089
        %v3211 = vmul.f32 %v3207, %v3089
        %v3212 = vmul.f32 %v3208, %v3089
        %v3213 = vmul.f32 %v3209, %v3089
        %v3214 = vadd.f32 %v3202, %v3210
        %v3215 = vadd.f32 %v3203, %v3211
        %v3216 = vadd.f32 %v3204, %v3212
        %v3217 = vadd.f32 %v3205, %v3213
        %v3218 = vmul.f32 %v3114, %v3105
        %v3219 = vmul.f32 %v3115, %v3105
        %v3220 = vmul.f32 %v3116, %v3105
        %v3221 = vmul.f32 %v3117, %v3105
        %v3222 = vadd.f32 %v3214, %v3218
        %v3223 = vadd.f32 %v3215, %v3219
        %v3224 = vadd.f32 %v3216, %v3220
        %v3225 = vadd.f32 %v3217, %v3221
        %v3226 = vmul.f32 %v3130, %v3121
        %v3227 = vmul.f32 %v3131, %v3121
        %v3228 = vmul.f32 %v3132, %v3121
        %v3229 = vmul.f32 %v3133, %v3121
        %v3230 = vadd.f32 %v3222, %v3226
        %v3231 = vadd.f32 %v3223, %v3227
        %v3232 = vadd.f32 %v3224, %v3228
        %v3233 = vadd.f32 %v3225, %v3229
        %v3234 = vld [vmem:[#allocation5 + $0x1] sm:$0xff]
        %v3235 = vld [vmem:[#allocation5 + $0x9] sm:$0xff]
        %v3236 = vld [vmem:[#allocation5 + $0x11] sm:$0xff]
        %v3237 = vld [vmem:[#allocation5 + $0x19] sm:$0x1]
        %v3238 = vmul.f32 %v3234, %v3137
        %v3239 = vmul.f32 %v3235, %v3137
        %v3240 = vmul.f32 %v3236, %v3137
        %v3241 = vmul.f32 %v3237, %v3137
        %v3242 = vadd.f32 %v3230, %v3238
        %v3243 = vadd.f32 %v3231, %v3239
        %v3244 = vadd.f32 %v3232, %v3240
        %v3245 = vadd.f32 %v3233, %v3241
        %v3246 = vmul.f32 %v3162, %v3153
        %v3247 = vmul.f32 %v3163, %v3153
        %v3248 = vmul.f32 %v3164, %v3153
        %v3249 = vmul.f32 %v3165, %v3153
        %v3250 = vadd.f32 %v3242, %v3246
        %v3251 = vadd.f32 %v3243, %v3247
        %v3252 = vadd.f32 %v3244, %v3248
        %v3253 = vadd.f32 %v3245, %v3249
        %v3254 = vmul.f32 %v3178, %v3169
        %v3255 = vmul.f32 %v3179, %v3169
        %v3256 = vmul.f32 %v3180, %v3169
        %v3257 = vmul.f32 %v3181, %v3169
        %v3258 = vadd.f32 %v3250, %v3254
        %v3259 = vadd.f32 %v3251, %v3255
        %v3260 = vadd.f32 %v3252, %v3256
        %v3261 = vadd.f32 %v3253, %v3257
        %v3262 = vld [vmem:[#allocation5 + $0x33] sm:$0xff]
        %v3263 = vld [vmem:[#allocation5 + $0x3b] sm:$0xff]
        %v3264 = vld [vmem:[#allocation5 + $0x43] sm:$0xff]
        %v3265 = vld [vmem:[#allocation5 + $0x4b] sm:$0x1]
        %v3266 = vmul.f32 %v3262, %v3185
        %v3267 = vmul.f32 %v3263, %v3185
        %v3268 = vmul.f32 %v3264, %v3185
        %v3269 = vmul.f32 %v3265, %v3185
        %v3270 = vadd.f32 %v3258, %v3266
        %v3271 = vadd.f32 %v3259, %v3267
        %v3272 = vadd.f32 %v3260, %v3268
        %v3273 = vadd.f32 %v3261, %v3269
        %v3274 = vmul.f32 %v3098, %v3061
        %v3275 = vmul.f32 %v3099, %v3061
        %v3276 = vmul.f32 %v3100, %v3061
        %v3277 = vmul.f32 %v3101, %v3061
        %v3278 = vmul.f32 %v3114, %v3073
        %v3279 = vmul.f32 %v3115, %v3073
        %v3280 = vmul.f32 %v3116, %v3073
        %v3281 = vmul.f32 %v3117, %v3073
        %v3282 = vadd.f32 %v3274, %v3278
        %v3283 = vadd.f32 %v3275, %v3279
        %v3284 = vadd.f32 %v3276, %v3280
        %v3285 = vadd.f32 %v3277, %v3281
        %v3286 = vmul.f32 %v3130, %v3089
        %v3287 = vmul.f32 %v3131, %v3089
        %v3288 = vmul.f32 %v3132, %v3089
        %v3289 = vmul.f32 %v3133, %v3089
        %v3290 = vadd.f32 %v3282, %v3286
        %v3291 = vadd.f32 %v3283, %v3287
        %v3292 = vadd.f32 %v3284, %v3288
        %v3293 = vadd.f32 %v3285, %v3289
        %v3294 = vmul.f32 %v3146, %v3105
        %v3295 = vmul.f32 %v3147, %v3105
        %v3296 = vmul.f32 %v3148, %v3105
        %v3297 = vmul.f32 %v3149, %v3105
        %v3298 = vadd.f32 %v3290, %v3294
        %v3299 = vadd.f32 %v3291, %v3295
        %v3300 = vadd.f32 %v3292, %v3296
        %v3301 = vadd.f32 %v3293, %v3297
        %v3302 = vmul.f32 %v3162, %v3121
        %v3303 = vmul.f32 %v3163, %v3121
        %v3304 = vmul.f32 %v3164, %v3121
        %v3305 = vmul.f32 %v3165, %v3121
        %v3306 = vadd.f32 %v3298, %v3302
        %v3307 = vadd.f32 %v3299, %v3303
        %v3308 = vadd.f32 %v3300, %v3304
        %v3309 = vadd.f32 %v3301, %v3305
        %v3310 = vmul.f32 %v3178, %v3137
        %v3311 = vmul.f32 %v3179, %v3137
        %v3312 = vmul.f32 %v3180, %v3137
        %v3313 = vmul.f32 %v3181, %v3137
        %v3314 = vadd.f32 %v3306, %v3310
        %v3315 = vadd.f32 %v3307, %v3311
        %v3316 = vadd.f32 %v3308, %v3312
        %v3317 = vadd.f32 %v3309, %v3313
        %v3318 = vld [vmem:[#allocation5 + $0x1d] sm:$0xff]
        %v3319 = vld [vmem:[#allocation5 + $0x25] sm:$0xff]
        %v3320 = vld [vmem:[#allocation5 + $0x35] sm:$0x1]
        %v3321 = vmul.f32 %v3318, %v3153
        %v3322 = vmul.f32 %v3319, %v3153
        %v3323 = vmul.f32 %v3066, %v3153
        %v3324 = vmul.f32 %v3320, %v3153
        %v3325 = vadd.f32 %v3314, %v3321
        %v3326 = vadd.f32 %v3315, %v3322
        %v3327 = vadd.f32 %v3316, %v3323
        %v3328 = vadd.f32 %v3317, %v3324
        %v3329 = vld [vmem:[#allocation5 + $0x5] sm:$0xff]
        %v3330 = vld [vmem:[#allocation5 + $0xd] sm:$0xff]
        %v3331 = vld [vmem:[#allocation5 + $0x15] sm:$0xff]
        %v3332 = vld [vmem:[#allocation5 + $0x1d] sm:$0x1]
        %v3333 = vmul.f32 %v3329, %v3169
        %v3334 = vmul.f32 %v3330, %v3169
        %v3335 = vmul.f32 %v3331, %v3169
        %v3336 = vmul.f32 %v3332, %v3169
        %v3337 = vadd.f32 %v3325, %v3333
        %v3338 = vadd.f32 %v3326, %v3334
        %v3339 = vadd.f32 %v3327, %v3335
        %v3340 = vadd.f32 %v3328, %v3336
        %v3341 = vld [vmem:[#allocation5 + $0x1e] sm:$0xff]
        %v3342 = vld [vmem:[#allocation5 + $0x26] sm:$0xff]
        %v3343 = vld [vmem:[#allocation5 + $0x36] sm:$0x1]
        %v3344 = vmul.f32 %v3341, %v3185
        %v3345 = vmul.f32 %v3342, %v3185
        %v3346 = vmul.f32 %v3206, %v3185
        %v3347 = vmul.f32 %v3343, %v3185
        %v3348 = vadd.f32 %v3337, %v3344
        %v3349 = vadd.f32 %v3338, %v3345
        %v3350 = vadd.f32 %v3339, %v3346
        %v3351 = vadd.f32 %v3340, %v3347
        %v3352 = vmul.f32 %v3114, %v3061
        %v3353 = vmul.f32 %v3115, %v3061
        %v3354 = vmul.f32 %v3116, %v3061
        %v3355 = vmul.f32 %v3117, %v3061
        %v3356 = vmul.f32 %v3130, %v3073
        %v3357 = vmul.f32 %v3131, %v3073
        %v3358 = vmul.f32 %v3132, %v3073
        %v3359 = vmul.f32 %v3133, %v3073
        %v3360 = vadd.f32 %v3352, %v3356
        %v3361 = vadd.f32 %v3353, %v3357
        %v3362 = vadd.f32 %v3354, %v3358
        %v3363 = vadd.f32 %v3355, %v3359
        %v3364 = vmul.f32 %v3234, %v3089
        %v3365 = vmul.f32 %v3235, %v3089
        %v3366 = vmul.f32 %v3236, %v3089
        %v3367 = vmul.f32 %v3237, %v3089
        %v3368 = vadd.f32 %v3360, %v3364
        %v3369 = vadd.f32 %v3361, %v3365
        %v3370 = vadd.f32 %v3362, %v3366
        %v3371 = vadd.f32 %v3363, %v3367
        %v3372 = vmul.f32 %v3162, %v3105
        %v3373 = vmul.f32 %v3163, %v3105
        %v3374 = vmul.f32 %v3164, %v3105
        %v3375 = vmul.f32 %v3165, %v3105
        %v3376 = vadd.f32 %v3368, %v3372
        %v3377 = vadd.f32 %v3369, %v3373
        %v3378 = vadd.f32 %v3370, %v3374
        %v3379 = vadd.f32 %v3371, %v3375
        %v3380 = vmul.f32 %v3178, %v3121
        %v3381 = vmul.f32 %v3179, %v3121
        %v3382 = vmul.f32 %v3180, %v3121
        %v3383 = vmul.f32 %v3181, %v3121
        %v3384 = vadd.f32 %v3376, %v3380
        %v3385 = vadd.f32 %v3377, %v3381
        %v3386 = vadd.f32 %v3378, %v3382
        %v3387 = vadd.f32 %v3379, %v3383
        %v3388 = vmul.f32 %v3262, %v3137
        %v3389 = vmul.f32 %v3263, %v3137
        %v3390 = vmul.f32 %v3264, %v3137
        %v3391 = vmul.f32 %v3265, %v3137
        %v3392 = vadd.f32 %v3384, %v3388
        %v3393 = vadd.f32 %v3385, %v3389
        %v3394 = vadd.f32 %v3386, %v3390
        %v3395 = vadd.f32 %v3387, %v3391
        %v3396 = vmul.f32 %v3329, %v3153
        %v3397 = vmul.f32 %v3330, %v3153
        %v3398 = vmul.f32 %v3331, %v3153
        %v3399 = vmul.f32 %v3332, %v3153
        %v3400 = vadd.f32 %v3392, %v3396
        %v3401 = vadd.f32 %v3393, %v3397
        %v3402 = vadd.f32 %v3394, %v3398
        %v3403 = vadd.f32 %v3395, %v3399
        %v3404 = vmul.f32 %v3341, %v3169
        %v3405 = vmul.f32 %v3342, %v3169
        %v3406 = vmul.f32 %v3206, %v3169
        %v3407 = vmul.f32 %v3343, %v3169
        %v3408 = vadd.f32 %v3400, %v3404
        %v3409 = vadd.f32 %v3401, %v3405
        %v3410 = vadd.f32 %v3402, %v3406
        %v3411 = vadd.f32 %v3403, %v3407
        %v3412 = vld [vmem:[#allocation5 + $0x6] sm:$0xff]
        %v3413 = vld [vmem:[#allocation5 + $0xe] sm:$0xff]
        %v3414 = vld [vmem:[#allocation5 + $0x16] sm:$0xff]
        %v3415 = vld [vmem:[#allocation5 + $0x1e] sm:$0x1]
        %v3416 = vmul.f32 %v3412, %v3185
        %v3417 = vmul.f32 %v3413, %v3185
        %v3418 = vmul.f32 %v3414, %v3185
        %v3419 = vmul.f32 %v3415, %v3185
        %v3420 = vadd.f32 %v3408, %v3416
        %v3421 = vadd.f32 %v3409, %v3417
        %v3422 = vadd.f32 %v3410, %v3418
        %v3423 = vadd.f32 %v3411, %v3419
        %v3428 = vrot.slane %v3270, 7
        %v3429 = vrot.slane %v3271, 7
        %v3430 = vsel %vm2635, %v3428, %v3429
        %v3431 = vrot.slane %v3272, 7
        %v3432 = vsel %vm2635, %v3429, %v3431
        %v3433 = vrot.slane %v3273, 7
        %v3434 = vsel %vm2635, %v3431, %v3433
        %vm3443 = vcmask 1041408
        %v3444 = vrot.slane %v3348, 6
        %v3445 = vrot.slane %v3349, 6
        %v3446 = vsel %vm3443, %v3444, %v3445
        %v3447 = vrot.slane %v3350, 6
        %v3448 = vsel %vm3443, %v3445, %v3447
        %v3449 = vrot.slane %v3351, 6
        %v3450 = vsel %vm3443, %v3447, %v3449
        %vm3459 = vcmask 1042432
        %v3460 = vrot.slane %v3420, 5
        %v3461 = vrot.slane %v3421, 5
        %v3462 = vsel %vm3459, %v3460, %v3461
        %v3463 = vrot.slane %v3422, 5
        %v3464 = vsel %vm3459, %v3461, %v3463
        %v3465 = vrot.slane %v3423, 5
        %v3466 = vsel %vm3459, %v3463, %v3465
        %v3471 = vsel %vm2635, %v3193, %v3428
        %v3472 = vsel %vm3443, %v3434, %v3444
        %v3473 = vsel %vm3459, %v3450, %v3460
        %v3474 = vlaneseq
        %v3475 = vshrl.u32 %v3474, 7
        %v3476 = vsub.s32 0, %v3475
        %v3477 = vrot.slane %v3053, %v3476
        %v3478 = vadd.f32 %v3190, %v3477
        %v3479 = vadd.f32 %v3191, %v3477
        %v3480 = vadd.f32 %v3192, %v3477
        %v3481 = vadd.f32 %v3471, %v3477
        %v3482 = vadd.f32 %v3430, %v3477
        %v3483 = vadd.f32 %v3432, %v3477
        %v3484 = vadd.f32 %v3472, %v3477
        %v3485 = vadd.f32 %v3446, %v3477
        %v3486 = vadd.f32 %v3448, %v3477
        %v3487 = vadd.f32 %v3473, %v3477
        %v3488 = vadd.f32 %v3462, %v3477
        %v3489 = vadd.f32 %v3464, %v3477
        %v3490 = vadd.f32 %v3466, %v3477
        %v3491 = vld [vmem:[%s2 + $0x218] sm:$0xff]
        %v3492 = vld [vmem:[%s2 + $0x220] sm:$0xff]
        %v3493 = vpack.c.bf16 %v3479, %v3478
        %v3494 = vpack.c.bf16 %v3481, %v3480
        %v3495 = vpack.c.bf16 %v3483, %v3482
        %v3496 = vpack.c.bf16 %v3485, %v3484
        %v3497 = vpack.c.bf16 %v3487, %v3486
        %v3498 = vpack.c.bf16 %v3489, %v3488
        %v3499 = vpack.c.bf16 %v3490, %v3490
        %v3500 = vld [vmem:[%s1 + $0x38] sm:$0xf]
        %v3501 = vld [vmem:[%s1 + $0x3c] sm:$0xf]
        %v3504 = vunpack.c.l.b16 %v3500
        %v3505 = vunpack.c.l.b16 %v3501
        %v3506 = vpack.c.b16 %v3505, %v3504
        %v3509 = vsel %vm933, %v3493, 0
        %v3512 = vsel %vm933, %v3494, 0
        %v3515 = vsel %vm933, %v3495, 0
        %v3518 = vsel %vm933, %v3496, 0
        %v3521 = vsel %vm933, %v3497, 0
        %v3524 = vsel %vm933, %v3498, 0
        %v3527 = vsel %vm933, %v3499, 0
        %3529 = vmatprep.subr.bf16.mxu0 0
        %3530 = vmatpush1.bf16.msra.mxu0 %v3506
        %3531 = vmatprep.subr.bf16.mxu0 0
        %3532 = vmatpush1.bf16.msra.mxu0 0
        %3533 = vmatprep.subr.bf16.mxu0 0
        %3534 = vmatpush1.bf16.msra.mxu0 0
        %3535 = vmatprep.subr.bf16.mxu0 0
        %3536 = vmatpush1.bf16.msra.mxu0 0
        %3537 = vmatprep.subr.bf16.mxu0 0
        %3538 = vmatpush1.bf16.msra.mxu0 0
        %3539 = vmatprep.subr.bf16.mxu0 0
        %3540 = vmatpush1.bf16.msra.mxu0 0
        %3541 = vmatprep.subr.bf16.mxu0 0
        %3542 = vmatpush1.bf16.msra.mxu0 0
        %3543 = vmatprep.subr.bf16.mxu0 0
        %3544 = vmatpush1.bf16.msra.mxu0 0
        %3545 = vmatprep.subr.bf16.mxu0 0
        %3546 = vmatpush1.bf16.msra.mxu0 0
        %3547 = vmatprep.subr.bf16.mxu0 0
        %3548 = vmatpush1.bf16.msra.mxu0 0
        %3549 = vmatprep.subr.bf16.mxu0 0
        %3550 = vmatpush1.bf16.msra.mxu0 0
        %3551 = vmatprep.subr.bf16.mxu0 0
        %3552 = vmatpush1.bf16.msra.mxu0 0
        %3553 = vmatprep.subr.bf16.mxu0 0
        %3554 = vmatpush1.bf16.msra.mxu0 0
        %3555 = vmatprep.subr.bf16.mxu0 0
        %3556 = vmatpush1.bf16.msra.mxu0 0
        %3557 = vmatprep.subr.bf16.mxu0 0
        %3558 = vmatpush1.bf16.msra.mxu0 0
        %3559 = vmatprep.subr.bf16.mxu0 0
        %3560 = vmatpush1.bf16.msra.mxu0 0
        %3561 = vmatprep.mubr.bf16.mxu0 0
        %3562 = vmatmul.mubr.bf16.gmra.mrb[0].mxu0 %v3509
        %v3563 = vpop.f32.mrb[0].mxu0
        %v3564 = vadd.f32 0.0, %v3563
        %v3565 = vpop.f32.mrb[0].mxu0
        %v3566 = vpop.f32.mrb[0].mxu0
        %v3567 = vadd.f32 0.0, %v3566
        %v3568 = vpop.f32.mrb[0].mxu0
        %3569 = vmatprep.mubr.bf16.mxu0 0
        %3570 = vmatmul.mubr.bf16.gmra.mrb[0].mxu0 %v3512
        %v3571 = vpop.f32.mrb[0].mxu0
        %v3572 = vadd.f32 0.0, %v3571
        %v3573 = vpop.f32.mrb[0].mxu0
        %v3574 = vpop.f32.mrb[0].mxu0
        %v3575 = vadd.f32 0.0, %v3574
        %v3576 = vpop.f32.mrb[0].mxu0
        %3577 = vmatprep.mubr.bf16.mxu0 0
        %3578 = vmatmul.mubr.bf16.gmra.mrb[0].mxu0 %v3515
        %v3579 = vpop.f32.mrb[0].mxu0
        %v3580 = vadd.f32 0.0, %v3579
        %v3581 = vpop.f32.mrb[0].mxu0
        %v3582 = vpop.f32.mrb[0].mxu0
        %v3583 = vadd.f32 0.0, %v3582
        %v3584 = vpop.f32.mrb[0].mxu0
        %3585 = vmatprep.mubr.bf16.mxu0 0
        %3586 = vmatmul.mubr.bf16.gmra.mrb[0].mxu0 %v3518
        %v3587 = vpop.f32.mrb[0].mxu0
        %v3588 = vadd.f32 0.0, %v3587
        %v3589 = vpop.f32.mrb[0].mxu0
        %v3590 = vpop.f32.mrb[0].mxu0
        %v3591 = vadd.f32 0.0, %v3590
        %v3592 = vpop.f32.mrb[0].mxu0
        %3593 = vmatprep.mubr.bf16.mxu0 0
        %3594 = vmatmul.mubr.bf16.gmra.mrb[0].mxu0 %v3521
        %v3595 = vpop.f32.mrb[0].mxu0
        %v3596 = vadd.f32 0.0, %v3595
        %v3597 = vpop.f32.mrb[0].mxu0
        %v3598 = vpop.f32.mrb[0].mxu0
        %v3599 = vadd.f32 0.0, %v3598
        %v3600 = vpop.f32.mrb[0].mxu0
        %3601 = vmatprep.mubr.bf16.mxu0 0
        %3602 = vmatmul.mubr.bf16.gmra.mrb[0].mxu0 %v3524
        %v3603 = vpop.f32.mrb[0].mxu0
        %v3604 = vadd.f32 0.0, %v3603
        %v3605 = vpop.f32.mrb[0].mxu0
        %v3606 = vpop.f32.mrb[0].mxu0
        %v3607 = vadd.f32 0.0, %v3606
        %v3608 = vpop.f32.mrb[0].mxu0
        %3609 = vmatprep.mubr.bf16.mxu0 0
        %3610 = vmatmul.mubr.bf16.gmra.mrb[0].mxu0 %v3527
        %v3611 = vpop.f32.mrb[0].mxu0
        %v3612 = vadd.f32 0.0, %v3611
        %v3613 = vpop.f32.mrb[0].mxu0
        %v3614 = vpop.f32.mrb[0].mxu0
        %v3615 = vpop.f32.mrb[0].mxu0
        %3616 = vdwg.mxu0
        %v3618 = vsel %vm933, %v2797, 0
        %v3621 = vsel %vm933, %v2798, 0
        %v3624 = vsel %vm933, %v2799, 0
        %v3627 = vsel %vm933, %v2800, 0
        %v3630 = vsel %vm933, %v2801, 0
        %v3633 = vsel %vm933, %v2802, 0
        %v3636 = vsel %vm933, %v2803, 0
        %v3639 = vsel %vm933, %v2804, 0
        %v3642 = vsel %vm933, %v2805, 0
        %v3645 = vsel %vm933, %v2806, 0
        %v3648 = vsel %vm933, %v2807, 0
        %v3651 = vsel %vm933, %v2808, 0
        %v3654 = vsel %vm933, %v2809, 0
        %3656 = vmatprep.subr.mxu0 0.0
        %3657 = vmatpush1.msra.mxu0 %v3491
        %3658 = vmatprep.subr.mxu0 0.0
        %3659 = vmatpush1.msra.mxu0 %v3492
        %3660 = vmatprep.subr.mxu0 0.0
        %3661 = vmatpush1.msra.mxu0 0.0
        %3662 = vmatprep.subr.mxu0 0.0
        %3663 = vmatpush1.msra.mxu0 0.0
        %3664 = vmatprep.subr.mxu0 0.0
        %3665 = vmatpush1.msra.mxu0 0.0
        %3666 = vmatprep.subr.mxu0 0.0
        %3667 = vmatpush1.msra.mxu0 0.0
        %3668 = vmatprep.subr.mxu0 0.0
        %3669 = vmatpush1.msra.mxu0 0.0
        %3670 = vmatprep.subr.mxu0 0.0
        %3671 = vmatpush1.msra.mxu0 0.0
        %3672 = vmatprep.subr.mxu0 0.0
        %3673 = vmatpush1.msra.mxu0 0.0
        %3674 = vmatprep.subr.mxu0 0.0
        %3675 = vmatpush1.msra.mxu0 0.0
        %3676 = vmatprep.subr.mxu0 0.0
        %3677 = vmatpush1.msra.mxu0 0.0
        %3678 = vmatprep.subr.mxu0 0.0
        %3679 = vmatpush1.msra.mxu0 0.0
        %3680 = vmatprep.subr.mxu0 0.0
        %3681 = vmatpush1.msra.mxu0 0.0
        %3682 = vmatprep.subr.mxu0 0.0
        %3683 = vmatpush1.msra.mxu0 0.0
        %3684 = vmatprep.subr.mxu0 0.0
        %3685 = vmatpush1.msra.mxu0 0.0
        %3686 = vmatprep.subr.mxu0 0.0
        %3687 = vmatpush1.msra.mxu0 0.0
        %3688 = vmatprep.subr.mxu0 0.0
        %3689 = vmatpush1.msra.mxu0 0.0
        %3690 = vmatprep.subr.mxu0 0.0
        %3691 = vmatpush1.msra.mxu0 0.0
        %3692 = vmatprep.subr.mxu0 0.0
        %3693 = vmatpush1.msra.mxu0 0.0
        %3694 = vmatprep.subr.mxu0 0.0
        %3695 = vmatpush1.msra.mxu0 0.0
        %3696 = vmatprep.subr.mxu0 0.0
        %3697 = vmatpush1.msra.mxu0 0.0
        %3698 = vmatprep.subr.mxu0 0.0
        %3699 = vmatpush1.msra.mxu0 0.0
        %3700 = vmatprep.subr.mxu0 0.0
        %3701 = vmatpush1.msra.mxu0 0.0
        %3702 = vmatprep.subr.mxu0 0.0
        %3703 = vmatpush1.msra.mxu0 0.0
        %3704 = vmatprep.subr.mxu0 0.0
        %3705 = vmatpush1.msra.mxu0 0.0
        %3706 = vmatprep.subr.mxu0 0.0
        %3707 = vmatpush1.msra.mxu0 0.0
        %3708 = vmatprep.subr.mxu0 0.0
        %3709 = vmatpush1.msra.mxu0 0.0
        %3710 = vmatprep.subr.mxu0 0.0
        %3711 = vmatpush1.msra.mxu0 0.0
        %3712 = vmatprep.subr.mxu0 0.0
        %3713 = vmatpush1.msra.mxu0 0.0
        %3714 = vmatprep.subr.mxu0 0.0
        %3715 = vmatpush1.msra.mxu0 0.0
        %3716 = vmatprep.subr.mxu0 0.0
        %3717 = vmatpush1.msra.mxu0 0.0
        %3718 = vmatprep.subr.mxu0 0.0
        %3719 = vmatpush1.msra.mxu0 0.0
        %3720 = vmatprep.mubr.f32.mxu0 0.0
        %3721 = vmatmul.mubr.f32.gmra.mrb[0].mxu0 %v3618
        %v3722 = vpop.f32.mrb[0].mxu0
        %v3723 = vadd.f32 %v3564, %v3722
        %v3724 = vpop.f32.mrb[0].mxu0
        %3725 = vmatprep.mubr.f32.mxu0 0.0
        %3726 = vmatmul.mubr.f32.gmra.mrb[0].mxu0 %v3621
        %v3727 = vpop.f32.mrb[0].mxu0
        %v3728 = vadd.f32 %v3567, %v3727
        %v3729 = vpop.f32.mrb[0].mxu0
        %3730 = vmatprep.mubr.f32.mxu0 0.0
        %3731 = vmatmul.mubr.f32.gmra.mrb[0].mxu0 %v3624
        %v3732 = vpop.f32.mrb[0].mxu0
        %v3733 = vadd.f32 %v3572, %v3732
        %v3734 = vpop.f32.mrb[0].mxu0
        %3735 = vmatprep.mubr.f32.mxu0 0.0
        %3736 = vmatmul.mubr.f32.gmra.mrb[0].mxu0 %v3627
        %v3737 = vpop.f32.mrb[0].mxu0
        %v3738 = vadd.f32 %v3575, %v3737
        %v3739 = vpop.f32.mrb[0].mxu0
        %3740 = vmatprep.mubr.f32.mxu0 0.0
        %3741 = vmatmul.mubr.f32.gmra.mrb[0].mxu0 %v3630
        %v3742 = vpop.f32.mrb[0].mxu0
        %v3743 = vadd.f32 %v3580, %v3742
        %v3744 = vpop.f32.mrb[0].mxu0
        %3745 = vmatprep.mubr.f32.mxu0 0.0
        %3746 = vmatmul.mubr.f32.gmra.mrb[0].mxu0 %v3633
        %v3747 = vpop.f32.mrb[0].mxu0
        %v3748 = vadd.f32 %v3583, %v3747
        %v3749 = vpop.f32.mrb[0].mxu0
        %3750 = vmatprep.mubr.f32.mxu0 0.0
        %3751 = vmatmul.mubr.f32.gmra.mrb[0].mxu0 %v3636
        %v3752 = vpop.f32.mrb[0].mxu0
        %v3753 = vadd.f32 %v3588, %v3752
        %v3754 = vpop.f32.mrb[0].mxu0
        %3755 = vmatprep.mubr.f32.mxu0 0.0
        %3756 = vmatmul.mubr.f32.gmra.mrb[0].mxu0 %v3639
        %v3757 = vpop.f32.mrb[0].mxu0
        %v3758 = vadd.f32 %v3591, %v3757
        %v3759 = vpop.f32.mrb[0].mxu0
        %3760 = vmatprep.mubr.f32.mxu0 0.0
        %3761 = vmatmul.mubr.f32.gmra.mrb[0].mxu0 %v3642
        %v3762 = vpop.f32.mrb[0].mxu0
        %v3763 = vadd.f32 %v3596, %v3762
        %v3764 = vpop.f32.mrb[0].mxu0
        %3765 = vmatprep.mubr.f32.mxu0 0.0
        %3766 = vmatmul.mubr.f32.gmra.mrb[0].mxu0 %v3645
        %v3767 = vpop.f32.mrb[0].mxu0
        %v3768 = vadd.f32 %v3599, %v3767
        %v3769 = vpop.f32.mrb[0].mxu0
        %3770 = vmatprep.mubr.f32.mxu0 0.0
        %3771 = vmatmul.mubr.f32.gmra.mrb[0].mxu0 %v3648
        %v3772 = vpop.f32.mrb[0].mxu0
        %v3773 = vadd.f32 %v3604, %v3772
        %v3774 = vpop.f32.mrb[0].mxu0
        %3775 = vmatprep.mubr.f32.mxu0 0.0
        %3776 = vmatmul.mubr.f32.gmra.mrb[0].mxu0 %v3651
        %v3777 = vpop.f32.mrb[0].mxu0
        %v3778 = vadd.f32 %v3607, %v3777
        %v3779 = vpop.f32.mrb[0].mxu0
        %3780 = vmatprep.mubr.f32.mxu0 0.0
        %3781 = vmatmul.mubr.f32.gmra.mrb[0].mxu0 %v3654
        %v3782 = vpop.f32.mrb[0].mxu0
        %v3783 = vadd.f32 %v3612, %v3782
        %v3784 = vpop.f32.mrb[0].mxu0
        %3785 = vdwg.mxu0
        %v3786 = vld [vmem:[%s2 + $0x228] sm:$0x1]
        %v3787 = vlaneseq
        %v3788 = vshrl.u32 %v3787, 7
        %v3789 = vsub.s32 0, %v3788
        %v3790 = vrot.slane %v3786, %v3789
        %v3791 = vadd.f32 %v3723, %v3790
        %v3792 = vadd.f32 %v3728, %v3790
        %v3793 = vadd.f32 %v3733, %v3790
        %v3794 = vadd.f32 %v3738, %v3790
        %v3795 = vadd.f32 %v3743, %v3790
        %v3796 = vadd.f32 %v3748, %v3790
        %v3797 = vadd.f32 %v3753, %v3790
        %v3798 = vadd.f32 %v3758, %v3790
        %v3799 = vadd.f32 %v3763, %v3790
        %v3800 = vadd.f32 %v3768, %v3790
        %v3801 = vadd.f32 %v3773, %v3790
        %v3802 = vadd.f32 %v3778, %v3790
        %v3803 = vadd.f32 %v3783, %v3790
        %v3804 = vmax.f32 %v3791, 0.0
        %v3805 = vmax.f32 %v3792, 0.0
        %v3806 = vmax.f32 %v3793, 0.0
        %v3807 = vmax.f32 %v3794, 0.0
        %v3808 = vmax.f32 %v3795, 0.0
        %v3809 = vmax.f32 %v3796, 0.0
        %v3810 = vmax.f32 %v3797, 0.0
        %v3811 = vmax.f32 %v3798, 0.0
        %v3812 = vmax.f32 %v3799, 0.0
        %v3813 = vmax.f32 %v3800, 0.0
        %v3814 = vmax.f32 %v3801, 0.0
        %v3815 = vmax.f32 %v3802, 0.0
        %v3816 = vmax.f32 %v3803, 0.0
        %v3817 = vmul.f32 %v3804, %v2963
        %v3818 = vmul.f32 %v3805, %v2968
        %v3819 = vmul.f32 %v3806, %v2973
        %v3820 = vmul.f32 %v3807, %v2978
        %v3821 = vmul.f32 %v3808, %v2983
        %v3822 = vmul.f32 %v3809, %v2988
        %v3823 = vmul.f32 %v3810, %v2993
        %v3824 = vmul.f32 %v3811, %v2998
        %v3825 = vmul.f32 %v3812, %v3003
        %v3826 = vmul.f32 %v3813, %v3008
        %v3827 = vmul.f32 %v3814, %v3013
        %v3828 = vmul.f32 %v3815, %v3018
        %v3829 = vmul.f32 %v3816, %v3023
        %3830 = vst.msk [vmem:[#allocation6] sm:$0xff] %vm2769, %v3817
        %3831 = vst.msk [vmem:[#allocation6 + $0x8] sm:$0xff] %vm2769, %v3818
        %3832 = vst.msk [vmem:[#allocation6 + $0x10] sm:$0xff] %vm2769, %v3819
        %3833 = vst.msk [vmem:[#allocation6 + $0x18] sm:$0xff] %vm2769, %v3820
        %3834 = vst.msk [vmem:[#allocation6 + $0x20] sm:$0xff] %vm2769, %v3821
        %3835 = vst.msk [vmem:[#allocation6 + $0x28] sm:$0xff] %vm2769, %v3822
        %3836 = vst.msk [vmem:[#allocation6 + $0x30] sm:$0xff] %vm2769, %v3823
        %3837 = vst.msk [vmem:[#allocation6 + $0x38] sm:$0xff] %vm2769, %v3824
        %3838 = vst.msk [vmem:[#allocation6 + $0x40] sm:$0xff] %vm2769, %v3825
        %3839 = vst.msk [vmem:[#allocation6 + $0x48] sm:$0xff] %vm2769, %v3826
        %3840 = vst.msk [vmem:[#allocation6 + $0x50] sm:$0xff] %vm2769, %v3827
        %3841 = vst.msk [vmem:[#allocation6 + $0x58] sm:$0xff] %vm2769, %v3828
        %3842 = vst.msk [vmem:[#allocation6 + $0x60] sm:$0xf] %vm2782, %v3829
        %v3843 = vld [vmem:[%s2 + $0x230] sm:$0xff]
        %v3844 = vld [vmem:[%s2 + $0x238] sm:$0xff]
        %v3845 = vld [vmem:[%s2 + $0x240] sm:$0xff]
        %v3846 = vld [vmem:[%s2 + $0x248] sm:$0xff]
        %v3847 = vld [vmem:[%s2 + $0x250] sm:$0xff]
        %v3848 = vld [vmem:[%s2 + $0x258] sm:$0xff]
        %v3849 = vld [vmem:[%s2 + $0x260] sm:$0xff]
        %v3850 = vld [vmem:[%s2 + $0x268] sm:$0xff]
        %v3851 = vld [vmem:[%s2 + $0x270] sm:$0xff]
        %v3852 = vld [vmem:[%s2 + $0x278] sm:$0xff]
        %v3853 = vld [vmem:[%s2 + $0x280] sm:$0xff]
        %v3854 = vld [vmem:[%s2 + $0x288] sm:$0xff]
        %v3855 = vld [vmem:[%s2 + $0x290] sm:$0xf]
        %v3856 = vld [vmem:[#allocation6] sm:$0xff]
        %v3857 = vld [vmem:[#allocation6 + $0x8] sm:$0xff]
        %v3858 = vld [vmem:[#allocation6 + $0x10] sm:$0xff]
        %v3859 = vld [vmem:[#allocation6 + $0x18] sm:$0xff]
        %v3860 = vld [vmem:[#allocation6 + $0x20] sm:$0xff]
        %v3861 = vld [vmem:[#allocation6 + $0x28] sm:$0xff]
        %v3862 = vld [vmem:[#allocation6 + $0x30] sm:$0xff]
        %v3863 = vld [vmem:[#allocation6 + $0x38] sm:$0xff]
        %v3864 = vld [vmem:[#allocation6 + $0x40] sm:$0xff]
        %v3865 = vld [vmem:[#allocation6 + $0x48] sm:$0xff]
        %v3866 = vld [vmem:[#allocation6 + $0x50] sm:$0xff]
        %v3867 = vld [vmem:[#allocation6 + $0x58] sm:$0xff]
        %v3868 = vld [vmem:[#allocation6 + $0x60] sm:$0xf]
        %v3869 = vpack.c.bf16 %v3857, %v3856
        %v3870 = vpack.c.bf16 %v3859, %v3858
        %v3871 = vpack.c.bf16 %v3861, %v3860
        %v3872 = vpack.c.bf16 %v3863, %v3862
        %v3873 = vpack.c.bf16 %v3865, %v3864
        %v3874 = vpack.c.bf16 %v3867, %v3866
        %v3875 = vpack.c.bf16 %v3868, %v3868
        %v3876 = vld [vmem:[%s2 + $0x298] sm:$0xff]
        %v3877 = vld [vmem:[%s2 + $0x2a0] sm:$0x1]
        %v3878 = vld [vmem:[%s2 + $0x2a8] sm:$0x1]
        %v3879 = vld [vmem:[#allocation6 + $0x18] sm:$0x1]
        %v3880 = vlaneseq
        %v3881 = vshrl.u32 %v3880, 7
        %v3882 = vsub.s32 0, %v3881
        %v3883 = vrot.slane %v3876, %v3882
        %v3884 = vmul.f32 %v3856, %v3883
        %v3885 = vmul.f32 %v3857, %v3883
        %v3886 = vmul.f32 %v3858, %v3883
        %v3887 = vmul.f32 %v3879, %v3883
        %v3888 = vld [vmem:[#allocation6 + $0x19] sm:$0xff]
        %v3889 = vld [vmem:[#allocation6 + $0x21] sm:$0xff]
        %v3890 = vld [vmem:[#allocation6 + $0x29] sm:$0xff]
        %v3891 = vld [vmem:[#allocation6 + $0x31] sm:$0x1]
        %v3892 = vlaneseq
        %v3893 = vshrl.u32 %v3892, 7
        %v3894 = vsub.s32 1, %v3893
        %v3895 = vrot.slane %v3876, %v3894
        %v3896 = vmul.f32 %v3888, %v3895
        %v3897 = vmul.f32 %v3889, %v3895
        %v3898 = vmul.f32 %v3890, %v3895
        %v3899 = vmul.f32 %v3891, %v3895
        %v3900 = vadd.f32 %v3884, %v3896
        %v3901 = vadd.f32 %v3885, %v3897
        %v3902 = vadd.f32 %v3886, %v3898
        %v3903 = vadd.f32 %v3887, %v3899
        %v3904 = vld [vmem:[#allocation6 + $0x1] sm:$0xff]
        %v3905 = vld [vmem:[#allocation6 + $0x9] sm:$0xff]
        %v3906 = vld [vmem:[#allocation6 + $0x11] sm:$0xff]
        %v3907 = vld [vmem:[#allocation6 + $0x19] sm:$0x1]
        %v3908 = vlaneseq
        %v3909 = vshrl.u32 %v3908, 7
        %v3910 = vsub.s32 2, %v3909
        %v3911 = vrot.slane %v3876, %v3910
        %v3912 = vmul.f32 %v3904, %v3911
        %v3913 = vmul.f32 %v3905, %v3911
        %v3914 = vmul.f32 %v3906, %v3911
        %v3915 = vmul.f32 %v3907, %v3911
        %v3916 = vadd.f32 %v3900, %v3912
        %v3917 = vadd.f32 %v3901, %v3913
        %v3918 = vadd.f32 %v3902, %v3914
        %v3919 = vadd.f32 %v3903, %v3915
        %v3920 = vld [vmem:[#allocation6 + $0x32] sm:$0xff]
        %v3921 = vld [vmem:[#allocation6 + $0x3a] sm:$0xff]
        %v3922 = vld [vmem:[#allocation6 + $0x42] sm:$0xff]
        %v3923 = vld [vmem:[#allocation6 + $0x4a] sm:$0x1]
        %v3924 = vlaneseq
        %v3925 = vshrl.u32 %v3924, 7
        %v3926 = vsub.s32 3, %v3925
        %v3927 = vrot.slane %v3876, %v3926
        %v3928 = vmul.f32 %v3920, %v3927
        %v3929 = vmul.f32 %v3921, %v3927
        %v3930 = vmul.f32 %v3922, %v3927
        %v3931 = vmul.f32 %v3923, %v3927
        %v3932 = vadd.f32 %v3916, %v3928
        %v3933 = vadd.f32 %v3917, %v3929
        %v3934 = vadd.f32 %v3918, %v3930
        %v3935 = vadd.f32 %v3919, %v3931
        %v3936 = vld [vmem:[#allocation6 + $0x4b] sm:$0xff]
        %v3937 = vld [vmem:[#allocation6 + $0x53] sm:$0xff]
        %v3938 = vld [vmem:[#allocation6 + $0x5b] sm:$0xff]
        %v3939 = vld [vmem:[#allocation6 + $0x63] sm:$0x1]
        %v3940 = vlaneseq
        %v3941 = vshrl.u32 %v3940, 7
        %v3942 = vsub.s32 4, %v3941
        %v3943 = vrot.slane %v3876, %v3942
        %v3944 = vmul.f32 %v3936, %v3943
        %v3945 = vmul.f32 %v3937, %v3943
        %v3946 = vmul.f32 %v3938, %v3943
        %v3947 = vmul.f32 %v3939, %v3943
        %v3948 = vadd.f32 %v3932, %v3944
        %v3949 = vadd.f32 %v3933, %v3945
        %v3950 = vadd.f32 %v3934, %v3946
        %v3951 = vadd.f32 %v3935, %v3947
        %v3952 = vld [vmem:[#allocation6 + $0x33] sm:$0xff]
        %v3953 = vld [vmem:[#allocation6 + $0x3b] sm:$0xff]
        %v3954 = vld [vmem:[#allocation6 + $0x43] sm:$0xff]
        %v3955 = vld [vmem:[#allocation6 + $0x4b] sm:$0x1]
        %v3956 = vlaneseq
        %v3957 = vshrl.u32 %v3956, 7
        %v3958 = vsub.s32 5, %v3957
        %v3959 = vrot.slane %v3876, %v3958
        %v3960 = vmul.f32 %v3952, %v3959
        %v3961 = vmul.f32 %v3953, %v3959
        %v3962 = vmul.f32 %v3954, %v3959
        %v3963 = vmul.f32 %v3955, %v3959
        %v3964 = vadd.f32 %v3948, %v3960
        %v3965 = vadd.f32 %v3949, %v3961
        %v3966 = vadd.f32 %v3950, %v3962
        %v3967 = vadd.f32 %v3951, %v3963
        %v3968 = vld [vmem:[#allocation6 + $0x5] sm:$0xff]
        %v3969 = vld [vmem:[#allocation6 + $0xd] sm:$0xff]
        %v3970 = vld [vmem:[#allocation6 + $0x15] sm:$0xff]
        %v3971 = vld [vmem:[#allocation6 + $0x1d] sm:$0x1]
        %v3972 = vlaneseq
        %v3973 = vshrl.u32 %v3972, 7
        %v3974 = vsub.s32 6, %v3973
        %v3975 = vrot.slane %v3876, %v3974
        %v3976 = vmul.f32 %v3968, %v3975
        %v3977 = vmul.f32 %v3969, %v3975
        %v3978 = vmul.f32 %v3970, %v3975
        %v3979 = vmul.f32 %v3971, %v3975
        %v3980 = vadd.f32 %v3964, %v3976
        %v3981 = vadd.f32 %v3965, %v3977
        %v3982 = vadd.f32 %v3966, %v3978
        %v3983 = vadd.f32 %v3967, %v3979
        %v3984 = vld [vmem:[#allocation6 + $0x1e] sm:$0xff]
        %v3985 = vld [vmem:[#allocation6 + $0x26] sm:$0xff]
        %v3986 = vld [vmem:[#allocation6 + $0x2e] sm:$0xff]
        %v3987 = vld [vmem:[#allocation6 + $0x36] sm:$0x1]
        %v3988 = vlaneseq
        %v3989 = vshrl.u32 %v3988, 7
        %v3990 = vsub.s32 7, %v3989
        %v3991 = vrot.slane %v3876, %v3990
        %v3992 = vmul.f32 %v3984, %v3991
        %v3993 = vmul.f32 %v3985, %v3991
        %v3994 = vmul.f32 %v3986, %v3991
        %v3995 = vmul.f32 %v3987, %v3991
        %v3996 = vadd.f32 %v3980, %v3992
        %v3997 = vadd.f32 %v3981, %v3993
        %v3998 = vadd.f32 %v3982, %v3994
        %v3999 = vadd.f32 %v3983, %v3995
        %v4000 = vld [vmem:[#allocation6 + $0x6] sm:$0xff]
        %v4001 = vld [vmem:[#allocation6 + $0xe] sm:$0xff]
        %v4002 = vld [vmem:[#allocation6 + $0x16] sm:$0xff]
        %v4003 = vld [vmem:[#allocation6 + $0x1e] sm:$0x1]
        %v4004 = vlaneseq
        %v4005 = vshrl.u32 %v4004, 7
        %v4006 = vsub.s32 0, %v4005
        %v4007 = vrot.slane %v3877, %v4006
        %v4008 = vmul.f32 %v4000, %v4007
        %v4009 = vmul.f32 %v4001, %v4007
        %v4010 = vmul.f32 %v4002, %v4007
        %v4011 = vmul.f32 %v4003, %v4007
        %v4012 = vadd.f32 %v3996, %v4008
        %v4013 = vadd.f32 %v3997, %v4009
        %v4014 = vadd.f32 %v3998, %v4010
        %v4015 = vadd.f32 %v3999, %v4011
        %v4016 = vlaneseq
        %v4017 = vshrl.u32 %v4016, 7
        %v4018 = vsub.s32 0, %v4017
        %v4019 = vrot.slane %v3878, %v4018
        %v4020 = vadd.f32 %v4012, %v4019
        %v4021 = vadd.f32 %v4013, %v4019
        %v4022 = vadd.f32 %v4014, %v4019
        %v4023 = vadd.f32 %v4015, %v4019
        %v4024 = vld [vmem:[%s1 + $0x50] sm:$0xf]
        %v4025 = vld [vmem:[%s1 + $0x54] sm:$0xf]
        %v4026 = vld [vmem:[%s1 + $0x58] sm:$0xf]
        %v4027 = vld [vmem:[%s1 + $0x5c] sm:$0xf]
        %v4028 = vld [vmem:[%s2 + $0x2b0] sm:$0x1]
        %v4029 = vlaneseq
        %v4030 = vshrl.u32 %v4029, 7
        %v4031 = vsub.s32 0, %v4030
        %v4032 = vrot.slane %v4028, %v4031
        %v4037 = vunpack.c.l.b16 %v4024
        %v4038 = vunpack.c.l.b16 %v4025
        %v4039 = vunpack.c.l.b16 %v4026
        %v4040 = vunpack.c.l.b16 %v4027
        %v4041 = vpack.c.b16 %v4038, %v4037
        %v4042 = vpack.c.b16 %v4040, %v4039
        %v4046 = vsel %vm2769, %v3869, 0
        %v4049 = vsel %vm2769, %v3870, 0
        %v4052 = vsel %vm2769, %v3871, 0
        %v4055 = vsel %vm2769, %v3872, 0
        %v4058 = vsel %vm2769, %v3873, 0
        %v4061 = vsel %vm2769, %v3874, 0
        %v4064 = vsel %vm2769, %v3875, 0
        %4066 = vmatprep.subr.bf16.mxu0 0
        %4067 = vmatpush1.bf16.msra.mxu0 %v4041
        %4068 = vmatprep.subr.bf16.mxu0 0
        %4069 = vmatpush1.bf16.msra.mxu0 %v4042
        %4070 = vmatprep.subr.bf16.mxu0 0
        %4071 = vmatpush1.bf16.msra.mxu0 0
        %4072 = vmatprep.subr.bf16.mxu0 0
        %4073 = vmatpush1.bf16.msra.mxu0 0
        %4074 = vmatprep.subr.bf16.mxu0 0
        %4075 = vmatpush1.bf16.msra.mxu0 0
        %4076 = vmatprep.subr.bf16.mxu0 0
        %4077 = vmatpush1.bf16.msra.mxu0 0
        %4078 = vmatprep.subr.bf16.mxu0 0
        %4079 = vmatpush1.bf16.msra.mxu0 0
        %4080 = vmatprep.subr.bf16.mxu0 0
        %4081 = vmatpush1.bf16.msra.mxu0 0
        %4082 = vmatprep.subr.bf16.mxu0 0
        %4083 = vmatpush1.bf16.msra.mxu0 0
        %4084 = vmatprep.subr.bf16.mxu0 0
        %4085 = vmatpush1.bf16.msra.mxu0 0
        %4086 = vmatprep.subr.bf16.mxu0 0
        %4087 = vmatpush1.bf16.msra.mxu0 0
        %4088 = vmatprep.subr.bf16.mxu0 0
        %4089 = vmatpush1.bf16.msra.mxu0 0
        %4090 = vmatprep.subr.bf16.mxu0 0
        %4091 = vmatpush1.bf16.msra.mxu0 0
        %4092 = vmatprep.subr.bf16.mxu0 0
        %4093 = vmatpush1.bf16.msra.mxu0 0
        %4094 = vmatprep.subr.bf16.mxu0 0
        %4095 = vmatpush1.bf16.msra.mxu0 0
        %4096 = vmatprep.subr.bf16.mxu0 0
        %4097 = vmatpush1.bf16.msra.mxu0 0
        %4098 = vmatprep.mubr.bf16.mxu0 0
        %4099 = vmatmul.mubr.bf16.gmra.mrb[0].mxu0 %v4046
        %v4100 = vpop.f32.mrb[0].mxu0
        %v4101 = vadd.f32 %v4032, %v4100
        %v4102 = vpop.f32.mrb[0].mxu0
        %v4103 = vpop.f32.mrb[0].mxu0
        %v4104 = vadd.f32 %v4032, %v4103
        %v4105 = vpop.f32.mrb[0].mxu0
        %4106 = vmatprep.mubr.bf16.mxu0 0
        %4107 = vmatmul.mubr.bf16.gmra.mrb[0].mxu0 %v4049
        %v4108 = vpop.f32.mrb[0].mxu0
        %v4109 = vadd.f32 %v4032, %v4108
        %v4110 = vpop.f32.mrb[0].mxu0
        %v4111 = vpop.f32.mrb[0].mxu0
        %v4112 = vadd.f32 %v4032, %v4111
        %v4113 = vpop.f32.mrb[0].mxu0
        %4114 = vmatprep.mubr.bf16.mxu0 0
        %4115 = vmatmul.mubr.bf16.gmra.mrb[0].mxu0 %v4052
        %v4116 = vpop.f32.mrb[0].mxu0
        %v4117 = vadd.f32 %v4032, %v4116
        %v4118 = vpop.f32.mrb[0].mxu0
        %v4119 = vpop.f32.mrb[0].mxu0
        %v4120 = vadd.f32 %v4032, %v4119
        %v4121 = vpop.f32.mrb[0].mxu0
        %4122 = vmatprep.mubr.bf16.mxu0 0
        %4123 = vmatmul.mubr.bf16.gmra.mrb[0].mxu0 %v4055
        %v4124 = vpop.f32.mrb[0].mxu0
        %v4125 = vadd.f32 %v4032, %v4124
        %v4126 = vpop.f32.mrb[0].mxu0
        %v4127 = vpop.f32.mrb[0].mxu0
        %v4128 = vadd.f32 %v4032, %v4127
        %v4129 = vpop.f32.mrb[0].mxu0
        %4130 = vmatprep.mubr.bf16.mxu0 0
        %4131 = vmatmul.mubr.bf16.gmra.mrb[0].mxu0 %v4058
        %v4132 = vpop.f32.mrb[0].mxu0
        %v4133 = vadd.f32 %v4032, %v4132
        %v4134 = vpop.f32.mrb[0].mxu0
        %v4135 = vpop.f32.mrb[0].mxu0
        %v4136 = vadd.f32 %v4032, %v4135
        %v4137 = vpop.f32.mrb[0].mxu0
        %4138 = vmatprep.mubr.bf16.mxu0 0
        %4139 = vmatmul.mubr.bf16.gmra.mrb[0].mxu0 %v4061
        %v4140 = vpop.f32.mrb[0].mxu0
        %v4141 = vadd.f32 %v4032, %v4140
        %v4142 = vpop.f32.mrb[0].mxu0
        %v4143 = vpop.f32.mrb[0].mxu0
        %v4144 = vadd.f32 %v4032, %v4143
        %v4145 = vpop.f32.mrb[0].mxu0
        %4146 = vmatprep.mubr.bf16.mxu0 0
        %4147 = vmatmul.mubr.bf16.gmra.mrb[0].mxu0 %v4064
        %v4148 = vpop.f32.mrb[0].mxu0
        %v4149 = vadd.f32 %v4032, %v4148
        %v4150 = vpop.f32.mrb[0].mxu0
        %v4151 = vpop.f32.mrb[0].mxu0
        %v4152 = vpop.f32.mrb[0].mxu0
        %4153 = vdwg.mxu0
        %v4154 = vmax.f32 %v4101, 0.0
        %v4155 = vmax.f32 %v4104, 0.0
        %v4156 = vmax.f32 %v4109, 0.0
        %v4157 = vmax.f32 %v4112, 0.0
        %v4158 = vmax.f32 %v4117, 0.0
        %v4159 = vmax.f32 %v4120, 0.0
        %v4160 = vmax.f32 %v4125, 0.0
        %v4161 = vmax.f32 %v4128, 0.0
        %v4162 = vmax.f32 %v4133, 0.0
        %v4163 = vmax.f32 %v4136, 0.0
        %v4164 = vmax.f32 %v4141, 0.0
        %v4165 = vmax.f32 %v4144, 0.0
        %v4166 = vmax.f32 %v4149, 0.0
        %4168 = vset.pattern.permute.xlu0 0
        %4169 = vperm.xlu0 %4168, %v3843
        %v4170 = vpop.permute.xlu0 %4169
        %4173 = vset.pattern.permute.xlu0 0
        %4174 = vperm.xlu0 %4173, %v3844
        %v4175 = vpop.permute.xlu0 %4174
        %4178 = vset.pattern.permute.xlu0 0
        %4179 = vperm.xlu0 %4178, %v3845
        %v4180 = vpop.permute.xlu0 %4179
        %4183 = vset.pattern.permute.xlu0 0
        %4184 = vperm.xlu0 %4183, %v3846
        %v4185 = vpop.permute.xlu0 %4184
        %4188 = vset.pattern.permute.xlu0 0
        %4189 = vperm.xlu0 %4188, %v3847
        %v4190 = vpop.permute.xlu0 %4189
        %4193 = vset.pattern.permute.xlu0 0
        %4194 = vperm.xlu0 %4193, %v3848
        %v4195 = vpop.permute.xlu0 %4194
        %4198 = vset.pattern.permute.xlu0 0
        %4199 = vperm.xlu0 %4198, %v3849
        %v4200 = vpop.permute.xlu0 %4199
        %4203 = vset.pattern.permute.xlu0 0
        %4204 = vperm.xlu0 %4203, %v3850
        %v4205 = vpop.permute.xlu0 %4204
        %4208 = vset.pattern.permute.xlu0 0
        %4209 = vperm.xlu0 %4208, %v3851
        %v4210 = vpop.permute.xlu0 %4209
        %4213 = vset.pattern.permute.xlu0 0
        %4214 = vperm.xlu0 %4213, %v3852
        %v4215 = vpop.permute.xlu0 %4214
        %4218 = vset.pattern.permute.xlu0 0
        %4219 = vperm.xlu0 %4218, %v3853
        %v4220 = vpop.permute.xlu0 %4219
        %4223 = vset.pattern.permute.xlu0 0
        %4224 = vperm.xlu0 %4223, %v3854
        %v4225 = vpop.permute.xlu0 %4224
        %4228 = vset.pattern.permute.xlu0 0
        %4229 = vperm.xlu0 %4228, %v3855
        %v4230 = vpop.permute.xlu0 %4229
        %v4232 = vmul.f32 %v4154, %v4170
        %v4233 = vmul.f32 %v4155, %v4175
        %v4234 = vmul.f32 %v4156, %v4180
        %v4235 = vmul.f32 %v4157, %v4185
        %v4236 = vmul.f32 %v4158, %v4190
        %v4237 = vmul.f32 %v4159, %v4195
        %v4238 = vmul.f32 %v4160, %v4200
        %v4239 = vmul.f32 %v4161, %v4205
        %v4240 = vmul.f32 %v4162, %v4210
        %v4241 = vmul.f32 %v4163, %v4215
        %v4242 = vmul.f32 %v4164, %v4220
        %v4243 = vmul.f32 %v4165, %v4225
        %v4244 = vmul.f32 %v4166, %v4230
        %4245 = vst.msk [vmem:[#allocation7] sm:$0xff] %vm2769, %v4232
        %4246 = vst.msk [vmem:[#allocation7 + $0x8] sm:$0xff] %vm2769, %v4233
        %4247 = vst.msk [vmem:[#allocation7 + $0x10] sm:$0xff] %vm2769, %v4234
        %4248 = vst.msk [vmem:[#allocation7 + $0x18] sm:$0xff] %vm2769, %v4235
        %4249 = vst.msk [vmem:[#allocation7 + $0x20] sm:$0xff] %vm2769, %v4236
        %4250 = vst.msk [vmem:[#allocation7 + $0x28] sm:$0xff] %vm2769, %v4237
        %4251 = vst.msk [vmem:[#allocation7 + $0x30] sm:$0xff] %vm2769, %v4238
        %4252 = vst.msk [vmem:[#allocation7 + $0x38] sm:$0xff] %vm2769, %v4239
        %4253 = vst.msk [vmem:[#allocation7 + $0x40] sm:$0xff] %vm2769, %v4240
        %4254 = vst.msk [vmem:[#allocation7 + $0x48] sm:$0xff] %vm2769, %v4241
        %4255 = vst.msk [vmem:[#allocation7 + $0x50] sm:$0xff] %vm2769, %v4242
        %4256 = vst.msk [vmem:[#allocation7 + $0x58] sm:$0xff] %vm2769, %v4243
        %4257 = vst.msk [vmem:[#allocation7 + $0x60] sm:$0xf] %vm2782, %v4244
        %v4258 = vld [vmem:[%s2 + $0x2b8] sm:$0xff]
        %v4259 = vld [vmem:[%s2 + $0x2c0] sm:$0x1]
        %v4260 = vld [vmem:[%s2 + $0x2c8] sm:$0x1]
        %v4261 = vld [vmem:[#allocation7] sm:$0xff]
        %v4262 = vld [vmem:[#allocation7 + $0x8] sm:$0xff]
        %v4263 = vld [vmem:[#allocation7 + $0x10] sm:$0xff]
        %v4264 = vld [vmem:[#allocation7 + $0x18] sm:$0x1]
        %v4265 = vlaneseq
        %v4266 = vshrl.u32 %v4265, 7
        %v4267 = vsub.s32 0, %v4266
        %v4268 = vrot.slane %v4258, %v4267
        %v4269 = vmul.f32 %v4261, %v4268
        %v4270 = vmul.f32 %v4262, %v4268
        %v4271 = vmul.f32 %v4263, %v4268
        %v4272 = vmul.f32 %v4264, %v4268
        %v4273 = vld [vmem:[#allocation7 + $0x19] sm:$0xff]
        %v4274 = vld [vmem:[#allocation7 + $0x21] sm:$0xff]
        %v4275 = vld [vmem:[#allocation7 + $0x29] sm:$0xff]
        %v4276 = vld [vmem:[#allocation7 + $0x31] sm:$0x1]
        %v4277 = vlaneseq
        %v4278 = vshrl.u32 %v4277, 7
        %v4279 = vsub.s32 1, %v4278
        %v4280 = vrot.slane %v4258, %v4279
        %v4281 = vmul.f32 %v4273, %v4280
        %v4282 = vmul.f32 %v4274, %v4280
        %v4283 = vmul.f32 %v4275, %v4280
        %v4284 = vmul.f32 %v4276, %v4280
        %v4285 = vadd.f32 %v4269, %v4281
        %v4286 = vadd.f32 %v4270, %v4282
        %v4287 = vadd.f32 %v4271, %v4283
        %v4288 = vadd.f32 %v4272, %v4284
        %v4289 = vld [vmem:[#allocation7 + $0x1] sm:$0xff]
        %v4290 = vld [vmem:[#allocation7 + $0x9] sm:$0xff]
        %v4291 = vld [vmem:[#allocation7 + $0x11] sm:$0xff]
        %v4292 = vld [vmem:[#allocation7 + $0x19] sm:$0x1]
        %v4293 = vlaneseq
        %v4294 = vshrl.u32 %v4293, 7
        %v4295 = vsub.s32 2, %v4294
        %v4296 = vrot.slane %v4258, %v4295
        %v4297 = vmul.f32 %v4289, %v4296
        %v4298 = vmul.f32 %v4290, %v4296
        %v4299 = vmul.f32 %v4291, %v4296
        %v4300 = vmul.f32 %v4292, %v4296
        %v4301 = vadd.f32 %v4285, %v4297
        %v4302 = vadd.f32 %v4286, %v4298
        %v4303 = vadd.f32 %v4287, %v4299
        %v4304 = vadd.f32 %v4288, %v4300
        %v4305 = vld [vmem:[#allocation7 + $0x32] sm:$0xff]
        %v4306 = vld [vmem:[#allocation7 + $0x3a] sm:$0xff]
        %v4307 = vld [vmem:[#allocation7 + $0x42] sm:$0xff]
        %v4308 = vld [vmem:[#allocation7 + $0x4a] sm:$0x1]
        %v4309 = vlaneseq
        %v4310 = vshrl.u32 %v4309, 7
        %v4311 = vsub.s32 3, %v4310
        %v4312 = vrot.slane %v4258, %v4311
        %v4313 = vmul.f32 %v4305, %v4312
        %v4314 = vmul.f32 %v4306, %v4312
        %v4315 = vmul.f32 %v4307, %v4312
        %v4316 = vmul.f32 %v4308, %v4312
        %v4317 = vadd.f32 %v4301, %v4313
        %v4318 = vadd.f32 %v4302, %v4314
        %v4319 = vadd.f32 %v4303, %v4315
        %v4320 = vadd.f32 %v4304, %v4316
        %v4321 = vld [vmem:[#allocation7 + $0x4b] sm:$0xff]
        %v4322 = vld [vmem:[#allocation7 + $0x53] sm:$0xff]
        %v4323 = vld [vmem:[#allocation7 + $0x5b] sm:$0xff]
        %v4324 = vld [vmem:[#allocation7 + $0x63] sm:$0x1]
        %v4325 = vlaneseq
        %v4326 = vshrl.u32 %v4325, 7
        %v4327 = vsub.s32 4, %v4326
        %v4328 = vrot.slane %v4258, %v4327
        %v4329 = vmul.f32 %v4321, %v4328
        %v4330 = vmul.f32 %v4322, %v4328
        %v4331 = vmul.f32 %v4323, %v4328
        %v4332 = vmul.f32 %v4324, %v4328
        %v4333 = vadd.f32 %v4317, %v4329
        %v4334 = vadd.f32 %v4318, %v4330
        %v4335 = vadd.f32 %v4319, %v4331
        %v4336 = vadd.f32 %v4320, %v4332
        %v4337 = vld [vmem:[#allocation7 + $0x33] sm:$0xff]
        %v4338 = vld [vmem:[#allocation7 + $0x3b] sm:$0xff]
        %v4339 = vld [vmem:[#allocation7 + $0x43] sm:$0xff]
        %v4340 = vld [vmem:[#allocation7 + $0x4b] sm:$0x1]
        %v4341 = vlaneseq
        %v4342 = vshrl.u32 %v4341, 7
        %v4343 = vsub.s32 5, %v4342
        %v4344 = vrot.slane %v4258, %v4343
        %v4345 = vmul.f32 %v4337, %v4344
        %v4346 = vmul.f32 %v4338, %v4344
        %v4347 = vmul.f32 %v4339, %v4344
        %v4348 = vmul.f32 %v4340, %v4344
        %v4349 = vadd.f32 %v4333, %v4345
        %v4350 = vadd.f32 %v4334, %v4346
        %v4351 = vadd.f32 %v4335, %v4347
        %v4352 = vadd.f32 %v4336, %v4348
        %v4353 = vld [vmem:[#allocation7 + $0x5] sm:$0xff]
        %v4354 = vld [vmem:[#allocation7 + $0xd] sm:$0xff]
        %v4355 = vld [vmem:[#allocation7 + $0x15] sm:$0xff]
        %v4356 = vld [vmem:[#allocation7 + $0x1d] sm:$0x1]
        %v4357 = vlaneseq
        %v4358 = vshrl.u32 %v4357, 7
        %v4359 = vsub.s32 6, %v4358
        %v4360 = vrot.slane %v4258, %v4359
        %v4361 = vmul.f32 %v4353, %v4360
        %v4362 = vmul.f32 %v4354, %v4360
        %v4363 = vmul.f32 %v4355, %v4360
        %v4364 = vmul.f32 %v4356, %v4360
        %v4365 = vadd.f32 %v4349, %v4361
        %v4366 = vadd.f32 %v4350, %v4362
        %v4367 = vadd.f32 %v4351, %v4363
        %v4368 = vadd.f32 %v4352, %v4364
        %v4369 = vld [vmem:[#allocation7 + $0x1e] sm:$0xff]
        %v4370 = vld [vmem:[#allocation7 + $0x26] sm:$0xff]
        %v4371 = vld [vmem:[#allocation7 + $0x2e] sm:$0xff]
        %v4372 = vld [vmem:[#allocation7 + $0x36] sm:$0x1]
        %v4373 = vlaneseq
        %v4374 = vshrl.u32 %v4373, 7
        %v4375 = vsub.s32 7, %v4374
        %v4376 = vrot.slane %v4258, %v4375
        %v4377 = vmul.f32 %v4369, %v4376
        %v4378 = vmul.f32 %v4370, %v4376
        %v4379 = vmul.f32 %v4371, %v4376
        %v4380 = vmul.f32 %v4372, %v4376
        %v4381 = vadd.f32 %v4365, %v4377
        %v4382 = vadd.f32 %v4366, %v4378
        %v4383 = vadd.f32 %v4367, %v4379
        %v4384 = vadd.f32 %v4368, %v4380
        %v4385 = vld [vmem:[#allocation7 + $0x6] sm:$0xff]
        %v4386 = vld [vmem:[#allocation7 + $0xe] sm:$0xff]
        %v4387 = vld [vmem:[#allocation7 + $0x16] sm:$0xff]
        %v4388 = vld [vmem:[#allocation7 + $0x1e] sm:$0x1]
        %v4389 = vlaneseq
        %v4390 = vshrl.u32 %v4389, 7
        %v4391 = vsub.s32 0, %v4390
        %v4392 = vrot.slane %v4259, %v4391
        %v4393 = vmul.f32 %v4385, %v4392
        %v4394 = vmul.f32 %v4386, %v4392
        %v4395 = vmul.f32 %v4387, %v4392
        %v4396 = vmul.f32 %v4388, %v4392
        %v4397 = vadd.f32 %v4381, %v4393
        %v4398 = vadd.f32 %v4382, %v4394
        %v4399 = vadd.f32 %v4383, %v4395
        %v4400 = vadd.f32 %v4384, %v4396
        %v4401 = vlaneseq
        %v4402 = vshrl.u32 %v4401, 7
        %v4403 = vsub.s32 0, %v4402
        %v4404 = vrot.slane %v4260, %v4403
        %v4405 = vadd.f32 %v4397, %v4404
        %v4406 = vadd.f32 %v4398, %v4404
        %v4407 = vadd.f32 %v4399, %v4404
        %v4408 = vadd.f32 %v4400, %v4404
        %v4409 = vpack.c.bf16 %v4021, %v4020
        %v4410 = vpack.c.bf16 %v4023, %v4022
        %v4411 = vld [vmem:[%s1 + $0x40] sm:$0xf]
        %v4412 = vld [vmem:[%s1 + $0x44] sm:$0xf]
        %v4413 = vld [vmem:[%s1 + $0x48] sm:$0xf]
        %v4414 = vld [vmem:[%s1 + $0x4c] sm:$0xf]
        %v4415 = vpack.c.bf16 %v4406, %v4405
        %v4416 = vpack.c.bf16 %v4408, %v4407
        %v4417 = vld [vmem:[%s1 + $0x60] sm:$0xf]
        %v4418 = vld [vmem:[%s1 + $0x64] sm:$0xf]
        %v4419 = vld [vmem:[%s1 + $0x68] sm:$0xf]
        %v4420 = vld [vmem:[%s1 + $0x6c] sm:$0xf]
        %v4425 = vunpack.c.l.b16 %v4417
        %v4426 = vunpack.c.l.b16 %v4418
        %v4427 = vunpack.c.l.b16 %v4419
        %v4428 = vunpack.c.l.b16 %v4420
        %v4429 = vpack.c.b16 %v4426, %v4425
        %v4430 = vpack.c.b16 %v4428, %v4427
        %v4434 = vsel %vm2769, %v4415, 0
        %v4437 = vsel %vm2769, %v4416, 0
        %4439 = vmatprep.subr.bf16.mxu0 0
        %4440 = vmatpush1.bf16.msra.mxu0 %v4429
        %4441 = vmatprep.subr.bf16.mxu0 0
        %4442 = vmatpush1.bf16.msra.mxu0 %v4430
        %4443 = vmatprep.subr.bf16.mxu0 0
        %4444 = vmatpush1.bf16.msra.mxu0 0
        %4445 = vmatprep.subr.bf16.mxu0 0
        %4446 = vmatpush1.bf16.msra.mxu0 0
        %4447 = vmatprep.subr.bf16.mxu0 0
        %4448 = vmatpush1.bf16.msra.mxu0 0
        %4449 = vmatprep.subr.bf16.mxu0 0
        %4450 = vmatpush1.bf16.msra.mxu0 0
        %4451 = vmatprep.subr.bf16.mxu0 0
        %4452 = vmatpush1.bf16.msra.mxu0 0
        %4453 = vmatprep.subr.bf16.mxu0 0
        %4454 = vmatpush1.bf16.msra.mxu0 0
        %4455 = vmatprep.subr.bf16.mxu0 0
        %4456 = vmatpush1.bf16.msra.mxu0 0
        %4457 = vmatprep.subr.bf16.mxu0 0
        %4458 = vmatpush1.bf16.msra.mxu0 0
        %4459 = vmatprep.subr.bf16.mxu0 0
        %4460 = vmatpush1.bf16.msra.mxu0 0
        %4461 = vmatprep.subr.bf16.mxu0 0
        %4462 = vmatpush1.bf16.msra.mxu0 0
        %4463 = vmatprep.subr.bf16.mxu0 0
        %4464 = vmatpush1.bf16.msra.mxu0 0
        %4465 = vmatprep.subr.bf16.mxu0 0
        %4466 = vmatpush1.bf16.msra.mxu0 0
        %4467 = vmatprep.subr.bf16.mxu0 0
        %4468 = vmatpush1.bf16.msra.mxu0 0
        %4469 = vmatprep.subr.bf16.mxu0 0
        %4470 = vmatpush1.bf16.msra.mxu0 0
        %4471 = vmatprep.mubr.bf16.mxu0 0
        %4472 = vmatmul.mubr.bf16.gmra.mrb[0].mxu0 %v4434
        %v4473 = vpop.f32.mrb[0].mxu0
        %v4474 = vadd.f32 0.0, %v4473
        %v4475 = vpop.f32.mrb[0].mxu0
        %v4476 = vpop.f32.mrb[0].mxu0
        %v4477 = vadd.f32 0.0, %v4476
        %v4478 = vpop.f32.mrb[0].mxu0
        %4479 = vmatprep.mubr.bf16.mxu0 0
        %4480 = vmatmul.mubr.bf16.gmra.mrb[0].mxu0 %v4437
        %v4481 = vpop.f32.mrb[0].mxu0
        %v4482 = vadd.f32 0.0, %v4481
        %v4483 = vpop.f32.mrb[0].mxu0
        %v4484 = vpop.f32.mrb[0].mxu0
        %v4485 = vadd.f32 0.0, %v4484
        %v4486 = vpop.f32.mrb[0].mxu0
        %4487 = vdwg.mxu0
        %v4492 = vunpack.c.l.b16 %v4411
        %v4493 = vunpack.c.l.b16 %v4412
        %v4494 = vunpack.c.l.b16 %v4413
        %v4495 = vunpack.c.l.b16 %v4414
        %v4496 = vpack.c.b16 %v4493, %v4492
        %v4497 = vpack.c.b16 %v4495, %v4494
        %v4501 = vsel %vm2769, %v4409, 0
        %v4504 = vsel %vm2769, %v4410, 0
        %4506 = vmatprep.subr.bf16.mxu0 0
        %4507 = vmatpush1.bf16.msra.mxu0 %v4496
        %4508 = vmatprep.subr.bf16.mxu0 0
        %4509 = vmatpush1.bf16.msra.mxu0 %v4497
        %4510 = vmatprep.subr.bf16.mxu0 0
        %4511 = vmatpush1.bf16.msra.mxu0 0
        %4512 = vmatprep.subr.bf16.mxu0 0
        %4513 = vmatpush1.bf16.msra.mxu0 0
        %4514 = vmatprep.subr.bf16.mxu0 0
        %4515 = vmatpush1.bf16.msra.mxu0 0
        %4516 = vmatprep.subr.bf16.mxu0 0
        %4517 = vmatpush1.bf16.msra.mxu0 0
        %4518 = vmatprep.subr.bf16.mxu0 0
        %4519 = vmatpush1.bf16.msra.mxu0 0
        %4520 = vmatprep.subr.bf16.mxu0 0
        %4521 = vmatpush1.bf16.msra.mxu0 0
        %4522 = vmatprep.subr.bf16.mxu0 0
        %4523 = vmatpush1.bf16.msra.mxu0 0
        %4524 = vmatprep.subr.bf16.mxu0 0
        %4525 = vmatpush1.bf16.msra.mxu0 0
        %4526 = vmatprep.subr.bf16.mxu0 0
        %4527 = vmatpush1.bf16.msra.mxu0 0
        %4528 = vmatprep.subr.bf16.mxu0 0
        %4529 = vmatpush1.bf16.msra.mxu0 0
        %4530 = vmatprep.subr.bf16.mxu0 0
        %4531 = vmatpush1.bf16.msra.mxu0 0
        %4532 = vmatprep.subr.bf16.mxu0 0
        %4533 = vmatpush1.bf16.msra.mxu0 0
        %4534 = vmatprep.subr.bf16.mxu0 0
        %4535 = vmatpush1.bf16.msra.mxu0 0
        %4536 = vmatprep.subr.bf16.mxu0 0
        %4537 = vmatpush1.bf16.msra.mxu0 0
        %4538 = vmatprep.mubr.bf16.mxu0 0
        %4539 = vmatmul.mubr.bf16.gmra.mrb[0].mxu0 %v4501
        %v4540 = vpop.f32.mrb[0].mxu0
        %v4541 = vadd.f32 %v4474, %v4540
        %v4542 = vpop.f32.mrb[0].mxu0
        %v4543 = vpop.f32.mrb[0].mxu0
        %v4544 = vadd.f32 %v4477, %v4543
        %v4545 = vpop.f32.mrb[0].mxu0
        %4546 = vmatprep.mubr.bf16.mxu0 0
        %4547 = vmatmul.mubr.bf16.gmra.mrb[0].mxu0 %v4504
        %v4548 = vpop.f32.mrb[0].mxu0
        %v4549 = vadd.f32 %v4482, %v4548
        %v4550 = vpop.f32.mrb[0].mxu0
        %v4551 = vpop.f32.mrb[0].mxu0
        %v4552 = vadd.f32 %v4485, %v4551
        %v4553 = vpop.f32.mrb[0].mxu0
        %4554 = vdwg.mxu0
        %v4555 = vld [vmem:[%s2 + $0x2d0] sm:$0x1]
        %v4556 = vlaneseq
        %v4557 = vshrl.u32 %v4556, 7
        %v4558 = vsub.s32 0, %v4557
        %v4559 = vrot.slane %v4555, %v4558
        %v4560 = vadd.f32 %v4541, %v4559
        %v4561 = vadd.f32 %v4544, %v4559
        %v4562 = vadd.f32 %v4549, %v4559
        %v4563 = vadd.f32 %v4552, %v4559
        %v4564 = vmax.f32 %v4560, 0.0
        %v4565 = vmax.f32 %v4561, 0.0
        %v4566 = vmax.f32 %v4562, 0.0
        %v4567 = vmax.f32 %v4563, 0.0
        %v4568 = vld [vmem:[%s2 + $0x2d8] sm:$0xff]
        %v4569 = vld [vmem:[%s2 + $0x2e0] sm:$0xff]
        %v4570 = vld [vmem:[%s2 + $0x2e8] sm:$0xff]
        %v4571 = vld [vmem:[%s2 + $0x2f0] sm:$0xff]
        %v4572 = vld [vmem:[%s2 + $0x2f8] sm:$0xf]
        %vm4573 = vcmask 203776
        %v4575 = vsel %vm4573, %v4568, 0
        %v4578 = vsel %vm4573, %v4569, 0
        %v4581 = vsel %vm4573, %v4570, 0
        %v4584 = vsel %vm4573, %v4571, 0
        %v4587 = vsel %vm4573, %v4572, 0
        %v4590 = vsel %vm2635, %v4567, 0
        %4592 = vmatprep.subr.mxu0 0.0
        %4593 = vmatpush1.msra.mxu0 %v4564
        %4594 = vmatprep.subr.mxu0 0.0
        %4595 = vmatpush1.msra.mxu0 %v4565
        %4596 = vmatprep.subr.mxu0 0.0
        %4597 = vmatpush1.msra.mxu0 %v4566
        %4598 = vmatprep.subr.mxu0 0.0
        %4599 = vmatpush1.msra.mxu0 %v4590
        %4600 = vmatprep.subr.mxu0 0.0
        %4601 = vmatpush1.msra.mxu0 0.0
        %4602 = vmatprep.subr.mxu0 0.0
        %4603 = vmatpush1.msra.mxu0 0.0
        %4604 = vmatprep.subr.mxu0 0.0
        %4605 = vmatpush1.msra.mxu0 0.0
        %4606 = vmatprep.subr.mxu0 0.0
        %4607 = vmatpush1.msra.mxu0 0.0
        %4608 = vmatprep.subr.mxu0 0.0
        %4609 = vmatpush1.msra.mxu0 0.0
        %4610 = vmatprep.subr.mxu0 0.0
        %4611 = vmatpush1.msra.mxu0 0.0
        %4612 = vmatprep.subr.mxu0 0.0
        %4613 = vmatpush1.msra.mxu0 0.0
        %4614 = vmatprep.subr.mxu0 0.0
        %4615 = vmatpush1.msra.mxu0 0.0
        %4616 = vmatprep.subr.mxu0 0.0
        %4617 = vmatpush1.msra.mxu0 0.0
        %4618 = vmatprep.subr.mxu0 0.0
        %4619 = vmatpush1.msra.mxu0 0.0
        %4620 = vmatprep.subr.mxu0 0.0
        %4621 = vmatpush1.msra.mxu0 0.0
        %4622 = vmatprep.subr.mxu0 0.0
        %4623 = vmatpush1.msra.mxu0 0.0
        %4624 = vmatprep.subr.mxu0 0.0
        %4625 = vmatpush1.msra.mxu0 0.0
        %4626 = vmatprep.subr.mxu0 0.0
        %4627 = vmatpush1.msra.mxu0 0.0
        %4628 = vmatprep.subr.mxu0 0.0
        %4629 = vmatpush1.msra.mxu0 0.0
        %4630 = vmatprep.subr.mxu0 0.0
        %4631 = vmatpush1.msra.mxu0 0.0
        %4632 = vmatprep.subr.mxu0 0.0
        %4633 = vmatpush1.msra.mxu0 0.0
        %4634 = vmatprep.subr.mxu0 0.0
        %4635 = vmatpush1.msra.mxu0 0.0
        %4636 = vmatprep.subr.mxu0 0.0
        %4637 = vmatpush1.msra.mxu0 0.0
        %4638 = vmatprep.subr.mxu0 0.0
        %4639 = vmatpush1.msra.mxu0 0.0
        %4640 = vmatprep.subr.mxu0 0.0
        %4641 = vmatpush1.msra.mxu0 0.0
        %4642 = vmatprep.subr.mxu0 0.0
        %4643 = vmatpush1.msra.mxu0 0.0
        %4644 = vmatprep.subr.mxu0 0.0
        %4645 = vmatpush1.msra.mxu0 0.0
        %4646 = vmatprep.subr.mxu0 0.0
        %4647 = vmatpush1.msra.mxu0 0.0
        %4648 = vmatprep.subr.mxu0 0.0
        %4649 = vmatpush1.msra.mxu0 0.0
        %4650 = vmatprep.subr.mxu0 0.0
        %4651 = vmatpush1.msra.mxu0 0.0
        %4652 = vmatprep.subr.mxu0 0.0
        %4653 = vmatpush1.msra.mxu0 0.0
        %4654 = vmatprep.subr.mxu0 0.0
        %4655 = vmatpush1.msra.mxu0 0.0
        %4656 = vmatprep.mubr.f32.mxu0 0.0
        %4657 = vmatmul.mubr.f32.gmra.mrb[0].mxu0 %v4575
        %v4658 = vpop.f32.mrb[0].mxu0
        %v4659 = vadd.f32 0.0, %v4658
        %v4660 = vpop.f32.mrb[0].mxu0
        %4661 = vmatprep.mubr.f32.mxu0 0.0
        %4662 = vmatmul.mubr.f32.gmra.mrb[0].mxu0 %v4578
        %v4663 = vpop.f32.mrb[0].mxu0
        %v4664 = vadd.f32 0.0, %v4663
        %v4665 = vpop.f32.mrb[0].mxu0
        %4666 = vmatprep.mubr.f32.mxu0 0.0
        %4667 = vmatmul.mubr.f32.gmra.mrb[0].mxu0 %v4581
        %v4668 = vpop.f32.mrb[0].mxu0
        %v4669 = vadd.f32 0.0, %v4668
        %v4670 = vpop.f32.mrb[0].mxu0
        %4671 = vmatprep.mubr.f32.mxu0 0.0
        %4672 = vmatmul.mubr.f32.gmra.mrb[0].mxu0 %v4584
        %v4673 = vpop.f32.mrb[0].mxu0
        %v4674 = vadd.f32 0.0, %v4673
        %v4675 = vpop.f32.mrb[0].mxu0
        %4676 = vmatprep.mubr.f32.mxu0 0.0
        %4677 = vmatmul.mubr.f32.gmra.mrb[0].mxu0 %v4587
        %v4678 = vpop.f32.mrb[0].mxu0
        %v4679 = vadd.f32 0.0, %v4678
        %v4680 = vpop.f32.mrb[0].mxu0
        %4681 = vdwg.mxu0
        %vm4682 = vcmask 523264
        %4683 = vst.msk [vmem:[#allocation8] sm:$0xff] %vm4682, %v4659
        %4684 = vst.msk [vmem:[#allocation8 + $0x8] sm:$0xff] %vm4682, %v4664
        %4685 = vst.msk [vmem:[#allocation8 + $0x10] sm:$0xff] %vm4682, %v4669
        %4686 = vst.msk [vmem:[#allocation8 + $0x18] sm:$0xff] %vm4682, %v4674
        %vm4687 = vcmask 519168
        %4688 = vst.msk [vmem:[#allocation8 + $0x20] sm:$0xf] %vm4687, %v4679
        %v4689 = vld [vmem:[%s2 + $0x348] sm:$0xff]
        %v4690 = vld [vmem:[%s2 + $0x350] sm:$0xff]
        %v4691 = vld [vmem:[%s2 + $0x358] sm:$0xff]
        %v4692 = vld [vmem:[%s2 + $0x360] sm:$0xff]
        %v4693 = vld [vmem:[%s2 + $0x368] sm:$0xf]
        %v4694 = vld [vmem:[#allocation8] sm:$0xff]
        %v4695 = vld [vmem:[#allocation8 + $0x8] sm:$0xff]
        %v4696 = vld [vmem:[#allocation8 + $0x10] sm:$0xff]
        %v4697 = vld [vmem:[#allocation8 + $0x18] sm:$0xff]
        %v4698 = vld [vmem:[#allocation8 + $0x20] sm:$0xf]
        %v4699 = vpack.c.bf16 %v4695, %v4694
        %v4700 = vpack.c.bf16 %v4697, %v4696
        %v4701 = vpack.c.bf16 %v4698, %v4698
        %v4702 = vld [vmem:[%s1 + $0x70] sm:$0xf]
        %v4703 = vld [vmem:[%s1 + $0x74] sm:$0xf]
        %v4704 = vld [vmem:[%s1 + $0x78] sm:$0xf]
        %v4705 = vld [vmem:[%s1 + $0x7c] sm:$0xf]
        %v4706 = vld [vmem:[%s1 + $0x80] sm:$0xf]
        %v4707 = vld [vmem:[%s1 + $0x84] sm:$0xf]
        %v4708 = vld [vmem:[%s1 + $0x88] sm:$0xf]
        %v4709 = vld [vmem:[%s1 + $0x8c] sm:$0xf]
        %v4710 = vld [vmem:[%s2 + $0x300] sm:$0x1]
        %v4711 = vlaneseq
        %v4712 = vshrl.u32 %v4711, 7
        %v4713 = vsub.s32 0, %v4712
        %v4714 = vrot.slane %v4710, %v4713
        %v4723 = vunpack.c.l.b16 %v4702
        %v4724 = vunpack.c.l.b16 %v4703
        %v4725 = vunpack.c.l.b16 %v4704
        %v4726 = vunpack.c.l.b16 %v4705
        %v4727 = vunpack.c.l.b16 %v4706
        %v4728 = vunpack.c.l.b16 %v4707
        %v4729 = vunpack.c.l.b16 %v4708
        %v4730 = vunpack.c.l.b16 %v4709
        %v4731 = vpack.c.b16 %v4724, %v4723
        %v4732 = vpack.c.b16 %v4726, %v4725
        %v4733 = vpack.c.b16 %v4728, %v4727
        %v4734 = vpack.c.b16 %v4730, %v4729
        %v4740 = vsel %vm4682, %v4699, 0
        %v4743 = vsel %vm4682, %v4700, 0
        %v4746 = vsel %vm4682, %v4701, 0
        %4748 = vmatprep.subr.bf16.mxu0 0
        %4749 = vmatpush1.bf16.msra.mxu0 %v4731
        %4750 = vmatprep.subr.bf16.mxu0 0
        %4751 = vmatpush1.bf16.msra.mxu0 %v4732
        %4752 = vmatprep.subr.bf16.mxu0 0
        %4753 = vmatpush1.bf16.msra.mxu0 %v4733
        %4754 = vmatprep.subr.bf16.mxu0 0
        %4755 = vmatpush1.bf16.msra.mxu0 %v4734
        %4756 = vmatprep.subr.bf16.mxu0 0
        %4757 = vmatpush1.bf16.msra.mxu0 0
        %4758 = vmatprep.subr.bf16.mxu0 0
        %4759 = vmatpush1.bf16.msra.mxu0 0
        %4760 = vmatprep.subr.bf16.mxu0 0
        %4761 = vmatpush1.bf16.msra.mxu0 0
        %4762 = vmatprep.subr.bf16.mxu0 0
        %4763 = vmatpush1.bf16.msra.mxu0 0
        %4764 = vmatprep.subr.bf16.mxu0 0
        %4765 = vmatpush1.bf16.msra.mxu0 0
        %4766 = vmatprep.subr.bf16.mxu0 0
        %4767 = vmatpush1.bf16.msra.mxu0 0
        %4768 = vmatprep.subr.bf16.mxu0 0
        %4769 = vmatpush1.bf16.msra.mxu0 0
        %4770 = vmatprep.subr.bf16.mxu0 0
        %4771 = vmatpush1.bf16.msra.mxu0 0
        %4772 = vmatprep.subr.bf16.mxu0 0
        %4773 = vmatpush1.bf16.msra.mxu0 0
        %4774 = vmatprep.subr.bf16.mxu0 0
        %4775 = vmatpush1.bf16.msra.mxu0 0
        %4776 = vmatprep.subr.bf16.mxu0 0
        %4777 = vmatpush1.bf16.msra.mxu0 0
        %4778 = vmatprep.subr.bf16.mxu0 0
        %4779 = vmatpush1.bf16.msra.mxu0 0
        %4780 = vmatprep.mubr.bf16.mxu0 0
        %4781 = vmatmul.mubr.bf16.gmra.mrb[0].mxu0 %v4740
        %v4782 = vpop.f32.mrb[0].mxu0
        %v4783 = vadd.f32 %v4714, %v4782
        %v4784 = vpop.f32.mrb[0].mxu0
        %v4785 = vpop.f32.mrb[0].mxu0
        %v4786 = vadd.f32 %v4714, %v4785
        %v4787 = vpop.f32.mrb[0].mxu0
        %4788 = vmatprep.mubr.bf16.mxu0 0
        %4789 = vmatmul.mubr.bf16.gmra.mrb[0].mxu0 %v4743
        %v4790 = vpop.f32.mrb[0].mxu0
        %v4791 = vadd.f32 %v4714, %v4790
        %v4792 = vpop.f32.mrb[0].mxu0
        %v4793 = vpop.f32.mrb[0].mxu0
        %v4794 = vadd.f32 %v4714, %v4793
        %v4795 = vpop.f32.mrb[0].mxu0
        %4796 = vmatprep.mubr.bf16.mxu0 0
        %4797 = vmatmul.mubr.bf16.gmra.mrb[0].mxu0 %v4746
        %v4798 = vpop.f32.mrb[0].mxu0
        %v4799 = vadd.f32 %v4714, %v4798
        %v4800 = vpop.f32.mrb[0].mxu0
        %v4801 = vpop.f32.mrb[0].mxu0
        %v4802 = vpop.f32.mrb[0].mxu0
        %4803 = vdwg.mxu0
        %v4804 = vmax.f32 %v4783, 0.0
        %v4805 = vmax.f32 %v4786, 0.0
        %v4806 = vmax.f32 %v4791, 0.0
        %v4807 = vmax.f32 %v4794, 0.0
        %v4808 = vmax.f32 %v4799, 0.0
        %4810 = vset.pattern.permute.xlu0 0
        %4811 = vperm.xlu0 %4810, %v4689
        %v4812 = vpop.permute.xlu0 %4811
        %4815 = vset.pattern.permute.xlu0 0
        %4816 = vperm.xlu0 %4815, %v4690
        %v4817 = vpop.permute.xlu0 %4816
        %4820 = vset.pattern.permute.xlu0 0
        %4821 = vperm.xlu0 %4820, %v4691
        %v4822 = vpop.permute.xlu0 %4821
        %4825 = vset.pattern.permute.xlu0 0
        %4826 = vperm.xlu0 %4825, %v4692
        %v4827 = vpop.permute.xlu0 %4826
        %4830 = vset.pattern.permute.xlu0 0
        %4831 = vperm.xlu0 %4830, %v4693
        %v4832 = vpop.permute.xlu0 %4831
        %v4834 = vmul.f32 %v4804, %v4812
        %v4835 = vmul.f32 %v4805, %v4817
        %v4836 = vmul.f32 %v4806, %v4822
        %v4837 = vmul.f32 %v4807, %v4827
        %v4838 = vmul.f32 %v4808, %v4832
        %4839 = vst.msk [vmem:[#allocation9] sm:$0xff] %vm2769, %v4834
        %4840 = vst.msk [vmem:[#allocation9 + $0x8] sm:$0xff] %vm2769, %v4835
        %4841 = vst.msk [vmem:[#allocation9 + $0x10] sm:$0xff] %vm2769, %v4836
        %4842 = vst.msk [vmem:[#allocation9 + $0x18] sm:$0xff] %vm2769, %v4837
        %4843 = vst.msk [vmem:[#allocation9 + $0x20] sm:$0xf] %vm2782, %v4838
        %v4844 = vld [vmem:[%s2 + $0x308] sm:$0xff]
        %v4845 = vld [vmem:[%s2 + $0x310] sm:$0x1]
        %v4846 = vld [vmem:[%s2 + $0x318] sm:$0x1]
        %v4847 = vld [vmem:[#allocation9 + $0x17] sm:$0xff]
        %v4848 = vld [vmem:[#allocation9 + $0x1f] sm:$0x1]
        %v4849 = vlaneseq
        %v4850 = vshrl.u32 %v4849, 7
        %v4851 = vsub.s32 0, %v4850
        %v4852 = vrot.slane %v4844, %v4851
        %v4853 = vmul.f32 %v4847, %v4852
        %v4854 = vmul.f32 %v4848, %v4852
        %v4855 = vld [vmem:[#allocation9 + $0xf] sm:$0xff]
        %v4856 = vld [vmem:[#allocation9 + $0x17] sm:$0x1]
        %v4857 = vlaneseq
        %v4858 = vshrl.u32 %v4857, 7
        %v4859 = vsub.s32 1, %v4858
        %v4860 = vrot.slane %v4844, %v4859
        %v4861 = vmul.f32 %v4855, %v4860
        %v4862 = vmul.f32 %v4856, %v4860
        %v4863 = vadd.f32 %v4853, %v4861
        %v4864 = vadd.f32 %v4854, %v4862
        %v4865 = vld [vmem:[#allocation9 + $0x18] sm:$0xff]
        %v4866 = vld [vmem:[#allocation9 + $0x20] sm:$0x1]
        %v4867 = vlaneseq
        %v4868 = vshrl.u32 %v4867, 7
        %v4869 = vsub.s32 2, %v4868
        %v4870 = vrot.slane %v4844, %v4869
        %v4871 = vmul.f32 %v4865, %v4870
        %v4872 = vmul.f32 %v4866, %v4870
        %v4873 = vadd.f32 %v4863, %v4871
        %v4874 = vadd.f32 %v4864, %v4872
        %v4875 = vld [vmem:[#allocation9 + $0x8] sm:$0xff]
        %v4876 = vld [vmem:[#allocation9 + $0x10] sm:$0x1]
        %v4877 = vlaneseq
        %v4878 = vshrl.u32 %v4877, 7
        %v4879 = vsub.s32 3, %v4878
        %v4880 = vrot.slane %v4844, %v4879
        %v4881 = vmul.f32 %v4875, %v4880
        %v4882 = vmul.f32 %v4876, %v4880
        %v4883 = vadd.f32 %v4873, %v4881
        %v4884 = vadd.f32 %v4874, %v4882
        %v4885 = vld [vmem:[#allocation9] sm:$0xff]
        %v4886 = vld [vmem:[#allocation9 + $0x8] sm:$0x1]
        %v4887 = vlaneseq
        %v4888 = vshrl.u32 %v4887, 7
        %v4889 = vsub.s32 4, %v4888
        %v4890 = vrot.slane %v4844, %v4889
        %v4891 = vmul.f32 %v4885, %v4890
        %v4892 = vmul.f32 %v4886, %v4890
        %v4893 = vadd.f32 %v4883, %v4891
        %v4894 = vadd.f32 %v4884, %v4892
        %v4895 = vld [vmem:[#allocation9 + $0x9] sm:$0xff]
        %v4896 = vld [vmem:[#allocation9 + $0x11] sm:$0x1]
        %v4897 = vlaneseq
        %v4898 = vshrl.u32 %v4897, 7
        %v4899 = vsub.s32 5, %v4898
        %v4900 = vrot.slane %v4844, %v4899
        %v4901 = vmul.f32 %v4895, %v4900
        %v4902 = vmul.f32 %v4896, %v4900
        %v4903 = vadd.f32 %v4893, %v4901
        %v4904 = vadd.f32 %v4894, %v4902
        %v4905 = vld [vmem:[#allocation9 + $0x1a] sm:$0xff]
        %v4906 = vld [vmem:[#allocation9 + $0x22] sm:$0x1]
        %v4907 = vlaneseq
        %v4908 = vshrl.u32 %v4907, 7
        %v4909 = vsub.s32 6, %v4908
        %v4910 = vrot.slane %v4844, %v4909
        %v4911 = vmul.f32 %v4905, %v4910
        %v4912 = vmul.f32 %v4906, %v4910
        %v4913 = vadd.f32 %v4903, %v4911
        %v4914 = vadd.f32 %v4904, %v4912
        %v4915 = vld [vmem:[#allocation9 + $0x12] sm:$0xff]
        %v4916 = vld [vmem:[#allocation9 + $0x1a] sm:$0x1]
        %v4917 = vlaneseq
        %v4918 = vshrl.u32 %v4917, 7
        %v4919 = vsub.s32 7, %v4918
        %v4920 = vrot.slane %v4844, %v4919
        %v4921 = vmul.f32 %v4915, %v4920
        %v4922 = vmul.f32 %v4916, %v4920
        %v4923 = vadd.f32 %v4913, %v4921
        %v4924 = vadd.f32 %v4914, %v4922
        %v4925 = vld [vmem:[#allocation9 + $0x1b] sm:$0xff]
        %v4926 = vld [vmem:[#allocation9 + $0x23] sm:$0x1]
        %v4927 = vlaneseq
        %v4928 = vshrl.u32 %v4927, 7
        %v4929 = vsub.s32 0, %v4928
        %v4930 = vrot.slane %v4845, %v4929
        %v4931 = vmul.f32 %v4925, %v4930
        %v4932 = vmul.f32 %v4926, %v4930
        %v4933 = vadd.f32 %v4923, %v4931
        %v4934 = vadd.f32 %v4924, %v4932
        %v4935 = vmul.f32 %v4855, %v4852
        %v4936 = vmul.f32 %v4856, %v4852
        %v4937 = vmul.f32 %v4865, %v4860
        %v4938 = vmul.f32 %v4866, %v4860
        %v4939 = vadd.f32 %v4935, %v4937
        %v4940 = vadd.f32 %v4936, %v4938
        %v4941 = vld [vmem:[#allocation9 + $0x10] sm:$0xff]
        %v4942 = vld [vmem:[#allocation9 + $0x18] sm:$0x1]
        %v4943 = vmul.f32 %v4941, %v4870
        %v4944 = vmul.f32 %v4942, %v4870
        %v4945 = vadd.f32 %v4939, %v4943
        %v4946 = vadd.f32 %v4940, %v4944
        %v4947 = vmul.f32 %v4885, %v4880
        %v4948 = vmul.f32 %v4886, %v4880
        %v4949 = vadd.f32 %v4945, %v4947
        %v4950 = vadd.f32 %v4946, %v4948
        %v4951 = vmul.f32 %v4895, %v4890
        %v4952 = vmul.f32 %v4896, %v4890
        %v4953 = vadd.f32 %v4949, %v4951
        %v4954 = vadd.f32 %v4950, %v4952
        %v4955 = vld [vmem:[#allocation9 + $0x1] sm:$0xff]
        %v4956 = vld [vmem:[#allocation9 + $0x9] sm:$0x1]
        %v4957 = vmul.f32 %v4955, %v4900
        %v4958 = vmul.f32 %v4956, %v4900
        %v4959 = vadd.f32 %v4953, %v4957
        %v4960 = vadd.f32 %v4954, %v4958
        %v4961 = vmul.f32 %v4915, %v4910
        %v4962 = vmul.f32 %v4916, %v4910
        %v4963 = vadd.f32 %v4959, %v4961
        %v4964 = vadd.f32 %v4960, %v4962
        %v4965 = vmul.f32 %v4925, %v4920
        %v4966 = vmul.f32 %v4926, %v4920
        %v4967 = vadd.f32 %v4963, %v4965
        %v4968 = vadd.f32 %v4964, %v4966
        %v4969 = vld [vmem:[#allocation9 + $0x13] sm:$0xff]
        %v4970 = vld [vmem:[#allocation9 + $0x1b] sm:$0x1]
        %v4971 = vmul.f32 %v4969, %v4930
        %v4972 = vmul.f32 %v4970, %v4930
        %v4973 = vadd.f32 %v4967, %v4971
        %v4974 = vadd.f32 %v4968, %v4972
        %v4975 = vmul.f32 %v4875, %v4852
        %v4976 = vmul.f32 %v4876, %v4852
        %v4977 = vmul.f32 %v4885, %v4860
        %v4978 = vmul.f32 %v4886, %v4860
        %v4979 = vadd.f32 %v4975, %v4977
        %v4980 = vadd.f32 %v4976, %v4978
        %v4981 = vmul.f32 %v4895, %v4870
        %v4982 = vmul.f32 %v4896, %v4870
        %v4983 = vadd.f32 %v4979, %v4981
        %v4984 = vadd.f32 %v4980, %v4982
        %v4985 = vmul.f32 %v4905, %v4880
        %v4986 = vmul.f32 %v4906, %v4880
        %v4987 = vadd.f32 %v4983, %v4985
        %v4988 = vadd.f32 %v4984, %v4986
        %v4989 = vmul.f32 %v4915, %v4890
        %v4990 = vmul.f32 %v4916, %v4890
        %v4991 = vadd.f32 %v4987, %v4989
        %v4992 = vadd.f32 %v4988, %v4990
        %v4993 = vmul.f32 %v4925, %v4900
        %v4994 = vmul.f32 %v4926, %v4900
        %v4995 = vadd.f32 %v4991, %v4993
        %v4996 = vadd.f32 %v4992, %v4994
        %v4997 = vld [vmem:[#allocation9 + $0xb] sm:$0xff]
        %v4998 = vld [vmem:[#allocation9 + $0x13] sm:$0x1]
        %v4999 = vmul.f32 %v4997, %v4910
        %v5000 = vmul.f32 %v4998, %v4910
        %v5001 = vadd.f32 %v4995, %v4999
        %v5002 = vadd.f32 %v4996, %v5000
        %v5003 = vld [vmem:[#allocation9 + $0x3] sm:$0xff]
        %v5004 = vld [vmem:[#allocation9 + $0xb] sm:$0x1]
        %v5005 = vmul.f32 %v5003, %v4920
        %v5006 = vmul.f32 %v5004, %v4920
        %v5007 = vadd.f32 %v5001, %v5005
        %v5008 = vadd.f32 %v5002, %v5006
        %v5009 = vld [vmem:[#allocation9 + $0xc] sm:$0xff]
        %v5010 = vld [vmem:[#allocation9 + $0x14] sm:$0x1]
        %v5011 = vmul.f32 %v5009, %v4930
        %v5012 = vmul.f32 %v5010, %v4930
        %v5013 = vadd.f32 %v5007, %v5011
        %v5014 = vadd.f32 %v5008, %v5012
        %v5015 = vmul.f32 %v4885, %v4852
        %v5016 = vmul.f32 %v4886, %v4852
        %v5017 = vmul.f32 %v4895, %v4860
        %v5018 = vmul.f32 %v4896, %v4860
        %v5019 = vadd.f32 %v5015, %v5017
        %v5020 = vadd.f32 %v5016, %v5018
        %v5021 = vmul.f32 %v4955, %v4870
        %v5022 = vmul.f32 %v4956, %v4870
        %v5023 = vadd.f32 %v5019, %v5021
        %v5024 = vadd.f32 %v5020, %v5022
        %v5025 = vmul.f32 %v4915, %v4880
        %v5026 = vmul.f32 %v4916, %v4880
        %v5027 = vadd.f32 %v5023, %v5025
        %v5028 = vadd.f32 %v5024, %v5026
        %v5029 = vmul.f32 %v4925, %v4890
        %v5030 = vmul.f32 %v4926, %v4890
        %v5031 = vadd.f32 %v5027, %v5029
        %v5032 = vadd.f32 %v5028, %v5030
        %v5033 = vmul.f32 %v4969, %v4900
        %v5034 = vmul.f32 %v4970, %v4900
        %v5035 = vadd.f32 %v5031, %v5033
        %v5036 = vadd.f32 %v5032, %v5034
        %v5037 = vmul.f32 %v5003, %v4910
        %v5038 = vmul.f32 %v5004, %v4910
        %v5039 = vadd.f32 %v5035, %v5037
        %v5040 = vadd.f32 %v5036, %v5038
        %v5041 = vmul.f32 %v5009, %v4920
        %v5042 = vmul.f32 %v5010, %v4920
        %v5043 = vadd.f32 %v5039, %v5041
        %v5044 = vadd.f32 %v5040, %v5042
        %v5045 = vld [vmem:[#allocation9 + $0x4] sm:$0xff]
        %v5046 = vld [vmem:[#allocation9 + $0xc] sm:$0x1]
        %v5047 = vmul.f32 %v5045, %v4930
        %v5048 = vmul.f32 %v5046, %v4930
        %v5049 = vadd.f32 %v5043, %v5047
        %v5050 = vadd.f32 %v5044, %v5048
        %v5053 = vrot.slane %v4973, 7
        %v5054 = vrot.slane %v4974, 7
        %v5055 = vsel %vm2635, %v5053, %v5054
        %v5060 = vrot.slane %v5013, 6
        %v5061 = vrot.slane %v5014, 6
        %v5062 = vsel %vm3443, %v5060, %v5061
        %v5067 = vrot.slane %v5049, 5
        %v5068 = vrot.slane %v5050, 5
        %v5069 = vsel %vm3459, %v5067, %v5068
        %v5072 = vsel %vm2635, %v4934, %v5053
        %v5073 = vsel %vm3443, %v5055, %v5060
        %v5074 = vsel %vm3459, %v5062, %v5067
        %v5075 = vlaneseq
        %v5076 = vshrl.u32 %v5075, 7
        %v5077 = vsub.s32 0, %v5076
        %v5078 = vrot.slane %v4846, %v5077
        %v5079 = vadd.f32 %v4933, %v5078
        %v5080 = vadd.f32 %v5072, %v5078
        %v5081 = vadd.f32 %v5073, %v5078
        %v5082 = vadd.f32 %v5074, %v5078
        %v5083 = vadd.f32 %v5069, %v5078
        %v5084 = vld [vmem:[%s2 + $0x320] sm:$0xff]
        %v5085 = vld [vmem:[%s2 + $0x328] sm:$0xff]
        %v5086 = vld [vmem:[%s2 + $0x330] sm:$0xff]
        %v5087 = vld [vmem:[%s2 + $0x338] sm:$0xff]
        %v5088 = vpack.c.bf16 %v5080, %v5079
        %v5089 = vpack.c.bf16 %v5082, %v5081
        %v5090 = vpack.c.bf16 %v5083, %v5083
        %v5091 = vld [vmem:[%s1 + $0x90] sm:$0xf]
        %v5092 = vld [vmem:[%s1 + $0x94] sm:$0xf]
        %v5093 = vld [vmem:[%s1 + $0x98] sm:$0xf]
        %v5094 = vld [vmem:[%s1 + $0x9c] sm:$0xf]
        %v5099 = vunpack.c.l.b16 %v5091
        %v5100 = vunpack.c.l.b16 %v5092
        %v5101 = vunpack.c.l.b16 %v5093
        %v5102 = vunpack.c.l.b16 %v5094
        %v5103 = vpack.c.b16 %v5100, %v5099
        %v5104 = vpack.c.b16 %v5102, %v5101
        %v5108 = vsel %vm2769, %v5088, 0
        %v5111 = vsel %vm2769, %v5089, 0
        %v5114 = vsel %vm2769, %v5090, 0
        %5116 = vmatprep.subr.bf16.mxu0 0
        %5117 = vmatpush1.bf16.msra.mxu0 %v5103
        %5118 = vmatprep.subr.bf16.mxu0 0
        %5119 = vmatpush1.bf16.msra.mxu0 %v5104
        %5120 = vmatprep.subr.bf16.mxu0 0
        %5121 = vmatpush1.bf16.msra.mxu0 0
        %5122 = vmatprep.subr.bf16.mxu0 0
        %5123 = vmatpush1.bf16.msra.mxu0 0
        %5124 = vmatprep.subr.bf16.mxu0 0
        %5125 = vmatpush1.bf16.msra.mxu0 0
        %5126 = vmatprep.subr.bf16.mxu0 0
        %5127 = vmatpush1.bf16.msra.mxu0 0
        %5128 = vmatprep.subr.bf16.mxu0 0
        %5129 = vmatpush1.bf16.msra.mxu0 0
        %5130 = vmatprep.subr.bf16.mxu0 0
        %5131 = vmatpush1.bf16.msra.mxu0 0
        %5132 = vmatprep.subr.bf16.mxu0 0
        %5133 = vmatpush1.bf16.msra.mxu0 0
        %5134 = vmatprep.subr.bf16.mxu0 0
        %5135 = vmatpush1.bf16.msra.mxu0 0
        %5136 = vmatprep.subr.bf16.mxu0 0
        %5137 = vmatpush1.bf16.msra.mxu0 0
        %5138 = vmatprep.subr.bf16.mxu0 0
        %5139 = vmatpush1.bf16.msra.mxu0 0
        %5140 = vmatprep.subr.bf16.mxu0 0
        %5141 = vmatpush1.bf16.msra.mxu0 0
        %5142 = vmatprep.subr.bf16.mxu0 0
        %5143 = vmatpush1.bf16.msra.mxu0 0
        %5144 = vmatprep.subr.bf16.mxu0 0
        %5145 = vmatpush1.bf16.msra.mxu0 0
        %5146 = vmatprep.subr.bf16.mxu0 0
        %5147 = vmatpush1.bf16.msra.mxu0 0
        %5148 = vmatprep.mubr.bf16.mxu0 0
        %5149 = vmatmul.mubr.bf16.gmra.mrb[0].mxu0 %v5108
        %v5150 = vpop.f32.mrb[0].mxu0
        %v5151 = vadd.f32 0.0, %v5150
        %v5152 = vpop.f32.mrb[0].mxu0
        %v5153 = vpop.f32.mrb[0].mxu0
        %v5154 = vadd.f32 0.0, %v5153
        %v5155 = vpop.f32.mrb[0].mxu0
        %5156 = vmatprep.mubr.bf16.mxu0 0
        %5157 = vmatmul.mubr.bf16.gmra.mrb[0].mxu0 %v5111
        %v5158 = vpop.f32.mrb[0].mxu0
        %v5159 = vadd.f32 0.0, %v5158
        %v5160 = vpop.f32.mrb[0].mxu0
        %v5161 = vpop.f32.mrb[0].mxu0
        %v5162 = vadd.f32 0.0, %v5161
        %v5163 = vpop.f32.mrb[0].mxu0
        %5164 = vmatprep.mubr.bf16.mxu0 0
        %5165 = vmatmul.mubr.bf16.gmra.mrb[0].mxu0 %v5114
        %v5166 = vpop.f32.mrb[0].mxu0
        %v5167 = vadd.f32 0.0, %v5166
        %v5168 = vpop.f32.mrb[0].mxu0
        %v5169 = vpop.f32.mrb[0].mxu0
        %v5170 = vpop.f32.mrb[0].mxu0
        %5171 = vdwg.mxu0
        %v5173 = vsel %vm2769, %v4694, 0
        %v5176 = vsel %vm2769, %v4695, 0
        %v5179 = vsel %vm2769, %v4696, 0
        %v5182 = vsel %vm2769, %v4697, 0
        %v5185 = vsel %vm2769, %v4698, 0
        %5187 = vmatprep.subr.mxu0 0.0
        %5188 = vmatpush1.msra.mxu0 %v5084
        %5189 = vmatprep.subr.mxu0 0.0
        %5190 = vmatpush1.msra.mxu0 %v5085
        %5191 = vmatprep.subr.mxu0 0.0
        %5192 = vmatpush1.msra.mxu0 %v5086
        %5193 = vmatprep.subr.mxu0 0.0
        %5194 = vmatpush1.msra.mxu0 %v5087
        %5195 = vmatprep.subr.mxu0 0.0
        %5196 = vmatpush1.msra.mxu0 0.0
        %5197 = vmatprep.subr.mxu0 0.0
        %5198 = vmatpush1.msra.mxu0 0.0
        %5199 = vmatprep.subr.mxu0 0.0
        %5200 = vmatpush1.msra.mxu0 0.0
        %5201 = vmatprep.subr.mxu0 0.0
        %5202 = vmatpush1.msra.mxu0 0.0
        %5203 = vmatprep.subr.mxu0 0.0
        %5204 = vmatpush1.msra.mxu0 0.0
        %5205 = vmatprep.subr.mxu0 0.0
        %5206 = vmatpush1.msra.mxu0 0.0
        %5207 = vmatprep.subr.mxu0 0.0
        %5208 = vmatpush1.msra.mxu0 0.0
        %5209 = vmatprep.subr.mxu0 0.0
        %5210 = vmatpush1.msra.mxu0 0.0
        %5211 = vmatprep.subr.mxu0 0.0
        %5212 = vmatpush1.msra.mxu0 0.0
        %5213 = vmatprep.subr.mxu0 0.0
        %5214 = vmatpush1.msra.mxu0 0.0
        %5215 = vmatprep.subr.mxu0 0.0
        %5216 = vmatpush1.msra.mxu0 0.0
        %5217 = vmatprep.subr.mxu0 0.0
        %5218 = vmatpush1.msra.mxu0 0.0
        %5219 = vmatprep.subr.mxu0 0.0
        %5220 = vmatpush1.msra.mxu0 0.0
        %5221 = vmatprep.subr.mxu0 0.0
        %5222 = vmatpush1.msra.mxu0 0.0
        %5223 = vmatprep.subr.mxu0 0.0
        %5224 = vmatpush1.msra.mxu0 0.0
        %5225 = vmatprep.subr.mxu0 0.0
        %5226 = vmatpush1.msra.mxu0 0.0
        %5227 = vmatprep.subr.mxu0 0.0
        %5228 = vmatpush1.msra.mxu0 0.0
        %5229 = vmatprep.subr.mxu0 0.0
        %5230 = vmatpush1.msra.mxu0 0.0
        %5231 = vmatprep.subr.mxu0 0.0
        %5232 = vmatpush1.msra.mxu0 0.0
        %5233 = vmatprep.subr.mxu0 0.0
        %5234 = vmatpush1.msra.mxu0 0.0
        %5235 = vmatprep.subr.mxu0 0.0
        %5236 = vmatpush1.msra.mxu0 0.0
        %5237 = vmatprep.subr.mxu0 0.0
        %5238 = vmatpush1.msra.mxu0 0.0
        %5239 = vmatprep.subr.mxu0 0.0
        %5240 = vmatpush1.msra.mxu0 0.0
        %5241 = vmatprep.subr.mxu0 0.0
        %5242 = vmatpush1.msra.mxu0 0.0
        %5243 = vmatprep.subr.mxu0 0.0
        %5244 = vmatpush1.msra.mxu0 0.0
        %5245 = vmatprep.subr.mxu0 0.0
        %5246 = vmatpush1.msra.mxu0 0.0
        %5247 = vmatprep.subr.mxu0 0.0
        %5248 = vmatpush1.msra.mxu0 0.0
        %5249 = vmatprep.subr.mxu0 0.0
        %5250 = vmatpush1.msra.mxu0 0.0
        %5251 = vmatprep.mubr.f32.mxu0 0.0
        %5252 = vmatmul.mubr.f32.gmra.mrb[0].mxu0 %v5173
        %v5253 = vpop.f32.mrb[0].mxu0
        %v5254 = vadd.f32 %v5151, %v5253
        %v5255 = vpop.f32.mrb[0].mxu0
        %5256 = vmatprep.mubr.f32.mxu0 0.0
        %5257 = vmatmul.mubr.f32.gmra.mrb[0].mxu0 %v5176
        %v5258 = vpop.f32.mrb[0].mxu0
        %v5259 = vadd.f32 %v5154, %v5258
        %v5260 = vpop.f32.mrb[0].mxu0
        %5261 = vmatprep.mubr.f32.mxu0 0.0
        %5262 = vmatmul.mubr.f32.gmra.mrb[0].mxu0 %v5179
        %v5263 = vpop.f32.mrb[0].mxu0
        %v5264 = vadd.f32 %v5159, %v5263
        %v5265 = vpop.f32.mrb[0].mxu0
        %5266 = vmatprep.mubr.f32.mxu0 0.0
        %5267 = vmatmul.mubr.f32.gmra.mrb[0].mxu0 %v5182
        %v5268 = vpop.f32.mrb[0].mxu0
        %v5269 = vadd.f32 %v5162, %v5268
        %v5270 = vpop.f32.mrb[0].mxu0
        %5271 = vmatprep.mubr.f32.mxu0 0.0
        %5272 = vmatmul.mubr.f32.gmra.mrb[0].mxu0 %v5185
        %v5273 = vpop.f32.mrb[0].mxu0
        %v5274 = vadd.f32 %v5167, %v5273
        %v5275 = vpop.f32.mrb[0].mxu0
        %5276 = vdwg.mxu0
        %v5277 = vld [vmem:[%s2 + $0x340] sm:$0x1]
        %v5278 = vlaneseq
        %v5279 = vshrl.u32 %v5278, 7
        %v5280 = vsub.s32 0, %v5279
        %v5281 = vrot.slane %v5277, %v5280
        %v5282 = vadd.f32 %v5254, %v5281
        %v5283 = vadd.f32 %v5259, %v5281
        %v5284 = vadd.f32 %v5264, %v5281
        %v5285 = vadd.f32 %v5269, %v5281
        %v5286 = vadd.f32 %v5274, %v5281
        %v5287 = vmax.f32 %v5282, 0.0
        %v5288 = vmax.f32 %v5283, 0.0
        %v5289 = vmax.f32 %v5284, 0.0
        %v5290 = vmax.f32 %v5285, 0.0
        %v5291 = vmax.f32 %v5286, 0.0
        %v5292 = vmul.f32 %v5287, %v4812
        %v5293 = vmul.f32 %v5288, %v4817
        %v5294 = vmul.f32 %v5289, %v4822
        %v5295 = vmul.f32 %v5290, %v4827
        %v5296 = vmul.f32 %v5291, %v4832
        %5297 = vst.msk [vmem:[#allocation10] sm:$0xff] %vm4682, %v5292
        %5298 = vst.msk [vmem:[#allocation10 + $0x8] sm:$0xff] %vm4682, %v5293
        %5299 = vst.msk [vmem:[#allocation10 + $0x10] sm:$0xff] %vm4682, %v5294
        %5300 = vst.msk [vmem:[#allocation10 + $0x18] sm:$0xff] %vm4682, %v5295
        %5301 = vst.msk [vmem:[#allocation10 + $0x20] sm:$0xf] %vm4687, %v5296
        %v5302 = vld [vmem:[%s2 + $0x348] sm:$0xff]
        %v5303 = vld [vmem:[%s2 + $0x350] sm:$0xff]
        %v5304 = vld [vmem:[%s2 + $0x358] sm:$0xff]
        %v5305 = vld [vmem:[%s2 + $0x360] sm:$0xff]
        %v5306 = vld [vmem:[%s2 + $0x368] sm:$0xf]
        %v5307 = vld [vmem:[#allocation10] sm:$0xff]
        %v5308 = vld [vmem:[#allocation10 + $0x8] sm:$0xff]
        %v5309 = vld [vmem:[#allocation10 + $0x10] sm:$0xff]
        %v5310 = vld [vmem:[#allocation10 + $0x18] sm:$0xff]
        %v5311 = vld [vmem:[#allocation10 + $0x20] sm:$0xf]
        %v5312 = vpack.c.bf16 %v5308, %v5307
        %v5313 = vpack.c.bf16 %v5310, %v5309
        %v5314 = vpack.c.bf16 %v5311, %v5311
        %v5315 = vld [vmem:[%s2 + $0x370] sm:$0xff]
        %v5316 = vld [vmem:[%s2 + $0x378] sm:$0x1]
        %v5317 = vld [vmem:[%s2 + $0x380] sm:$0x1]
        %v5318 = vld [vmem:[#allocation10 + $0x8] sm:$0x1]
        %v5319 = vlaneseq
        %v5320 = vshrl.u32 %v5319, 7
        %v5321 = vsub.s32 0, %v5320
        %v5322 = vrot.slane %v5315, %v5321
        %v5323 = vmul.f32 %v5307, %v5322
        %v5324 = vmul.f32 %v5318, %v5322
        %v5325 = vld [vmem:[#allocation10 + $0x9] sm:$0xff]
        %v5326 = vld [vmem:[#allocation10 + $0x11] sm:$0x1]
        %v5327 = vlaneseq
        %v5328 = vshrl.u32 %v5327, 7
        %v5329 = vsub.s32 1, %v5328
        %v5330 = vrot.slane %v5315, %v5329
        %v5331 = vmul.f32 %v5325, %v5330
        %v5332 = vmul.f32 %v5326, %v5330
        %v5333 = vadd.f32 %v5323, %v5331
        %v5334 = vadd.f32 %v5324, %v5332
        %v5335 = vld [vmem:[#allocation10 + $0x1] sm:$0xff]
        %v5336 = vld [vmem:[#allocation10 + $0x9] sm:$0x1]
        %v5337 = vlaneseq
        %v5338 = vshrl.u32 %v5337, 7
        %v5339 = vsub.s32 2, %v5338
        %v5340 = vrot.slane %v5315, %v5339
        %v5341 = vmul.f32 %v5335, %v5340
        %v5342 = vmul.f32 %v5336, %v5340
        %v5343 = vadd.f32 %v5333, %v5341
        %v5344 = vadd.f32 %v5334, %v5342
        %v5345 = vld [vmem:[#allocation10 + $0x12] sm:$0xff]
        %v5346 = vld [vmem:[#allocation10 + $0x1a] sm:$0x1]
        %v5347 = vlaneseq
        %v5348 = vshrl.u32 %v5347, 7
        %v5349 = vsub.s32 3, %v5348
        %v5350 = vrot.slane %v5315, %v5349
        %v5351 = vmul.f32 %v5345, %v5350
        %v5352 = vmul.f32 %v5346, %v5350
        %v5353 = vadd.f32 %v5343, %v5351
        %v5354 = vadd.f32 %v5344, %v5352
        %v5355 = vld [vmem:[#allocation10 + $0x1b] sm:$0xff]
        %v5356 = vld [vmem:[#allocation10 + $0x23] sm:$0x1]
        %v5357 = vlaneseq
        %v5358 = vshrl.u32 %v5357, 7
        %v5359 = vsub.s32 4, %v5358
        %v5360 = vrot.slane %v5315, %v5359
        %v5361 = vmul.f32 %v5355, %v5360
        %v5362 = vmul.f32 %v5356, %v5360
        %v5363 = vadd.f32 %v5353, %v5361
        %v5364 = vadd.f32 %v5354, %v5362
        %v5365 = vld [vmem:[#allocation10 + $0x13] sm:$0xff]
        %v5366 = vld [vmem:[#allocation10 + $0x1b] sm:$0x1]
        %v5367 = vlaneseq
        %v5368 = vshrl.u32 %v5367, 7
        %v5369 = vsub.s32 5, %v5368
        %v5370 = vrot.slane %v5315, %v5369
        %v5371 = vmul.f32 %v5365, %v5370
        %v5372 = vmul.f32 %v5366, %v5370
        %v5373 = vadd.f32 %v5363, %v5371
        %v5374 = vadd.f32 %v5364, %v5372
        %v5375 = vld [vmem:[#allocation10 + $0x3] sm:$0xff]
        %v5376 = vld [vmem:[#allocation10 + $0xb] sm:$0x1]
        %v5377 = vlaneseq
        %v5378 = vshrl.u32 %v5377, 7
        %v5379 = vsub.s32 6, %v5378
        %v5380 = vrot.slane %v5315, %v5379
        %v5381 = vmul.f32 %v5375, %v5380
        %v5382 = vmul.f32 %v5376, %v5380
        %v5383 = vadd.f32 %v5373, %v5381
        %v5384 = vadd.f32 %v5374, %v5382
        %v5385 = vld [vmem:[#allocation10 + $0xc] sm:$0xff]
        %v5386 = vld [vmem:[#allocation10 + $0x14] sm:$0x1]
        %v5387 = vlaneseq
        %v5388 = vshrl.u32 %v5387, 7
        %v5389 = vsub.s32 7, %v5388
        %v5390 = vrot.slane %v5315, %v5389
        %v5391 = vmul.f32 %v5385, %v5390
        %v5392 = vmul.f32 %v5386, %v5390
        %v5393 = vadd.f32 %v5383, %v5391
        %v5394 = vadd.f32 %v5384, %v5392
        %v5395 = vld [vmem:[#allocation10 + $0x4] sm:$0xff]
        %v5396 = vld [vmem:[#allocation10 + $0xc] sm:$0x1]
        %v5397 = vlaneseq
        %v5398 = vshrl.u32 %v5397, 7
        %v5399 = vsub.s32 0, %v5398
        %v5400 = vrot.slane %v5316, %v5399
        %v5401 = vmul.f32 %v5395, %v5400
        %v5402 = vmul.f32 %v5396, %v5400
        %v5403 = vadd.f32 %v5393, %v5401
        %v5404 = vadd.f32 %v5394, %v5402
        %v5405 = vlaneseq
        %v5406 = vshrl.u32 %v5405, 7
        %v5407 = vsub.s32 0, %v5406
        %v5408 = vrot.slane %v5317, %v5407
        %v5409 = vadd.f32 %v5403, %v5408
        %v5410 = vadd.f32 %v5404, %v5408
        %v5411 = vld [vmem:[%s1 + $0xc0] sm:$0xf]
        %v5412 = vld [vmem:[%s1 + $0xc4] sm:$0xf]
        %v5413 = vld [vmem:[%s1 + $0xc8] sm:$0xf]
        %v5414 = vld [vmem:[%s1 + $0xcc] sm:$0xf]
        %v5415 = vld [vmem:[%s1 + $0xd0] sm:$0xf]
        %v5416 = vld [vmem:[%s1 + $0xd4] sm:$0xf]
        %v5417 = vld [vmem:[%s1 + $0xd8] sm:$0xf]
        %v5418 = vld [vmem:[%s1 + $0xdc] sm:$0xf]
        %v5419 = vld [vmem:[%s2 + $0x388] sm:$0x1]
        %v5420 = vlaneseq
        %v5421 = vshrl.u32 %v5420, 7
        %v5422 = vsub.s32 0, %v5421
        %v5423 = vrot.slane %v5419, %v5422
        %v5432 = vunpack.c.l.b16 %v5411
        %v5433 = vunpack.c.l.b16 %v5412
        %v5434 = vunpack.c.l.b16 %v5413
        %v5435 = vunpack.c.l.b16 %v5414
        %v5436 = vunpack.c.l.b16 %v5415
        %v5437 = vunpack.c.l.b16 %v5416
        %v5438 = vunpack.c.l.b16 %v5417
        %v5439 = vunpack.c.l.b16 %v5418
        %v5440 = vpack.c.b16 %v5433, %v5432
        %v5441 = vpack.c.b16 %v5435, %v5434
        %v5442 = vpack.c.b16 %v5437, %v5436
        %v5443 = vpack.c.b16 %v5439, %v5438
        %v5449 = vsel %vm4682, %v5312, 0
        %v5452 = vsel %vm4682, %v5313, 0
        %v5455 = vsel %vm4682, %v5314, 0
        %5457 = vmatprep.subr.bf16.mxu0 0
        %5458 = vmatpush1.bf16.msra.mxu0 %v5440
        %5459 = vmatprep.subr.bf16.mxu0 0
        %5460 = vmatpush1.bf16.msra.mxu0 %v5441
        %5461 = vmatprep.subr.bf16.mxu0 0
        %5462 = vmatpush1.bf16.msra.mxu0 %v5442
        %5463 = vmatprep.subr.bf16.mxu0 0
        %5464 = vmatpush1.bf16.msra.mxu0 %v5443
        %5465 = vmatprep.subr.bf16.mxu0 0
        %5466 = vmatpush1.bf16.msra.mxu0 0
        %5467 = vmatprep.subr.bf16.mxu0 0
        %5468 = vmatpush1.bf16.msra.mxu0 0
        %5469 = vmatprep.subr.bf16.mxu0 0
        %5470 = vmatpush1.bf16.msra.mxu0 0
        %5471 = vmatprep.subr.bf16.mxu0 0
        %5472 = vmatpush1.bf16.msra.mxu0 0
        %5473 = vmatprep.subr.bf16.mxu0 0
        %5474 = vmatpush1.bf16.msra.mxu0 0
        %5475 = vmatprep.subr.bf16.mxu0 0
        %5476 = vmatpush1.bf16.msra.mxu0 0
        %5477 = vmatprep.subr.bf16.mxu0 0
        %5478 = vmatpush1.bf16.msra.mxu0 0
        %5479 = vmatprep.subr.bf16.mxu0 0
        %5480 = vmatpush1.bf16.msra.mxu0 0
        %5481 = vmatprep.subr.bf16.mxu0 0
        %5482 = vmatpush1.bf16.msra.mxu0 0
        %5483 = vmatprep.subr.bf16.mxu0 0
        %5484 = vmatpush1.bf16.msra.mxu0 0
        %5485 = vmatprep.subr.bf16.mxu0 0
        %5486 = vmatpush1.bf16.msra.mxu0 0
        %5487 = vmatprep.subr.bf16.mxu0 0
        %5488 = vmatpush1.bf16.msra.mxu0 0
        %5489 = vmatprep.mubr.bf16.mxu0 0
        %5490 = vmatmul.mubr.bf16.gmra.mrb[0].mxu0 %v5449
        %v5491 = vpop.f32.mrb[0].mxu0
        %v5492 = vadd.f32 %v5423, %v5491
        %v5493 = vpop.f32.mrb[0].mxu0
        %v5494 = vpop.f32.mrb[0].mxu0
        %v5495 = vadd.f32 %v5423, %v5494
        %v5496 = vpop.f32.mrb[0].mxu0
        %5497 = vmatprep.mubr.bf16.mxu0 0
        %5498 = vmatmul.mubr.bf16.gmra.mrb[0].mxu0 %v5452
        %v5499 = vpop.f32.mrb[0].mxu0
        %v5500 = vadd.f32 %v5423, %v5499
        %v5501 = vpop.f32.mrb[0].mxu0
        %v5502 = vpop.f32.mrb[0].mxu0
        %v5503 = vadd.f32 %v5423, %v5502
        %v5504 = vpop.f32.mrb[0].mxu0
        %5505 = vmatprep.mubr.bf16.mxu0 0
        %5506 = vmatmul.mubr.bf16.gmra.mrb[0].mxu0 %v5455
        %v5507 = vpop.f32.mrb[0].mxu0
        %v5508 = vadd.f32 %v5423, %v5507
        %v5509 = vpop.f32.mrb[0].mxu0
        %v5510 = vpop.f32.mrb[0].mxu0
        %v5511 = vpop.f32.mrb[0].mxu0
        %5512 = vdwg.mxu0
        %v5513 = vmax.f32 %v5492, 0.0
        %v5514 = vmax.f32 %v5495, 0.0
        %v5515 = vmax.f32 %v5500, 0.0
        %v5516 = vmax.f32 %v5503, 0.0
        %v5517 = vmax.f32 %v5508, 0.0
        %5519 = vset.pattern.permute.xlu0 0
        %5520 = vperm.xlu0 %5519, %v5302
        %v5521 = vpop.permute.xlu0 %5520
        %5524 = vset.pattern.permute.xlu0 0
        %5525 = vperm.xlu0 %5524, %v5303
        %v5526 = vpop.permute.xlu0 %5525
        %5529 = vset.pattern.permute.xlu0 0
        %5530 = vperm.xlu0 %5529, %v5304
        %v5531 = vpop.permute.xlu0 %5530
        %5534 = vset.pattern.permute.xlu0 0
        %5535 = vperm.xlu0 %5534, %v5305
        %v5536 = vpop.permute.xlu0 %5535
        %5539 = vset.pattern.permute.xlu0 0
        %5540 = vperm.xlu0 %5539, %v5306
        %v5541 = vpop.permute.xlu0 %5540
        %v5543 = vmul.f32 %v5513, %v5521
        %v5544 = vmul.f32 %v5514, %v5526
        %v5545 = vmul.f32 %v5515, %v5531
        %v5546 = vmul.f32 %v5516, %v5536
        %v5547 = vmul.f32 %v5517, %v5541
        %5548 = vst.msk [vmem:[#allocation11] sm:$0xff] %vm4682, %v5543
        %5549 = vst.msk [vmem:[#allocation11 + $0x8] sm:$0xff] %vm4682, %v5544
        %5550 = vst.msk [vmem:[#allocation11 + $0x10] sm:$0xff] %vm4682, %v5545
        %5551 = vst.msk [vmem:[#allocation11 + $0x18] sm:$0xff] %vm4682, %v5546
        %5552 = vst.msk [vmem:[#allocation11 + $0x20] sm:$0xf] %vm4687, %v5547
        %v5553 = vld [vmem:[%s2 + $0x390] sm:$0xff]
        %v5554 = vld [vmem:[%s2 + $0x398] sm:$0x1]
        %v5555 = vld [vmem:[%s2 + $0x3a0] sm:$0x1]
        %v5556 = vld [vmem:[#allocation11] sm:$0xff]
        %v5557 = vld [vmem:[#allocation11 + $0x8] sm:$0x1]
        %v5558 = vlaneseq
        %v5559 = vshrl.u32 %v5558, 7
        %v5560 = vsub.s32 0, %v5559
        %v5561 = vrot.slane %v5553, %v5560
        %v5562 = vmul.f32 %v5556, %v5561
        %v5563 = vmul.f32 %v5557, %v5561
        %v5564 = vld [vmem:[#allocation11 + $0x9] sm:$0xff]
        %v5565 = vld [vmem:[#allocation11 + $0x11] sm:$0x1]
        %v5566 = vlaneseq
        %v5567 = vshrl.u32 %v5566, 7
        %v5568 = vsub.s32 1, %v5567
        %v5569 = vrot.slane %v5553, %v5568
        %v5570 = vmul.f32 %v5564, %v5569
        %v5571 = vmul.f32 %v5565, %v5569
        %v5572 = vadd.f32 %v5562, %v5570
        %v5573 = vadd.f32 %v5563, %v5571
        %v5574 = vld [vmem:[#allocation11 + $0x1] sm:$0xff]
        %v5575 = vld [vmem:[#allocation11 + $0x9] sm:$0x1]
        %v5576 = vlaneseq
        %v5577 = vshrl.u32 %v5576, 7
        %v5578 = vsub.s32 2, %v5577
        %v5579 = vrot.slane %v5553, %v5578
        %v5580 = vmul.f32 %v5574, %v5579
        %v5581 = vmul.f32 %v5575, %v5579
        %v5582 = vadd.f32 %v5572, %v5580
        %v5583 = vadd.f32 %v5573, %v5581
        %v5584 = vld [vmem:[#allocation11 + $0x12] sm:$0xff]
        %v5585 = vld [vmem:[#allocation11 + $0x1a] sm:$0x1]
        %v5586 = vlaneseq
        %v5587 = vshrl.u32 %v5586, 7
        %v5588 = vsub.s32 3, %v5587
        %v5589 = vrot.slane %v5553, %v5588
        %v5590 = vmul.f32 %v5584, %v5589
        %v5591 = vmul.f32 %v5585, %v5589
        %v5592 = vadd.f32 %v5582, %v5590
        %v5593 = vadd.f32 %v5583, %v5591
        %v5594 = vld [vmem:[#allocation11 + $0x1b] sm:$0xff]
        %v5595 = vld [vmem:[#allocation11 + $0x23] sm:$0x1]
        %v5596 = vlaneseq
        %v5597 = vshrl.u32 %v5596, 7
        %v5598 = vsub.s32 4, %v5597
        %v5599 = vrot.slane %v5553, %v5598
        %v5600 = vmul.f32 %v5594, %v5599
        %v5601 = vmul.f32 %v5595, %v5599
        %v5602 = vadd.f32 %v5592, %v5600
        %v5603 = vadd.f32 %v5593, %v5601
        %v5604 = vld [vmem:[#allocation11 + $0x13] sm:$0xff]
        %v5605 = vld [vmem:[#allocation11 + $0x1b] sm:$0x1]
        %v5606 = vlaneseq
        %v5607 = vshrl.u32 %v5606, 7
        %v5608 = vsub.s32 5, %v5607
        %v5609 = vrot.slane %v5553, %v5608
        %v5610 = vmul.f32 %v5604, %v5609
        %v5611 = vmul.f32 %v5605, %v5609
        %v5612 = vadd.f32 %v5602, %v5610
        %v5613 = vadd.f32 %v5603, %v5611
        %v5614 = vld [vmem:[#allocation11 + $0x3] sm:$0xff]
        %v5615 = vld [vmem:[#allocation11 + $0xb] sm:$0x1]
        %v5616 = vlaneseq
        %v5617 = vshrl.u32 %v5616, 7
        %v5618 = vsub.s32 6, %v5617
        %v5619 = vrot.slane %v5553, %v5618
        %v5620 = vmul.f32 %v5614, %v5619
        %v5621 = vmul.f32 %v5615, %v5619
        %v5622 = vadd.f32 %v5612, %v5620
        %v5623 = vadd.f32 %v5613, %v5621
        %v5624 = vld [vmem:[#allocation11 + $0xc] sm:$0xff]
        %v5625 = vld [vmem:[#allocation11 + $0x14] sm:$0x1]
        %v5626 = vlaneseq
        %v5627 = vshrl.u32 %v5626, 7
        %v5628 = vsub.s32 7, %v5627
        %v5629 = vrot.slane %v5553, %v5628
        %v5630 = vmul.f32 %v5624, %v5629
        %v5631 = vmul.f32 %v5625, %v5629
        %v5632 = vadd.f32 %v5622, %v5630
        %v5633 = vadd.f32 %v5623, %v5631
        %v5634 = vld [vmem:[#allocation11 + $0x4] sm:$0xff]
        %v5635 = vld [vmem:[#allocation11 + $0xc] sm:$0x1]
        %v5636 = vlaneseq
        %v5637 = vshrl.u32 %v5636, 7
        %v5638 = vsub.s32 0, %v5637
        %v5639 = vrot.slane %v5554, %v5638
        %v5640 = vmul.f32 %v5634, %v5639
        %v5641 = vmul.f32 %v5635, %v5639
        %v5642 = vadd.f32 %v5632, %v5640
        %v5643 = vadd.f32 %v5633, %v5641
        %v5644 = vlaneseq
        %v5645 = vshrl.u32 %v5644, 7
        %v5646 = vsub.s32 0, %v5645
        %v5647 = vrot.slane %v5555, %v5646
        %v5648 = vadd.f32 %v5642, %v5647
        %v5649 = vadd.f32 %v5643, %v5647
        %v5650 = vpack.c.bf16 %v5410, %v5409
        %v5651 = vld [vmem:[%s1 + $0xa0] sm:$0xf]
        %v5652 = vld [vmem:[%s1 + $0xa4] sm:$0xf]
        %v5653 = vld [vmem:[%s1 + $0xa8] sm:$0xf]
        %v5654 = vld [vmem:[%s1 + $0xac] sm:$0xf]
        %v5655 = vld [vmem:[%s1 + $0xb0] sm:$0xf]
        %v5656 = vld [vmem:[%s1 + $0xb4] sm:$0xf]
        %v5657 = vld [vmem:[%s1 + $0xb8] sm:$0xf]
        %v5658 = vld [vmem:[%s1 + $0xbc] sm:$0xf]
        %v5659 = vpack.c.bf16 %v5649, %v5648
        %v5660 = vld [vmem:[%s1 + $0xe0] sm:$0xf]
        %v5661 = vld [vmem:[%s1 + $0xe4] sm:$0xf]
        %v5662 = vld [vmem:[%s1 + $0xe8] sm:$0xf]
        %v5663 = vld [vmem:[%s1 + $0xec] sm:$0xf]
        %v5664 = vld [vmem:[%s1 + $0xf0] sm:$0xf]
        %v5665 = vld [vmem:[%s1 + $0xf4] sm:$0xf]
        %v5666 = vld [vmem:[%s1 + $0xf8] sm:$0xf]
        %v5667 = vld [vmem:[%s1 + $0xfc] sm:$0xf]
        %v5676 = vunpack.c.l.b16 %v5660
        %v5677 = vunpack.c.l.b16 %v5661
        %v5678 = vunpack.c.l.b16 %v5662
        %v5679 = vunpack.c.l.b16 %v5663
        %v5680 = vunpack.c.l.b16 %v5664
        %v5681 = vunpack.c.l.b16 %v5665
        %v5682 = vunpack.c.l.b16 %v5666
        %v5683 = vunpack.c.l.b16 %v5667
        %v5684 = vpack.c.b16 %v5677, %v5676
        %v5685 = vpack.c.b16 %v5679, %v5678
        %v5686 = vpack.c.b16 %v5681, %v5680
        %v5687 = vpack.c.b16 %v5683, %v5682
        %v5693 = vsel %vm4682, %v5659, 0
        %5695 = vmatprep.subr.bf16.mxu0 0
        %5696 = vmatpush1.bf16.msra.mxu0 %v5684
        %5697 = vmatprep.subr.bf16.mxu0 0
        %5698 = vmatpush1.bf16.msra.mxu0 %v5685
        %5699 = vmatprep.subr.bf16.mxu0 0
        %5700 = vmatpush1.bf16.msra.mxu0 %v5686
        %5701 = vmatprep.subr.bf16.mxu0 0
        %5702 = vmatpush1.bf16.msra.mxu0 %v5687
        %5703 = vmatprep.subr.bf16.mxu0 0
        %5704 = vmatpush1.bf16.msra.mxu0 0
        %5705 = vmatprep.subr.bf16.mxu0 0
        %5706 = vmatpush1.bf16.msra.mxu0 0
        %5707 = vmatprep.subr.bf16.mxu0 0
        %5708 = vmatpush1.bf16.msra.mxu0 0
        %5709 = vmatprep.subr.bf16.mxu0 0
        %5710 = vmatpush1.bf16.msra.mxu0 0
        %5711 = vmatprep.subr.bf16.mxu0 0
        %5712 = vmatpush1.bf16.msra.mxu0 0
        %5713 = vmatprep.subr.bf16.mxu0 0
        %5714 = vmatpush1.bf16.msra.mxu0 0
        %5715 = vmatprep.subr.bf16.mxu0 0
        %5716 = vmatpush1.bf16.msra.mxu0 0
        %5717 = vmatprep.subr.bf16.mxu0 0
        %5718 = vmatpush1.bf16.msra.mxu0 0
        %5719 = vmatprep.subr.bf16.mxu0 0
        %5720 = vmatpush1.bf16.msra.mxu0 0
        %5721 = vmatprep.subr.bf16.mxu0 0
        %5722 = vmatpush1.bf16.msra.mxu0 0
        %5723 = vmatprep.subr.bf16.mxu0 0
        %5724 = vmatpush1.bf16.msra.mxu0 0
        %5725 = vmatprep.subr.bf16.mxu0 0
        %5726 = vmatpush1.bf16.msra.mxu0 0
        %5727 = vmatprep.mubr.bf16.mxu0 0
        %5728 = vmatmul.mubr.bf16.gmra.mrb[0].mxu0 %v5693
        %v5729 = vpop.f32.mrb[0].mxu0
        %v5730 = vadd.f32 0.0, %v5729
        %v5731 = vpop.f32.mrb[0].mxu0
        %v5732 = vpop.f32.mrb[0].mxu0
        %v5733 = vadd.f32 0.0, %v5732
        %v5734 = vpop.f32.mrb[0].mxu0
        %5735 = vdwg.mxu0
        %v5744 = vunpack.c.l.b16 %v5651
        %v5745 = vunpack.c.l.b16 %v5652
        %v5746 = vunpack.c.l.b16 %v5653
        %v5747 = vunpack.c.l.b16 %v5654
        %v5748 = vunpack.c.l.b16 %v5655
        %v5749 = vunpack.c.l.b16 %v5656
        %v5750 = vunpack.c.l.b16 %v5657
        %v5751 = vunpack.c.l.b16 %v5658
        %v5752 = vpack.c.b16 %v5745, %v5744
        %v5753 = vpack.c.b16 %v5747, %v5746
        %v5754 = vpack.c.b16 %v5749, %v5748
        %v5755 = vpack.c.b16 %v5751, %v5750
        %v5761 = vsel %vm4682, %v5650, 0
        %5763 = vmatprep.subr.bf16.mxu0 0
        %5764 = vmatpush1.bf16.msra.mxu0 %v5752
        %5765 = vmatprep.subr.bf16.mxu0 0
        %5766 = vmatpush1.bf16.msra.mxu0 %v5753
        %5767 = vmatprep.subr.bf16.mxu0 0
        %5768 = vmatpush1.bf16.msra.mxu0 %v5754
        %5769 = vmatprep.subr.bf16.mxu0 0
        %5770 = vmatpush1.bf16.msra.mxu0 %v5755
        %5771 = vmatprep.subr.bf16.mxu0 0
        %5772 = vmatpush1.bf16.msra.mxu0 0
        %5773 = vmatprep.subr.bf16.mxu0 0
        %5774 = vmatpush1.bf16.msra.mxu0 0
        %5775 = vmatprep.subr.bf16.mxu0 0
        %5776 = vmatpush1.bf16.msra.mxu0 0
        %5777 = vmatprep.subr.bf16.mxu0 0
        %5778 = vmatpush1.bf16.msra.mxu0 0
        %5779 = vmatprep.subr.bf16.mxu0 0
        %5780 = vmatpush1.bf16.msra.mxu0 0
        %5781 = vmatprep.subr.bf16.mxu0 0
        %5782 = vmatpush1.bf16.msra.mxu0 0
        %5783 = vmatprep.subr.bf16.mxu0 0
        %5784 = vmatpush1.bf16.msra.mxu0 0
        %5785 = vmatprep.subr.bf16.mxu0 0
        %5786 = vmatpush1.bf16.msra.mxu0 0
        %5787 = vmatprep.subr.bf16.mxu0 0
        %5788 = vmatpush1.bf16.msra.mxu0 0
        %5789 = vmatprep.subr.bf16.mxu0 0
        %5790 = vmatpush1.bf16.msra.mxu0 0
        %5791 = vmatprep.subr.bf16.mxu0 0
        %5792 = vmatpush1.bf16.msra.mxu0 0
        %5793 = vmatprep.subr.bf16.mxu0 0
        %5794 = vmatpush1.bf16.msra.mxu0 0
        %5795 = vmatprep.mubr.bf16.mxu0 0
        %5796 = vmatmul.mubr.bf16.gmra.mrb[0].mxu0 %v5761
        %v5797 = vpop.f32.mrb[0].mxu0
        %v5798 = vadd.f32 %v5730, %v5797
        %v5799 = vpop.f32.mrb[0].mxu0
        %v5800 = vpop.f32.mrb[0].mxu0
        %v5801 = vadd.f32 %v5733, %v5800
        %v5802 = vpop.f32.mrb[0].mxu0
        %5803 = vdwg.mxu0
        %v5804 = vld [vmem:[%s2 + $0x3a8] sm:$0x1]
        %v5805 = vlaneseq
        %v5806 = vshrl.u32 %v5805, 7
        %v5807 = vsub.s32 0, %v5806
        %v5808 = vrot.slane %v5804, %v5807
        %v5809 = vadd.f32 %v5798, %v5808
        %v5810 = vadd.f32 %v5801, %v5808
        %v5811 = vmax.f32 %v5809, 0.0
        %v5812 = vmax.f32 %v5810, 0.0
        %v5813 = vld [vmem:[%s2 + $0x3b0] sm:$0xff]
        %v5814 = vld [vmem:[%s2 + $0x3b8] sm:$0xff]
        %vm5815 = vcmask 72704
        %v5817 = vsel %vm5815, %v5813, 0
        %v5820 = vsel %vm5815, %v5814, 0
        %v5823 = vsel %vm2635, %v5812, 0
        %5825 = vmatprep.subr.mxu0 0.0
        %5826 = vmatpush1.msra.mxu0 %v5811
        %5827 = vmatprep.subr.mxu0 0.0
        %5828 = vmatpush1.msra.mxu0 %v5823
        %5829 = vmatprep.subr.mxu0 0.0
        %5830 = vmatpush1.msra.mxu0 0.0
        %5831 = vmatprep.subr.mxu0 0.0
        %5832 = vmatpush1.msra.mxu0 0.0
        %5833 = vmatprep.subr.mxu0 0.0
        %5834 = vmatpush1.msra.mxu0 0.0
        %5835 = vmatprep.subr.mxu0 0.0
        %5836 = vmatpush1.msra.mxu0 0.0
        %5837 = vmatprep.subr.mxu0 0.0
        %5838 = vmatpush1.msra.mxu0 0.0
        %5839 = vmatprep.subr.mxu0 0.0
        %5840 = vmatpush1.msra.mxu0 0.0
        %5841 = vmatprep.subr.mxu0 0.0
        %5842 = vmatpush1.msra.mxu0 0.0
        %5843 = vmatprep.subr.mxu0 0.0
        %5844 = vmatpush1.msra.mxu0 0.0
        %5845 = vmatprep.subr.mxu0 0.0
        %5846 = vmatpush1.msra.mxu0 0.0
        %5847 = vmatprep.subr.mxu0 0.0
        %5848 = vmatpush1.msra.mxu0 0.0
        %5849 = vmatprep.subr.mxu0 0.0
        %5850 = vmatpush1.msra.mxu0 0.0
        %5851 = vmatprep.subr.mxu0 0.0
        %5852 = vmatpush1.msra.mxu0 0.0
        %5853 = vmatprep.subr.mxu0 0.0
        %5854 = vmatpush1.msra.mxu0 0.0
        %5855 = vmatprep.subr.mxu0 0.0
        %5856 = vmatpush1.msra.mxu0 0.0
        %5857 = vmatprep.subr.mxu0 0.0
        %5858 = vmatpush1.msra.mxu0 0.0
        %5859 = vmatprep.subr.mxu0 0.0
        %5860 = vmatpush1.msra.mxu0 0.0
        %5861 = vmatprep.subr.mxu0 0.0
        %5862 = vmatpush1.msra.mxu0 0.0
        %5863 = vmatprep.subr.mxu0 0.0
        %5864 = vmatpush1.msra.mxu0 0.0
        %5865 = vmatprep.subr.mxu0 0.0
        %5866 = vmatpush1.msra.mxu0 0.0
        %5867 = vmatprep.subr.mxu0 0.0
        %5868 = vmatpush1.msra.mxu0 0.0
        %5869 = vmatprep.subr.mxu0 0.0
        %5870 = vmatpush1.msra.mxu0 0.0
        %5871 = vmatprep.subr.mxu0 0.0
        %5872 = vmatpush1.msra.mxu0 0.0
        %5873 = vmatprep.subr.mxu0 0.0
        %5874 = vmatpush1.msra.mxu0 0.0
        %5875 = vmatprep.subr.mxu0 0.0
        %5876 = vmatpush1.msra.mxu0 0.0
        %5877 = vmatprep.subr.mxu0 0.0
        %5878 = vmatpush1.msra.mxu0 0.0
        %5879 = vmatprep.subr.mxu0 0.0
        %5880 = vmatpush1.msra.mxu0 0.0
        %5881 = vmatprep.subr.mxu0 0.0
        %5882 = vmatpush1.msra.mxu0 0.0
        %5883 = vmatprep.subr.mxu0 0.0
        %5884 = vmatpush1.msra.mxu0 0.0
        %5885 = vmatprep.subr.mxu0 0.0
        %5886 = vmatpush1.msra.mxu0 0.0
        %5887 = vmatprep.subr.mxu0 0.0
        %5888 = vmatpush1.msra.mxu0 0.0
        %5889 = vmatprep.mubr.f32.mxu0 0.0
        %5890 = vmatmul.mubr.f32.gmra.mrb[0].mxu0 %v5817
        %v5891 = vpop.f32.mrb[0].mxu0
        %v5892 = vadd.f32 0.0, %v5891
        %v5893 = vpop.f32.mrb[0].mxu0
        %5894 = vmatprep.mubr.f32.mxu0 0.0
        %5895 = vmatmul.mubr.f32.gmra.mrb[0].mxu0 %v5820
        %v5896 = vpop.f32.mrb[0].mxu0
        %v5897 = vadd.f32 0.0, %v5896
        %v5898 = vpop.f32.mrb[0].mxu0
        %5899 = vdwg.mxu0
        %5900 = vst [vmem:[#allocation12] sm:$0xff] %v5892
        %5901 = vst [vmem:[#allocation12 + $0x8] sm:$0xff] %v5897
        %v5902 = vld [vmem:[%s2 + $0x428] sm:$0xff]
        %v5903 = vld [vmem:[%s2 + $0x430] sm:$0xff]
        %v5904 = vld [vmem:[#allocation12] sm:$0xff]
        %v5905 = vld [vmem:[#allocation12 + $0x8] sm:$0xff]
        %v5906 = vpack.c.bf16 %v5905, %v5904
        %v5907 = vld [vmem:[%s1 + $0x100] sm:$0xf]
        %v5908 = vld [vmem:[%s1 + $0x104] sm:$0xf]
        %v5909 = vld [vmem:[%s1 + $0x108] sm:$0xf]
        %v5910 = vld [vmem:[%s1 + $0x10c] sm:$0xf]
        %v5911 = vld [vmem:[%s1 + $0x110] sm:$0xf]
        %v5912 = vld [vmem:[%s1 + $0x114] sm:$0xf]
        %v5913 = vld [vmem:[%s1 + $0x118] sm:$0xf]
        %v5914 = vld [vmem:[%s1 + $0x11c] sm:$0xf]
        %v5915 = vld [vmem:[%s1 + $0x120] sm:$0xf]
        %v5916 = vld [vmem:[%s1 + $0x124] sm:$0xf]
        %v5917 = vld [vmem:[%s1 + $0x128] sm:$0xf]
        %v5918 = vld [vmem:[%s1 + $0x12c] sm:$0xf]
        %v5919 = vld [vmem:[%s1 + $0x130] sm:$0xf]
        %v5920 = vld [vmem:[%s1 + $0x134] sm:$0xf]
        %v5921 = vld [vmem:[%s1 + $0x138] sm:$0xf]
        %v5922 = vld [vmem:[%s1 + $0x13c] sm:$0xf]
        %v5923 = vld [vmem:[%s2 + $0x3c0] sm:$0x1]
        %v5924 = vlaneseq
        %v5925 = vshrl.u32 %v5924, 7
        %v5926 = vsub.s32 0, %v5925
        %v5927 = vrot.slane %v5923, %v5926
        %v5944 = vunpack.c.l.b16 %v5907
        %v5945 = vunpack.c.l.b16 %v5908
        %v5946 = vunpack.c.l.b16 %v5909
        %v5947 = vunpack.c.l.b16 %v5910
        %v5948 = vunpack.c.l.b16 %v5911
        %v5949 = vunpack.c.l.b16 %v5912
        %v5950 = vunpack.c.l.b16 %v5913
        %v5951 = vunpack.c.l.b16 %v5914
        %v5952 = vunpack.c.l.b16 %v5915
        %v5953 = vunpack.c.l.b16 %v5916
        %v5954 = vunpack.c.l.b16 %v5917
        %v5955 = vunpack.c.l.b16 %v5918
        %v5956 = vunpack.c.l.b16 %v5919
        %v5957 = vunpack.c.l.b16 %v5920
        %v5958 = vunpack.c.l.b16 %v5921
        %v5959 = vunpack.c.l.b16 %v5922
        %v5960 = vpack.c.b16 %v5945, %v5944
        %v5961 = vpack.c.b16 %v5947, %v5946
        %v5962 = vpack.c.b16 %v5949, %v5948
        %v5963 = vpack.c.b16 %v5951, %v5950
        %v5964 = vpack.c.b16 %v5953, %v5952
        %v5965 = vpack.c.b16 %v5955, %v5954
        %v5966 = vpack.c.b16 %v5957, %v5956
        %v5967 = vpack.c.b16 %v5959, %v5958
        %5976 = vmatprep.subr.bf16.mxu0 0
        %5977 = vmatpush1.bf16.msra.mxu0 %v5960
        %5978 = vmatprep.subr.bf16.mxu0 0
        %5979 = vmatpush1.bf16.msra.mxu0 %v5961
        %5980 = vmatprep.subr.bf16.mxu0 0
        %5981 = vmatpush1.bf16.msra.mxu0 %v5962
        %5982 = vmatprep.subr.bf16.mxu0 0
        %5983 = vmatpush1.bf16.msra.mxu0 %v5963
        %5984 = vmatprep.subr.bf16.mxu0 0
        %5985 = vmatpush1.bf16.msra.mxu0 %v5964
        %5986 = vmatprep.subr.bf16.mxu0 0
        %5987 = vmatpush1.bf16.msra.mxu0 %v5965
        %5988 = vmatprep.subr.bf16.mxu0 0
        %5989 = vmatpush1.bf16.msra.mxu0 %v5966
        %5990 = vmatprep.subr.bf16.mxu0 0
        %5991 = vmatpush1.bf16.msra.mxu0 %v5967
        %5992 = vmatprep.subr.bf16.mxu0 0
        %5993 = vmatpush1.bf16.msra.mxu0 0
        %5994 = vmatprep.subr.bf16.mxu0 0
        %5995 = vmatpush1.bf16.msra.mxu0 0
        %5996 = vmatprep.subr.bf16.mxu0 0
        %5997 = vmatpush1.bf16.msra.mxu0 0
        %5998 = vmatprep.subr.bf16.mxu0 0
        %5999 = vmatpush1.bf16.msra.mxu0 0
        %6000 = vmatprep.subr.bf16.mxu0 0
        %6001 = vmatpush1.bf16.msra.mxu0 0
        %6002 = vmatprep.subr.bf16.mxu0 0
        %6003 = vmatpush1.bf16.msra.mxu0 0
        %6004 = vmatprep.subr.bf16.mxu0 0
        %6005 = vmatpush1.bf16.msra.mxu0 0
        %6006 = vmatprep.subr.bf16.mxu0 0
        %6007 = vmatpush1.bf16.msra.mxu0 0
        %6008 = vmatprep.mubr.bf16.mxu0 0
        %6009 = vmatmul.mubr.bf16.gmra.mrb[0].mxu0 %v5906
        %v6010 = vpop.f32.mrb[0].mxu0
        %v6011 = vadd.f32 %v5927, %v6010
        %v6012 = vpop.f32.mrb[0].mxu0
        %v6013 = vpop.f32.mrb[0].mxu0
        %v6014 = vadd.f32 %v5927, %v6013
        %v6015 = vpop.f32.mrb[0].mxu0
        %6016 = vdwg.mxu0
        %v6017 = vmax.f32 %v6011, 0.0
        %v6018 = vmax.f32 %v6014, 0.0
        %6020 = vset.pattern.permute.xlu0 0
        %6021 = vperm.xlu0 %6020, %v5902
        %v6022 = vpop.permute.xlu0 %6021
        %6025 = vset.pattern.permute.xlu0 0
        %6026 = vperm.xlu0 %6025, %v5903
        %v6027 = vpop.permute.xlu0 %6026
        %v6029 = vmul.f32 %v6017, %v6022
        %v6030 = vmul.f32 %v6018, %v6027
        %6031 = vst.msk [vmem:[#allocation13] sm:$0xff] %vm4682, %v6029
        %6032 = vst.msk [vmem:[#allocation13 + $0x8] sm:$0xff] %vm4682, %v6030
        %v6033 = vld [vmem:[%s2 + $0x3c8] sm:$0xff]
        %v6034 = vld [vmem:[%s2 + $0x3d0] sm:$0x1]
        %v6035 = vld [vmem:[%s2 + $0x3d8] sm:$0x1]
        %v6036 = vld [vmem:[#allocation13 + $0x9] sm:$0xf]
        %v6037 = vlaneseq
        %v6038 = vshrl.u32 %v6037, 7
        %v6039 = vsub.s32 0, %v6038
        %v6040 = vrot.slane %v6033, %v6039
        %v6041 = vmul.f32 %v6036, %v6040
        %v6042 = vld [vmem:[#allocation13 + $0x6] sm:$0xf]
        %v6043 = vlaneseq
        %v6044 = vshrl.u32 %v6043, 7
        %v6045 = vsub.s32 1, %v6044
        %v6046 = vrot.slane %v6033, %v6045
        %v6047 = vmul.f32 %v6042, %v6046
        %v6048 = vadd.f32 %v6041, %v6047
        %v6049 = vld [vmem:[#allocation13 + $0xa] sm:$0xf]
        %v6050 = vlaneseq
        %v6051 = vshrl.u32 %v6050, 7
        %v6052 = vsub.s32 2, %v6051
        %v6053 = vrot.slane %v6033, %v6052
        %v6054 = vmul.f32 %v6049, %v6053
        %v6055 = vadd.f32 %v6048, %v6054
        %v6056 = vld [vmem:[#allocation13 + $0x3] sm:$0xf]
        %v6057 = vlaneseq
        %v6058 = vshrl.u32 %v6057, 7
        %v6059 = vsub.s32 3, %v6058
        %v6060 = vrot.slane %v6033, %v6059
        %v6061 = vmul.f32 %v6056, %v6060
        %v6062 = vadd.f32 %v6055, %v6061
        %v6063 = vld [vmem:[#allocation13] sm:$0xf]
        %v6064 = vlaneseq
        %v6065 = vshrl.u32 %v6064, 7
        %v6066 = vsub.s32 4, %v6065
        %v6067 = vrot.slane %v6033, %v6066
        %v6068 = vmul.f32 %v6063, %v6067
        %v6069 = vadd.f32 %v6062, %v6068
        %v6070 = vld [vmem:[#allocation13 + $0x4] sm:$0xf]
        %v6071 = vlaneseq
        %v6072 = vshrl.u32 %v6071, 7
        %v6073 = vsub.s32 5, %v6072
        %v6074 = vrot.slane %v6033, %v6073
        %v6075 = vmul.f32 %v6070, %v6074
        %v6076 = vadd.f32 %v6069, %v6075
        %v6077 = vld [vmem:[#allocation13 + $0xb] sm:$0xf]
        %v6078 = vlaneseq
        %v6079 = vshrl.u32 %v6078, 7
        %v6080 = vsub.s32 6, %v6079
        %v6081 = vrot.slane %v6033, %v6080
        %v6082 = vmul.f32 %v6077, %v6081
        %v6083 = vadd.f32 %v6076, %v6082
        %v6084 = vld [vmem:[#allocation13 + $0x8] sm:$0xf]
        %v6085 = vlaneseq
        %v6086 = vshrl.u32 %v6085, 7
        %v6087 = vsub.s32 7, %v6086
        %v6088 = vrot.slane %v6033, %v6087
        %v6089 = vmul.f32 %v6084, %v6088
        %v6090 = vadd.f32 %v6083, %v6089
        %v6091 = vld [vmem:[#allocation13 + $0xc] sm:$0xf]
        %v6092 = vlaneseq
        %v6093 = vshrl.u32 %v6092, 7
        %v6094 = vsub.s32 0, %v6093
        %v6095 = vrot.slane %v6034, %v6094
        %v6096 = vmul.f32 %v6091, %v6095
        %v6097 = vadd.f32 %v6090, %v6096
        %v6098 = vmul.f32 %v6042, %v6040
        %v6099 = vmul.f32 %v6049, %v6046
        %v6100 = vadd.f32 %v6098, %v6099
        %v6101 = vld [vmem:[#allocation13 + $0x7] sm:$0xf]
        %v6102 = vmul.f32 %v6101, %v6053
        %v6103 = vadd.f32 %v6100, %v6102
        %v6104 = vmul.f32 %v6063, %v6060
        %v6105 = vadd.f32 %v6103, %v6104
        %v6106 = vmul.f32 %v6070, %v6067
        %v6107 = vadd.f32 %v6105, %v6106
        %v6108 = vld [vmem:[#allocation13 + $0x1] sm:$0xf]
        %v6109 = vmul.f32 %v6108, %v6074
        %v6110 = vadd.f32 %v6107, %v6109
        %v6111 = vmul.f32 %v6084, %v6081
        %v6112 = vadd.f32 %v6110, %v6111
        %v6113 = vmul.f32 %v6091, %v6088
        %v6114 = vadd.f32 %v6112, %v6113
        %v6115 = vmul.f32 %v6036, %v6095
        %v6116 = vadd.f32 %v6114, %v6115
        %v6117 = vmul.f32 %v6056, %v6040
        %v6118 = vmul.f32 %v6063, %v6046
        %v6119 = vadd.f32 %v6117, %v6118
        %v6120 = vmul.f32 %v6070, %v6053
        %v6121 = vadd.f32 %v6119, %v6120
        %v6122 = vmul.f32 %v6077, %v6060
        %v6123 = vadd.f32 %v6121, %v6122
        %v6124 = vmul.f32 %v6084, %v6067
        %v6125 = vadd.f32 %v6123, %v6124
        %v6126 = vmul.f32 %v6091, %v6074
        %v6127 = vadd.f32 %v6125, %v6126
        %v6128 = vld [vmem:[#allocation13 + $0x5] sm:$0xf]
        %v6129 = vmul.f32 %v6128, %v6081
        %v6130 = vadd.f32 %v6127, %v6129
        %v6131 = vld [vmem:[#allocation13 + $0x2] sm:$0xf]
        %v6132 = vmul.f32 %v6131, %v6088
        %v6133 = vadd.f32 %v6130, %v6132
        %v6134 = vmul.f32 %v6042, %v6095
        %v6135 = vadd.f32 %v6133, %v6134
        %v6136 = vmul.f32 %v6063, %v6040
        %v6137 = vmul.f32 %v6070, %v6046
        %v6138 = vadd.f32 %v6136, %v6137
        %v6139 = vmul.f32 %v6108, %v6053
        %v6140 = vadd.f32 %v6138, %v6139
        %v6141 = vmul.f32 %v6084, %v6060
        %v6142 = vadd.f32 %v6140, %v6141
        %v6143 = vmul.f32 %v6091, %v6067
        %v6144 = vadd.f32 %v6142, %v6143
        %v6145 = vmul.f32 %v6036, %v6074
        %v6146 = vadd.f32 %v6144, %v6145
        %v6147 = vmul.f32 %v6131, %v6081
        %v6148 = vadd.f32 %v6146, %v6147
        %v6149 = vmul.f32 %v6042, %v6088
        %v6150 = vadd.f32 %v6148, %v6149
        %v6151 = vmul.f32 %v6056, %v6095
        %v6152 = vadd.f32 %v6150, %v6151
        %v6154 = vrot.slane %v6116, 4
        %v6157 = vrot.slane %v6152, 4
        %vm6159 = vcmask 1043456
        %v6160 = vsel %vm6159, %v6097, %v6154
        %v6161 = vsel %vm6159, %v6135, %v6157
        %v6162 = vlaneseq
        %v6163 = vshrl.u32 %v6162, 7
        %v6164 = vsub.s32 0, %v6163
        %v6165 = vrot.slane %v6035, %v6164
        %v6166 = vadd.f32 %v6160, %v6165
        %v6167 = vadd.f32 %v6161, %v6165
        %v6168 = vld [vmem:[%s2 + $0x3e0] sm:$0xff]
        %v6169 = vld [vmem:[%s2 + $0x3e8] sm:$0xff]
        %v6170 = vld [vmem:[%s2 + $0x3f0] sm:$0xff]
        %v6171 = vld [vmem:[%s2 + $0x3f8] sm:$0xff]
        %v6172 = vld [vmem:[%s2 + $0x400] sm:$0xff]
        %v6173 = vld [vmem:[%s2 + $0x408] sm:$0xff]
        %v6174 = vld [vmem:[%s2 + $0x410] sm:$0xff]
        %v6175 = vld [vmem:[%s2 + $0x418] sm:$0xff]
        %v6176 = vpack.c.bf16 %v6167, %v6166
        %v6177 = vld [vmem:[%s1 + $0x140] sm:$0xf]
        %v6178 = vld [vmem:[%s1 + $0x144] sm:$0xf]
        %v6179 = vld [vmem:[%s1 + $0x148] sm:$0xf]
        %v6180 = vld [vmem:[%s1 + $0x14c] sm:$0xf]
        %v6181 = vld [vmem:[%s1 + $0x150] sm:$0xf]
        %v6182 = vld [vmem:[%s1 + $0x154] sm:$0xf]
        %v6183 = vld [vmem:[%s1 + $0x158] sm:$0xf]
        %v6184 = vld [vmem:[%s1 + $0x15c] sm:$0xf]
        %v6193 = vunpack.c.l.b16 %v6177
        %v6194 = vunpack.c.l.b16 %v6178
        %v6195 = vunpack.c.l.b16 %v6179
        %v6196 = vunpack.c.l.b16 %v6180
        %v6197 = vunpack.c.l.b16 %v6181
        %v6198 = vunpack.c.l.b16 %v6182
        %v6199 = vunpack.c.l.b16 %v6183
        %v6200 = vunpack.c.l.b16 %v6184
        %v6201 = vpack.c.b16 %v6194, %v6193
        %v6202 = vpack.c.b16 %v6196, %v6195
        %v6203 = vpack.c.b16 %v6198, %v6197
        %v6204 = vpack.c.b16 %v6200, %v6199
        %v6210 = vsel %vm4682, %v6176, 0
        %6212 = vmatprep.subr.bf16.mxu0 0
        %6213 = vmatpush1.bf16.msra.mxu0 %v6201
        %6214 = vmatprep.subr.bf16.mxu0 0
        %6215 = vmatpush1.bf16.msra.mxu0 %v6202
        %6216 = vmatprep.subr.bf16.mxu0 0
        %6217 = vmatpush1.bf16.msra.mxu0 %v6203
        %6218 = vmatprep.subr.bf16.mxu0 0
        %6219 = vmatpush1.bf16.msra.mxu0 %v6204
        %6220 = vmatprep.subr.bf16.mxu0 0
        %6221 = vmatpush1.bf16.msra.mxu0 0
        %6222 = vmatprep.subr.bf16.mxu0 0
        %6223 = vmatpush1.bf16.msra.mxu0 0
        %6224 = vmatprep.subr.bf16.mxu0 0
        %6225 = vmatpush1.bf16.msra.mxu0 0
        %6226 = vmatprep.subr.bf16.mxu0 0
        %6227 = vmatpush1.bf16.msra.mxu0 0
        %6228 = vmatprep.subr.bf16.mxu0 0
        %6229 = vmatpush1.bf16.msra.mxu0 0
        %6230 = vmatprep.subr.bf16.mxu0 0
        %6231 = vmatpush1.bf16.msra.mxu0 0
        %6232 = vmatprep.subr.bf16.mxu0 0
        %6233 = vmatpush1.bf16.msra.mxu0 0
        %6234 = vmatprep.subr.bf16.mxu0 0
        %6235 = vmatpush1.bf16.msra.mxu0 0
        %6236 = vmatprep.subr.bf16.mxu0 0
        %6237 = vmatpush1.bf16.msra.mxu0 0
        %6238 = vmatprep.subr.bf16.mxu0 0
        %6239 = vmatpush1.bf16.msra.mxu0 0
        %6240 = vmatprep.subr.bf16.mxu0 0
        %6241 = vmatpush1.bf16.msra.mxu0 0
        %6242 = vmatprep.subr.bf16.mxu0 0
        %6243 = vmatpush1.bf16.msra.mxu0 0
        %6244 = vmatprep.mubr.bf16.mxu0 0
        %6245 = vmatmul.mubr.bf16.gmra.mrb[0].mxu0 %v6210
        %v6246 = vpop.f32.mrb[0].mxu0
        %v6247 = vadd.f32 0.0, %v6246
        %v6248 = vpop.f32.mrb[0].mxu0
        %v6249 = vpop.f32.mrb[0].mxu0
        %v6250 = vadd.f32 0.0, %v6249
        %v6251 = vpop.f32.mrb[0].mxu0
        %6252 = vdwg.mxu0
        %v6254 = vsel %vm4682, %v5904, 0
        %v6257 = vsel %vm4682, %v5905, 0
        %6259 = vmatprep.subr.mxu0 0.0
        %6260 = vmatpush1.msra.mxu0 %v6168
        %6261 = vmatprep.subr.mxu0 0.0
        %6262 = vmatpush1.msra.mxu0 %v6169
        %6263 = vmatprep.subr.mxu0 0.0
        %6264 = vmatpush1.msra.mxu0 %v6170
        %6265 = vmatprep.subr.mxu0 0.0
        %6266 = vmatpush1.msra.mxu0 %v6171
        %6267 = vmatprep.subr.mxu0 0.0
        %6268 = vmatpush1.msra.mxu0 %v6172
        %6269 = vmatprep.subr.mxu0 0.0
        %6270 = vmatpush1.msra.mxu0 %v6173
        %6271 = vmatprep.subr.mxu0 0.0
        %6272 = vmatpush1.msra.mxu0 %v6174
        %6273 = vmatprep.subr.mxu0 0.0
        %6274 = vmatpush1.msra.mxu0 %v6175
        %6275 = vmatprep.subr.mxu0 0.0
        %6276 = vmatpush1.msra.mxu0 0.0
        %6277 = vmatprep.subr.mxu0 0.0
        %6278 = vmatpush1.msra.mxu0 0.0
        %6279 = vmatprep.subr.mxu0 0.0
        %6280 = vmatpush1.msra.mxu0 0.0
        %6281 = vmatprep.subr.mxu0 0.0
        %6282 = vmatpush1.msra.mxu0 0.0
        %6283 = vmatprep.subr.mxu0 0.0
        %6284 = vmatpush1.msra.mxu0 0.0
        %6285 = vmatprep.subr.mxu0 0.0
        %6286 = vmatpush1.msra.mxu0 0.0
        %6287 = vmatprep.subr.mxu0 0.0
        %6288 = vmatpush1.msra.mxu0 0.0
        %6289 = vmatprep.subr.mxu0 0.0
        %6290 = vmatpush1.msra.mxu0 0.0
        %6291 = vmatprep.subr.mxu0 0.0
        %6292 = vmatpush1.msra.mxu0 0.0
        %6293 = vmatprep.subr.mxu0 0.0
        %6294 = vmatpush1.msra.mxu0 0.0
        %6295 = vmatprep.subr.mxu0 0.0
        %6296 = vmatpush1.msra.mxu0 0.0
        %6297 = vmatprep.subr.mxu0 0.0
        %6298 = vmatpush1.msra.mxu0 0.0
        %6299 = vmatprep.subr.mxu0 0.0
        %6300 = vmatpush1.msra.mxu0 0.0
        %6301 = vmatprep.subr.mxu0 0.0
        %6302 = vmatpush1.msra.mxu0 0.0
        %6303 = vmatprep.subr.mxu0 0.0
        %6304 = vmatpush1.msra.mxu0 0.0
        %6305 = vmatprep.subr.mxu0 0.0
        %6306 = vmatpush1.msra.mxu0 0.0
        %6307 = vmatprep.subr.mxu0 0.0
        %6308 = vmatpush1.msra.mxu0 0.0
        %6309 = vmatprep.subr.mxu0 0.0
        %6310 = vmatpush1.msra.mxu0 0.0
        %6311 = vmatprep.subr.mxu0 0.0
        %6312 = vmatpush1.msra.mxu0 0.0
        %6313 = vmatprep.subr.mxu0 0.0
        %6314 = vmatpush1.msra.mxu0 0.0
        %6315 = vmatprep.subr.mxu0 0.0
        %6316 = vmatpush1.msra.mxu0 0.0
        %6317 = vmatprep.subr.mxu0 0.0
        %6318 = vmatpush1.msra.mxu0 0.0
        %6319 = vmatprep.subr.mxu0 0.0
        %6320 = vmatpush1.msra.mxu0 0.0
        %6321 = vmatprep.subr.mxu0 0.0
        %6322 = vmatpush1.msra.mxu0 0.0
        %6323 = vmatprep.mubr.f32.mxu0 0.0
        %6324 = vmatmul.mubr.f32.gmra.mrb[0].mxu0 %v6254
        %v6325 = vpop.f32.mrb[0].mxu0
        %v6326 = vadd.f32 %v6247, %v6325
        %v6327 = vpop.f32.mrb[0].mxu0
        %6328 = vmatprep.mubr.f32.mxu0 0.0
        %6329 = vmatmul.mubr.f32.gmra.mrb[0].mxu0 %v6257
        %v6330 = vpop.f32.mrb[0].mxu0
        %v6331 = vadd.f32 %v6250, %v6330
        %v6332 = vpop.f32.mrb[0].mxu0
        %6333 = vdwg.mxu0
        %v6334 = vld [vmem:[%s2 + $0x420] sm:$0x1]
        %v6335 = vlaneseq
        %v6336 = vshrl.u32 %v6335, 7
        %v6337 = vsub.s32 0, %v6336
        %v6338 = vrot.slane %v6334, %v6337
        %v6339 = vadd.f32 %v6326, %v6338
        %v6340 = vadd.f32 %v6331, %v6338
        %v6341 = vmax.f32 %v6339, 0.0
        %v6342 = vmax.f32 %v6340, 0.0
        %v6343 = vmul.f32 %v6341, %v6022
        %v6344 = vmul.f32 %v6342, %v6027
        %6345 = vst [vmem:[#allocation14] sm:$0xff] %v6343
        %6346 = vst [vmem:[#allocation14 + $0x8] sm:$0xff] %v6344
        %v6347 = vld [vmem:[#allocation14 + $0xc] sm:$0x1]
        %v6348 = vld [vmem:[#allocation14 + $0x9] sm:$0x1]
        %v6349 = vld [vmem:[#allocation14 + $0x6] sm:$0x1]
        %v6350 = vld [vmem:[#allocation14 + $0x3] sm:$0x1]
        %v6352 = vrot.slane %v6348, 7
        %v6355 = vrot.slane %v6349, 6
        %v6358 = vrot.slane %v6350, 5
        %v6360 = vsel %vm2635, %v6347, %v6352
        %v6361 = vsel %vm3443, %v6360, %v6355
        %v6362 = vsel %vm3459, %v6361, %v6358
        %6363 = vst [vmem:[%s163] sm:$0xf] %v6362
        %s6364 = sand.u32 %s93, 1
        %s6365 = scalar_lea.sflag [#allocation16], %s6364
        %s6366 = sand.u32 %s93, 1
        %s6367 = smul.addr %s6366, 4
        %s6368 = scalar_lea.vmem [#allocation15], %s6367
        // Predicated region
        $region33: #{forward.1} parent=31 // pred_check
          %p6369 = pneg %p103
        $region34: #{forward.1} parent=31 // pred_check_branch
          %6371 = sbr.rel (%p6369) target = $region36
        $region35: #{forward.1} parent=31 // pred_region
          %s6373 = ssub.s32 64, 64
          %6374 = vsyncadd %s6365, %s6373
          %s6375 = smul.addr %s17, 64
          %s6376 = scalar_lea.hbm %s3, %s6375
          %s6378 = sshll.u32 %s6368, 4
          %s6379 = int_to_ptr.vmem [resolvable:$true] %s6378
          %6381 = dma.vmem_to_hbm [thread:$0]  %s6379, 64, %s6376, %s6365
        $region36: #{forward.1} parent=31 // pred_fallthru
          _
      $region32: #{forward.1} parent=5 // pred_fallthru
        _
      %p6382 = scmp.le.s32.totalorder 2, %s12
      // Predicated region
      $region37: #{forward.1} parent=5 // pred_check
        %p6383 = pneg %p6382
      $region38: #{forward.1} parent=5 // pred_check_branch
        %6385 = sbr.rel (%p6383) target = $region40
      $region39: #{forward.1} parent=5 // pred_region
        %s6386 = ssub.s32 %s12, 2
        // Predicated region
        $region41: #{forward.1} parent=39 // pred_check
          %p6387 = pneg %p109
        $region42: #{forward.1} parent=39 // pred_check_branch
          %6389 = sbr.rel (%p6387) target = $region44
        $region43: #{forward.1} parent=39 // pred_region
          %s6390 = sand.u32 %s94, 1
          %s6391 = scalar_lea.sflag [#allocation16], %s6390
          %s6392 = sand.u32 %s94, 1
          %s6393 = smul.addr %s6392, 4
          %s6394 = scalar_lea.vmem [#allocation15], %s6393
          %6395 = dma.done %s6391, 64
        $region44: #{forward.1} parent=39 // pred_fallthru
          _
      $region40: #{forward.1} parent=5 // pred_fallthru
        _
    $region6: #{forward.1} parent=1 // loop_footer
      %s16 = sadd.s32 1, %s12
    $region7: #{forward.1} parent=1 // loop_footer_branch
      %11 = sbr.rel target = $region3
    $region8: #{forward.1} parent=1 // loop_exit
      _
    %6396 = vsyncpa [#allocation16], 1
    %s6397 = scalar_lea.sflag [#allocation16], 1
    %6398 = vsyncpa %s6397, 1

</llo_original>
